<compile_context>
chip_gen: v7x
topology: tpu7x:2x2x1
jax: 0.10.0
libtpu: 0.0.40
codegen_flags: <defaults>
</compile_context>

<pallas_src>
import math

import numpy as np
import jax
import jax.numpy as jnp
from jax import lax
from jax.experimental import pallas as pl
from jax.experimental.pallas import tpu as pltpu

HIGHEST = jax.lax.Precision.HIGHEST


# ---------------------------------------------------------------------------
# shared math helpers
# ---------------------------------------------------------------------------
def _layernorm(x, g, b, eps=1e-5):
    mu = jnp.mean(x, axis=-1, keepdims=True)
    var = jnp.mean((x - mu) ** 2, axis=-1, keepdims=True)
    return (x - mu) * lax.rsqrt(var + eps) * g + b


def _linear_ref(x, w, b):
    # reference-only linear: x (rows, in), w (out, in) torch layout, f32 HIGHEST
    y = lax.dot_general(x, w, (((1,), (1,)), ((), ())),
                        precision=HIGHEST, preferred_element_type=jnp.float32)
    return y + b


# ---------------------------------------------------------------------------
# host-side parameter packing: everything -> two f32 slabs per encoder
# ---------------------------------------------------------------------------
def pack_encoder(params, pos, *, S, D, H, base_dim):
    """Pack one encoder's parameters into slab_a (lane width D) and slab_b
    (lane width 4D).  Folds: qk scaling into in_proj q rows, 1/S mean-pool
    into projw, and permutes in_proj to a head-grouped [q_h|k_h|v_h] layout.
    Returns (slab_a, slab_b, offsets) with static Python-int row offsets."""
    L = params["inw"].shape[0]
    hd = D // H
    assert D % H == 0 and base_dim <= 4 * D
    scaling = float(hd) ** -0.5
    WB = 4 * D                       # slab-B lane width

    # head-grouped qkv column permutation: head h -> [q_h | k_h | v_h]
    perm = np.concatenate(
        [np.concatenate([part * D + h * hd + np.arange(hd) for part in range(3)])
         for h in range(H)])

    a_rows, b_rows = [], []
    a_len, b_len = [0], [0]
    off = {}

    def _pad_rows(arr):                      # keep every offset 8-sublane aligned
        pad = (-arr.shape[0]) % 8
        if pad:
            arr = jnp.concatenate(
                [arr, jnp.zeros((pad, arr.shape[1]), jnp.float32)], axis=0)
        return arr

    def put_a(name, arr):
        arr = jnp.asarray(arr, jnp.float32)
        off[name] = a_len[0]
        arr = _pad_rows(arr)
        a_rows.append(arr)
        a_len[0] += arr.shape[0]

    def put_b(name, arr):
        arr = jnp.asarray(arr, jnp.float32)
        padded = jnp.zeros((arr.shape[0], WB), jnp.float32)
        padded = padded.at[:, :arr.shape[1]].set(arr)
        off[name] = b_len[0]
        padded = _pad_rows(padded)
        b_rows.append(padded)
        b_len[0] += padded.shape[0]

    put_a("pos", pos)                                        # (S, D)
    for l in range(L):
        inw = params["inw"][l].at[:D, :].multiply(scaling)   # fold qk scale
        inb = params["inb"][l].at[:, :D].multiply(scaling)   # (1, 3D)
        put_a(f"ln0g{l}", params["ln0g"][l])
        put_a(f"ln0b{l}", params["ln0b"][l])
        put_a(f"inw{l}", inw[perm, :])                       # (3D, D) head-grouped
        put_b(f"inb{l}", inb[:, perm])                       # (1, 3D) -> (1, 4D)
        put_a(f"outw{l}", params["outw"][l])                 # (D, D)
        put_a(f"outb{l}", params["outb"][l])
        put_a(f"ln1g{l}", params["ln1g"][l])
        put_a(f"ln1b{l}", params["ln1b"][l])
        put_a(f"fc1w{l}", params["fc1w"][l])                 # (4D, D)
        put_b(f"fc1b{l}", params["fc1b"][l])                 # (1, 4D)
        put_b(f"fc2w{l}", params["fc2w"][l])                 # (D, 4D)
        put_a(f"fc2b{l}", params["fc2b"][l])
    put_a("flng", params["flng"])
    put_a("flnb", params["flnb"])
    put_a("projw", params["projw"] * (1.0 / S))              # fold mean-pool
    put_b("projb", params["projb"])                          # (1, base_dim)

    return jnp.concatenate(a_rows, axis=0), jnp.concatenate(b_rows, axis=0), off


# ---------------------------------------------------------------------------
# Pallas kernel: BOTH encoders, one invocation, weights read from two slabs
# ---------------------------------------------------------------------------
def make_fused_kernel(B, S, D, H, L, base_dim, off):
    hd = D // H
    T = B * S
    embed_scale = math.sqrt(D)
    bf16 = jnp.bfloat16

    def lin(x, w, bias=None):
        # bf16 MXU operands, f32 accumulation; w in torch (out, in) layout.
        y = lax.dot_general(x.astype(bf16), w.astype(bf16),
                            (((1,), (1,)), ((), ())),
                            preferred_element_type=jnp.float32)
        return y if bias is None else y + bias

    def kernel(x_ref, a_ref, b_ref, o_ref):
        # Static loop over the two encoders (visual, acoustic): one kernel
        # invocation, no grid, weight slabs DMA'd exactly once.
        for e in range(2):
            def ga(name, rows):      # slab A: lane width D
                r0 = off[name]
                return a_ref[e, r0:r0 + rows, :]

            def gb(name, rows):      # slab B: lane width 4D
                r0 = off[name]
                return b_ref[e, r0:r0 + rows, :]

            pos = ga("pos", S)                                      # (S, D)
            x = x_ref[e] * jnp.float32(embed_scale) + pos           # (B, S, D)
            x = x.reshape(T, D)                                     # fold batch

            for l in range(L):
                # ---- pre-norm multi-head self-attention (+ residual) ----
                y = _layernorm(x, ga(f"ln0g{l}", 1), ga(f"ln0b{l}", 1))
                qkv = lin(y, ga(f"inw{l}", 3 * D),
                          gb(f"inb{l}", 1)[:, :3 * D])              # (T, 3D)
                qkv = qkv.reshape(B, S, 3 * D)
                # head-grouped layout: one contiguous slice per head, one
                # leading-axis concat -> (H*B, S, 3*hd)
                heads = jnp.concatenate(
                    [qkv[:, :, h * 3 * hd:(h + 1) * 3 * hd] for h in range(H)],
                    axis=0)
                q = heads[:, :, :hd]
                k = heads[:, :, hd:2 * hd]
                v = heads[:, :, 2 * hd:]
                s = jnp.einsum("bqd,bkd->bqk", q.astype(bf16), k.astype(bf16),
                               preferred_element_type=jnp.float32)  # (HB, S, S)
                s = s - jnp.max(s, axis=-1, keepdims=True)
                p = jnp.exp(s)
                p = p / jnp.sum(p, axis=-1, keepdims=True)          # exact recip
                ctx = jnp.einsum("bqk,bkd->bqd", p.astype(bf16), v.astype(bf16),
                                 preferred_element_type=jnp.float32)  # (HB,S,hd)
                attn = jnp.concatenate(
                    [ctx[h * B:(h + 1) * B] for h in range(H)], axis=-1)
                attn = attn.reshape(T, D)
                x = x + lin(attn, ga(f"outw{l}", D), ga(f"outb{l}", 1))

                # ---- pre-norm position-wise FFN (+ residual) ----
                y = _layernorm(x, ga(f"ln1g{l}", 1), ga(f"ln1b{l}", 1))
                ff = jnp.maximum(
                    lin(y, ga(f"fc1w{l}", 4 * D), gb(f"fc1b{l}", 1)), 0.0)
                x = x + lin(ff, gb(f"fc2w{l}", D), ga(f"fc2b{l}", 1))

            # final LayerNorm, sum-pool (1/S folded into projw), project
            x = _layernorm(x, ga("flng", 1), ga("flnb", 1))
            pooled = jnp.sum(x.reshape(B, S, D), axis=1)            # (B, D)
            o_ref[e] = lin(pooled, ga("projw", base_dim),
                           gb("projb", 1)[:, :base_dim])            # (B, base)

    return kernel


def fused_dual_encoder(visual, acoustic, pos_v, pos_a, params_v, params_a,
                       *, nheads, base_dim):
    """Both transformer encoders + mean pool + projection in ONE pallas_call
    with a single invocation (no grid) and only three inputs."""
    assert visual.shape == acoustic.shape, "stacked path needs matching shapes"
    B, S, D = visual.shape
    H = nheads
    L = params_v["inw"].shape[0]

    a_v, b_v, off_v = pack_encoder(params_v, pos_v, S=S, D=D, H=H, base_dim=base_dim)
    a_a, b_a, off_a = pack_encoder(params_a, pos_a, S=S, D=D, H=H, base_dim=base_dim)
    assert off_v == off_a and a_v.shape == a_a.shape and b_v.shape == b_a.shape

    x_st = jnp.stack([visual, acoustic], axis=0).astype(jnp.float32)  # (2,B,S,D)
    slab_a = jnp.stack([a_v, a_a], axis=0)                            # (2,RA,D)
    slab_b = jnp.stack([b_v, b_a], axis=0)                            # (2,RB,4D)
    # total VMEM footprint ~0.3 MiB -> fine on v5e/v6e (128 MiB) and v7x (64 MiB).
    # If D/L grow, switch to an 'arbitrary' grid axis over layers with
    # layer-indexed slab BlockSpecs and set vmem_limit_bytes explicitly.

    kernel = make_fused_kernel(B, S, D, H, L, base_dim, off_v)
    vmem = pl.BlockSpec(memory_space=pltpu.MemorySpace.VMEM)
    out = pl.pallas_call(
        kernel,
        out_shape=jax.ShapeDtypeStruct((2, B, base_dim), jnp.float32),
        in_specs=[vmem, vmem, vmem],
        out_specs=vmem,
    )(x_st, slab_a, slab_b)
    return out[0], out[1]


# ---------------------------------------------------------------------------
# parameter / positional-embedding setup (glue, plain JAX)
# ---------------------------------------------------------------------------
def init_encoder_params(key, D, L, base_dim):
    ks = jax.random.split(key, 10)

    def w(k, shape, scale=0.05):
        return (scale * jax.random.normal(k, shape)).astype(jnp.float32)

    return dict(
        inw=w(ks[0], (L, 3 * D, D)),
        inb=w(ks[1], (L, 1, 3 * D)),
        outw=w(ks[2], (L, D, D)),
        outb=w(ks[3], (L, 1, D)),
        ln0g=jnp.ones((L, 1, D), jnp.float32),
        ln0b=jnp.zeros((L, 1, D), jnp.float32),
        fc1w=w(ks[4], (L, 4 * D, D)),
        fc1b=w(ks[5], (L, 1, 4 * D)),
        fc2w=w(ks[6], (L, D, 4 * D)),
        fc2b=w(ks[7], (L, 1, D)),
        ln1g=jnp.ones((L, 1, D), jnp.float32),
        ln1b=jnp.zeros((L, 1, D), jnp.float32),
        flng=jnp.ones((1, D), jnp.float32),
        flnb=jnp.zeros((1, D), jnp.float32),
        projw=w(ks[8], (base_dim, D)),
        projb=w(ks[9], (1, base_dim)),
    )


def sinusoidal_positions(S, D, padding_idx=0):
    # fairseq SinusoidalPositionalEmbedding; with no pad tokens positions = 1..S
    half = D // 2
    emb = math.log(10000.0) / (half - 1)
    freqs = jnp.exp(jnp.arange(half, dtype=jnp.float32) * -emb)
    pos = jnp.arange(padding_idx + 1, padding_idx + 1 + S, dtype=jnp.float32)
    args = pos[:, None] * freqs[None, :]
    pe = jnp.concatenate([jnp.sin(args), jnp.cos(args)], axis=1)
    if D % 2 == 1:
        pe = jnp.concatenate([pe, jnp.zeros((S, 1), jnp.float32)], axis=1)
    return pe.astype(jnp.float32)


# ---------------------------------------------------------------------------
# pure-JAX reference (mirrors the PyTorch forward) for a correctness check
# ---------------------------------------------------------------------------
def ref_forward(textual, visual, acoustic, pos_v, pos_a, pv, pa, nheads):
    def enc(xb, pos, p, H):
        S, D = xb.shape
        hd = D // H
        L = p["inw"].shape[0]
        x = xb * math.sqrt(D) + pos
        for l in range(L):
            y = _layernorm(x, p["ln0g"][l], p["ln0b"][l])
            qkv = _linear_ref(y, p["inw"][l], p["inb"][l])
            q = qkv[:, :D] * (hd ** -0.5)
            k = qkv[:, D:2 * D]
            v = qkv[:, 2 * D:]
            heads = []
            for h in range(H):
                qh = q[:, h * hd:(h + 1) * hd]
                kh = k[:, h * hd:(h + 1) * hd]
                vh = v[:, h * hd:(h + 1) * hd]
                sc = jnp.dot(qh, kh.T, precision=HIGHEST)
                p_attn = jax.nn.softmax(sc, axis=-1)
                heads.append(jnp.dot(p_attn, vh, precision=HIGHEST))
            attn = jnp.concatenate(heads, axis=-1)
            x = x + _linear_ref(attn, p["outw"][l], p["outb"][l])
            y = _layernorm(x, p["ln1g"][l], p["ln1b"][l])
            ff = jnp.maximum(_linear_ref(y, p["fc1w"][l], p["fc1b"][l]), 0.0)
            x = x + _linear_ref(ff, p["fc2w"][l], p["fc2b"][l])
        x = _layernorm(x, p["flng"], p["flnb"])
        pooled = jnp.mean(x, axis=0, keepdims=True)
        return _linear_ref(pooled, p["projw"], p["projb"])[0]

    vis = jnp.stack([enc(visual[b], pos_v, pv, nheads) for b in range(visual.shape[0])])
    aco = jnp.stack([enc(acoustic[b], pos_a, pa, nheads) for b in range(acoustic.shape[0])])
    txt = textual[:, 0]
    return txt, vis, aco, txt + vis + aco


# ---------------------------------------------------------------------------
if __name__ == "__main__":
    # small, module-consistent shapes
    B, S, T_txt = 2, 8, 8
    base_dim = 32
    text_feat_dim = base_dim        # required: fusion adds textual CLS directly
    video_feat_dim = 32
    audio_feat_dim = 32
    nheads = 4
    encoder_layers = 2

    key = jax.random.PRNGKey(0)
    k1, k2, k3, k4, k5 = jax.random.split(key, 5)
    textual = jax.random.normal(k1, (B, T_txt, text_feat_dim), jnp.float32)
    visual = jax.random.normal(k2, (B, S, video_feat_dim), jnp.float32)
    acoustic = jax.random.normal(k3, (B, S, audio_feat_dim), jnp.float32)

    params_v = init_encoder_params(k4, video_feat_dim, encoder_layers, base_dim)
    params_a = init_encoder_params(k5, audio_feat_dim, encoder_layers, base_dim)
    pos_v = sinusoidal_positions(S, video_feat_dim)
    pos_a = sinusoidal_positions(S, audio_feat_dim)

    # Pallas forward: ONE kernel invocation for both encoders
    vis_out, aco_out = fused_dual_encoder(visual, acoustic, pos_v, pos_a,
                                          params_v, params_a,
                                          nheads=nheads, base_dim=base_dim)
    txt_out = textual[:, 0]
    # tiny (B, base_dim) add: plain JAX/XLA, not worth a pallas_call launch
    fusion = txt_out + vis_out + aco_out
    jax.block_until_ready((txt_out, vis_out, aco_out, fusion))

    # correctness check against pure-JAX f32/HIGHEST reference.
    # Kernel uses bf16 MXU operands with f32 accumulation (residual stream,
    # LayerNorm and softmax stay f32): observed error is ~1e-3; the 1e-2
    # tolerance leaves margin while still catching packing/layout bugs.
    rt, rv, ra, rf = ref_forward(textual, visual, acoustic, pos_v, pos_a,
                                 params_v, params_a, nheads)
    assert jnp.allclose(vis_out, rv, atol=1e-2, rtol=1e-2)
    assert jnp.allclose(aco_out, ra, atol=1e-2, rtol=1e-2)
    assert jnp.allclose(txt_out, rt, atol=1e-6, rtol=1e-6)
    assert jnp.allclose(fusion, rf, atol=1e-2, rtol=1e-2)

    print("KERNEL_OK")
</pallas_src>

<mosaic_0001>
module attributes {stable_mosaic.version = 11 : i64} {
  func.func @kernel(%arg0: memref<2x2x8x32xf32, #tpu.memory_space<vmem>>, %arg1: memref<2x664x32xf32, #tpu.memory_space<vmem>>, %arg2: memref<2x104x128xf32, #tpu.memory_space<vmem>>, %arg3: memref<2x2x32xf32, #tpu.memory_space<vmem>>) attributes {dimension_semantics = [], scalar_prefetch = 0 : i64, scratch_operands = 0 : i64, tpu.core_type = #tpu.core_type<tc>} {
    %c0 = arith.constant 0 : index
    %c0_0 = arith.constant 0 : index
    %c0_1 = arith.constant 0 : index
    %0 = vector.load %arg1[%c0, %c0_0, %c0_1] : memref<2x664x32xf32, #tpu.memory_space<vmem>>, vector<1x8x32xf32>
    %1 = vector.shape_cast %0 : vector<1x8x32xf32> to vector<8x32xf32>
    %c0_2 = arith.constant 0 : index
    %c0_3 = arith.constant 0 : index
    %c0_4 = arith.constant 0 : index
    %c0_5 = arith.constant 0 : index
    %2 = vector.load %arg0[%c0_2, %c0_3, %c0_4, %c0_5] : memref<2x2x8x32xf32, #tpu.memory_space<vmem>>, vector<1x2x8x32xf32>
    %3 = vector.shape_cast %2 : vector<1x2x8x32xf32> to vector<2x8x32xf32>
    %cst = arith.constant 5.65685415 : f32
    %4 = vector.broadcast %cst : f32 to vector<2x8x32xf32>
    %5 = arith.mulf %3, %4 : vector<2x8x32xf32>
    %6 = vector.shape_cast %1 : vector<8x32xf32> to vector<1x8x32xf32>
    %7 = vector.broadcast %6 : vector<1x8x32xf32> to vector<2x8x32xf32>
    %8 = arith.addf %5, %7 : vector<2x8x32xf32>
    %9 = vector.shape_cast %8 : vector<2x8x32xf32> to vector<16x32xf32>
    %c0_6 = arith.constant 0 : index
    %c8 = arith.constant 8 : index
    %c0_7 = arith.constant 0 : index
    %10 = vector.load %arg1[%c0_6, %c8, %c0_7] : memref<2x664x32xf32, #tpu.memory_space<vmem>>, vector<1x1x32xf32>
    %11 = vector.shape_cast %10 : vector<1x1x32xf32> to vector<1x32xf32>
    %c0_8 = arith.constant 0 : index
    %c16 = arith.constant 16 : index
    %c0_9 = arith.constant 0 : index
    %12 = vector.load %arg1[%c0_8, %c16, %c0_9] : memref<2x664x32xf32, #tpu.memory_space<vmem>>, vector<1x1x32xf32>
    %13 = vector.shape_cast %12 : vector<1x1x32xf32> to vector<1x32xf32>
    %cst_10 = arith.constant dense<0.000000e+00> : vector<16xf32>
    %14 = vector.multi_reduction <add>, %9, %cst_10 [1] : vector<16x32xf32> to vector<16xf32>
    %15 = vector.shape_cast %14 : vector<16xf32> to vector<16x1xf32>
    %cst_11 = arith.constant 3.200000e+01 : f32
    %16 = vector.broadcast %cst_11 : f32 to vector<16x1xf32>
    %17 = arith.divf %15, %16 : vector<16x1xf32>
    %18 = vector.broadcast %17 : vector<16x1xf32> to vector<16x32xf32>
    %19 = arith.subf %9, %18 : vector<16x32xf32>
    %20 = arith.mulf %19, %19 : vector<16x32xf32>
    %cst_12 = arith.constant dense<0.000000e+00> : vector<16xf32>
    %21 = vector.multi_reduction <add>, %20, %cst_12 [1] : vector<16x32xf32> to vector<16xf32>
    %22 = vector.shape_cast %21 : vector<16xf32> to vector<16x1xf32>
    %cst_13 = arith.constant 3.200000e+01 : f32
    %23 = vector.broadcast %cst_13 : f32 to vector<16x1xf32>
    %24 = arith.divf %22, %23 : vector<16x1xf32>
    %25 = vector.broadcast %17 : vector<16x1xf32> to vector<16x32xf32>
    %26 = arith.subf %9, %25 : vector<16x32xf32>
    %cst_14 = arith.constant 9.99999974E-6 : f32
    %27 = vector.broadcast %cst_14 : f32 to vector<16x1xf32>
    %28 = arith.addf %24, %27 : vector<16x1xf32>
    %29 = math.rsqrt %28 : vector<16x1xf32>
    %30 = vector.broadcast %29 : vector<16x1xf32> to vector<16x32xf32>
    %31 = arith.mulf %26, %30 : vector<16x32xf32>
    %32 = vector.broadcast %11 : vector<1x32xf32> to vector<16x32xf32>
    %33 = arith.mulf %31, %32 : vector<16x32xf32>
    %34 = vector.broadcast %13 : vector<1x32xf32> to vector<16x32xf32>
    %35 = arith.addf %33, %34 : vector<16x32xf32>
    %c0_15 = arith.constant 0 : index
    %c24 = arith.constant 24 : index
    %c0_16 = arith.constant 0 : index
    %36 = vector.load %arg1[%c0_15, %c24, %c0_16] : memref<2x664x32xf32, #tpu.memory_space<vmem>>, vector<1x96x32xf32>
    %37 = vector.shape_cast %36 : vector<1x96x32xf32> to vector<96x32xf32>
    %c0_17 = arith.constant 0 : index
    %c0_18 = arith.constant 0 : index
    %c0_19 = arith.constant 0 : index
    %38 = vector.load %arg2[%c0_17, %c0_18, %c0_19] : memref<2x104x128xf32, #tpu.memory_space<vmem>>, vector<1x1x128xf32>
    %39 = vector.shape_cast %38 : vector<1x1x128xf32> to vector<1x128xf32>
    %40 = vector.extract_strided_slice %39 {offsets = [0, 0], sizes = [1, 96], strides = [1, 1]} : vector<1x128xf32> to vector<1x96xf32>
    %41 = arith.truncf %35 : vector<16x32xf32> to vector<16x32xbf16>
    %42 = arith.truncf %37 : vector<96x32xf32> to vector<96x32xbf16>
    %cst_20 = arith.constant dense<0.000000e+00> : vector<16x96xf32>
    %43 = tpu.matmul %41, %42, %cst_20 {dimension_numbers = #tpu.dot_dimension_numbers<[1], [1], [0], [0], [0, 0, 1, 0], [], []>} : vector<16x32xbf16>, vector<96x32xbf16>, vector<16x96xf32> -> vector<16x96xf32>
    %44 = vector.broadcast %40 : vector<1x96xf32> to vector<16x96xf32>
    %45 = arith.addf %43, %44 : vector<16x96xf32>
    %46 = vector.shape_cast %45 : vector<16x96xf32> to vector<2x8x96xf32>
    %47 = vector.extract_strided_slice %46 {offsets = [0, 0, 0], sizes = [2, 8, 24], strides = [1, 1, 1]} : vector<2x8x96xf32> to vector<2x8x24xf32>
    %48 = vector.extract_strided_slice %46 {offsets = [0, 0, 24], sizes = [2, 8, 24], strides = [1, 1, 1]} : vector<2x8x96xf32> to vector<2x8x24xf32>
    %49 = vector.extract_strided_slice %46 {offsets = [0, 0, 48], sizes = [2, 8, 24], strides = [1, 1, 1]} : vector<2x8x96xf32> to vector<2x8x24xf32>
    %50 = vector.extract_strided_slice %46 {offsets = [0, 0, 72], sizes = [2, 8, 24], strides = [1, 1, 1]} : vector<2x8x96xf32> to vector<2x8x24xf32>
    %51 = tpu.concatenate %47, %48, %49, %50 in 0 : vector<2x8x24xf32>, vector<2x8x24xf32>, vector<2x8x24xf32>, vector<2x8x24xf32> -> vector<8x8x24xf32>
    %52 = vector.extract_strided_slice %51 {offsets = [0, 0, 0], sizes = [8, 8, 8], strides = [1, 1, 1]} : vector<8x8x24xf32> to vector<8x8x8xf32>
    %53 = vector.extract_strided_slice %51 {offsets = [0, 0, 8], sizes = [8, 8, 8], strides = [1, 1, 1]} : vector<8x8x24xf32> to vector<8x8x8xf32>
    %54 = vector.extract_strided_slice %51 {offsets = [0, 0, 16], sizes = [8, 8, 8], strides = [1, 1, 1]} : vector<8x8x24xf32> to vector<8x8x8xf32>
    %55 = arith.truncf %52 : vector<8x8x8xf32> to vector<8x8x8xbf16>
    %56 = arith.truncf %53 : vector<8x8x8xf32> to vector<8x8x8xbf16>
    "tpu.trace_start"() <{level = 10 : i32, message = "bqd,bkd->bqk"}> : () -> ()
    %cst_21 = arith.constant dense<0.000000e+00> : vector<8x8x8xf32>
    %57 = tpu.matmul %55, %56, %cst_21 {dimension_numbers = #tpu.dot_dimension_numbers<[2], [2], [1], [1], [0, 0, 0, 1, 1, 1], [0], [0]>} : vector<8x8x8xbf16>, vector<8x8x8xbf16>, vector<8x8x8xf32> -> vector<8x8x8xf32>
    "tpu.trace_stop"() : () -> ()
    %cst_22 = arith.constant dense<0xFF800000> : vector<8x8xf32>
    %58 = vector.multi_reduction <maximumf>, %57, %cst_22 [2] : vector<8x8x8xf32> to vector<8x8xf32>
    %59 = vector.shape_cast %58 : vector<8x8xf32> to vector<8x8x1xf32>
    %60 = vector.broadcast %59 : vector<8x8x1xf32> to vector<8x8x8xf32>
    %61 = arith.subf %57, %60 : vector<8x8x8xf32>
    %62 = math.exp %61 : vector<8x8x8xf32>
    %cst_23 = arith.constant dense<0.000000e+00> : vector<8x8xf32>
    %63 = vector.multi_reduction <add>, %62, %cst_23 [2] : vector<8x8x8xf32> to vector<8x8xf32>
    %64 = vector.shape_cast %63 : vector<8x8xf32> to vector<8x8x1xf32>
    %65 = vector.broadcast %64 : vector<8x8x1xf32> to vector<8x8x8xf32>
    %66 = arith.divf %62, %65 : vector<8x8x8xf32>
    %67 = arith.truncf %66 : vector<8x8x8xf32> to vector<8x8x8xbf16>
    %68 = arith.truncf %54 : vector<8x8x8xf32> to vector<8x8x8xbf16>
    "tpu.trace_start"() <{level = 10 : i32, message = "bqk,bkd->bqd"}> : () -> ()
    %cst_24 = arith.constant dense<0.000000e+00> : vector<8x8x8xf32>
    %69 = tpu.matmul %67, %68, %cst_24 {dimension_numbers = #tpu.dot_dimension_numbers<[2], [1], [1], [2], [0, 0, 0, 1, 1, 2], [0], [0]>} : vector<8x8x8xbf16>, vector<8x8x8xbf16>, vector<8x8x8xf32> -> vector<8x8x8xf32>
    "tpu.trace_stop"() : () -> ()
    %70 = vector.extract_strided_slice %69 {offsets = [0, 0, 0], sizes = [2, 8, 8], strides = [1, 1, 1]} : vector<8x8x8xf32> to vector<2x8x8xf32>
    %71 = vector.extract_strided_slice %69 {offsets = [2, 0, 0], sizes = [2, 8, 8], strides = [1, 1, 1]} : vector<8x8x8xf32> to vector<2x8x8xf32>
    %72 = vector.extract_strided_slice %69 {offsets = [4, 0, 0], sizes = [2, 8, 8], strides = [1, 1, 1]} : vector<8x8x8xf32> to vector<2x8x8xf32>
    %73 = vector.extract_strided_slice %69 {offsets = [6, 0, 0], sizes = [2, 8, 8], strides = [1, 1, 1]} : vector<8x8x8xf32> to vector<2x8x8xf32>
    %74 = tpu.concatenate %70, %71, %72, %73 in 2 : vector<2x8x8xf32>, vector<2x8x8xf32>, vector<2x8x8xf32>, vector<2x8x8xf32> -> vector<2x8x32xf32>
    %75 = vector.shape_cast %74 : vector<2x8x32xf32> to vector<16x32xf32>
    %c0_25 = arith.constant 0 : index
    %c120 = arith.constant 120 : index
    %c0_26 = arith.constant 0 : index
    %76 = vector.load %arg1[%c0_25, %c120, %c0_26] : memref<2x664x32xf32, #tpu.memory_space<vmem>>, vector<1x32x32xf32>
    %77 = vector.shape_cast %76 : vector<1x32x32xf32> to vector<32x32xf32>
    %c0_27 = arith.constant 0 : index
    %c152 = arith.constant 152 : index
    %c0_28 = arith.constant 0 : index
    %78 = vector.load %arg1[%c0_27, %c152, %c0_28] : memref<2x664x32xf32, #tpu.memory_space<vmem>>, vector<1x1x32xf32>
    %79 = vector.shape_cast %78 : vector<1x1x32xf32> to vector<1x32xf32>
    %80 = arith.truncf %75 : vector<16x32xf32> to vector<16x32xbf16>
    %81 = arith.truncf %77 : vector<32x32xf32> to vector<32x32xbf16>
    %cst_29 = arith.constant dense<0.000000e+00> : vector<16x32xf32>
    %82 = tpu.matmul %80, %81, %cst_29 {dimension_numbers = #tpu.dot_dimension_numbers<[1], [1], [0], [0], [0, 0, 1, 0], [], []>} : vector<16x32xbf16>, vector<32x32xbf16>, vector<16x32xf32> -> vector<16x32xf32>
    %83 = vector.broadcast %79 : vector<1x32xf32> to vector<16x32xf32>
    %84 = arith.addf %82, %83 : vector<16x32xf32>
    %85 = arith.addf %9, %84 : vector<16x32xf32>
    %c0_30 = arith.constant 0 : index
    %c160 = arith.constant 160 : index
    %c0_31 = arith.constant 0 : index
    %86 = vector.load %arg1[%c0_30, %c160, %c0_31] : memref<2x664x32xf32, #tpu.memory_space<vmem>>, vector<1x1x32xf32>
    %87 = vector.shape_cast %86 : vector<1x1x32xf32> to vector<1x32xf32>
    %c0_32 = arith.constant 0 : index
    %c168 = arith.constant 168 : index
    %c0_33 = arith.constant 0 : index
    %88 = vector.load %arg1[%c0_32, %c168, %c0_33] : memref<2x664x32xf32, #tpu.memory_space<vmem>>, vector<1x1x32xf32>
    %89 = vector.shape_cast %88 : vector<1x1x32xf32> to vector<1x32xf32>
    %cst_34 = arith.constant dense<0.000000e+00> : vector<16xf32>
    %90 = vector.multi_reduction <add>, %85, %cst_34 [1] : vector<16x32xf32> to vector<16xf32>
    %91 = vector.shape_cast %90 : vector<16xf32> to vector<16x1xf32>
    %cst_35 = arith.constant 3.200000e+01 : f32
    %92 = vector.broadcast %cst_35 : f32 to vector<16x1xf32>
    %93 = arith.divf %91, %92 : vector<16x1xf32>
    %94 = vector.broadcast %93 : vector<16x1xf32> to vector<16x32xf32>
    %95 = arith.subf %85, %94 : vector<16x32xf32>
    %96 = arith.mulf %95, %95 : vector<16x32xf32>
    %cst_36 = arith.constant dense<0.000000e+00> : vector<16xf32>
    %97 = vector.multi_reduction <add>, %96, %cst_36 [1] : vector<16x32xf32> to vector<16xf32>
    %98 = vector.shape_cast %97 : vector<16xf32> to vector<16x1xf32>
    %cst_37 = arith.constant 3.200000e+01 : f32
    %99 = vector.broadcast %cst_37 : f32 to vector<16x1xf32>
    %100 = arith.divf %98, %99 : vector<16x1xf32>
    %101 = vector.broadcast %93 : vector<16x1xf32> to vector<16x32xf32>
    %102 = arith.subf %85, %101 : vector<16x32xf32>
    %cst_38 = arith.constant 9.99999974E-6 : f32
    %103 = vector.broadcast %cst_38 : f32 to vector<16x1xf32>
    %104 = arith.addf %100, %103 : vector<16x1xf32>
    %105 = math.rsqrt %104 : vector<16x1xf32>
    %106 = vector.broadcast %105 : vector<16x1xf32> to vector<16x32xf32>
    %107 = arith.mulf %102, %106 : vector<16x32xf32>
    %108 = vector.broadcast %87 : vector<1x32xf32> to vector<16x32xf32>
    %109 = arith.mulf %107, %108 : vector<16x32xf32>
    %110 = vector.broadcast %89 : vector<1x32xf32> to vector<16x32xf32>
    %111 = arith.addf %109, %110 : vector<16x32xf32>
    %c0_39 = arith.constant 0 : index
    %c176 = arith.constant 176 : index
    %c0_40 = arith.constant 0 : index
    %112 = vector.load %arg1[%c0_39, %c176, %c0_40] : memref<2x664x32xf32, #tpu.memory_space<vmem>>, vector<1x128x32xf32>
    %113 = vector.shape_cast %112 : vector<1x128x32xf32> to vector<128x32xf32>
    %c0_41 = arith.constant 0 : index
    %c8_42 = arith.constant 8 : index
    %c0_43 = arith.constant 0 : index
    %114 = vector.load %arg2[%c0_41, %c8_42, %c0_43] : memref<2x104x128xf32, #tpu.memory_space<vmem>>, vector<1x1x128xf32>
    %115 = vector.shape_cast %114 : vector<1x1x128xf32> to vector<1x128xf32>
    %116 = arith.truncf %111 : vector<16x32xf32> to vector<16x32xbf16>
    %117 = arith.truncf %113 : vector<128x32xf32> to vector<128x32xbf16>
    %cst_44 = arith.constant dense<0.000000e+00> : vector<16x128xf32>
    %118 = tpu.matmul %116, %117, %cst_44 {dimension_numbers = #tpu.dot_dimension_numbers<[1], [1], [0], [0], [0, 0, 1, 0], [], []>} : vector<16x32xbf16>, vector<128x32xbf16>, vector<16x128xf32> -> vector<16x128xf32>
    %119 = vector.broadcast %115 : vector<1x128xf32> to vector<16x128xf32>
    %120 = arith.addf %118, %119 : vector<16x128xf32>
    %cst_45 = arith.constant 0.000000e+00 : f32
    %121 = vector.broadcast %cst_45 : f32 to vector<16x128xf32>
    %122 = arith.maximumf %120, %121 : vector<16x128xf32>
    %c0_46 = arith.constant 0 : index
    %c16_47 = arith.constant 16 : index
    %c0_48 = arith.constant 0 : index
    %123 = vector.load %arg2[%c0_46, %c16_47, %c0_48] : memref<2x104x128xf32, #tpu.memory_space<vmem>>, vector<1x32x128xf32>
    %124 = vector.shape_cast %123 : vector<1x32x128xf32> to vector<32x128xf32>
    %c0_49 = arith.constant 0 : index
    %c304 = arith.constant 304 : index
    %c0_50 = arith.constant 0 : index
    %125 = vector.load %arg1[%c0_49, %c304, %c0_50] : memref<2x664x32xf32, #tpu.memory_space<vmem>>, vector<1x1x32xf32>
    %126 = vector.shape_cast %125 : vector<1x1x32xf32> to vector<1x32xf32>
    %127 = arith.truncf %122 : vector<16x128xf32> to vector<16x128xbf16>
    %128 = arith.truncf %124 : vector<32x128xf32> to vector<32x128xbf16>
    %cst_51 = arith.constant dense<0.000000e+00> : vector<16x32xf32>
    %129 = tpu.matmul %127, %128, %cst_51 {dimension_numbers = #tpu.dot_dimension_numbers<[1], [1], [0], [0], [0, 0, 1, 0], [], []>} : vector<16x128xbf16>, vector<32x128xbf16>, vector<16x32xf32> -> vector<16x32xf32>
    %130 = vector.broadcast %126 : vector<1x32xf32> to vector<16x32xf32>
    %131 = arith.addf %129, %130 : vector<16x32xf32>
    %132 = arith.addf %85, %131 : vector<16x32xf32>
    %c0_52 = arith.constant 0 : index
    %c312 = arith.constant 312 : index
    %c0_53 = arith.constant 0 : index
    %133 = vector.load %arg1[%c0_52, %c312, %c0_53] : memref<2x664x32xf32, #tpu.memory_space<vmem>>, vector<1x1x32xf32>
    %134 = vector.shape_cast %133 : vector<1x1x32xf32> to vector<1x32xf32>
    %c0_54 = arith.constant 0 : index
    %c320 = arith.constant 320 : index
    %c0_55 = arith.constant 0 : index
    %135 = vector.load %arg1[%c0_54, %c320, %c0_55] : memref<2x664x32xf32, #tpu.memory_space<vmem>>, vector<1x1x32xf32>
    %136 = vector.shape_cast %135 : vector<1x1x32xf32> to vector<1x32xf32>
    %cst_56 = arith.constant dense<0.000000e+00> : vector<16xf32>
    %137 = vector.multi_reduction <add>, %132, %cst_56 [1] : vector<16x32xf32> to vector<16xf32>
    %138 = vector.shape_cast %137 : vector<16xf32> to vector<16x1xf32>
    %cst_57 = arith.constant 3.200000e+01 : f32
    %139 = vector.broadcast %cst_57 : f32 to vector<16x1xf32>
    %140 = arith.divf %138, %139 : vector<16x1xf32>
    %141 = vector.broadcast %140 : vector<16x1xf32> to vector<16x32xf32>
    %142 = arith.subf %132, %141 : vector<16x32xf32>
    %143 = arith.mulf %142, %142 : vector<16x32xf32>
    %cst_58 = arith.constant dense<0.000000e+00> : vector<16xf32>
    %144 = vector.multi_reduction <add>, %143, %cst_58 [1] : vector<16x32xf32> to vector<16xf32>
    %145 = vector.shape_cast %144 : vector<16xf32> to vector<16x1xf32>
    %cst_59 = arith.constant 3.200000e+01 : f32
    %146 = vector.broadcast %cst_59 : f32 to vector<16x1xf32>
    %147 = arith.divf %145, %146 : vector<16x1xf32>
    %148 = vector.broadcast %140 : vector<16x1xf32> to vector<16x32xf32>
    %149 = arith.subf %132, %148 : vector<16x32xf32>
    %cst_60 = arith.constant 9.99999974E-6 : f32
    %150 = vector.broadcast %cst_60 : f32 to vector<16x1xf32>
    %151 = arith.addf %147, %150 : vector<16x1xf32>
    %152 = math.rsqrt %151 : vector<16x1xf32>
    %153 = vector.broadcast %152 : vector<16x1xf32> to vector<16x32xf32>
    %154 = arith.mulf %149, %153 : vector<16x32xf32>
    %155 = vector.broadcast %134 : vector<1x32xf32> to vector<16x32xf32>
    %156 = arith.mulf %154, %155 : vector<16x32xf32>
    %157 = vector.broadcast %136 : vector<1x32xf32> to vector<16x32xf32>
    %158 = arith.addf %156, %157 : vector<16x32xf32>
    %c0_61 = arith.constant 0 : index
    %c328 = arith.constant 328 : index
    %c0_62 = arith.constant 0 : index
    %159 = vector.load %arg1[%c0_61, %c328, %c0_62] : memref<2x664x32xf32, #tpu.memory_space<vmem>>, vector<1x96x32xf32>
    %160 = vector.shape_cast %159 : vector<1x96x32xf32> to vector<96x32xf32>
    %c0_63 = arith.constant 0 : index
    %c48 = arith.constant 48 : index
    %c0_64 = arith.constant 0 : index
    %161 = vector.load %arg2[%c0_63, %c48, %c0_64] : memref<2x104x128xf32, #tpu.memory_space<vmem>>, vector<1x1x128xf32>
    %162 = vector.shape_cast %161 : vector<1x1x128xf32> to vector<1x128xf32>
    %163 = vector.extract_strided_slice %162 {offsets = [0, 0], sizes = [1, 96], strides = [1, 1]} : vector<1x128xf32> to vector<1x96xf32>
    %164 = arith.truncf %158 : vector<16x32xf32> to vector<16x32xbf16>
    %165 = arith.truncf %160 : vector<96x32xf32> to vector<96x32xbf16>
    %cst_65 = arith.constant dense<0.000000e+00> : vector<16x96xf32>
    %166 = tpu.matmul %164, %165, %cst_65 {dimension_numbers = #tpu.dot_dimension_numbers<[1], [1], [0], [0], [0, 0, 1, 0], [], []>} : vector<16x32xbf16>, vector<96x32xbf16>, vector<16x96xf32> -> vector<16x96xf32>
    %167 = vector.broadcast %163 : vector<1x96xf32> to vector<16x96xf32>
    %168 = arith.addf %166, %167 : vector<16x96xf32>
    %169 = vector.shape_cast %168 : vector<16x96xf32> to vector<2x8x96xf32>
    %170 = vector.extract_strided_slice %169 {offsets = [0, 0, 0], sizes = [2, 8, 24], strides = [1, 1, 1]} : vector<2x8x96xf32> to vector<2x8x24xf32>
    %171 = vector.extract_strided_slice %169 {offsets = [0, 0, 24], sizes = [2, 8, 24], strides = [1, 1, 1]} : vector<2x8x96xf32> to vector<2x8x24xf32>
    %172 = vector.extract_strided_slice %169 {offsets = [0, 0, 48], sizes = [2, 8, 24], strides = [1, 1, 1]} : vector<2x8x96xf32> to vector<2x8x24xf32>
    %173 = vector.extract_strided_slice %169 {offsets = [0, 0, 72], sizes = [2, 8, 24], strides = [1, 1, 1]} : vector<2x8x96xf32> to vector<2x8x24xf32>
    %174 = tpu.concatenate %170, %171, %172, %173 in 0 : vector<2x8x24xf32>, vector<2x8x24xf32>, vector<2x8x24xf32>, vector<2x8x24xf32> -> vector<8x8x24xf32>
    %175 = vector.extract_strided_slice %174 {offsets = [0, 0, 0], sizes = [8, 8, 8], strides = [1, 1, 1]} : vector<8x8x24xf32> to vector<8x8x8xf32>
    %176 = vector.extract_strided_slice %174 {offsets = [0, 0, 8], sizes = [8, 8, 8], strides = [1, 1, 1]} : vector<8x8x24xf32> to vector<8x8x8xf32>
    %177 = vector.extract_strided_slice %174 {offsets = [0, 0, 16], sizes = [8, 8, 8], strides = [1, 1, 1]} : vector<8x8x24xf32> to vector<8x8x8xf32>
    %178 = arith.truncf %175 : vector<8x8x8xf32> to vector<8x8x8xbf16>
    %179 = arith.truncf %176 : vector<8x8x8xf32> to vector<8x8x8xbf16>
    "tpu.trace_start"() <{level = 10 : i32, message = "bqd,bkd->bqk"}> : () -> ()
    %cst_66 = arith.constant dense<0.000000e+00> : vector<8x8x8xf32>
    %180 = tpu.matmul %178, %179, %cst_66 {dimension_numbers = #tpu.dot_dimension_numbers<[2], [2], [1], [1], [0, 0, 0, 1, 1, 1], [0], [0]>} : vector<8x8x8xbf16>, vector<8x8x8xbf16>, vector<8x8x8xf32> -> vector<8x8x8xf32>
    "tpu.trace_stop"() : () -> ()
    %cst_67 = arith.constant dense<0xFF800000> : vector<8x8xf32>
    %181 = vector.multi_reduction <maximumf>, %180, %cst_67 [2] : vector<8x8x8xf32> to vector<8x8xf32>
    %182 = vector.shape_cast %181 : vector<8x8xf32> to vector<8x8x1xf32>
    %183 = vector.broadcast %182 : vector<8x8x1xf32> to vector<8x8x8xf32>
    %184 = arith.subf %180, %183 : vector<8x8x8xf32>
    %185 = math.exp %184 : vector<8x8x8xf32>
    %cst_68 = arith.constant dense<0.000000e+00> : vector<8x8xf32>
    %186 = vector.multi_reduction <add>, %185, %cst_68 [2] : vector<8x8x8xf32> to vector<8x8xf32>
    %187 = vector.shape_cast %186 : vector<8x8xf32> to vector<8x8x1xf32>
    %188 = vector.broadcast %187 : vector<8x8x1xf32> to vector<8x8x8xf32>
    %189 = arith.divf %185, %188 : vector<8x8x8xf32>
    %190 = arith.truncf %189 : vector<8x8x8xf32> to vector<8x8x8xbf16>
    %191 = arith.truncf %177 : vector<8x8x8xf32> to vector<8x8x8xbf16>
    "tpu.trace_start"() <{level = 10 : i32, message = "bqk,bkd->bqd"}> : () -> ()
    %cst_69 = arith.constant dense<0.000000e+00> : vector<8x8x8xf32>
    %192 = tpu.matmul %190, %191, %cst_69 {dimension_numbers = #tpu.dot_dimension_numbers<[2], [1], [1], [2], [0, 0, 0, 1, 1, 2], [0], [0]>} : vector<8x8x8xbf16>, vector<8x8x8xbf16>, vector<8x8x8xf32> -> vector<8x8x8xf32>
    "tpu.trace_stop"() : () -> ()
    %193 = vector.extract_strided_slice %192 {offsets = [0, 0, 0], sizes = [2, 8, 8], strides = [1, 1, 1]} : vector<8x8x8xf32> to vector<2x8x8xf32>
    %194 = vector.extract_strided_slice %192 {offsets = [2, 0, 0], sizes = [2, 8, 8], strides = [1, 1, 1]} : vector<8x8x8xf32> to vector<2x8x8xf32>
    %195 = vector.extract_strided_slice %192 {offsets = [4, 0, 0], sizes = [2, 8, 8], strides = [1, 1, 1]} : vector<8x8x8xf32> to vector<2x8x8xf32>
    %196 = vector.extract_strided_slice %192 {offsets = [6, 0, 0], sizes = [2, 8, 8], strides = [1, 1, 1]} : vector<8x8x8xf32> to vector<2x8x8xf32>
    %197 = tpu.concatenate %193, %194, %195, %196 in 2 : vector<2x8x8xf32>, vector<2x8x8xf32>, vector<2x8x8xf32>, vector<2x8x8xf32> -> vector<2x8x32xf32>
    %198 = vector.shape_cast %197 : vector<2x8x32xf32> to vector<16x32xf32>
    %c0_70 = arith.constant 0 : index
    %c424 = arith.constant 424 : index
    %c0_71 = arith.constant 0 : index
    %199 = vector.load %arg1[%c0_70, %c424, %c0_71] : memref<2x664x32xf32, #tpu.memory_space<vmem>>, vector<1x32x32xf32>
    %200 = vector.shape_cast %199 : vector<1x32x32xf32> to vector<32x32xf32>
    %c0_72 = arith.constant 0 : index
    %c456 = arith.constant 456 : index
    %c0_73 = arith.constant 0 : index
    %201 = vector.load %arg1[%c0_72, %c456, %c0_73] : memref<2x664x32xf32, #tpu.memory_space<vmem>>, vector<1x1x32xf32>
    %202 = vector.shape_cast %201 : vector<1x1x32xf32> to vector<1x32xf32>
    %203 = arith.truncf %198 : vector<16x32xf32> to vector<16x32xbf16>
    %204 = arith.truncf %200 : vector<32x32xf32> to vector<32x32xbf16>
    %cst_74 = arith.constant dense<0.000000e+00> : vector<16x32xf32>
    %205 = tpu.matmul %203, %204, %cst_74 {dimension_numbers = #tpu.dot_dimension_numbers<[1], [1], [0], [0], [0, 0, 1, 0], [], []>} : vector<16x32xbf16>, vector<32x32xbf16>, vector<16x32xf32> -> vector<16x32xf32>
    %206 = vector.broadcast %202 : vector<1x32xf32> to vector<16x32xf32>
    %207 = arith.addf %205, %206 : vector<16x32xf32>
    %208 = arith.addf %132, %207 : vector<16x32xf32>
    %c0_75 = arith.constant 0 : index
    %c464 = arith.constant 464 : index
    %c0_76 = arith.constant 0 : index
    %209 = vector.load %arg1[%c0_75, %c464, %c0_76] : memref<2x664x32xf32, #tpu.memory_space<vmem>>, vector<1x1x32xf32>
    %210 = vector.shape_cast %209 : vector<1x1x32xf32> to vector<1x32xf32>
    %c0_77 = arith.constant 0 : index
    %c472 = arith.constant 472 : index
    %c0_78 = arith.constant 0 : index
    %211 = vector.load %arg1[%c0_77, %c472, %c0_78] : memref<2x664x32xf32, #tpu.memory_space<vmem>>, vector<1x1x32xf32>
    %212 = vector.shape_cast %211 : vector<1x1x32xf32> to vector<1x32xf32>
    %cst_79 = arith.constant dense<0.000000e+00> : vector<16xf32>
    %213 = vector.multi_reduction <add>, %208, %cst_79 [1] : vector<16x32xf32> to vector<16xf32>
    %214 = vector.shape_cast %213 : vector<16xf32> to vector<16x1xf32>
    %cst_80 = arith.constant 3.200000e+01 : f32
    %215 = vector.broadcast %cst_80 : f32 to vector<16x1xf32>
    %216 = arith.divf %214, %215 : vector<16x1xf32>
    %217 = vector.broadcast %216 : vector<16x1xf32> to vector<16x32xf32>
    %218 = arith.subf %208, %217 : vector<16x32xf32>
    %219 = arith.mulf %218, %218 : vector<16x32xf32>
    %cst_81 = arith.constant dense<0.000000e+00> : vector<16xf32>
    %220 = vector.multi_reduction <add>, %219, %cst_81 [1] : vector<16x32xf32> to vector<16xf32>
    %221 = vector.shape_cast %220 : vector<16xf32> to vector<16x1xf32>
    %cst_82 = arith.constant 3.200000e+01 : f32
    %222 = vector.broadcast %cst_82 : f32 to vector<16x1xf32>
    %223 = arith.divf %221, %222 : vector<16x1xf32>
    %224 = vector.broadcast %216 : vector<16x1xf32> to vector<16x32xf32>
    %225 = arith.subf %208, %224 : vector<16x32xf32>
    %cst_83 = arith.constant 9.99999974E-6 : f32
    %226 = vector.broadcast %cst_83 : f32 to vector<16x1xf32>
    %227 = arith.addf %223, %226 : vector<16x1xf32>
    %228 = math.rsqrt %227 : vector<16x1xf32>
    %229 = vector.broadcast %228 : vector<16x1xf32> to vector<16x32xf32>
    %230 = arith.mulf %225, %229 : vector<16x32xf32>
    %231 = vector.broadcast %210 : vector<1x32xf32> to vector<16x32xf32>
    %232 = arith.mulf %230, %231 : vector<16x32xf32>
    %233 = vector.broadcast %212 : vector<1x32xf32> to vector<16x32xf32>
    %234 = arith.addf %232, %233 : vector<16x32xf32>
    %c0_84 = arith.constant 0 : index
    %c480 = arith.constant 480 : index
    %c0_85 = arith.constant 0 : index
    %235 = vector.load %arg1[%c0_84, %c480, %c0_85] : memref<2x664x32xf32, #tpu.memory_space<vmem>>, vector<1x128x32xf32>
    %236 = vector.shape_cast %235 : vector<1x128x32xf32> to vector<128x32xf32>
    %c0_86 = arith.constant 0 : index
    %c56 = arith.constant 56 : index
    %c0_87 = arith.constant 0 : index
    %237 = vector.load %arg2[%c0_86, %c56, %c0_87] : memref<2x104x128xf32, #tpu.memory_space<vmem>>, vector<1x1x128xf32>
    %238 = vector.shape_cast %237 : vector<1x1x128xf32> to vector<1x128xf32>
    %239 = arith.truncf %234 : vector<16x32xf32> to vector<16x32xbf16>
    %240 = arith.truncf %236 : vector<128x32xf32> to vector<128x32xbf16>
    %cst_88 = arith.constant dense<0.000000e+00> : vector<16x128xf32>
    %241 = tpu.matmul %239, %240, %cst_88 {dimension_numbers = #tpu.dot_dimension_numbers<[1], [1], [0], [0], [0, 0, 1, 0], [], []>} : vector<16x32xbf16>, vector<128x32xbf16>, vector<16x128xf32> -> vector<16x128xf32>
    %242 = vector.broadcast %238 : vector<1x128xf32> to vector<16x128xf32>
    %243 = arith.addf %241, %242 : vector<16x128xf32>
    %cst_89 = arith.constant 0.000000e+00 : f32
    %244 = vector.broadcast %cst_89 : f32 to vector<16x128xf32>
    %245 = arith.maximumf %243, %244 : vector<16x128xf32>
    %c0_90 = arith.constant 0 : index
    %c64 = arith.constant 64 : index
    %c0_91 = arith.constant 0 : index
    %246 = vector.load %arg2[%c0_90, %c64, %c0_91] : memref<2x104x128xf32, #tpu.memory_space<vmem>>, vector<1x32x128xf32>
    %247 = vector.shape_cast %246 : vector<1x32x128xf32> to vector<32x128xf32>
    %c0_92 = arith.constant 0 : index
    %c608 = arith.constant 608 : index
    %c0_93 = arith.constant 0 : index
    %248 = vector.load %arg1[%c0_92, %c608, %c0_93] : memref<2x664x32xf32, #tpu.memory_space<vmem>>, vector<1x1x32xf32>
    %249 = vector.shape_cast %248 : vector<1x1x32xf32> to vector<1x32xf32>
    %250 = arith.truncf %245 : vector<16x128xf32> to vector<16x128xbf16>
    %251 = arith.truncf %247 : vector<32x128xf32> to vector<32x128xbf16>
    %cst_94 = arith.constant dense<0.000000e+00> : vector<16x32xf32>
    %252 = tpu.matmul %250, %251, %cst_94 {dimension_numbers = #tpu.dot_dimension_numbers<[1], [1], [0], [0], [0, 0, 1, 0], [], []>} : vector<16x128xbf16>, vector<32x128xbf16>, vector<16x32xf32> -> vector<16x32xf32>
    %253 = vector.broadcast %249 : vector<1x32xf32> to vector<16x32xf32>
    %254 = arith.addf %252, %253 : vector<16x32xf32>
    %255 = arith.addf %208, %254 : vector<16x32xf32>
    %c0_95 = arith.constant 0 : index
    %c616 = arith.constant 616 : index
    %c0_96 = arith.constant 0 : index
    %256 = vector.load %arg1[%c0_95, %c616, %c0_96] : memref<2x664x32xf32, #tpu.memory_space<vmem>>, vector<1x1x32xf32>
    %257 = vector.shape_cast %256 : vector<1x1x32xf32> to vector<1x32xf32>
    %c0_97 = arith.constant 0 : index
    %c624 = arith.constant 624 : index
    %c0_98 = arith.constant 0 : index
    %258 = vector.load %arg1[%c0_97, %c624, %c0_98] : memref<2x664x32xf32, #tpu.memory_space<vmem>>, vector<1x1x32xf32>
    %259 = vector.shape_cast %258 : vector<1x1x32xf32> to vector<1x32xf32>
    %cst_99 = arith.constant dense<0.000000e+00> : vector<16xf32>
    %260 = vector.multi_reduction <add>, %255, %cst_99 [1] : vector<16x32xf32> to vector<16xf32>
    %261 = vector.shape_cast %260 : vector<16xf32> to vector<16x1xf32>
    %cst_100 = arith.constant 3.200000e+01 : f32
    %262 = vector.broadcast %cst_100 : f32 to vector<16x1xf32>
    %263 = arith.divf %261, %262 : vector<16x1xf32>
    %264 = vector.broadcast %263 : vector<16x1xf32> to vector<16x32xf32>
    %265 = arith.subf %255, %264 : vector<16x32xf32>
    %266 = arith.mulf %265, %265 : vector<16x32xf32>
    %cst_101 = arith.constant dense<0.000000e+00> : vector<16xf32>
    %267 = vector.multi_reduction <add>, %266, %cst_101 [1] : vector<16x32xf32> to vector<16xf32>
    %268 = vector.shape_cast %267 : vector<16xf32> to vector<16x1xf32>
    %cst_102 = arith.constant 3.200000e+01 : f32
    %269 = vector.broadcast %cst_102 : f32 to vector<16x1xf32>
    %270 = arith.divf %268, %269 : vector<16x1xf32>
    %271 = vector.broadcast %263 : vector<16x1xf32> to vector<16x32xf32>
    %272 = arith.subf %255, %271 : vector<16x32xf32>
    %cst_103 = arith.constant 9.99999974E-6 : f32
    %273 = vector.broadcast %cst_103 : f32 to vector<16x1xf32>
    %274 = arith.addf %270, %273 : vector<16x1xf32>
    %275 = math.rsqrt %274 : vector<16x1xf32>
    %276 = vector.broadcast %275 : vector<16x1xf32> to vector<16x32xf32>
    %277 = arith.mulf %272, %276 : vector<16x32xf32>
    %278 = vector.broadcast %257 : vector<1x32xf32> to vector<16x32xf32>
    %279 = arith.mulf %277, %278 : vector<16x32xf32>
    %280 = vector.broadcast %259 : vector<1x32xf32> to vector<16x32xf32>
    %281 = arith.addf %279, %280 : vector<16x32xf32>
    %282 = vector.shape_cast %281 : vector<16x32xf32> to vector<2x8x32xf32>
    %cst_104 = arith.constant dense<0.000000e+00> : vector<2x32xf32>
    %283 = vector.multi_reduction <add>, %282, %cst_104 [1] : vector<2x8x32xf32> to vector<2x32xf32>
    %c0_105 = arith.constant 0 : index
    %c632 = arith.constant 632 : index
    %c0_106 = arith.constant 0 : index
    %284 = vector.load %arg1[%c0_105, %c632, %c0_106] : memref<2x664x32xf32, #tpu.memory_space<vmem>>, vector<1x32x32xf32>
    %285 = vector.shape_cast %284 : vector<1x32x32xf32> to vector<32x32xf32>
    %c0_107 = arith.constant 0 : index
    %c96 = arith.constant 96 : index
    %c0_108 = arith.constant 0 : index
    %286 = vector.load %arg2[%c0_107, %c96, %c0_108] : memref<2x104x128xf32, #tpu.memory_space<vmem>>, vector<1x1x128xf32>
    %287 = vector.shape_cast %286 : vector<1x1x128xf32> to vector<1x128xf32>
    %288 = vector.extract_strided_slice %287 {offsets = [0, 0], sizes = [1, 32], strides = [1, 1]} : vector<1x128xf32> to vector<1x32xf32>
    %289 = arith.truncf %283 : vector<2x32xf32> to vector<2x32xbf16>
    %290 = arith.truncf %285 : vector<32x32xf32> to vector<32x32xbf16>
    %cst_109 = arith.constant dense<0.000000e+00> : vector<2x32xf32>
    %291 = tpu.matmul %289, %290, %cst_109 {dimension_numbers = #tpu.dot_dimension_numbers<[1], [1], [0], [0], [0, 0, 1, 0], [], []>} : vector<2x32xbf16>, vector<32x32xbf16>, vector<2x32xf32> -> vector<2x32xf32>
    %292 = vector.broadcast %288 : vector<1x32xf32> to vector<2x32xf32>
    %293 = arith.addf %291, %292 : vector<2x32xf32>
    %c0_110 = arith.constant 0 : index
    %c0_111 = arith.constant 0 : index
    %c0_112 = arith.constant 0 : index
    %294 = vector.load %arg3[%c0_110, %c0_111, %c0_112] : memref<2x2x32xf32, #tpu.memory_space<vmem>>, vector<1x2x32xf32>
    %295 = vector.shape_cast %294 : vector<1x2x32xf32> to vector<2x32xf32>
    %296 = vector.shape_cast %293 : vector<2x32xf32> to vector<1x2x32xf32>
    tpu.vector_store %arg3[%c0_110, %c0_111, %c0_112], %296 {strides = array<i32>} : memref<2x2x32xf32, #tpu.memory_space<vmem>>, vector<1x2x32xf32>,
    %c1 = arith.constant 1 : index
    %c0_113 = arith.constant 0 : index
    %c0_114 = arith.constant 0 : index
    %297 = vector.load %arg1[%c1, %c0_113, %c0_114] : memref<2x664x32xf32, #tpu.memory_space<vmem>>, vector<1x8x32xf32>
    %298 = vector.shape_cast %297 : vector<1x8x32xf32> to vector<8x32xf32>
    %c1_115 = arith.constant 1 : index
    %c0_116 = arith.constant 0 : index
    %c0_117 = arith.constant 0 : index
    %c0_118 = arith.constant 0 : index
    %299 = vector.load %arg0[%c1_115, %c0_116, %c0_117, %c0_118] : memref<2x2x8x32xf32, #tpu.memory_space<vmem>>, vector<1x2x8x32xf32>
    %300 = vector.shape_cast %299 : vector<1x2x8x32xf32> to vector<2x8x32xf32>
    %cst_119 = arith.constant 5.65685415 : f32
    %301 = vector.broadcast %cst_119 : f32 to vector<2x8x32xf32>
    %302 = arith.mulf %300, %301 : vector<2x8x32xf32>
    %303 = vector.shape_cast %298 : vector<8x32xf32> to vector<1x8x32xf32>
    %304 = vector.broadcast %303 : vector<1x8x32xf32> to vector<2x8x32xf32>
    %305 = arith.addf %302, %304 : vector<2x8x32xf32>
    %306 = vector.shape_cast %305 : vector<2x8x32xf32> to vector<16x32xf32>
    %c1_120 = arith.constant 1 : index
    %c8_121 = arith.constant 8 : index
    %c0_122 = arith.constant 0 : index
    %307 = vector.load %arg1[%c1_120, %c8_121, %c0_122] : memref<2x664x32xf32, #tpu.memory_space<vmem>>, vector<1x1x32xf32>
    %308 = vector.shape_cast %307 : vector<1x1x32xf32> to vector<1x32xf32>
    %c1_123 = arith.constant 1 : index
    %c16_124 = arith.constant 16 : index
    %c0_125 = arith.constant 0 : index
    %309 = vector.load %arg1[%c1_123, %c16_124, %c0_125] : memref<2x664x32xf32, #tpu.memory_space<vmem>>, vector<1x1x32xf32>
    %310 = vector.shape_cast %309 : vector<1x1x32xf32> to vector<1x32xf32>
    %cst_126 = arith.constant dense<0.000000e+00> : vector<16xf32>
    %311 = vector.multi_reduction <add>, %306, %cst_126 [1] : vector<16x32xf32> to vector<16xf32>
    %312 = vector.shape_cast %311 : vector<16xf32> to vector<16x1xf32>
    %cst_127 = arith.constant 3.200000e+01 : f32
    %313 = vector.broadcast %cst_127 : f32 to vector<16x1xf32>
    %314 = arith.divf %312, %313 : vector<16x1xf32>
    %315 = vector.broadcast %314 : vector<16x1xf32> to vector<16x32xf32>
    %316 = arith.subf %306, %315 : vector<16x32xf32>
    %317 = arith.mulf %316, %316 : vector<16x32xf32>
    %cst_128 = arith.constant dense<0.000000e+00> : vector<16xf32>
    %318 = vector.multi_reduction <add>, %317, %cst_128 [1] : vector<16x32xf32> to vector<16xf32>
    %319 = vector.shape_cast %318 : vector<16xf32> to vector<16x1xf32>
    %cst_129 = arith.constant 3.200000e+01 : f32
    %320 = vector.broadcast %cst_129 : f32 to vector<16x1xf32>
    %321 = arith.divf %319, %320 : vector<16x1xf32>
    %322 = vector.broadcast %314 : vector<16x1xf32> to vector<16x32xf32>
    %323 = arith.subf %306, %322 : vector<16x32xf32>
    %cst_130 = arith.constant 9.99999974E-6 : f32
    %324 = vector.broadcast %cst_130 : f32 to vector<16x1xf32>
    %325 = arith.addf %321, %324 : vector<16x1xf32>
    %326 = math.rsqrt %325 : vector<16x1xf32>
    %327 = vector.broadcast %326 : vector<16x1xf32> to vector<16x32xf32>
    %328 = arith.mulf %323, %327 : vector<16x32xf32>
    %329 = vector.broadcast %308 : vector<1x32xf32> to vector<16x32xf32>
    %330 = arith.mulf %328, %329 : vector<16x32xf32>
    %331 = vector.broadcast %310 : vector<1x32xf32> to vector<16x32xf32>
    %332 = arith.addf %330, %331 : vector<16x32xf32>
    %c1_131 = arith.constant 1 : index
    %c24_132 = arith.constant 24 : index
    %c0_133 = arith.constant 0 : index
    %333 = vector.load %arg1[%c1_131, %c24_132, %c0_133] : memref<2x664x32xf32, #tpu.memory_space<vmem>>, vector<1x96x32xf32>
    %334 = vector.shape_cast %333 : vector<1x96x32xf32> to vector<96x32xf32>
    %c1_134 = arith.constant 1 : index
    %c0_135 = arith.constant 0 : index
    %c0_136 = arith.constant 0 : index
    %335 = vector.load %arg2[%c1_134, %c0_135, %c0_136] : memref<2x104x128xf32, #tpu.memory_space<vmem>>, vector<1x1x128xf32>
    %336 = vector.shape_cast %335 : vector<1x1x128xf32> to vector<1x128xf32>
    %337 = vector.extract_strided_slice %336 {offsets = [0, 0], sizes = [1, 96], strides = [1, 1]} : vector<1x128xf32> to vector<1x96xf32>
    %338 = arith.truncf %332 : vector<16x32xf32> to vector<16x32xbf16>
    %339 = arith.truncf %334 : vector<96x32xf32> to vector<96x32xbf16>
    %cst_137 = arith.constant dense<0.000000e+00> : vector<16x96xf32>
    %340 = tpu.matmul %338, %339, %cst_137 {dimension_numbers = #tpu.dot_dimension_numbers<[1], [1], [0], [0], [0, 0, 1, 0], [], []>} : vector<16x32xbf16>, vector<96x32xbf16>, vector<16x96xf32> -> vector<16x96xf32>
    %341 = vector.broadcast %337 : vector<1x96xf32> to vector<16x96xf32>
    %342 = arith.addf %340, %341 : vector<16x96xf32>
    %343 = vector.shape_cast %342 : vector<16x96xf32> to vector<2x8x96xf32>
    %344 = vector.extract_strided_slice %343 {offsets = [0, 0, 0], sizes = [2, 8, 24], strides = [1, 1, 1]} : vector<2x8x96xf32> to vector<2x8x24xf32>
    %345 = vector.extract_strided_slice %343 {offsets = [0, 0, 24], sizes = [2, 8, 24], strides = [1, 1, 1]} : vector<2x8x96xf32> to vector<2x8x24xf32>
    %346 = vector.extract_strided_slice %343 {offsets = [0, 0, 48], sizes = [2, 8, 24], strides = [1, 1, 1]} : vector<2x8x96xf32> to vector<2x8x24xf32>
    %347 = vector.extract_strided_slice %343 {offsets = [0, 0, 72], sizes = [2, 8, 24], strides = [1, 1, 1]} : vector<2x8x96xf32> to vector<2x8x24xf32>
    %348 = tpu.concatenate %344, %345, %346, %347 in 0 : vector<2x8x24xf32>, vector<2x8x24xf32>, vector<2x8x24xf32>, vector<2x8x24xf32> -> vector<8x8x24xf32>
    %349 = vector.extract_strided_slice %348 {offsets = [0, 0, 0], sizes = [8, 8, 8], strides = [1, 1, 1]} : vector<8x8x24xf32> to vector<8x8x8xf32>
    %350 = vector.extract_strided_slice %348 {offsets = [0, 0, 8], sizes = [8, 8, 8], strides = [1, 1, 1]} : vector<8x8x24xf32> to vector<8x8x8xf32>
    %351 = vector.extract_strided_slice %348 {offsets = [0, 0, 16], sizes = [8, 8, 8], strides = [1, 1, 1]} : vector<8x8x24xf32> to vector<8x8x8xf32>
    %352 = arith.truncf %349 : vector<8x8x8xf32> to vector<8x8x8xbf16>
    %353 = arith.truncf %350 : vector<8x8x8xf32> to vector<8x8x8xbf16>
    "tpu.trace_start"() <{level = 10 : i32, message = "bqd,bkd->bqk"}> : () -> ()
    %cst_138 = arith.constant dense<0.000000e+00> : vector<8x8x8xf32>
    %354 = tpu.matmul %352, %353, %cst_138 {dimension_numbers = #tpu.dot_dimension_numbers<[2], [2], [1], [1], [0, 0, 0, 1, 1, 1], [0], [0]>} : vector<8x8x8xbf16>, vector<8x8x8xbf16>, vector<8x8x8xf32> -> vector<8x8x8xf32>
    "tpu.trace_stop"() : () -> ()
    %cst_139 = arith.constant dense<0xFF800000> : vector<8x8xf32>
    %355 = vector.multi_reduction <maximumf>, %354, %cst_139 [2] : vector<8x8x8xf32> to vector<8x8xf32>
    %356 = vector.shape_cast %355 : vector<8x8xf32> to vector<8x8x1xf32>
    %357 = vector.broadcast %356 : vector<8x8x1xf32> to vector<8x8x8xf32>
    %358 = arith.subf %354, %357 : vector<8x8x8xf32>
    %359 = math.exp %358 : vector<8x8x8xf32>
    %cst_140 = arith.constant dense<0.000000e+00> : vector<8x8xf32>
    %360 = vector.multi_reduction <add>, %359, %cst_140 [2] : vector<8x8x8xf32> to vector<8x8xf32>
    %361 = vector.shape_cast %360 : vector<8x8xf32> to vector<8x8x1xf32>
    %362 = vector.broadcast %361 : vector<8x8x1xf32> to vector<8x8x8xf32>
    %363 = arith.divf %359, %362 : vector<8x8x8xf32>
    %364 = arith.truncf %363 : vector<8x8x8xf32> to vector<8x8x8xbf16>
    %365 = arith.truncf %351 : vector<8x8x8xf32> to vector<8x8x8xbf16>
    "tpu.trace_start"() <{level = 10 : i32, message = "bqk,bkd->bqd"}> : () -> ()
    %cst_141 = arith.constant dense<0.000000e+00> : vector<8x8x8xf32>
    %366 = tpu.matmul %364, %365, %cst_141 {dimension_numbers = #tpu.dot_dimension_numbers<[2], [1], [1], [2], [0, 0, 0, 1, 1, 2], [0], [0]>} : vector<8x8x8xbf16>, vector<8x8x8xbf16>, vector<8x8x8xf32> -> vector<8x8x8xf32>
    "tpu.trace_stop"() : () -> ()
    %367 = vector.extract_strided_slice %366 {offsets = [0, 0, 0], sizes = [2, 8, 8], strides = [1, 1, 1]} : vector<8x8x8xf32> to vector<2x8x8xf32>
    %368 = vector.extract_strided_slice %366 {offsets = [2, 0, 0], sizes = [2, 8, 8], strides = [1, 1, 1]} : vector<8x8x8xf32> to vector<2x8x8xf32>
    %369 = vector.extract_strided_slice %366 {offsets = [4, 0, 0], sizes = [2, 8, 8], strides = [1, 1, 1]} : vector<8x8x8xf32> to vector<2x8x8xf32>
    %370 = vector.extract_strided_slice %366 {offsets = [6, 0, 0], sizes = [2, 8, 8], strides = [1, 1, 1]} : vector<8x8x8xf32> to vector<2x8x8xf32>
    %371 = tpu.concatenate %367, %368, %369, %370 in 2 : vector<2x8x8xf32>, vector<2x8x8xf32>, vector<2x8x8xf32>, vector<2x8x8xf32> -> vector<2x8x32xf32>
    %372 = vector.shape_cast %371 : vector<2x8x32xf32> to vector<16x32xf32>
    %c1_142 = arith.constant 1 : index
    %c120_143 = arith.constant 120 : index
    %c0_144 = arith.constant 0 : index
    %373 = vector.load %arg1[%c1_142, %c120_143, %c0_144] : memref<2x664x32xf32, #tpu.memory_space<vmem>>, vector<1x32x32xf32>
    %374 = vector.shape_cast %373 : vector<1x32x32xf32> to vector<32x32xf32>
    %c1_145 = arith.constant 1 : index
    %c152_146 = arith.constant 152 : index
    %c0_147 = arith.constant 0 : index
    %375 = vector.load %arg1[%c1_145, %c152_146, %c0_147] : memref<2x664x32xf32, #tpu.memory_space<vmem>>, vector<1x1x32xf32>
    %376 = vector.shape_cast %375 : vector<1x1x32xf32> to vector<1x32xf32>
    %377 = arith.truncf %372 : vector<16x32xf32> to vector<16x32xbf16>
    %378 = arith.truncf %374 : vector<32x32xf32> to vector<32x32xbf16>
    %cst_148 = arith.constant dense<0.000000e+00> : vector<16x32xf32>
    %379 = tpu.matmul %377, %378, %cst_148 {dimension_numbers = #tpu.dot_dimension_numbers<[1], [1], [0], [0], [0, 0, 1, 0], [], []>} : vector<16x32xbf16>, vector<32x32xbf16>, vector<16x32xf32> -> vector<16x32xf32>
    %380 = vector.broadcast %376 : vector<1x32xf32> to vector<16x32xf32>
    %381 = arith.addf %379, %380 : vector<16x32xf32>
    %382 = arith.addf %306, %381 : vector<16x32xf32>
    %c1_149 = arith.constant 1 : index
    %c160_150 = arith.constant 160 : index
    %c0_151 = arith.constant 0 : index
    %383 = vector.load %arg1[%c1_149, %c160_150, %c0_151] : memref<2x664x32xf32, #tpu.memory_space<vmem>>, vector<1x1x32xf32>
    %384 = vector.shape_cast %383 : vector<1x1x32xf32> to vector<1x32xf32>
    %c1_152 = arith.constant 1 : index
    %c168_153 = arith.constant 168 : index
    %c0_154 = arith.constant 0 : index
    %385 = vector.load %arg1[%c1_152, %c168_153, %c0_154] : memref<2x664x32xf32, #tpu.memory_space<vmem>>, vector<1x1x32xf32>
    %386 = vector.shape_cast %385 : vector<1x1x32xf32> to vector<1x32xf32>
    %cst_155 = arith.constant dense<0.000000e+00> : vector<16xf32>
    %387 = vector.multi_reduction <add>, %382, %cst_155 [1] : vector<16x32xf32> to vector<16xf32>
    %388 = vector.shape_cast %387 : vector<16xf32> to vector<16x1xf32>
    %cst_156 = arith.constant 3.200000e+01 : f32
    %389 = vector.broadcast %cst_156 : f32 to vector<16x1xf32>
    %390 = arith.divf %388, %389 : vector<16x1xf32>
    %391 = vector.broadcast %390 : vector<16x1xf32> to vector<16x32xf32>
    %392 = arith.subf %382, %391 : vector<16x32xf32>
    %393 = arith.mulf %392, %392 : vector<16x32xf32>
    %cst_157 = arith.constant dense<0.000000e+00> : vector<16xf32>
    %394 = vector.multi_reduction <add>, %393, %cst_157 [1] : vector<16x32xf32> to vector<16xf32>
    %395 = vector.shape_cast %394 : vector<16xf32> to vector<16x1xf32>
    %cst_158 = arith.constant 3.200000e+01 : f32
    %396 = vector.broadcast %cst_158 : f32 to vector<16x1xf32>
    %397 = arith.divf %395, %396 : vector<16x1xf32>
    %398 = vector.broadcast %390 : vector<16x1xf32> to vector<16x32xf32>
    %399 = arith.subf %382, %398 : vector<16x32xf32>
    %cst_159 = arith.constant 9.99999974E-6 : f32
    %400 = vector.broadcast %cst_159 : f32 to vector<16x1xf32>
    %401 = arith.addf %397, %400 : vector<16x1xf32>
    %402 = math.rsqrt %401 : vector<16x1xf32>
    %403 = vector.broadcast %402 : vector<16x1xf32> to vector<16x32xf32>
    %404 = arith.mulf %399, %403 : vector<16x32xf32>
    %405 = vector.broadcast %384 : vector<1x32xf32> to vector<16x32xf32>
    %406 = arith.mulf %404, %405 : vector<16x32xf32>
    %407 = vector.broadcast %386 : vector<1x32xf32> to vector<16x32xf32>
    %408 = arith.addf %406, %407 : vector<16x32xf32>
    %c1_160 = arith.constant 1 : index
    %c176_161 = arith.constant 176 : index
    %c0_162 = arith.constant 0 : index
    %409 = vector.load %arg1[%c1_160, %c176_161, %c0_162] : memref<2x664x32xf32, #tpu.memory_space<vmem>>, vector<1x128x32xf32>
    %410 = vector.shape_cast %409 : vector<1x128x32xf32> to vector<128x32xf32>
    %c1_163 = arith.constant 1 : index
    %c8_164 = arith.constant 8 : index
    %c0_165 = arith.constant 0 : index
    %411 = vector.load %arg2[%c1_163, %c8_164, %c0_165] : memref<2x104x128xf32, #tpu.memory_space<vmem>>, vector<1x1x128xf32>
    %412 = vector.shape_cast %411 : vector<1x1x128xf32> to vector<1x128xf32>
    %413 = arith.truncf %408 : vector<16x32xf32> to vector<16x32xbf16>
    %414 = arith.truncf %410 : vector<128x32xf32> to vector<128x32xbf16>
    %cst_166 = arith.constant dense<0.000000e+00> : vector<16x128xf32>
    %415 = tpu.matmul %413, %414, %cst_166 {dimension_numbers = #tpu.dot_dimension_numbers<[1], [1], [0], [0], [0, 0, 1, 0], [], []>} : vector<16x32xbf16>, vector<128x32xbf16>, vector<16x128xf32> -> vector<16x128xf32>
    %416 = vector.broadcast %412 : vector<1x128xf32> to vector<16x128xf32>
    %417 = arith.addf %415, %416 : vector<16x128xf32>
    %cst_167 = arith.constant 0.000000e+00 : f32
    %418 = vector.broadcast %cst_167 : f32 to vector<16x128xf32>
    %419 = arith.maximumf %417, %418 : vector<16x128xf32>
    %c1_168 = arith.constant 1 : index
    %c16_169 = arith.constant 16 : index
    %c0_170 = arith.constant 0 : index
    %420 = vector.load %arg2[%c1_168, %c16_169, %c0_170] : memref<2x104x128xf32, #tpu.memory_space<vmem>>, vector<1x32x128xf32>
    %421 = vector.shape_cast %420 : vector<1x32x128xf32> to vector<32x128xf32>
    %c1_171 = arith.constant 1 : index
    %c304_172 = arith.constant 304 : index
    %c0_173 = arith.constant 0 : index
    %422 = vector.load %arg1[%c1_171, %c304_172, %c0_173] : memref<2x664x32xf32, #tpu.memory_space<vmem>>, vector<1x1x32xf32>
    %423 = vector.shape_cast %422 : vector<1x1x32xf32> to vector<1x32xf32>
    %424 = arith.truncf %419 : vector<16x128xf32> to vector<16x128xbf16>
    %425 = arith.truncf %421 : vector<32x128xf32> to vector<32x128xbf16>
    %cst_174 = arith.constant dense<0.000000e+00> : vector<16x32xf32>
    %426 = tpu.matmul %424, %425, %cst_174 {dimension_numbers = #tpu.dot_dimension_numbers<[1], [1], [0], [0], [0, 0, 1, 0], [], []>} : vector<16x128xbf16>, vector<32x128xbf16>, vector<16x32xf32> -> vector<16x32xf32>
    %427 = vector.broadcast %423 : vector<1x32xf32> to vector<16x32xf32>
    %428 = arith.addf %426, %427 : vector<16x32xf32>
    %429 = arith.addf %382, %428 : vector<16x32xf32>
    %c1_175 = arith.constant 1 : index
    %c312_176 = arith.constant 312 : index
    %c0_177 = arith.constant 0 : index
    %430 = vector.load %arg1[%c1_175, %c312_176, %c0_177] : memref<2x664x32xf32, #tpu.memory_space<vmem>>, vector<1x1x32xf32>
    %431 = vector.shape_cast %430 : vector<1x1x32xf32> to vector<1x32xf32>
    %c1_178 = arith.constant 1 : index
    %c320_179 = arith.constant 320 : index
    %c0_180 = arith.constant 0 : index
    %432 = vector.load %arg1[%c1_178, %c320_179, %c0_180] : memref<2x664x32xf32, #tpu.memory_space<vmem>>, vector<1x1x32xf32>
    %433 = vector.shape_cast %432 : vector<1x1x32xf32> to vector<1x32xf32>
    %cst_181 = arith.constant dense<0.000000e+00> : vector<16xf32>
    %434 = vector.multi_reduction <add>, %429, %cst_181 [1] : vector<16x32xf32> to vector<16xf32>
    %435 = vector.shape_cast %434 : vector<16xf32> to vector<16x1xf32>
    %cst_182 = arith.constant 3.200000e+01 : f32
    %436 = vector.broadcast %cst_182 : f32 to vector<16x1xf32>
    %437 = arith.divf %435, %436 : vector<16x1xf32>
    %438 = vector.broadcast %437 : vector<16x1xf32> to vector<16x32xf32>
    %439 = arith.subf %429, %438 : vector<16x32xf32>
    %440 = arith.mulf %439, %439 : vector<16x32xf32>
    %cst_183 = arith.constant dense<0.000000e+00> : vector<16xf32>
    %441 = vector.multi_reduction <add>, %440, %cst_183 [1] : vector<16x32xf32> to vector<16xf32>
    %442 = vector.shape_cast %441 : vector<16xf32> to vector<16x1xf32>
    %cst_184 = arith.constant 3.200000e+01 : f32
    %443 = vector.broadcast %cst_184 : f32 to vector<16x1xf32>
    %444 = arith.divf %442, %443 : vector<16x1xf32>
    %445 = vector.broadcast %437 : vector<16x1xf32> to vector<16x32xf32>
    %446 = arith.subf %429, %445 : vector<16x32xf32>
    %cst_185 = arith.constant 9.99999974E-6 : f32
    %447 = vector.broadcast %cst_185 : f32 to vector<16x1xf32>
    %448 = arith.addf %444, %447 : vector<16x1xf32>
    %449 = math.rsqrt %448 : vector<16x1xf32>
    %450 = vector.broadcast %449 : vector<16x1xf32> to vector<16x32xf32>
    %451 = arith.mulf %446, %450 : vector<16x32xf32>
    %452 = vector.broadcast %431 : vector<1x32xf32> to vector<16x32xf32>
    %453 = arith.mulf %451, %452 : vector<16x32xf32>
    %454 = vector.broadcast %433 : vector<1x32xf32> to vector<16x32xf32>
    %455 = arith.addf %453, %454 : vector<16x32xf32>
    %c1_186 = arith.constant 1 : index
    %c328_187 = arith.constant 328 : index
    %c0_188 = arith.constant 0 : index
    %456 = vector.load %arg1[%c1_186, %c328_187, %c0_188] : memref<2x664x32xf32, #tpu.memory_space<vmem>>, vector<1x96x32xf32>
    %457 = vector.shape_cast %456 : vector<1x96x32xf32> to vector<96x32xf32>
    %c1_189 = arith.constant 1 : index
    %c48_190 = arith.constant 48 : index
    %c0_191 = arith.constant 0 : index
    %458 = vector.load %arg2[%c1_189, %c48_190, %c0_191] : memref<2x104x128xf32, #tpu.memory_space<vmem>>, vector<1x1x128xf32>
    %459 = vector.shape_cast %458 : vector<1x1x128xf32> to vector<1x128xf32>
    %460 = vector.extract_strided_slice %459 {offsets = [0, 0], sizes = [1, 96], strides = [1, 1]} : vector<1x128xf32> to vector<1x96xf32>
    %461 = arith.truncf %455 : vector<16x32xf32> to vector<16x32xbf16>
    %462 = arith.truncf %457 : vector<96x32xf32> to vector<96x32xbf16>
    %cst_192 = arith.constant dense<0.000000e+00> : vector<16x96xf32>
    %463 = tpu.matmul %461, %462, %cst_192 {dimension_numbers = #tpu.dot_dimension_numbers<[1], [1], [0], [0], [0, 0, 1, 0], [], []>} : vector<16x32xbf16>, vector<96x32xbf16>, vector<16x96xf32> -> vector<16x96xf32>
    %464 = vector.broadcast %460 : vector<1x96xf32> to vector<16x96xf32>
    %465 = arith.addf %463, %464 : vector<16x96xf32>
    %466 = vector.shape_cast %465 : vector<16x96xf32> to vector<2x8x96xf32>
    %467 = vector.extract_strided_slice %466 {offsets = [0, 0, 0], sizes = [2, 8, 24], strides = [1, 1, 1]} : vector<2x8x96xf32> to vector<2x8x24xf32>
    %468 = vector.extract_strided_slice %466 {offsets = [0, 0, 24], sizes = [2, 8, 24], strides = [1, 1, 1]} : vector<2x8x96xf32> to vector<2x8x24xf32>
    %469 = vector.extract_strided_slice %466 {offsets = [0, 0, 48], sizes = [2, 8, 24], strides = [1, 1, 1]} : vector<2x8x96xf32> to vector<2x8x24xf32>
    %470 = vector.extract_strided_slice %466 {offsets = [0, 0, 72], sizes = [2, 8, 24], strides = [1, 1, 1]} : vector<2x8x96xf32> to vector<2x8x24xf32>
    %471 = tpu.concatenate %467, %468, %469, %470 in 0 : vector<2x8x24xf32>, vector<2x8x24xf32>, vector<2x8x24xf32>, vector<2x8x24xf32> -> vector<8x8x24xf32>
    %472 = vector.extract_strided_slice %471 {offsets = [0, 0, 0], sizes = [8, 8, 8], strides = [1, 1, 1]} : vector<8x8x24xf32> to vector<8x8x8xf32>
    %473 = vector.extract_strided_slice %471 {offsets = [0, 0, 8], sizes = [8, 8, 8], strides = [1, 1, 1]} : vector<8x8x24xf32> to vector<8x8x8xf32>
    %474 = vector.extract_strided_slice %471 {offsets = [0, 0, 16], sizes = [8, 8, 8], strides = [1, 1, 1]} : vector<8x8x24xf32> to vector<8x8x8xf32>
    %475 = arith.truncf %472 : vector<8x8x8xf32> to vector<8x8x8xbf16>
    %476 = arith.truncf %473 : vector<8x8x8xf32> to vector<8x8x8xbf16>
    "tpu.trace_start"() <{level = 10 : i32, message = "bqd,bkd->bqk"}> : () -> ()
    %cst_193 = arith.constant dense<0.000000e+00> : vector<8x8x8xf32>
    %477 = tpu.matmul %475, %476, %cst_193 {dimension_numbers = #tpu.dot_dimension_numbers<[2], [2], [1], [1], [0, 0, 0, 1, 1, 1], [0], [0]>} : vector<8x8x8xbf16>, vector<8x8x8xbf16>, vector<8x8x8xf32> -> vector<8x8x8xf32>
    "tpu.trace_stop"() : () -> ()
    %cst_194 = arith.constant dense<0xFF800000> : vector<8x8xf32>
    %478 = vector.multi_reduction <maximumf>, %477, %cst_194 [2] : vector<8x8x8xf32> to vector<8x8xf32>
    %479 = vector.shape_cast %478 : vector<8x8xf32> to vector<8x8x1xf32>
    %480 = vector.broadcast %479 : vector<8x8x1xf32> to vector<8x8x8xf32>
    %481 = arith.subf %477, %480 : vector<8x8x8xf32>
    %482 = math.exp %481 : vector<8x8x8xf32>
    %cst_195 = arith.constant dense<0.000000e+00> : vector<8x8xf32>
    %483 = vector.multi_reduction <add>, %482, %cst_195 [2] : vector<8x8x8xf32> to vector<8x8xf32>
    %484 = vector.shape_cast %483 : vector<8x8xf32> to vector<8x8x1xf32>
    %485 = vector.broadcast %484 : vector<8x8x1xf32> to vector<8x8x8xf32>
    %486 = arith.divf %482, %485 : vector<8x8x8xf32>
    %487 = arith.truncf %486 : vector<8x8x8xf32> to vector<8x8x8xbf16>
    %488 = arith.truncf %474 : vector<8x8x8xf32> to vector<8x8x8xbf16>
    "tpu.trace_start"() <{level = 10 : i32, message = "bqk,bkd->bqd"}> : () -> ()
    %cst_196 = arith.constant dense<0.000000e+00> : vector<8x8x8xf32>
    %489 = tpu.matmul %487, %488, %cst_196 {dimension_numbers = #tpu.dot_dimension_numbers<[2], [1], [1], [2], [0, 0, 0, 1, 1, 2], [0], [0]>} : vector<8x8x8xbf16>, vector<8x8x8xbf16>, vector<8x8x8xf32> -> vector<8x8x8xf32>
    "tpu.trace_stop"() : () -> ()
    %490 = vector.extract_strided_slice %489 {offsets = [0, 0, 0], sizes = [2, 8, 8], strides = [1, 1, 1]} : vector<8x8x8xf32> to vector<2x8x8xf32>
    %491 = vector.extract_strided_slice %489 {offsets = [2, 0, 0], sizes = [2, 8, 8], strides = [1, 1, 1]} : vector<8x8x8xf32> to vector<2x8x8xf32>
    %492 = vector.extract_strided_slice %489 {offsets = [4, 0, 0], sizes = [2, 8, 8], strides = [1, 1, 1]} : vector<8x8x8xf32> to vector<2x8x8xf32>
    %493 = vector.extract_strided_slice %489 {offsets = [6, 0, 0], sizes = [2, 8, 8], strides = [1, 1, 1]} : vector<8x8x8xf32> to vector<2x8x8xf32>
    %494 = tpu.concatenate %490, %491, %492, %493 in 2 : vector<2x8x8xf32>, vector<2x8x8xf32>, vector<2x8x8xf32>, vector<2x8x8xf32> -> vector<2x8x32xf32>
    %495 = vector.shape_cast %494 : vector<2x8x32xf32> to vector<16x32xf32>
    %c1_197 = arith.constant 1 : index
    %c424_198 = arith.constant 424 : index
    %c0_199 = arith.constant 0 : index
    %496 = vector.load %arg1[%c1_197, %c424_198, %c0_199] : memref<2x664x32xf32, #tpu.memory_space<vmem>>, vector<1x32x32xf32>
    %497 = vector.shape_cast %496 : vector<1x32x32xf32> to vector<32x32xf32>
    %c1_200 = arith.constant 1 : index
    %c456_201 = arith.constant 456 : index
    %c0_202 = arith.constant 0 : index
    %498 = vector.load %arg1[%c1_200, %c456_201, %c0_202] : memref<2x664x32xf32, #tpu.memory_space<vmem>>, vector<1x1x32xf32>
    %499 = vector.shape_cast %498 : vector<1x1x32xf32> to vector<1x32xf32>
    %500 = arith.truncf %495 : vector<16x32xf32> to vector<16x32xbf16>
    %501 = arith.truncf %497 : vector<32x32xf32> to vector<32x32xbf16>
    %cst_203 = arith.constant dense<0.000000e+00> : vector<16x32xf32>
    %502 = tpu.matmul %500, %501, %cst_203 {dimension_numbers = #tpu.dot_dimension_numbers<[1], [1], [0], [0], [0, 0, 1, 0], [], []>} : vector<16x32xbf16>, vector<32x32xbf16>, vector<16x32xf32> -> vector<16x32xf32>
    %503 = vector.broadcast %499 : vector<1x32xf32> to vector<16x32xf32>
    %504 = arith.addf %502, %503 : vector<16x32xf32>
    %505 = arith.addf %429, %504 : vector<16x32xf32>
    %c1_204 = arith.constant 1 : index
    %c464_205 = arith.constant 464 : index
    %c0_206 = arith.constant 0 : index
    %506 = vector.load %arg1[%c1_204, %c464_205, %c0_206] : memref<2x664x32xf32, #tpu.memory_space<vmem>>, vector<1x1x32xf32>
    %507 = vector.shape_cast %506 : vector<1x1x32xf32> to vector<1x32xf32>
    %c1_207 = arith.constant 1 : index
    %c472_208 = arith.constant 472 : index
    %c0_209 = arith.constant 0 : index
    %508 = vector.load %arg1[%c1_207, %c472_208, %c0_209] : memref<2x664x32xf32, #tpu.memory_space<vmem>>, vector<1x1x32xf32>
    %509 = vector.shape_cast %508 : vector<1x1x32xf32> to vector<1x32xf32>
    %cst_210 = arith.constant dense<0.000000e+00> : vector<16xf32>
    %510 = vector.multi_reduction <add>, %505, %cst_210 [1] : vector<16x32xf32> to vector<16xf32>
    %511 = vector.shape_cast %510 : vector<16xf32> to vector<16x1xf32>
    %cst_211 = arith.constant 3.200000e+01 : f32
    %512 = vector.broadcast %cst_211 : f32 to vector<16x1xf32>
    %513 = arith.divf %511, %512 : vector<16x1xf32>
    %514 = vector.broadcast %513 : vector<16x1xf32> to vector<16x32xf32>
    %515 = arith.subf %505, %514 : vector<16x32xf32>
    %516 = arith.mulf %515, %515 : vector<16x32xf32>
    %cst_212 = arith.constant dense<0.000000e+00> : vector<16xf32>
    %517 = vector.multi_reduction <add>, %516, %cst_212 [1] : vector<16x32xf32> to vector<16xf32>
    %518 = vector.shape_cast %517 : vector<16xf32> to vector<16x1xf32>
    %cst_213 = arith.constant 3.200000e+01 : f32
    %519 = vector.broadcast %cst_213 : f32 to vector<16x1xf32>
    %520 = arith.divf %518, %519 : vector<16x1xf32>
    %521 = vector.broadcast %513 : vector<16x1xf32> to vector<16x32xf32>
    %522 = arith.subf %505, %521 : vector<16x32xf32>
    %cst_214 = arith.constant 9.99999974E-6 : f32
    %523 = vector.broadcast %cst_214 : f32 to vector<16x1xf32>
    %524 = arith.addf %520, %523 : vector<16x1xf32>
    %525 = math.rsqrt %524 : vector<16x1xf32>
    %526 = vector.broadcast %525 : vector<16x1xf32> to vector<16x32xf32>
    %527 = arith.mulf %522, %526 : vector<16x32xf32>
    %528 = vector.broadcast %507 : vector<1x32xf32> to vector<16x32xf32>
    %529 = arith.mulf %527, %528 : vector<16x32xf32>
    %530 = vector.broadcast %509 : vector<1x32xf32> to vector<16x32xf32>
    %531 = arith.addf %529, %530 : vector<16x32xf32>
    %c1_215 = arith.constant 1 : index
    %c480_216 = arith.constant 480 : index
    %c0_217 = arith.constant 0 : index
    %532 = vector.load %arg1[%c1_215, %c480_216, %c0_217] : memref<2x664x32xf32, #tpu.memory_space<vmem>>, vector<1x128x32xf32>
    %533 = vector.shape_cast %532 : vector<1x128x32xf32> to vector<128x32xf32>
    %c1_218 = arith.constant 1 : index
    %c56_219 = arith.constant 56 : index
    %c0_220 = arith.constant 0 : index
    %534 = vector.load %arg2[%c1_218, %c56_219, %c0_220] : memref<2x104x128xf32, #tpu.memory_space<vmem>>, vector<1x1x128xf32>
    %535 = vector.shape_cast %534 : vector<1x1x128xf32> to vector<1x128xf32>
    %536 = arith.truncf %531 : vector<16x32xf32> to vector<16x32xbf16>
    %537 = arith.truncf %533 : vector<128x32xf32> to vector<128x32xbf16>
    %cst_221 = arith.constant dense<0.000000e+00> : vector<16x128xf32>
    %538 = tpu.matmul %536, %537, %cst_221 {dimension_numbers = #tpu.dot_dimension_numbers<[1], [1], [0], [0], [0, 0, 1, 0], [], []>} : vector<16x32xbf16>, vector<128x32xbf16>, vector<16x128xf32> -> vector<16x128xf32>
    %539 = vector.broadcast %535 : vector<1x128xf32> to vector<16x128xf32>
    %540 = arith.addf %538, %539 : vector<16x128xf32>
    %cst_222 = arith.constant 0.000000e+00 : f32
    %541 = vector.broadcast %cst_222 : f32 to vector<16x128xf32>
    %542 = arith.maximumf %540, %541 : vector<16x128xf32>
    %c1_223 = arith.constant 1 : index
    %c64_224 = arith.constant 64 : index
    %c0_225 = arith.constant 0 : index
    %543 = vector.load %arg2[%c1_223, %c64_224, %c0_225] : memref<2x104x128xf32, #tpu.memory_space<vmem>>, vector<1x32x128xf32>
    %544 = vector.shape_cast %543 : vector<1x32x128xf32> to vector<32x128xf32>
    %c1_226 = arith.constant 1 : index
    %c608_227 = arith.constant 608 : index
    %c0_228 = arith.constant 0 : index
    %545 = vector.load %arg1[%c1_226, %c608_227, %c0_228] : memref<2x664x32xf32, #tpu.memory_space<vmem>>, vector<1x1x32xf32>
    %546 = vector.shape_cast %545 : vector<1x1x32xf32> to vector<1x32xf32>
    %547 = arith.truncf %542 : vector<16x128xf32> to vector<16x128xbf16>
    %548 = arith.truncf %544 : vector<32x128xf32> to vector<32x128xbf16>
    %cst_229 = arith.constant dense<0.000000e+00> : vector<16x32xf32>
    %549 = tpu.matmul %547, %548, %cst_229 {dimension_numbers = #tpu.dot_dimension_numbers<[1], [1], [0], [0], [0, 0, 1, 0], [], []>} : vector<16x128xbf16>, vector<32x128xbf16>, vector<16x32xf32> -> vector<16x32xf32>
    %550 = vector.broadcast %546 : vector<1x32xf32> to vector<16x32xf32>
    %551 = arith.addf %549, %550 : vector<16x32xf32>
    %552 = arith.addf %505, %551 : vector<16x32xf32>
    %c1_230 = arith.constant 1 : index
    %c616_231 = arith.constant 616 : index
    %c0_232 = arith.constant 0 : index
    %553 = vector.load %arg1[%c1_230, %c616_231, %c0_232] : memref<2x664x32xf32, #tpu.memory_space<vmem>>, vector<1x1x32xf32>
    %554 = vector.shape_cast %553 : vector<1x1x32xf32> to vector<1x32xf32>
    %c1_233 = arith.constant 1 : index
    %c624_234 = arith.constant 624 : index
    %c0_235 = arith.constant 0 : index
    %555 = vector.load %arg1[%c1_233, %c624_234, %c0_235] : memref<2x664x32xf32, #tpu.memory_space<vmem>>, vector<1x1x32xf32>
    %556 = vector.shape_cast %555 : vector<1x1x32xf32> to vector<1x32xf32>
    %cst_236 = arith.constant dense<0.000000e+00> : vector<16xf32>
    %557 = vector.multi_reduction <add>, %552, %cst_236 [1] : vector<16x32xf32> to vector<16xf32>
    %558 = vector.shape_cast %557 : vector<16xf32> to vector<16x1xf32>
    %cst_237 = arith.constant 3.200000e+01 : f32
    %559 = vector.broadcast %cst_237 : f32 to vector<16x1xf32>
    %560 = arith.divf %558, %559 : vector<16x1xf32>
    %561 = vector.broadcast %560 : vector<16x1xf32> to vector<16x32xf32>
    %562 = arith.subf %552, %561 : vector<16x32xf32>
    %563 = arith.mulf %562, %562 : vector<16x32xf32>
    %cst_238 = arith.constant dense<0.000000e+00> : vector<16xf32>
    %564 = vector.multi_reduction <add>, %563, %cst_238 [1] : vector<16x32xf32> to vector<16xf32>
    %565 = vector.shape_cast %564 : vector<16xf32> to vector<16x1xf32>
    %cst_239 = arith.constant 3.200000e+01 : f32
    %566 = vector.broadcast %cst_239 : f32 to vector<16x1xf32>
    %567 = arith.divf %565, %566 : vector<16x1xf32>
    %568 = vector.broadcast %560 : vector<16x1xf32> to vector<16x32xf32>
    %569 = arith.subf %552, %568 : vector<16x32xf32>
    %cst_240 = arith.constant 9.99999974E-6 : f32
    %570 = vector.broadcast %cst_240 : f32 to vector<16x1xf32>
    %571 = arith.addf %567, %570 : vector<16x1xf32>
    %572 = math.rsqrt %571 : vector<16x1xf32>
    %573 = vector.broadcast %572 : vector<16x1xf32> to vector<16x32xf32>
    %574 = arith.mulf %569, %573 : vector<16x32xf32>
    %575 = vector.broadcast %554 : vector<1x32xf32> to vector<16x32xf32>
    %576 = arith.mulf %574, %575 : vector<16x32xf32>
    %577 = vector.broadcast %556 : vector<1x32xf32> to vector<16x32xf32>
    %578 = arith.addf %576, %577 : vector<16x32xf32>
    %579 = vector.shape_cast %578 : vector<16x32xf32> to vector<2x8x32xf32>
    %cst_241 = arith.constant dense<0.000000e+00> : vector<2x32xf32>
    %580 = vector.multi_reduction <add>, %579, %cst_241 [1] : vector<2x8x32xf32> to vector<2x32xf32>
    %c1_242 = arith.constant 1 : index
    %c632_243 = arith.constant 632 : index
    %c0_244 = arith.constant 0 : index
    %581 = vector.load %arg1[%c1_242, %c632_243, %c0_244] : memref<2x664x32xf32, #tpu.memory_space<vmem>>, vector<1x32x32xf32>
    %582 = vector.shape_cast %581 : vector<1x32x32xf32> to vector<32x32xf32>
    %c1_245 = arith.constant 1 : index
    %c96_246 = arith.constant 96 : index
    %c0_247 = arith.constant 0 : index
    %583 = vector.load %arg2[%c1_245, %c96_246, %c0_247] : memref<2x104x128xf32, #tpu.memory_space<vmem>>, vector<1x1x128xf32>
    %584 = vector.shape_cast %583 : vector<1x1x128xf32> to vector<1x128xf32>
    %585 = vector.extract_strided_slice %584 {offsets = [0, 0], sizes = [1, 32], strides = [1, 1]} : vector<1x128xf32> to vector<1x32xf32>
    %586 = arith.truncf %580 : vector<2x32xf32> to vector<2x32xbf16>
    %587 = arith.truncf %582 : vector<32x32xf32> to vector<32x32xbf16>
    %cst_248 = arith.constant dense<0.000000e+00> : vector<2x32xf32>
    %588 = tpu.matmul %586, %587, %cst_248 {dimension_numbers = #tpu.dot_dimension_numbers<[1], [1], [0], [0], [0, 0, 1, 0], [], []>} : vector<2x32xbf16>, vector<32x32xbf16>, vector<2x32xf32> -> vector<2x32xf32>
    %589 = vector.broadcast %585 : vector<1x32xf32> to vector<2x32xf32>
    %590 = arith.addf %588, %589 : vector<2x32xf32>
    %c1_249 = arith.constant 1 : index
    %c0_250 = arith.constant 0 : index
    %c0_251 = arith.constant 0 : index
    %591 = vector.load %arg3[%c1_249, %c0_250, %c0_251] : memref<2x2x32xf32, #tpu.memory_space<vmem>>, vector<1x2x32xf32>
    %592 = vector.shape_cast %591 : vector<1x2x32xf32> to vector<2x32xf32>
    %593 = vector.shape_cast %590 : vector<2x32xf32> to vector<1x2x32xf32>
    tpu.vector_store %arg3[%c1_249, %c0_250, %c0_251], %593 {strides = array<i32>} : memref<2x2x32xf32, #tpu.memory_space<vmem>>, vector<1x2x32xf32>,
    return
  }
}

</mosaic_0001>

<llo_original>
// kernel: tpu_custom_call.1
$region0: #{tpu_custom_call.1}
  #allocation0 [shape = 'u32[]', space=smem, size = 0x4, offset = 0x4, fixed_abs, tag = 'smem constant byte address 0x4 - core index']
  #allocation1 [shape = 'u32[144,128]{1,0:T(1,128)}', space=vmem, size = 0x12000, scoped, tag = 'internal scratch']
  %s0 = inlined_call_operand.vmem [shape: f32[2,2,8,32], index: 0, kind: input, shape index: {}]
  %s1 = inlined_call_operand.vmem [shape: f32[2,664,32], index: 1, kind: input, shape index: {}]
  %s2 = inlined_call_operand.vmem [shape: f32[2,104,128], index: 2, kind: input, shape index: {}]
  %s3 = inlined_call_operand.hbm [shape: f32[2,2,32], index: 3, kind: output, shape index: {}]
  %s4 = sld [smem:[#allocation0]]
  $region22: #{tpu_custom_call.1} parent=0
    _
  %s6 = ssub.s32 1, %s4
  %s7 = scalar_select 0, %s6, %s4
  $region1: #{tpu_custom_call.1} parent=0
    #allocation2 [shape = 'u8[2048]{0}', space=vmem, size = 0x800, scoped, tag = 'output window, operand 0, single buffered']
    #allocation3 [shape = 's32[1]{0}', space=sflag, size = 0x4, scoped, tag = 'scoped memory for tpu_custom_call.1']
    %8 = vsyncpa [#allocation3], 0
    // Predicated region
    $region2: #{tpu_custom_call.1} parent=1 // pred_check
      _
    $region3: #{tpu_custom_call.1} parent=1 // pred_check_branch
      %10 = sbr.rel (0) target = $region5
    $region4: #{tpu_custom_call.1} parent=1 // pred_region
      _
    $region5: #{tpu_custom_call.1} parent=1 // pred_fallthru
      _
    // Predicated region
    $region6: #{tpu_custom_call.1} parent=1 // pred_check
      _
    $region7: #{tpu_custom_call.1} parent=1 // pred_check_branch
      %12 = sbr.rel (0) target = $region9
    $region8: #{tpu_custom_call.1} parent=1 // pred_region
      _
    $region9: #{tpu_custom_call.1} parent=1 // pred_fallthru
      _
    // Predicated region
    $region10: #{tpu_custom_call.1} parent=1 // pred_check
      _
    $region11: #{tpu_custom_call.1} parent=1 // pred_check_branch
      %14 = sbr.rel (0) target = $region13
    $region12: #{tpu_custom_call.1} parent=1 // pred_region
      _
    $region13: #{tpu_custom_call.1} parent=1 // pred_fallthru
      _
    %v16 = vld [vmem:[%s1] sm:$0xff]
    %v17 = vld [vmem:[%s0] sm:$0xff]
    %v18 = vld [vmem:[%s0 + $0x8] sm:$0xff]
    %v19 = vmul.f32 %v17, 5.656854
    %v20 = vmul.f32 %v18, 5.656854
    %v21 = vadd.f32 %v19, %v16
    %v22 = vadd.f32 %v20, %v16
    %v23 = vld [vmem:[%s1 + $0x8] sm:$0x1]
    %v24 = vld [vmem:[%s1 + $0x10] sm:$0x1]
    %vm25 = vcmask 261120
    %v26 = vsel %vm25, %v21, 0.0
    %27 = vadd.xlane.f32.xlu0 %v26
    %v28 = vpop.xlane.xlu0 %27
    %v29 = vsel %vm25, %v22, 0.0
    %30 = vadd.xlane.f32.xlu0 %v29
    %v31 = vpop.xlane.xlu0 %30
    %v32 = vrcp.pop 32.0
    %v33 = vmul.f32 %v28, %v32
    %v34 = vmul.f32 %v31, %v32
    %v35 = vsub.f32 %v21, %v33
    %v36 = vsub.f32 %v22, %v34
    %v37 = vmul.f32 %v35, %v35
    %v38 = vmul.f32 %v36, %v36
    %v39 = vsel %vm25, %v37, 0.0
    %40 = vadd.xlane.f32.xlu0 %v39
    %v41 = vpop.xlane.xlu0 %40
    %v42 = vsel %vm25, %v38, 0.0
    %43 = vadd.xlane.f32.xlu0 %v42
    %v44 = vpop.xlane.xlu0 %43
    %v45 = vmul.f32 %v41, %v32
    %v46 = vmul.f32 %v44, %v32
    %v47 = vadd.f32 %v45, 1e-05
    %v48 = vadd.f32 %v46, 1e-05
    %v49 = vrsqrt.pop %v47
    %v50 = vrsqrt.pop %v48
    %v51 = vmul.f32 %v35, %v49
    %v52 = vmul.f32 %v36, %v50
    %v53 = vlaneseq
    %v54 = vshrl.u32 %v53, 7
    %v55 = vsub.s32 0, %v54
    %v56 = vrot.slane %v23, %v55
    %v57 = vmul.f32 %v51, %v56
    %v58 = vmul.f32 %v52, %v56
    %v59 = vlaneseq
    %v60 = vshrl.u32 %v59, 7
    %v61 = vsub.s32 0, %v60
    %v62 = vrot.slane %v24, %v61
    %v63 = vadd.f32 %v57, %v62
    %v64 = vadd.f32 %v58, %v62
    %v65 = vld [vmem:[%s1 + $0x18] sm:$0xff]
    %v66 = vld [vmem:[%s1 + $0x20] sm:$0xff]
    %v67 = vld [vmem:[%s1 + $0x28] sm:$0xff]
    %v68 = vld [vmem:[%s1 + $0x30] sm:$0xff]
    %v69 = vld [vmem:[%s1 + $0x38] sm:$0xff]
    %v70 = vld [vmem:[%s1 + $0x40] sm:$0xff]
    %v71 = vld [vmem:[%s1 + $0x48] sm:$0xff]
    %v72 = vld [vmem:[%s1 + $0x50] sm:$0xff]
    %v73 = vld [vmem:[%s1 + $0x58] sm:$0xff]
    %v74 = vld [vmem:[%s1 + $0x60] sm:$0xff]
    %v75 = vld [vmem:[%s1 + $0x68] sm:$0xff]
    %v76 = vld [vmem:[%s1 + $0x70] sm:$0xff]
    %v77 = vld [vmem:[%s2] sm:$0x1]
    %v78 = vpack.c.bf16 %v64, %v63
    %v79 = vpack.c.bf16 %v66, %v65
    %v80 = vpack.c.bf16 %v68, %v67
    %v81 = vpack.c.bf16 %v70, %v69
    %v82 = vpack.c.bf16 %v72, %v71
    %v83 = vpack.c.bf16 %v74, %v73
    %v84 = vpack.c.bf16 %v76, %v75
    %v85 = vlaneseq
    %v86 = vshrl.u32 %v85, 7
    %v87 = vsub.s32 0, %v86
    %v88 = vrot.slane %v77, %v87
    %v90 = vsel %vm25, %v78, 0
    %v93 = vsel %vm25, %v79, 0
    %v96 = vsel %vm25, %v80, 0
    %v99 = vsel %vm25, %v81, 0
    %v102 = vsel %vm25, %v82, 0
    %v105 = vsel %vm25, %v83, 0
    %v108 = vsel %vm25, %v84, 0
    %110 = vmatprep.subr.bf16.mxu0 0
    %111 = vmatpush1.bf16.xpose.msra.mxu0 %v93
    %112 = vmatprep.subr.bf16.mxu0 0
    %113 = vmatpush1.bf16.xpose.msra.mxu0 %v96
    %114 = vmatprep.subr.bf16.mxu0 0
    %115 = vmatpush1.bf16.xpose.msra.mxu0 %v99
    %116 = vmatprep.subr.bf16.mxu0 0
    %117 = vmatpush1.bf16.xpose.msra.mxu0 %v102
    %118 = vmatprep.subr.bf16.mxu0 0
    %119 = vmatpush1.bf16.xpose.msra.mxu0 %v105
    %120 = vmatprep.subr.bf16.mxu0 0
    %121 = vmatpush1.bf16.xpose.msra.mxu0 %v108
    %122 = vmatprep.subr.bf16.mxu0 0
    %123 = vmatpush1.bf16.xpose.msra.mxu0 0
    %124 = vmatprep.subr.bf16.mxu0 0
    %125 = vmatpush1.bf16.xpose.msra.mxu0 0
    %126 = vmatprep.subr.bf16.mxu0 0
    %127 = vmatpush1.bf16.xpose.msra.mxu0 0
    %128 = vmatprep.subr.bf16.mxu0 0
    %129 = vmatpush1.bf16.xpose.msra.mxu0 0
    %130 = vmatprep.subr.bf16.mxu0 0
    %131 = vmatpush1.bf16.xpose.msra.mxu0 0
    %132 = vmatprep.subr.bf16.mxu0 0
    %133 = vmatpush1.bf16.xpose.msra.mxu0 0
    %134 = vmatprep.subr.bf16.mxu0 0
    %135 = vmatpush1.bf16.xpose.msra.mxu0 0
    %136 = vmatprep.subr.bf16.mxu0 0
    %137 = vmatpush1.bf16.xpose.msra.mxu0 0
    %138 = vmatprep.subr.bf16.mxu0 0
    %139 = vmatpush1.bf16.xpose.msra.mxu0 0
    %140 = vmatprep.subr.bf16.mxu0 0
    %141 = vmatpush1.bf16.xpose.msra.mxu0 0
    %142 = vmatprep.mubr.bf16.mxu0 0
    %143 = vmatmul.mubr.bf16.gmra.mrb[0].mxu0 %v90
    %v144 = vpop.f32.mrb[0].mxu0
    %v145 = vadd.f32 %v88, %v144
    %v146 = vpop.f32.mrb[0].mxu0
    %v147 = vpop.f32.mrb[0].mxu0
    %v148 = vadd.f32 %v88, %v147
    %v149 = vpop.f32.mrb[0].mxu0
    %150 = vdwg.mxu0
    %153 = vrot.lane.b32.xlu0 %v145, 104
    %v154 = vpop.permute.xlu0 %153
    %155 = vrot.lane.b32.xlu0 %v148, 104
    %v156 = vpop.permute.xlu0 %155
    %159 = vrot.lane.b32.xlu0 %v145, 80
    %v160 = vpop.permute.xlu0 %159
    %161 = vrot.lane.b32.xlu0 %v148, 80
    %v162 = vpop.permute.xlu0 %161
    %165 = vrot.lane.b32.xlu0 %v145, 56
    %v166 = vpop.permute.xlu0 %165
    %167 = vrot.lane.b32.xlu0 %v148, 56
    %v168 = vpop.permute.xlu0 %167
    %v171 = vpack.c.bf16 %v145, %v145
    %v172 = vpack.c.bf16 %v148, %v148
    %v173 = vpack.c.bf16 %v154, %v154
    %v174 = vpack.c.bf16 %v156, %v156
    %v175 = vpack.c.bf16 %v160, %v160
    %v176 = vpack.c.bf16 %v162, %v162
    %v177 = vpack.c.bf16 %v166, %v166
    %v178 = vpack.c.bf16 %v168, %v168
    %180 = vrot.lane.b32.xlu0 %v171, 120
    %v181 = vpop.permute.xlu0 %180
    %vm182 = vcmask 64512
    %v184 = vsel %vm182, %v171, 0
    %v187 = vsel %vm182, %v181, 0
    %189 = vmatprep.subr.bf16.mxu0 0
    %190 = vmatpush1.bf16.xpose.msra.mxu0 %v187
    %191 = vmatprep.subr.bf16.mxu0 0
    %192 = vmatpush1.bf16.xpose.msra.mxu0 0
    %193 = vmatprep.subr.bf16.mxu0 0
    %194 = vmatpush1.bf16.xpose.msra.mxu0 0
    %195 = vmatprep.subr.bf16.mxu0 0
    %196 = vmatpush1.bf16.xpose.msra.mxu0 0
    %197 = vmatprep.subr.bf16.mxu0 0
    %198 = vmatpush1.bf16.xpose.msra.mxu0 0
    %199 = vmatprep.subr.bf16.mxu0 0
    %200 = vmatpush1.bf16.xpose.msra.mxu0 0
    %201 = vmatprep.subr.bf16.mxu0 0
    %202 = vmatpush1.bf16.xpose.msra.mxu0 0
    %203 = vmatprep.subr.bf16.mxu0 0
    %204 = vmatpush1.bf16.xpose.msra.mxu0 0
    %205 = vmatprep.subr.bf16.mxu0 0
    %206 = vmatpush1.bf16.xpose.msra.mxu0 0
    %207 = vmatprep.subr.bf16.mxu0 0
    %208 = vmatpush1.bf16.xpose.msra.mxu0 0
    %209 = vmatprep.subr.bf16.mxu0 0
    %210 = vmatpush1.bf16.xpose.msra.mxu0 0
    %211 = vmatprep.subr.bf16.mxu0 0
    %212 = vmatpush1.bf16.xpose.msra.mxu0 0
    %213 = vmatprep.subr.bf16.mxu0 0
    %214 = vmatpush1.bf16.xpose.msra.mxu0 0
    %215 = vmatprep.subr.bf16.mxu0 0
    %216 = vmatpush1.bf16.xpose.msra.mxu0 0
    %217 = vmatprep.subr.bf16.mxu0 0
    %218 = vmatpush1.bf16.xpose.msra.mxu0 0
    %219 = vmatprep.subr.bf16.mxu0 0
    %220 = vmatpush1.bf16.xpose.msra.mxu0 0
    %221 = vmatprep.mubr.bf16.mxu0 0
    %222 = vmatmul.mubr.bf16.gmra.mrb[0].mxu0 %v184
    %v223 = vpop.f32.mrb[0].mxu0
    %v224 = vadd.f32 0.0, %v223
    %v225 = vpop.f32.mrb[0].mxu0
    %v226 = vpop.f32.mrb[0].mxu0
    %v227 = vpop.f32.mrb[0].mxu0
    %228 = vdwg.mxu0
    %230 = vrot.lane.b32.xlu0 %v172, 120
    %v231 = vpop.permute.xlu0 %230
    %v233 = vsel %vm182, %v172, 0
    %v236 = vsel %vm182, %v231, 0
    %238 = vmatprep.subr.bf16.mxu0 0
    %239 = vmatpush1.bf16.xpose.msra.mxu0 %v236
    %240 = vmatprep.subr.bf16.mxu0 0
    %241 = vmatpush1.bf16.xpose.msra.mxu0 0
    %242 = vmatprep.subr.bf16.mxu0 0
    %243 = vmatpush1.bf16.xpose.msra.mxu0 0
    %244 = vmatprep.subr.bf16.mxu0 0
    %245 = vmatpush1.bf16.xpose.msra.mxu0 0
    %246 = vmatprep.subr.bf16.mxu0 0
    %247 = vmatpush1.bf16.xpose.msra.mxu0 0
    %248 = vmatprep.subr.bf16.mxu0 0
    %249 = vmatpush1.bf16.xpose.msra.mxu0 0
    %250 = vmatprep.subr.bf16.mxu0 0
    %251 = vmatpush1.bf16.xpose.msra.mxu0 0
    %252 = vmatprep.subr.bf16.mxu0 0
    %253 = vmatpush1.bf16.xpose.msra.mxu0 0
    %254 = vmatprep.subr.bf16.mxu0 0
    %255 = vmatpush1.bf16.xpose.msra.mxu0 0
    %256 = vmatprep.subr.bf16.mxu0 0
    %257 = vmatpush1.bf16.xpose.msra.mxu0 0
    %258 = vmatprep.subr.bf16.mxu0 0
    %259 = vmatpush1.bf16.xpose.msra.mxu0 0
    %260 = vmatprep.subr.bf16.mxu0 0
    %261 = vmatpush1.bf16.xpose.msra.mxu0 0
    %262 = vmatprep.subr.bf16.mxu0 0
    %263 = vmatpush1.bf16.xpose.msra.mxu0 0
    %264 = vmatprep.subr.bf16.mxu0 0
    %265 = vmatpush1.bf16.xpose.msra.mxu0 0
    %266 = vmatprep.subr.bf16.mxu0 0
    %267 = vmatpush1.bf16.xpose.msra.mxu0 0
    %268 = vmatprep.subr.bf16.mxu0 0
    %269 = vmatpush1.bf16.xpose.msra.mxu0 0
    %270 = vmatprep.mubr.bf16.mxu0 0
    %271 = vmatmul.mubr.bf16.gmra.mrb[0].mxu0 %v233
    %v272 = vpop.f32.mrb[0].mxu0
    %v273 = vadd.f32 0.0, %v272
    %v274 = vpop.f32.mrb[0].mxu0
    %v275 = vpop.f32.mrb[0].mxu0
    %v276 = vpop.f32.mrb[0].mxu0
    %277 = vdwg.mxu0
    %279 = vrot.lane.b32.xlu0 %v173, 120
    %v280 = vpop.permute.xlu0 %279
    %v282 = vsel %vm182, %v173, 0
    %v285 = vsel %vm182, %v280, 0
    %287 = vmatprep.subr.bf16.mxu0 0
    %288 = vmatpush1.bf16.xpose.msra.mxu0 %v285
    %289 = vmatprep.subr.bf16.mxu0 0
    %290 = vmatpush1.bf16.xpose.msra.mxu0 0
    %291 = vmatprep.subr.bf16.mxu0 0
    %292 = vmatpush1.bf16.xpose.msra.mxu0 0
    %293 = vmatprep.subr.bf16.mxu0 0
    %294 = vmatpush1.bf16.xpose.msra.mxu0 0
    %295 = vmatprep.subr.bf16.mxu0 0
    %296 = vmatpush1.bf16.xpose.msra.mxu0 0
    %297 = vmatprep.subr.bf16.mxu0 0
    %298 = vmatpush1.bf16.xpose.msra.mxu0 0
    %299 = vmatprep.subr.bf16.mxu0 0
    %300 = vmatpush1.bf16.xpose.msra.mxu0 0
    %301 = vmatprep.subr.bf16.mxu0 0
    %302 = vmatpush1.bf16.xpose.msra.mxu0 0
    %303 = vmatprep.subr.bf16.mxu0 0
    %304 = vmatpush1.bf16.xpose.msra.mxu0 0
    %305 = vmatprep.subr.bf16.mxu0 0
    %306 = vmatpush1.bf16.xpose.msra.mxu0 0
    %307 = vmatprep.subr.bf16.mxu0 0
    %308 = vmatpush1.bf16.xpose.msra.mxu0 0
    %309 = vmatprep.subr.bf16.mxu0 0
    %310 = vmatpush1.bf16.xpose.msra.mxu0 0
    %311 = vmatprep.subr.bf16.mxu0 0
    %312 = vmatpush1.bf16.xpose.msra.mxu0 0
    %313 = vmatprep.subr.bf16.mxu0 0
    %314 = vmatpush1.bf16.xpose.msra.mxu0 0
    %315 = vmatprep.subr.bf16.mxu0 0
    %316 = vmatpush1.bf16.xpose.msra.mxu0 0
    %317 = vmatprep.subr.bf16.mxu0 0
    %318 = vmatpush1.bf16.xpose.msra.mxu0 0
    %319 = vmatprep.mubr.bf16.mxu0 0
    %320 = vmatmul.mubr.bf16.gmra.mrb[0].mxu0 %v282
    %v321 = vpop.f32.mrb[0].mxu0
    %v322 = vadd.f32 0.0, %v321
    %v323 = vpop.f32.mrb[0].mxu0
    %v324 = vpop.f32.mrb[0].mxu0
    %v325 = vpop.f32.mrb[0].mxu0
    %326 = vdwg.mxu0
    %328 = vrot.lane.b32.xlu0 %v174, 120
    %v329 = vpop.permute.xlu0 %328
    %v331 = vsel %vm182, %v174, 0
    %v334 = vsel %vm182, %v329, 0
    %336 = vmatprep.subr.bf16.mxu0 0
    %337 = vmatpush1.bf16.xpose.msra.mxu0 %v334
    %338 = vmatprep.subr.bf16.mxu0 0
    %339 = vmatpush1.bf16.xpose.msra.mxu0 0
    %340 = vmatprep.subr.bf16.mxu0 0
    %341 = vmatpush1.bf16.xpose.msra.mxu0 0
    %342 = vmatprep.subr.bf16.mxu0 0
    %343 = vmatpush1.bf16.xpose.msra.mxu0 0
    %344 = vmatprep.subr.bf16.mxu0 0
    %345 = vmatpush1.bf16.xpose.msra.mxu0 0
    %346 = vmatprep.subr.bf16.mxu0 0
    %347 = vmatpush1.bf16.xpose.msra.mxu0 0
    %348 = vmatprep.subr.bf16.mxu0 0
    %349 = vmatpush1.bf16.xpose.msra.mxu0 0
    %350 = vmatprep.subr.bf16.mxu0 0
    %351 = vmatpush1.bf16.xpose.msra.mxu0 0
    %352 = vmatprep.subr.bf16.mxu0 0
    %353 = vmatpush1.bf16.xpose.msra.mxu0 0
    %354 = vmatprep.subr.bf16.mxu0 0
    %355 = vmatpush1.bf16.xpose.msra.mxu0 0
    %356 = vmatprep.subr.bf16.mxu0 0
    %357 = vmatpush1.bf16.xpose.msra.mxu0 0
    %358 = vmatprep.subr.bf16.mxu0 0
    %359 = vmatpush1.bf16.xpose.msra.mxu0 0
    %360 = vmatprep.subr.bf16.mxu0 0
    %361 = vmatpush1.bf16.xpose.msra.mxu0 0
    %362 = vmatprep.subr.bf16.mxu0 0
    %363 = vmatpush1.bf16.xpose.msra.mxu0 0
    %364 = vmatprep.subr.bf16.mxu0 0
    %365 = vmatpush1.bf16.xpose.msra.mxu0 0
    %366 = vmatprep.subr.bf16.mxu0 0
    %367 = vmatpush1.bf16.xpose.msra.mxu0 0
    %368 = vmatprep.mubr.bf16.mxu0 0
    %369 = vmatmul.mubr.bf16.gmra.mrb[0].mxu0 %v331
    %v370 = vpop.f32.mrb[0].mxu0
    %v371 = vadd.f32 0.0, %v370
    %v372 = vpop.f32.mrb[0].mxu0
    %v373 = vpop.f32.mrb[0].mxu0
    %v374 = vpop.f32.mrb[0].mxu0
    %375 = vdwg.mxu0
    %377 = vrot.lane.b32.xlu0 %v175, 120
    %v378 = vpop.permute.xlu0 %377
    %v380 = vsel %vm182, %v175, 0
    %v383 = vsel %vm182, %v378, 0
    %385 = vmatprep.subr.bf16.mxu0 0
    %386 = vmatpush1.bf16.xpose.msra.mxu0 %v383
    %387 = vmatprep.subr.bf16.mxu0 0
    %388 = vmatpush1.bf16.xpose.msra.mxu0 0
    %389 = vmatprep.subr.bf16.mxu0 0
    %390 = vmatpush1.bf16.xpose.msra.mxu0 0
    %391 = vmatprep.subr.bf16.mxu0 0
    %392 = vmatpush1.bf16.xpose.msra.mxu0 0
    %393 = vmatprep.subr.bf16.mxu0 0
    %394 = vmatpush1.bf16.xpose.msra.mxu0 0
    %395 = vmatprep.subr.bf16.mxu0 0
    %396 = vmatpush1.bf16.xpose.msra.mxu0 0
    %397 = vmatprep.subr.bf16.mxu0 0
    %398 = vmatpush1.bf16.xpose.msra.mxu0 0
    %399 = vmatprep.subr.bf16.mxu0 0
    %400 = vmatpush1.bf16.xpose.msra.mxu0 0
    %401 = vmatprep.subr.bf16.mxu0 0
    %402 = vmatpush1.bf16.xpose.msra.mxu0 0
    %403 = vmatprep.subr.bf16.mxu0 0
    %404 = vmatpush1.bf16.xpose.msra.mxu0 0
    %405 = vmatprep.subr.bf16.mxu0 0
    %406 = vmatpush1.bf16.xpose.msra.mxu0 0
    %407 = vmatprep.subr.bf16.mxu0 0
    %408 = vmatpush1.bf16.xpose.msra.mxu0 0
    %409 = vmatprep.subr.bf16.mxu0 0
    %410 = vmatpush1.bf16.xpose.msra.mxu0 0
    %411 = vmatprep.subr.bf16.mxu0 0
    %412 = vmatpush1.bf16.xpose.msra.mxu0 0
    %413 = vmatprep.subr.bf16.mxu0 0
    %414 = vmatpush1.bf16.xpose.msra.mxu0 0
    %415 = vmatprep.subr.bf16.mxu0 0
    %416 = vmatpush1.bf16.xpose.msra.mxu0 0
    %417 = vmatprep.mubr.bf16.mxu0 0
    %418 = vmatmul.mubr.bf16.gmra.mrb[0].mxu0 %v380
    %v419 = vpop.f32.mrb[0].mxu0
    %v420 = vadd.f32 0.0, %v419
    %v421 = vpop.f32.mrb[0].mxu0
    %v422 = vpop.f32.mrb[0].mxu0
    %v423 = vpop.f32.mrb[0].mxu0
    %424 = vdwg.mxu0
    %426 = vrot.lane.b32.xlu0 %v176, 120
    %v427 = vpop.permute.xlu0 %426
    %v429 = vsel %vm182, %v176, 0
    %v432 = vsel %vm182, %v427, 0
    %434 = vmatprep.subr.bf16.mxu0 0
    %435 = vmatpush1.bf16.xpose.msra.mxu0 %v432
    %436 = vmatprep.subr.bf16.mxu0 0
    %437 = vmatpush1.bf16.xpose.msra.mxu0 0
    %438 = vmatprep.subr.bf16.mxu0 0
    %439 = vmatpush1.bf16.xpose.msra.mxu0 0
    %440 = vmatprep.subr.bf16.mxu0 0
    %441 = vmatpush1.bf16.xpose.msra.mxu0 0
    %442 = vmatprep.subr.bf16.mxu0 0
    %443 = vmatpush1.bf16.xpose.msra.mxu0 0
    %444 = vmatprep.subr.bf16.mxu0 0
    %445 = vmatpush1.bf16.xpose.msra.mxu0 0
    %446 = vmatprep.subr.bf16.mxu0 0
    %447 = vmatpush1.bf16.xpose.msra.mxu0 0
    %448 = vmatprep.subr.bf16.mxu0 0
    %449 = vmatpush1.bf16.xpose.msra.mxu0 0
    %450 = vmatprep.subr.bf16.mxu0 0
    %451 = vmatpush1.bf16.xpose.msra.mxu0 0
    %452 = vmatprep.subr.bf16.mxu0 0
    %453 = vmatpush1.bf16.xpose.msra.mxu0 0
    %454 = vmatprep.subr.bf16.mxu0 0
    %455 = vmatpush1.bf16.xpose.msra.mxu0 0
    %456 = vmatprep.subr.bf16.mxu0 0
    %457 = vmatpush1.bf16.xpose.msra.mxu0 0
    %458 = vmatprep.subr.bf16.mxu0 0
    %459 = vmatpush1.bf16.xpose.msra.mxu0 0
    %460 = vmatprep.subr.bf16.mxu0 0
    %461 = vmatpush1.bf16.xpose.msra.mxu0 0
    %462 = vmatprep.subr.bf16.mxu0 0
    %463 = vmatpush1.bf16.xpose.msra.mxu0 0
    %464 = vmatprep.subr.bf16.mxu0 0
    %465 = vmatpush1.bf16.xpose.msra.mxu0 0
    %466 = vmatprep.mubr.bf16.mxu0 0
    %467 = vmatmul.mubr.bf16.gmra.mrb[0].mxu0 %v429
    %v468 = vpop.f32.mrb[0].mxu0
    %v469 = vadd.f32 0.0, %v468
    %v470 = vpop.f32.mrb[0].mxu0
    %v471 = vpop.f32.mrb[0].mxu0
    %v472 = vpop.f32.mrb[0].mxu0
    %473 = vdwg.mxu0
    %475 = vrot.lane.b32.xlu0 %v177, 120
    %v476 = vpop.permute.xlu0 %475
    %v478 = vsel %vm182, %v177, 0
    %v481 = vsel %vm182, %v476, 0
    %483 = vmatprep.subr.bf16.mxu0 0
    %484 = vmatpush1.bf16.xpose.msra.mxu0 %v481
    %485 = vmatprep.subr.bf16.mxu0 0
    %486 = vmatpush1.bf16.xpose.msra.mxu0 0
    %487 = vmatprep.subr.bf16.mxu0 0
    %488 = vmatpush1.bf16.xpose.msra.mxu0 0
    %489 = vmatprep.subr.bf16.mxu0 0
    %490 = vmatpush1.bf16.xpose.msra.mxu0 0
    %491 = vmatprep.subr.bf16.mxu0 0
    %492 = vmatpush1.bf16.xpose.msra.mxu0 0
    %493 = vmatprep.subr.bf16.mxu0 0
    %494 = vmatpush1.bf16.xpose.msra.mxu0 0
    %495 = vmatprep.subr.bf16.mxu0 0
    %496 = vmatpush1.bf16.xpose.msra.mxu0 0
    %497 = vmatprep.subr.bf16.mxu0 0
    %498 = vmatpush1.bf16.xpose.msra.mxu0 0
    %499 = vmatprep.subr.bf16.mxu0 0
    %500 = vmatpush1.bf16.xpose.msra.mxu0 0
    %501 = vmatprep.subr.bf16.mxu0 0
    %502 = vmatpush1.bf16.xpose.msra.mxu0 0
    %503 = vmatprep.subr.bf16.mxu0 0
    %504 = vmatpush1.bf16.xpose.msra.mxu0 0
    %505 = vmatprep.subr.bf16.mxu0 0
    %506 = vmatpush1.bf16.xpose.msra.mxu0 0
    %507 = vmatprep.subr.bf16.mxu0 0
    %508 = vmatpush1.bf16.xpose.msra.mxu0 0
    %509 = vmatprep.subr.bf16.mxu0 0
    %510 = vmatpush1.bf16.xpose.msra.mxu0 0
    %511 = vmatprep.subr.bf16.mxu0 0
    %512 = vmatpush1.bf16.xpose.msra.mxu0 0
    %513 = vmatprep.subr.bf16.mxu0 0
    %514 = vmatpush1.bf16.xpose.msra.mxu0 0
    %515 = vmatprep.mubr.bf16.mxu0 0
    %516 = vmatmul.mubr.bf16.gmra.mrb[0].mxu0 %v478
    %v517 = vpop.f32.mrb[0].mxu0
    %v518 = vadd.f32 0.0, %v517
    %v519 = vpop.f32.mrb[0].mxu0
    %v520 = vpop.f32.mrb[0].mxu0
    %v521 = vpop.f32.mrb[0].mxu0
    %522 = vdwg.mxu0
    %524 = vrot.lane.b32.xlu0 %v178, 120
    %v525 = vpop.permute.xlu0 %524
    %v527 = vsel %vm182, %v178, 0
    %v530 = vsel %vm182, %v525, 0
    %532 = vmatprep.subr.bf16.mxu0 0
    %533 = vmatpush1.bf16.xpose.msra.mxu0 %v530
    %534 = vmatprep.subr.bf16.mxu0 0
    %535 = vmatpush1.bf16.xpose.msra.mxu0 0
    %536 = vmatprep.subr.bf16.mxu0 0
    %537 = vmatpush1.bf16.xpose.msra.mxu0 0
    %538 = vmatprep.subr.bf16.mxu0 0
    %539 = vmatpush1.bf16.xpose.msra.mxu0 0
    %540 = vmatprep.subr.bf16.mxu0 0
    %541 = vmatpush1.bf16.xpose.msra.mxu0 0
    %542 = vmatprep.subr.bf16.mxu0 0
    %543 = vmatpush1.bf16.xpose.msra.mxu0 0
    %544 = vmatprep.subr.bf16.mxu0 0
    %545 = vmatpush1.bf16.xpose.msra.mxu0 0
    %546 = vmatprep.subr.bf16.mxu0 0
    %547 = vmatpush1.bf16.xpose.msra.mxu0 0
    %548 = vmatprep.subr.bf16.mxu0 0
    %549 = vmatpush1.bf16.xpose.msra.mxu0 0
    %550 = vmatprep.subr.bf16.mxu0 0
    %551 = vmatpush1.bf16.xpose.msra.mxu0 0
    %552 = vmatprep.subr.bf16.mxu0 0
    %553 = vmatpush1.bf16.xpose.msra.mxu0 0
    %554 = vmatprep.subr.bf16.mxu0 0
    %555 = vmatpush1.bf16.xpose.msra.mxu0 0
    %556 = vmatprep.subr.bf16.mxu0 0
    %557 = vmatpush1.bf16.xpose.msra.mxu0 0
    %558 = vmatprep.subr.bf16.mxu0 0
    %559 = vmatpush1.bf16.xpose.msra.mxu0 0
    %560 = vmatprep.subr.bf16.mxu0 0
    %561 = vmatpush1.bf16.xpose.msra.mxu0 0
    %562 = vmatprep.subr.bf16.mxu0 0
    %563 = vmatpush1.bf16.xpose.msra.mxu0 0
    %564 = vmatprep.mubr.bf16.mxu0 0
    %565 = vmatmul.mubr.bf16.gmra.mrb[0].mxu0 %v527
    %v566 = vpop.f32.mrb[0].mxu0
    %v567 = vadd.f32 0.0, %v566
    %v568 = vpop.f32.mrb[0].mxu0
    %v569 = vpop.f32.mrb[0].mxu0
    %v570 = vpop.f32.mrb[0].mxu0
    %571 = vdwg.mxu0
    %v572 = vsel %vm182, %v224, -inf
    %573 = vmax.xlane.f32.xlu0 %v572
    %v574 = vpop.xlane.xlu0 %573
    %v575 = vsel %vm182, %v273, -inf
    %576 = vmax.xlane.f32.xlu0 %v575
    %v577 = vpop.xlane.xlu0 %576
    %v578 = vsel %vm182, %v322, -inf
    %579 = vmax.xlane.f32.xlu0 %v578
    %v580 = vpop.xlane.xlu0 %579
    %v581 = vsel %vm182, %v371, -inf
    %582 = vmax.xlane.f32.xlu0 %v581
    %v583 = vpop.xlane.xlu0 %582
    %v584 = vsel %vm182, %v420, -inf
    %585 = vmax.xlane.f32.xlu0 %v584
    %v586 = vpop.xlane.xlu0 %585
    %v587 = vsel %vm182, %v469, -inf
    %588 = vmax.xlane.f32.xlu0 %v587
    %v589 = vpop.xlane.xlu0 %588
    %v590 = vsel %vm182, %v518, -inf
    %591 = vmax.xlane.f32.xlu0 %v590
    %v592 = vpop.xlane.xlu0 %591
    %v593 = vsel %vm182, %v567, -inf
    %594 = vmax.xlane.f32.xlu0 %v593
    %v595 = vpop.xlane.xlu0 %594
    %v596 = vsub.f32 %v224, %v574
    %v597 = vsub.f32 %v273, %v577
    %v598 = vsub.f32 %v322, %v580
    %v599 = vsub.f32 %v371, %v583
    %v600 = vsub.f32 %v420, %v586
    %v601 = vsub.f32 %v469, %v589
    %v602 = vsub.f32 %v518, %v592
    %v603 = vsub.f32 %v567, %v595
    %v604 = vmul.f32 %v596, 1.442695
    %v605 = vpow.pop %v604
    %v606 = vmul.f32 %v597, 1.442695
    %v607 = vpow.pop %v606
    %v608 = vmul.f32 %v598, 1.442695
    %v609 = vpow.pop %v608
    %v610 = vmul.f32 %v599, 1.442695
    %v611 = vpow.pop %v610
    %v612 = vmul.f32 %v600, 1.442695
    %v613 = vpow.pop %v612
    %v614 = vmul.f32 %v601, 1.442695
    %v615 = vpow.pop %v614
    %v616 = vmul.f32 %v602, 1.442695
    %v617 = vpow.pop %v616
    %v618 = vmul.f32 %v603, 1.442695
    %v619 = vpow.pop %v618
    %v620 = vsel %vm182, %v605, 0.0
    %621 = vadd.xlane.f32.xlu0 %v620
    %v622 = vpop.xlane.xlu0 %621
    %v623 = vsel %vm182, %v607, 0.0
    %624 = vadd.xlane.f32.xlu0 %v623
    %v625 = vpop.xlane.xlu0 %624
    %v626 = vsel %vm182, %v609, 0.0
    %627 = vadd.xlane.f32.xlu0 %v626
    %v628 = vpop.xlane.xlu0 %627
    %v629 = vsel %vm182, %v611, 0.0
    %630 = vadd.xlane.f32.xlu0 %v629
    %v631 = vpop.xlane.xlu0 %630
    %v632 = vsel %vm182, %v613, 0.0
    %633 = vadd.xlane.f32.xlu0 %v632
    %v634 = vpop.xlane.xlu0 %633
    %v635 = vsel %vm182, %v615, 0.0
    %636 = vadd.xlane.f32.xlu0 %v635
    %v637 = vpop.xlane.xlu0 %636
    %v638 = vsel %vm182, %v617, 0.0
    %639 = vadd.xlane.f32.xlu0 %v638
    %v640 = vpop.xlane.xlu0 %639
    %v641 = vsel %vm182, %v619, 0.0
    %642 = vadd.xlane.f32.xlu0 %v641
    %v643 = vpop.xlane.xlu0 %642
    %v644 = vrcp.pop %v622
    %v645 = vmul.f32 %v605, %v644
    %v646 = vrcp.pop %v625
    %v647 = vmul.f32 %v607, %v646
    %v648 = vrcp.pop %v628
    %v649 = vmul.f32 %v609, %v648
    %v650 = vrcp.pop %v631
    %v651 = vmul.f32 %v611, %v650
    %v652 = vrcp.pop %v634
    %v653 = vmul.f32 %v613, %v652
    %v654 = vrcp.pop %v637
    %v655 = vmul.f32 %v615, %v654
    %v656 = vrcp.pop %v640
    %v657 = vmul.f32 %v617, %v656
    %v658 = vrcp.pop %v643
    %v659 = vmul.f32 %v619, %v658
    %v660 = vpack.c.bf16 %v645, %v645
    %v661 = vpack.c.bf16 %v647, %v647
    %v662 = vpack.c.bf16 %v649, %v649
    %v663 = vpack.c.bf16 %v651, %v651
    %v664 = vpack.c.bf16 %v653, %v653
    %v665 = vpack.c.bf16 %v655, %v655
    %v666 = vpack.c.bf16 %v657, %v657
    %v667 = vpack.c.bf16 %v659, %v659
    %668 = vrot.lane.b32.xlu0 %v171, 112
    %v669 = vpop.permute.xlu0 %668
    %v671 = vsel %vm182, %v660, 0
    %vm673 = vcmask 1043456
    %v675 = vsel %vm673, %v669, 0
    %677 = vmatprep.subr.bf16.mxu0 0
    %678 = vmatpush1.bf16.msra.mxu0 %v675
    %679 = vmatprep.subr.bf16.mxu0 0
    %680 = vmatpush1.bf16.msra.mxu0 0
    %681 = vmatprep.subr.bf16.mxu0 0
    %682 = vmatpush1.bf16.msra.mxu0 0
    %683 = vmatprep.subr.bf16.mxu0 0
    %684 = vmatpush1.bf16.msra.mxu0 0
    %685 = vmatprep.subr.bf16.mxu0 0
    %686 = vmatpush1.bf16.msra.mxu0 0
    %687 = vmatprep.subr.bf16.mxu0 0
    %688 = vmatpush1.bf16.msra.mxu0 0
    %689 = vmatprep.subr.bf16.mxu0 0
    %690 = vmatpush1.bf16.msra.mxu0 0
    %691 = vmatprep.subr.bf16.mxu0 0
    %692 = vmatpush1.bf16.msra.mxu0 0
    %693 = vmatprep.subr.bf16.mxu0 0
    %694 = vmatpush1.bf16.msra.mxu0 0
    %695 = vmatprep.subr.bf16.mxu0 0
    %696 = vmatpush1.bf16.msra.mxu0 0
    %697 = vmatprep.subr.bf16.mxu0 0
    %698 = vmatpush1.bf16.msra.mxu0 0
    %699 = vmatprep.subr.bf16.mxu0 0
    %700 = vmatpush1.bf16.msra.mxu0 0
    %701 = vmatprep.subr.bf16.mxu0 0
    %702 = vmatpush1.bf16.msra.mxu0 0
    %703 = vmatprep.subr.bf16.mxu0 0
    %704 = vmatpush1.bf16.msra.mxu0 0
    %705 = vmatprep.subr.bf16.mxu0 0
    %706 = vmatpush1.bf16.msra.mxu0 0
    %707 = vmatprep.subr.bf16.mxu0 0
    %708 = vmatpush1.bf16.msra.mxu0 0
    %709 = vmatprep.mubr.bf16.mxu0 0
    %710 = vmatmul.mubr.bf16.gmra.mrb[0].mxu0 %v671
    %v711 = vpop.f32.mrb[0].mxu0
    %v712 = vadd.f32 0.0, %v711
    %v713 = vpop.f32.mrb[0].mxu0
    %v714 = vpop.f32.mrb[0].mxu0
    %v715 = vpop.f32.mrb[0].mxu0
    %716 = vdwg.mxu0
    %717 = vrot.lane.b32.xlu0 %v172, 112
    %v718 = vpop.permute.xlu0 %717
    %v720 = vsel %vm182, %v661, 0
    %v723 = vsel %vm673, %v718, 0
    %725 = vmatprep.subr.bf16.mxu0 0
    %726 = vmatpush1.bf16.msra.mxu0 %v723
    %727 = vmatprep.subr.bf16.mxu0 0
    %728 = vmatpush1.bf16.msra.mxu0 0
    %729 = vmatprep.subr.bf16.mxu0 0
    %730 = vmatpush1.bf16.msra.mxu0 0
    %731 = vmatprep.subr.bf16.mxu0 0
    %732 = vmatpush1.bf16.msra.mxu0 0
    %733 = vmatprep.subr.bf16.mxu0 0
    %734 = vmatpush1.bf16.msra.mxu0 0
    %735 = vmatprep.subr.bf16.mxu0 0
    %736 = vmatpush1.bf16.msra.mxu0 0
    %737 = vmatprep.subr.bf16.mxu0 0
    %738 = vmatpush1.bf16.msra.mxu0 0
    %739 = vmatprep.subr.bf16.mxu0 0
    %740 = vmatpush1.bf16.msra.mxu0 0
    %741 = vmatprep.subr.bf16.mxu0 0
    %742 = vmatpush1.bf16.msra.mxu0 0
    %743 = vmatprep.subr.bf16.mxu0 0
    %744 = vmatpush1.bf16.msra.mxu0 0
    %745 = vmatprep.subr.bf16.mxu0 0
    %746 = vmatpush1.bf16.msra.mxu0 0
    %747 = vmatprep.subr.bf16.mxu0 0
    %748 = vmatpush1.bf16.msra.mxu0 0
    %749 = vmatprep.subr.bf16.mxu0 0
    %750 = vmatpush1.bf16.msra.mxu0 0
    %751 = vmatprep.subr.bf16.mxu0 0
    %752 = vmatpush1.bf16.msra.mxu0 0
    %753 = vmatprep.subr.bf16.mxu0 0
    %754 = vmatpush1.bf16.msra.mxu0 0
    %755 = vmatprep.subr.bf16.mxu0 0
    %756 = vmatpush1.bf16.msra.mxu0 0
    %757 = vmatprep.mubr.bf16.mxu0 0
    %758 = vmatmul.mubr.bf16.gmra.mrb[0].mxu0 %v720
    %v759 = vpop.f32.mrb[0].mxu0
    %v760 = vadd.f32 0.0, %v759
    %v761 = vpop.f32.mrb[0].mxu0
    %v762 = vpop.f32.mrb[0].mxu0
    %v763 = vpop.f32.mrb[0].mxu0
    %764 = vdwg.mxu0
    %765 = vrot.lane.b32.xlu0 %v173, 112
    %v766 = vpop.permute.xlu0 %765
    %v768 = vsel %vm182, %v662, 0
    %v771 = vsel %vm673, %v766, 0
    %773 = vmatprep.subr.bf16.mxu0 0
    %774 = vmatpush1.bf16.msra.mxu0 %v771
    %775 = vmatprep.subr.bf16.mxu0 0
    %776 = vmatpush1.bf16.msra.mxu0 0
    %777 = vmatprep.subr.bf16.mxu0 0
    %778 = vmatpush1.bf16.msra.mxu0 0
    %779 = vmatprep.subr.bf16.mxu0 0
    %780 = vmatpush1.bf16.msra.mxu0 0
    %781 = vmatprep.subr.bf16.mxu0 0
    %782 = vmatpush1.bf16.msra.mxu0 0
    %783 = vmatprep.subr.bf16.mxu0 0
    %784 = vmatpush1.bf16.msra.mxu0 0
    %785 = vmatprep.subr.bf16.mxu0 0
    %786 = vmatpush1.bf16.msra.mxu0 0
    %787 = vmatprep.subr.bf16.mxu0 0
    %788 = vmatpush1.bf16.msra.mxu0 0
    %789 = vmatprep.subr.bf16.mxu0 0
    %790 = vmatpush1.bf16.msra.mxu0 0
    %791 = vmatprep.subr.bf16.mxu0 0
    %792 = vmatpush1.bf16.msra.mxu0 0
    %793 = vmatprep.subr.bf16.mxu0 0
    %794 = vmatpush1.bf16.msra.mxu0 0
    %795 = vmatprep.subr.bf16.mxu0 0
    %796 = vmatpush1.bf16.msra.mxu0 0
    %797 = vmatprep.subr.bf16.mxu0 0
    %798 = vmatpush1.bf16.msra.mxu0 0
    %799 = vmatprep.subr.bf16.mxu0 0
    %800 = vmatpush1.bf16.msra.mxu0 0
    %801 = vmatprep.subr.bf16.mxu0 0
    %802 = vmatpush1.bf16.msra.mxu0 0
    %803 = vmatprep.subr.bf16.mxu0 0
    %804 = vmatpush1.bf16.msra.mxu0 0
    %805 = vmatprep.mubr.bf16.mxu0 0
    %806 = vmatmul.mubr.bf16.gmra.mrb[0].mxu0 %v768
    %v807 = vpop.f32.mrb[0].mxu0
    %v808 = vadd.f32 0.0, %v807
    %v809 = vpop.f32.mrb[0].mxu0
    %v810 = vpop.f32.mrb[0].mxu0
    %v811 = vpop.f32.mrb[0].mxu0
    %812 = vdwg.mxu0
    %813 = vrot.lane.b32.xlu0 %v174, 112
    %v814 = vpop.permute.xlu0 %813
    %v816 = vsel %vm182, %v663, 0
    %v819 = vsel %vm673, %v814, 0
    %821 = vmatprep.subr.bf16.mxu0 0
    %822 = vmatpush1.bf16.msra.mxu0 %v819
    %823 = vmatprep.subr.bf16.mxu0 0
    %824 = vmatpush1.bf16.msra.mxu0 0
    %825 = vmatprep.subr.bf16.mxu0 0
    %826 = vmatpush1.bf16.msra.mxu0 0
    %827 = vmatprep.subr.bf16.mxu0 0
    %828 = vmatpush1.bf16.msra.mxu0 0
    %829 = vmatprep.subr.bf16.mxu0 0
    %830 = vmatpush1.bf16.msra.mxu0 0
    %831 = vmatprep.subr.bf16.mxu0 0
    %832 = vmatpush1.bf16.msra.mxu0 0
    %833 = vmatprep.subr.bf16.mxu0 0
    %834 = vmatpush1.bf16.msra.mxu0 0
    %835 = vmatprep.subr.bf16.mxu0 0
    %836 = vmatpush1.bf16.msra.mxu0 0
    %837 = vmatprep.subr.bf16.mxu0 0
    %838 = vmatpush1.bf16.msra.mxu0 0
    %839 = vmatprep.subr.bf16.mxu0 0
    %840 = vmatpush1.bf16.msra.mxu0 0
    %841 = vmatprep.subr.bf16.mxu0 0
    %842 = vmatpush1.bf16.msra.mxu0 0
    %843 = vmatprep.subr.bf16.mxu0 0
    %844 = vmatpush1.bf16.msra.mxu0 0
    %845 = vmatprep.subr.bf16.mxu0 0
    %846 = vmatpush1.bf16.msra.mxu0 0
    %847 = vmatprep.subr.bf16.mxu0 0
    %848 = vmatpush1.bf16.msra.mxu0 0
    %849 = vmatprep.subr.bf16.mxu0 0
    %850 = vmatpush1.bf16.msra.mxu0 0
    %851 = vmatprep.subr.bf16.mxu0 0
    %852 = vmatpush1.bf16.msra.mxu0 0
    %853 = vmatprep.mubr.bf16.mxu0 0
    %854 = vmatmul.mubr.bf16.gmra.mrb[0].mxu0 %v816
    %v855 = vpop.f32.mrb[0].mxu0
    %v856 = vadd.f32 0.0, %v855
    %v857 = vpop.f32.mrb[0].mxu0
    %v858 = vpop.f32.mrb[0].mxu0
    %v859 = vpop.f32.mrb[0].mxu0
    %860 = vdwg.mxu0
    %861 = vrot.lane.b32.xlu0 %v175, 112
    %v862 = vpop.permute.xlu0 %861
    %v864 = vsel %vm182, %v664, 0
    %v867 = vsel %vm673, %v862, 0
    %869 = vmatprep.subr.bf16.mxu0 0
    %870 = vmatpush1.bf16.msra.mxu0 %v867
    %871 = vmatprep.subr.bf16.mxu0 0
    %872 = vmatpush1.bf16.msra.mxu0 0
    %873 = vmatprep.subr.bf16.mxu0 0
    %874 = vmatpush1.bf16.msra.mxu0 0
    %875 = vmatprep.subr.bf16.mxu0 0
    %876 = vmatpush1.bf16.msra.mxu0 0
    %877 = vmatprep.subr.bf16.mxu0 0
    %878 = vmatpush1.bf16.msra.mxu0 0
    %879 = vmatprep.subr.bf16.mxu0 0
    %880 = vmatpush1.bf16.msra.mxu0 0
    %881 = vmatprep.subr.bf16.mxu0 0
    %882 = vmatpush1.bf16.msra.mxu0 0
    %883 = vmatprep.subr.bf16.mxu0 0
    %884 = vmatpush1.bf16.msra.mxu0 0
    %885 = vmatprep.subr.bf16.mxu0 0
    %886 = vmatpush1.bf16.msra.mxu0 0
    %887 = vmatprep.subr.bf16.mxu0 0
    %888 = vmatpush1.bf16.msra.mxu0 0
    %889 = vmatprep.subr.bf16.mxu0 0
    %890 = vmatpush1.bf16.msra.mxu0 0
    %891 = vmatprep.subr.bf16.mxu0 0
    %892 = vmatpush1.bf16.msra.mxu0 0
    %893 = vmatprep.subr.bf16.mxu0 0
    %894 = vmatpush1.bf16.msra.mxu0 0
    %895 = vmatprep.subr.bf16.mxu0 0
    %896 = vmatpush1.bf16.msra.mxu0 0
    %897 = vmatprep.subr.bf16.mxu0 0
    %898 = vmatpush1.bf16.msra.mxu0 0
    %899 = vmatprep.subr.bf16.mxu0 0
    %900 = vmatpush1.bf16.msra.mxu0 0
    %901 = vmatprep.mubr.bf16.mxu0 0
    %902 = vmatmul.mubr.bf16.gmra.mrb[0].mxu0 %v864
    %v903 = vpop.f32.mrb[0].mxu0
    %v904 = vadd.f32 0.0, %v903
    %v905 = vpop.f32.mrb[0].mxu0
    %v906 = vpop.f32.mrb[0].mxu0
    %v907 = vpop.f32.mrb[0].mxu0
    %908 = vdwg.mxu0
    %909 = vrot.lane.b32.xlu0 %v176, 112
    %v910 = vpop.permute.xlu0 %909
    %v912 = vsel %vm182, %v665, 0
    %v915 = vsel %vm673, %v910, 0
    %917 = vmatprep.subr.bf16.mxu0 0
    %918 = vmatpush1.bf16.msra.mxu0 %v915
    %919 = vmatprep.subr.bf16.mxu0 0
    %920 = vmatpush1.bf16.msra.mxu0 0
    %921 = vmatprep.subr.bf16.mxu0 0
    %922 = vmatpush1.bf16.msra.mxu0 0
    %923 = vmatprep.subr.bf16.mxu0 0
    %924 = vmatpush1.bf16.msra.mxu0 0
    %925 = vmatprep.subr.bf16.mxu0 0
    %926 = vmatpush1.bf16.msra.mxu0 0
    %927 = vmatprep.subr.bf16.mxu0 0
    %928 = vmatpush1.bf16.msra.mxu0 0
    %929 = vmatprep.subr.bf16.mxu0 0
    %930 = vmatpush1.bf16.msra.mxu0 0
    %931 = vmatprep.subr.bf16.mxu0 0
    %932 = vmatpush1.bf16.msra.mxu0 0
    %933 = vmatprep.subr.bf16.mxu0 0
    %934 = vmatpush1.bf16.msra.mxu0 0
    %935 = vmatprep.subr.bf16.mxu0 0
    %936 = vmatpush1.bf16.msra.mxu0 0
    %937 = vmatprep.subr.bf16.mxu0 0
    %938 = vmatpush1.bf16.msra.mxu0 0
    %939 = vmatprep.subr.bf16.mxu0 0
    %940 = vmatpush1.bf16.msra.mxu0 0
    %941 = vmatprep.subr.bf16.mxu0 0
    %942 = vmatpush1.bf16.msra.mxu0 0
    %943 = vmatprep.subr.bf16.mxu0 0
    %944 = vmatpush1.bf16.msra.mxu0 0
    %945 = vmatprep.subr.bf16.mxu0 0
    %946 = vmatpush1.bf16.msra.mxu0 0
    %947 = vmatprep.subr.bf16.mxu0 0
    %948 = vmatpush1.bf16.msra.mxu0 0
    %949 = vmatprep.mubr.bf16.mxu0 0
    %950 = vmatmul.mubr.bf16.gmra.mrb[0].mxu0 %v912
    %v951 = vpop.f32.mrb[0].mxu0
    %v952 = vadd.f32 0.0, %v951
    %v953 = vpop.f32.mrb[0].mxu0
    %v954 = vpop.f32.mrb[0].mxu0
    %v955 = vpop.f32.mrb[0].mxu0
    %956 = vdwg.mxu0
    %957 = vrot.lane.b32.xlu0 %v177, 112
    %v958 = vpop.permute.xlu0 %957
    %v960 = vsel %vm182, %v666, 0
    %v963 = vsel %vm673, %v958, 0
    %965 = vmatprep.subr.bf16.mxu0 0
    %966 = vmatpush1.bf16.msra.mxu0 %v963
    %967 = vmatprep.subr.bf16.mxu0 0
    %968 = vmatpush1.bf16.msra.mxu0 0
    %969 = vmatprep.subr.bf16.mxu0 0
    %970 = vmatpush1.bf16.msra.mxu0 0
    %971 = vmatprep.subr.bf16.mxu0 0
    %972 = vmatpush1.bf16.msra.mxu0 0
    %973 = vmatprep.subr.bf16.mxu0 0
    %974 = vmatpush1.bf16.msra.mxu0 0
    %975 = vmatprep.subr.bf16.mxu0 0
    %976 = vmatpush1.bf16.msra.mxu0 0
    %977 = vmatprep.subr.bf16.mxu0 0
    %978 = vmatpush1.bf16.msra.mxu0 0
    %979 = vmatprep.subr.bf16.mxu0 0
    %980 = vmatpush1.bf16.msra.mxu0 0
    %981 = vmatprep.subr.bf16.mxu0 0
    %982 = vmatpush1.bf16.msra.mxu0 0
    %983 = vmatprep.subr.bf16.mxu0 0
    %984 = vmatpush1.bf16.msra.mxu0 0
    %985 = vmatprep.subr.bf16.mxu0 0
    %986 = vmatpush1.bf16.msra.mxu0 0
    %987 = vmatprep.subr.bf16.mxu0 0
    %988 = vmatpush1.bf16.msra.mxu0 0
    %989 = vmatprep.subr.bf16.mxu0 0
    %990 = vmatpush1.bf16.msra.mxu0 0
    %991 = vmatprep.subr.bf16.mxu0 0
    %992 = vmatpush1.bf16.msra.mxu0 0
    %993 = vmatprep.subr.bf16.mxu0 0
    %994 = vmatpush1.bf16.msra.mxu0 0
    %995 = vmatprep.subr.bf16.mxu0 0
    %996 = vmatpush1.bf16.msra.mxu0 0
    %997 = vmatprep.mubr.bf16.mxu0 0
    %998 = vmatmul.mubr.bf16.gmra.mrb[0].mxu0 %v960
    %v999 = vpop.f32.mrb[0].mxu0
    %v1000 = vadd.f32 0.0, %v999
    %v1001 = vpop.f32.mrb[0].mxu0
    %v1002 = vpop.f32.mrb[0].mxu0
    %v1003 = vpop.f32.mrb[0].mxu0
    %1004 = vdwg.mxu0
    %1005 = vrot.lane.b32.xlu0 %v178, 112
    %v1006 = vpop.permute.xlu0 %1005
    %v1008 = vsel %vm182, %v667, 0
    %v1011 = vsel %vm673, %v1006, 0
    %1013 = vmatprep.subr.bf16.mxu0 0
    %1014 = vmatpush1.bf16.msra.mxu0 %v1011
    %1015 = vmatprep.subr.bf16.mxu0 0
    %1016 = vmatpush1.bf16.msra.mxu0 0
    %1017 = vmatprep.subr.bf16.mxu0 0
    %1018 = vmatpush1.bf16.msra.mxu0 0
    %1019 = vmatprep.subr.bf16.mxu0 0
    %1020 = vmatpush1.bf16.msra.mxu0 0
    %1021 = vmatprep.subr.bf16.mxu0 0
    %1022 = vmatpush1.bf16.msra.mxu0 0
    %1023 = vmatprep.subr.bf16.mxu0 0
    %1024 = vmatpush1.bf16.msra.mxu0 0
    %1025 = vmatprep.subr.bf16.mxu0 0
    %1026 = vmatpush1.bf16.msra.mxu0 0
    %1027 = vmatprep.subr.bf16.mxu0 0
    %1028 = vmatpush1.bf16.msra.mxu0 0
    %1029 = vmatprep.subr.bf16.mxu0 0
    %1030 = vmatpush1.bf16.msra.mxu0 0
    %1031 = vmatprep.subr.bf16.mxu0 0
    %1032 = vmatpush1.bf16.msra.mxu0 0
    %1033 = vmatprep.subr.bf16.mxu0 0
    %1034 = vmatpush1.bf16.msra.mxu0 0
    %1035 = vmatprep.subr.bf16.mxu0 0
    %1036 = vmatpush1.bf16.msra.mxu0 0
    %1037 = vmatprep.subr.bf16.mxu0 0
    %1038 = vmatpush1.bf16.msra.mxu0 0
    %1039 = vmatprep.subr.bf16.mxu0 0
    %1040 = vmatpush1.bf16.msra.mxu0 0
    %1041 = vmatprep.subr.bf16.mxu0 0
    %1042 = vmatpush1.bf16.msra.mxu0 0
    %1043 = vmatprep.subr.bf16.mxu0 0
    %1044 = vmatpush1.bf16.msra.mxu0 0
    %1045 = vmatprep.mubr.bf16.mxu0 0
    %1046 = vmatmul.mubr.bf16.gmra.mrb[0].mxu0 %v1008
    %v1047 = vpop.f32.mrb[0].mxu0
    %v1048 = vadd.f32 0.0, %v1047
    %v1049 = vpop.f32.mrb[0].mxu0
    %v1050 = vpop.f32.mrb[0].mxu0
    %v1051 = vpop.f32.mrb[0].mxu0
    %1052 = vdwg.mxu0
    %1055 = vrot.lane.b32.xlu0 %v808, 8
    %v1056 = vpop.permute.xlu0 %1055
    %1057 = vrot.lane.b32.xlu0 %v856, 8
    %v1058 = vpop.permute.xlu0 %1057
    %1063 = vrot.lane.b32.xlu0 %v904, 16
    %v1064 = vpop.permute.xlu0 %1063
    %1065 = vrot.lane.b32.xlu0 %v952, 16
    %v1066 = vpop.permute.xlu0 %1065
    %1071 = vrot.lane.b32.xlu0 %v1000, 24
    %v1072 = vpop.permute.xlu0 %1071
    %1073 = vrot.lane.b32.xlu0 %v1048, 24
    %v1074 = vpop.permute.xlu0 %1073
    %v1077 = vsel %vm182, %v712, %v1056
    %v1078 = vsel %vm182, %v760, %v1058
    %vm1079 = vcmask 130048
    %v1080 = vsel %vm1079, %v1077, %v1064
    %v1081 = vsel %vm1079, %v1078, %v1066
    %vm1082 = vcmask 195584
    %v1083 = vsel %vm1082, %v1080, %v1072
    %v1084 = vsel %vm1082, %v1081, %v1074
    %v1085 = vld [vmem:[%s1 + $0x78] sm:$0xff]
    %v1086 = vld [vmem:[%s1 + $0x80] sm:$0xff]
    %v1087 = vld [vmem:[%s1 + $0x88] sm:$0xff]
    %v1088 = vld [vmem:[%s1 + $0x90] sm:$0xff]
    %v1089 = vld [vmem:[%s1 + $0x98] sm:$0x1]
    %v1090 = vpack.c.bf16 %v1084, %v1083
    %v1091 = vpack.c.bf16 %v1086, %v1085
    %v1092 = vpack.c.bf16 %v1088, %v1087
    %v1093 = vlaneseq
    %v1094 = vshrl.u32 %v1093, 7
    %v1095 = vsub.s32 0, %v1094
    %v1096 = vrot.slane %v1089, %v1095
    %v1098 = vsel %vm25, %v1090, 0
    %v1101 = vsel %vm25, %v1091, 0
    %v1104 = vsel %vm25, %v1092, 0
    %1106 = vmatprep.subr.bf16.mxu0 0
    %1107 = vmatpush1.bf16.xpose.msra.mxu0 %v1101
    %1108 = vmatprep.subr.bf16.mxu0 0
    %1109 = vmatpush1.bf16.xpose.msra.mxu0 %v1104
    %1110 = vmatprep.subr.bf16.mxu0 0
    %1111 = vmatpush1.bf16.xpose.msra.mxu0 0
    %1112 = vmatprep.subr.bf16.mxu0 0
    %1113 = vmatpush1.bf16.xpose.msra.mxu0 0
    %1114 = vmatprep.subr.bf16.mxu0 0
    %1115 = vmatpush1.bf16.xpose.msra.mxu0 0
    %1116 = vmatprep.subr.bf16.mxu0 0
    %1117 = vmatpush1.bf16.xpose.msra.mxu0 0
    %1118 = vmatprep.subr.bf16.mxu0 0
    %1119 = vmatpush1.bf16.xpose.msra.mxu0 0
    %1120 = vmatprep.subr.bf16.mxu0 0
    %1121 = vmatpush1.bf16.xpose.msra.mxu0 0
    %1122 = vmatprep.subr.bf16.mxu0 0
    %1123 = vmatpush1.bf16.xpose.msra.mxu0 0
    %1124 = vmatprep.subr.bf16.mxu0 0
    %1125 = vmatpush1.bf16.xpose.msra.mxu0 0
    %1126 = vmatprep.subr.bf16.mxu0 0
    %1127 = vmatpush1.bf16.xpose.msra.mxu0 0
    %1128 = vmatprep.subr.bf16.mxu0 0
    %1129 = vmatpush1.bf16.xpose.msra.mxu0 0
    %1130 = vmatprep.subr.bf16.mxu0 0
    %1131 = vmatpush1.bf16.xpose.msra.mxu0 0
    %1132 = vmatprep.subr.bf16.mxu0 0
    %1133 = vmatpush1.bf16.xpose.msra.mxu0 0
    %1134 = vmatprep.subr.bf16.mxu0 0
    %1135 = vmatpush1.bf16.xpose.msra.mxu0 0
    %1136 = vmatprep.subr.bf16.mxu0 0
    %1137 = vmatpush1.bf16.xpose.msra.mxu0 0
    %1138 = vmatprep.mubr.bf16.mxu0 0
    %1139 = vmatmul.mubr.bf16.gmra.mrb[0].mxu0 %v1098
    %v1140 = vpop.f32.mrb[0].mxu0
    %v1141 = vadd.f32 %v1096, %v1140
    %v1142 = vpop.f32.mrb[0].mxu0
    %v1143 = vpop.f32.mrb[0].mxu0
    %v1144 = vadd.f32 %v1096, %v1143
    %v1145 = vpop.f32.mrb[0].mxu0
    %1146 = vdwg.mxu0
    %v1147 = vadd.f32 %v21, %v1141
    %v1148 = vadd.f32 %v22, %v1144
    %v1149 = vld [vmem:[%s1 + $0xa0] sm:$0x1]
    %v1150 = vld [vmem:[%s1 + $0xa8] sm:$0x1]
    %v1151 = vsel %vm25, %v1147, 0.0
    %1152 = vadd.xlane.f32.xlu0 %v1151
    %v1153 = vpop.xlane.xlu0 %1152
    %v1154 = vsel %vm25, %v1148, 0.0
    %1155 = vadd.xlane.f32.xlu0 %v1154
    %v1156 = vpop.xlane.xlu0 %1155
    %v1157 = vmul.f32 %v1153, %v32
    %v1158 = vmul.f32 %v1156, %v32
    %v1159 = vsub.f32 %v1147, %v1157
    %v1160 = vsub.f32 %v1148, %v1158
    %v1161 = vmul.f32 %v1159, %v1159
    %v1162 = vmul.f32 %v1160, %v1160
    %v1163 = vsel %vm25, %v1161, 0.0
    %1164 = vadd.xlane.f32.xlu0 %v1163
    %v1165 = vpop.xlane.xlu0 %1164
    %v1166 = vsel %vm25, %v1162, 0.0
    %1167 = vadd.xlane.f32.xlu0 %v1166
    %v1168 = vpop.xlane.xlu0 %1167
    %v1169 = vmul.f32 %v1165, %v32
    %v1170 = vmul.f32 %v1168, %v32
    %v1171 = vadd.f32 %v1169, 1e-05
    %v1172 = vadd.f32 %v1170, 1e-05
    %v1173 = vrsqrt.pop %v1171
    %v1174 = vrsqrt.pop %v1172
    %v1175 = vmul.f32 %v1159, %v1173
    %v1176 = vmul.f32 %v1160, %v1174
    %v1177 = vlaneseq
    %v1178 = vshrl.u32 %v1177, 7
    %v1179 = vsub.s32 0, %v1178
    %v1180 = vrot.slane %v1149, %v1179
    %v1181 = vmul.f32 %v1175, %v1180
    %v1182 = vmul.f32 %v1176, %v1180
    %v1183 = vlaneseq
    %v1184 = vshrl.u32 %v1183, 7
    %v1185 = vsub.s32 0, %v1184
    %v1186 = vrot.slane %v1150, %v1185
    %v1187 = vadd.f32 %v1181, %v1186
    %v1188 = vadd.f32 %v1182, %v1186
    %v1189 = vld [vmem:[%s1 + $0xb0] sm:$0xff]
    %v1190 = vld [vmem:[%s1 + $0xb8] sm:$0xff]
    %v1191 = vld [vmem:[%s1 + $0xc0] sm:$0xff]
    %v1192 = vld [vmem:[%s1 + $0xc8] sm:$0xff]
    %v1193 = vld [vmem:[%s1 + $0xd0] sm:$0xff]
    %v1194 = vld [vmem:[%s1 + $0xd8] sm:$0xff]
    %v1195 = vld [vmem:[%s1 + $0xe0] sm:$0xff]
    %v1196 = vld [vmem:[%s1 + $0xe8] sm:$0xff]
    %v1197 = vld [vmem:[%s1 + $0xf0] sm:$0xff]
    %v1198 = vld [vmem:[%s1 + $0xf8] sm:$0xff]
    %v1199 = vld [vmem:[%s1 + $0x100] sm:$0xff]
    %v1200 = vld [vmem:[%s1 + $0x108] sm:$0xff]
    %v1201 = vld [vmem:[%s1 + $0x110] sm:$0xff]
    %v1202 = vld [vmem:[%s1 + $0x118] sm:$0xff]
    %v1203 = vld [vmem:[%s1 + $0x120] sm:$0xff]
    %v1204 = vld [vmem:[%s1 + $0x128] sm:$0xff]
    %v1205 = vld [vmem:[%s2 + $0x8] sm:$0x1]
    %v1206 = vpack.c.bf16 %v1188, %v1187
    %v1207 = vpack.c.bf16 %v1190, %v1189
    %v1208 = vpack.c.bf16 %v1192, %v1191
    %v1209 = vpack.c.bf16 %v1194, %v1193
    %v1210 = vpack.c.bf16 %v1196, %v1195
    %v1211 = vpack.c.bf16 %v1198, %v1197
    %v1212 = vpack.c.bf16 %v1200, %v1199
    %v1213 = vpack.c.bf16 %v1202, %v1201
    %v1214 = vpack.c.bf16 %v1204, %v1203
    %v1215 = vlaneseq
    %v1216 = vshrl.u32 %v1215, 7
    %v1217 = vsub.s32 0, %v1216
    %v1218 = vrot.slane %v1205, %v1217
    %v1220 = vsel %vm25, %v1206, 0
    %v1223 = vsel %vm25, %v1207, 0
    %v1226 = vsel %vm25, %v1208, 0
    %v1229 = vsel %vm25, %v1209, 0
    %v1232 = vsel %vm25, %v1210, 0
    %v1235 = vsel %vm25, %v1211, 0
    %v1238 = vsel %vm25, %v1212, 0
    %v1241 = vsel %vm25, %v1213, 0
    %v1244 = vsel %vm25, %v1214, 0
    %1246 = vmatprep.subr.bf16.mxu0 0
    %1247 = vmatpush1.bf16.xpose.msra.mxu0 %v1223
    %1248 = vmatprep.subr.bf16.mxu0 0
    %1249 = vmatpush1.bf16.xpose.msra.mxu0 %v1226
    %1250 = vmatprep.subr.bf16.mxu0 0
    %1251 = vmatpush1.bf16.xpose.msra.mxu0 %v1229
    %1252 = vmatprep.subr.bf16.mxu0 0
    %1253 = vmatpush1.bf16.xpose.msra.mxu0 %v1232
    %1254 = vmatprep.subr.bf16.mxu0 0
    %1255 = vmatpush1.bf16.xpose.msra.mxu0 %v1235
    %1256 = vmatprep.subr.bf16.mxu0 0
    %1257 = vmatpush1.bf16.xpose.msra.mxu0 %v1238
    %1258 = vmatprep.subr.bf16.mxu0 0
    %1259 = vmatpush1.bf16.xpose.msra.mxu0 %v1241
    %1260 = vmatprep.subr.bf16.mxu0 0
    %1261 = vmatpush1.bf16.xpose.msra.mxu0 %v1244
    %1262 = vmatprep.subr.bf16.mxu0 0
    %1263 = vmatpush1.bf16.xpose.msra.mxu0 0
    %1264 = vmatprep.subr.bf16.mxu0 0
    %1265 = vmatpush1.bf16.xpose.msra.mxu0 0
    %1266 = vmatprep.subr.bf16.mxu0 0
    %1267 = vmatpush1.bf16.xpose.msra.mxu0 0
    %1268 = vmatprep.subr.bf16.mxu0 0
    %1269 = vmatpush1.bf16.xpose.msra.mxu0 0
    %1270 = vmatprep.subr.bf16.mxu0 0
    %1271 = vmatpush1.bf16.xpose.msra.mxu0 0
    %1272 = vmatprep.subr.bf16.mxu0 0
    %1273 = vmatpush1.bf16.xpose.msra.mxu0 0
    %1274 = vmatprep.subr.bf16.mxu0 0
    %1275 = vmatpush1.bf16.xpose.msra.mxu0 0
    %1276 = vmatprep.subr.bf16.mxu0 0
    %1277 = vmatpush1.bf16.xpose.msra.mxu0 0
    %1278 = vmatprep.mubr.bf16.mxu0 0
    %1279 = vmatmul.mubr.bf16.gmra.mrb[0].mxu0 %v1220
    %v1280 = vpop.f32.mrb[0].mxu0
    %v1281 = vadd.f32 %v1218, %v1280
    %v1282 = vpop.f32.mrb[0].mxu0
    %v1283 = vpop.f32.mrb[0].mxu0
    %v1284 = vadd.f32 %v1218, %v1283
    %v1285 = vpop.f32.mrb[0].mxu0
    %1286 = vdwg.mxu0
    %v1287 = vmax.f32 %v1281, 0.0
    %v1288 = vmax.f32 %v1284, 0.0
    %v1289 = vld [vmem:[%s2 + $0x10] sm:$0xff]
    %v1290 = vld [vmem:[%s2 + $0x18] sm:$0xff]
    %v1291 = vld [vmem:[%s2 + $0x20] sm:$0xff]
    %v1292 = vld [vmem:[%s2 + $0x28] sm:$0xff]
    %v1293 = vld [vmem:[%s1 + $0x130] sm:$0x1]
    %v1294 = vpack.c.bf16 %v1288, %v1287
    %v1295 = vpack.c.bf16 %v1290, %v1289
    %v1296 = vpack.c.bf16 %v1292, %v1291
    %v1297 = vlaneseq
    %v1298 = vshrl.u32 %v1297, 7
    %v1299 = vsub.s32 0, %v1298
    %v1300 = vrot.slane %v1293, %v1299
    %1301 = vmatprep.subr.bf16.mxu0 0
    %1302 = vmatpush1.bf16.xpose.msra.mxu0 %v1295
    %1303 = vmatprep.subr.bf16.mxu0 0
    %1304 = vmatpush1.bf16.xpose.msra.mxu0 %v1296
    %1305 = vmatprep.subr.bf16.mxu0 0
    %1306 = vmatpush1.bf16.xpose.msra.mxu0 0
    %1307 = vmatprep.subr.bf16.mxu0 0
    %1308 = vmatpush1.bf16.xpose.msra.mxu0 0
    %1309 = vmatprep.subr.bf16.mxu0 0
    %1310 = vmatpush1.bf16.xpose.msra.mxu0 0
    %1311 = vmatprep.subr.bf16.mxu0 0
    %1312 = vmatpush1.bf16.xpose.msra.mxu0 0
    %1313 = vmatprep.subr.bf16.mxu0 0
    %1314 = vmatpush1.bf16.xpose.msra.mxu0 0
    %1315 = vmatprep.subr.bf16.mxu0 0
    %1316 = vmatpush1.bf16.xpose.msra.mxu0 0
    %1317 = vmatprep.subr.bf16.mxu0 0
    %1318 = vmatpush1.bf16.xpose.msra.mxu0 0
    %1319 = vmatprep.subr.bf16.mxu0 0
    %1320 = vmatpush1.bf16.xpose.msra.mxu0 0
    %1321 = vmatprep.subr.bf16.mxu0 0
    %1322 = vmatpush1.bf16.xpose.msra.mxu0 0
    %1323 = vmatprep.subr.bf16.mxu0 0
    %1324 = vmatpush1.bf16.xpose.msra.mxu0 0
    %1325 = vmatprep.subr.bf16.mxu0 0
    %1326 = vmatpush1.bf16.xpose.msra.mxu0 0
    %1327 = vmatprep.subr.bf16.mxu0 0
    %1328 = vmatpush1.bf16.xpose.msra.mxu0 0
    %1329 = vmatprep.subr.bf16.mxu0 0
    %1330 = vmatpush1.bf16.xpose.msra.mxu0 0
    %1331 = vmatprep.subr.bf16.mxu0 0
    %1332 = vmatpush1.bf16.xpose.msra.mxu0 0
    %1333 = vmatprep.mubr.bf16.mxu0 0
    %1334 = vmatmul.mubr.bf16.gmra.mrb[0].mxu0 %v1294
    %v1335 = vpop.f32.mrb[0].mxu0
    %v1336 = vadd.f32 %v1300, %v1335
    %v1337 = vpop.f32.mrb[0].mxu0
    %v1338 = vpop.f32.mrb[0].mxu0
    %v1339 = vadd.f32 %v1300, %v1338
    %v1340 = vpop.f32.mrb[0].mxu0
    %1341 = vdwg.mxu0
    %v1342 = vadd.f32 %v1147, %v1336
    %v1343 = vadd.f32 %v1148, %v1339
    %v1344 = vld [vmem:[%s1 + $0x138] sm:$0x1]
    %v1345 = vld [vmem:[%s1 + $0x140] sm:$0x1]
    %v1346 = vsel %vm25, %v1342, 0.0
    %1347 = vadd.xlane.f32.xlu0 %v1346
    %v1348 = vpop.xlane.xlu0 %1347
    %v1349 = vsel %vm25, %v1343, 0.0
    %1350 = vadd.xlane.f32.xlu0 %v1349
    %v1351 = vpop.xlane.xlu0 %1350
    %v1352 = vmul.f32 %v1348, %v32
    %v1353 = vmul.f32 %v1351, %v32
    %v1354 = vsub.f32 %v1342, %v1352
    %v1355 = vsub.f32 %v1343, %v1353
    %v1356 = vmul.f32 %v1354, %v1354
    %v1357 = vmul.f32 %v1355, %v1355
    %v1358 = vsel %vm25, %v1356, 0.0
    %1359 = vadd.xlane.f32.xlu0 %v1358
    %v1360 = vpop.xlane.xlu0 %1359
    %v1361 = vsel %vm25, %v1357, 0.0
    %1362 = vadd.xlane.f32.xlu0 %v1361
    %v1363 = vpop.xlane.xlu0 %1362
    %v1364 = vmul.f32 %v1360, %v32
    %v1365 = vmul.f32 %v1363, %v32
    %v1366 = vadd.f32 %v1364, 1e-05
    %v1367 = vadd.f32 %v1365, 1e-05
    %v1368 = vrsqrt.pop %v1366
    %v1369 = vrsqrt.pop %v1367
    %v1370 = vmul.f32 %v1354, %v1368
    %v1371 = vmul.f32 %v1355, %v1369
    %v1372 = vlaneseq
    %v1373 = vshrl.u32 %v1372, 7
    %v1374 = vsub.s32 0, %v1373
    %v1375 = vrot.slane %v1344, %v1374
    %v1376 = vmul.f32 %v1370, %v1375
    %v1377 = vmul.f32 %v1371, %v1375
    %v1378 = vlaneseq
    %v1379 = vshrl.u32 %v1378, 7
    %v1380 = vsub.s32 0, %v1379
    %v1381 = vrot.slane %v1345, %v1380
    %v1382 = vadd.f32 %v1376, %v1381
    %v1383 = vadd.f32 %v1377, %v1381
    %v1384 = vld [vmem:[%s1 + $0x148] sm:$0xff]
    %v1385 = vld [vmem:[%s1 + $0x150] sm:$0xff]
    %v1386 = vld [vmem:[%s1 + $0x158] sm:$0xff]
    %v1387 = vld [vmem:[%s1 + $0x160] sm:$0xff]
    %v1388 = vld [vmem:[%s1 + $0x168] sm:$0xff]
    %v1389 = vld [vmem:[%s1 + $0x170] sm:$0xff]
    %v1390 = vld [vmem:[%s1 + $0x178] sm:$0xff]
    %v1391 = vld [vmem:[%s1 + $0x180] sm:$0xff]
    %v1392 = vld [vmem:[%s1 + $0x188] sm:$0xff]
    %v1393 = vld [vmem:[%s1 + $0x190] sm:$0xff]
    %v1394 = vld [vmem:[%s1 + $0x198] sm:$0xff]
    %v1395 = vld [vmem:[%s1 + $0x1a0] sm:$0xff]
    %v1396 = vld [vmem:[%s2 + $0x30] sm:$0x1]
    %v1397 = vpack.c.bf16 %v1383, %v1382
    %v1398 = vpack.c.bf16 %v1385, %v1384
    %v1399 = vpack.c.bf16 %v1387, %v1386
    %v1400 = vpack.c.bf16 %v1389, %v1388
    %v1401 = vpack.c.bf16 %v1391, %v1390
    %v1402 = vpack.c.bf16 %v1393, %v1392
    %v1403 = vpack.c.bf16 %v1395, %v1394
    %v1404 = vlaneseq
    %v1405 = vshrl.u32 %v1404, 7
    %v1406 = vsub.s32 0, %v1405
    %v1407 = vrot.slane %v1396, %v1406
    %v1409 = vsel %vm25, %v1397, 0
    %v1412 = vsel %vm25, %v1398, 0
    %v1415 = vsel %vm25, %v1399, 0
    %v1418 = vsel %vm25, %v1400, 0
    %v1421 = vsel %vm25, %v1401, 0
    %v1424 = vsel %vm25, %v1402, 0
    %v1427 = vsel %vm25, %v1403, 0
    %1429 = vmatprep.subr.bf16.mxu0 0
    %1430 = vmatpush1.bf16.xpose.msra.mxu0 %v1412
    %1431 = vmatprep.subr.bf16.mxu0 0
    %1432 = vmatpush1.bf16.xpose.msra.mxu0 %v1415
    %1433 = vmatprep.subr.bf16.mxu0 0
    %1434 = vmatpush1.bf16.xpose.msra.mxu0 %v1418
    %1435 = vmatprep.subr.bf16.mxu0 0
    %1436 = vmatpush1.bf16.xpose.msra.mxu0 %v1421
    %1437 = vmatprep.subr.bf16.mxu0 0
    %1438 = vmatpush1.bf16.xpose.msra.mxu0 %v1424
    %1439 = vmatprep.subr.bf16.mxu0 0
    %1440 = vmatpush1.bf16.xpose.msra.mxu0 %v1427
    %1441 = vmatprep.subr.bf16.mxu0 0
    %1442 = vmatpush1.bf16.xpose.msra.mxu0 0
    %1443 = vmatprep.subr.bf16.mxu0 0
    %1444 = vmatpush1.bf16.xpose.msra.mxu0 0
    %1445 = vmatprep.subr.bf16.mxu0 0
    %1446 = vmatpush1.bf16.xpose.msra.mxu0 0
    %1447 = vmatprep.subr.bf16.mxu0 0
    %1448 = vmatpush1.bf16.xpose.msra.mxu0 0
    %1449 = vmatprep.subr.bf16.mxu0 0
    %1450 = vmatpush1.bf16.xpose.msra.mxu0 0
    %1451 = vmatprep.subr.bf16.mxu0 0
    %1452 = vmatpush1.bf16.xpose.msra.mxu0 0
    %1453 = vmatprep.subr.bf16.mxu0 0
    %1454 = vmatpush1.bf16.xpose.msra.mxu0 0
    %1455 = vmatprep.subr.bf16.mxu0 0
    %1456 = vmatpush1.bf16.xpose.msra.mxu0 0
    %1457 = vmatprep.subr.bf16.mxu0 0
    %1458 = vmatpush1.bf16.xpose.msra.mxu0 0
    %1459 = vmatprep.subr.bf16.mxu0 0
    %1460 = vmatpush1.bf16.xpose.msra.mxu0 0
    %1461 = vmatprep.mubr.bf16.mxu0 0
    %1462 = vmatmul.mubr.bf16.gmra.mrb[0].mxu0 %v1409
    %v1463 = vpop.f32.mrb[0].mxu0
    %v1464 = vadd.f32 %v1407, %v1463
    %v1465 = vpop.f32.mrb[0].mxu0
    %v1466 = vpop.f32.mrb[0].mxu0
    %v1467 = vadd.f32 %v1407, %v1466
    %v1468 = vpop.f32.mrb[0].mxu0
    %1469 = vdwg.mxu0
    %1472 = vrot.lane.b32.xlu0 %v1464, 104
    %v1473 = vpop.permute.xlu0 %1472
    %1474 = vrot.lane.b32.xlu0 %v1467, 104
    %v1475 = vpop.permute.xlu0 %1474
    %1478 = vrot.lane.b32.xlu0 %v1464, 80
    %v1479 = vpop.permute.xlu0 %1478
    %1480 = vrot.lane.b32.xlu0 %v1467, 80
    %v1481 = vpop.permute.xlu0 %1480
    %1484 = vrot.lane.b32.xlu0 %v1464, 56
    %v1485 = vpop.permute.xlu0 %1484
    %1486 = vrot.lane.b32.xlu0 %v1467, 56
    %v1487 = vpop.permute.xlu0 %1486
    %v1490 = vpack.c.bf16 %v1464, %v1464
    %v1491 = vpack.c.bf16 %v1467, %v1467
    %v1492 = vpack.c.bf16 %v1473, %v1473
    %v1493 = vpack.c.bf16 %v1475, %v1475
    %v1494 = vpack.c.bf16 %v1479, %v1479
    %v1495 = vpack.c.bf16 %v1481, %v1481
    %v1496 = vpack.c.bf16 %v1485, %v1485
    %v1497 = vpack.c.bf16 %v1487, %v1487
    %1499 = vrot.lane.b32.xlu0 %v1490, 120
    %v1500 = vpop.permute.xlu0 %1499
    %v1502 = vsel %vm182, %v1490, 0
    %v1505 = vsel %vm182, %v1500, 0
    %1507 = vmatprep.subr.bf16.mxu0 0
    %1508 = vmatpush1.bf16.xpose.msra.mxu0 %v1505
    %1509 = vmatprep.subr.bf16.mxu0 0
    %1510 = vmatpush1.bf16.xpose.msra.mxu0 0
    %1511 = vmatprep.subr.bf16.mxu0 0
    %1512 = vmatpush1.bf16.xpose.msra.mxu0 0
    %1513 = vmatprep.subr.bf16.mxu0 0
    %1514 = vmatpush1.bf16.xpose.msra.mxu0 0
    %1515 = vmatprep.subr.bf16.mxu0 0
    %1516 = vmatpush1.bf16.xpose.msra.mxu0 0
    %1517 = vmatprep.subr.bf16.mxu0 0
    %1518 = vmatpush1.bf16.xpose.msra.mxu0 0
    %1519 = vmatprep.subr.bf16.mxu0 0
    %1520 = vmatpush1.bf16.xpose.msra.mxu0 0
    %1521 = vmatprep.subr.bf16.mxu0 0
    %1522 = vmatpush1.bf16.xpose.msra.mxu0 0
    %1523 = vmatprep.subr.bf16.mxu0 0
    %1524 = vmatpush1.bf16.xpose.msra.mxu0 0
    %1525 = vmatprep.subr.bf16.mxu0 0
    %1526 = vmatpush1.bf16.xpose.msra.mxu0 0
    %1527 = vmatprep.subr.bf16.mxu0 0
    %1528 = vmatpush1.bf16.xpose.msra.mxu0 0
    %1529 = vmatprep.subr.bf16.mxu0 0
    %1530 = vmatpush1.bf16.xpose.msra.mxu0 0
    %1531 = vmatprep.subr.bf16.mxu0 0
    %1532 = vmatpush1.bf16.xpose.msra.mxu0 0
    %1533 = vmatprep.subr.bf16.mxu0 0
    %1534 = vmatpush1.bf16.xpose.msra.mxu0 0
    %1535 = vmatprep.subr.bf16.mxu0 0
    %1536 = vmatpush1.bf16.xpose.msra.mxu0 0
    %1537 = vmatprep.subr.bf16.mxu0 0
    %1538 = vmatpush1.bf16.xpose.msra.mxu0 0
    %1539 = vmatprep.mubr.bf16.mxu0 0
    %1540 = vmatmul.mubr.bf16.gmra.mrb[0].mxu0 %v1502
    %v1541 = vpop.f32.mrb[0].mxu0
    %v1542 = vadd.f32 0.0, %v1541
    %v1543 = vpop.f32.mrb[0].mxu0
    %v1544 = vpop.f32.mrb[0].mxu0
    %v1545 = vpop.f32.mrb[0].mxu0
    %1546 = vdwg.mxu0
    %1548 = vrot.lane.b32.xlu0 %v1491, 120
    %v1549 = vpop.permute.xlu0 %1548
    %v1551 = vsel %vm182, %v1491, 0
    %v1554 = vsel %vm182, %v1549, 0
    %1556 = vmatprep.subr.bf16.mxu0 0
    %1557 = vmatpush1.bf16.xpose.msra.mxu0 %v1554
    %1558 = vmatprep.subr.bf16.mxu0 0
    %1559 = vmatpush1.bf16.xpose.msra.mxu0 0
    %1560 = vmatprep.subr.bf16.mxu0 0
    %1561 = vmatpush1.bf16.xpose.msra.mxu0 0
    %1562 = vmatprep.subr.bf16.mxu0 0
    %1563 = vmatpush1.bf16.xpose.msra.mxu0 0
    %1564 = vmatprep.subr.bf16.mxu0 0
    %1565 = vmatpush1.bf16.xpose.msra.mxu0 0
    %1566 = vmatprep.subr.bf16.mxu0 0
    %1567 = vmatpush1.bf16.xpose.msra.mxu0 0
    %1568 = vmatprep.subr.bf16.mxu0 0
    %1569 = vmatpush1.bf16.xpose.msra.mxu0 0
    %1570 = vmatprep.subr.bf16.mxu0 0
    %1571 = vmatpush1.bf16.xpose.msra.mxu0 0
    %1572 = vmatprep.subr.bf16.mxu0 0
    %1573 = vmatpush1.bf16.xpose.msra.mxu0 0
    %1574 = vmatprep.subr.bf16.mxu0 0
    %1575 = vmatpush1.bf16.xpose.msra.mxu0 0
    %1576 = vmatprep.subr.bf16.mxu0 0
    %1577 = vmatpush1.bf16.xpose.msra.mxu0 0
    %1578 = vmatprep.subr.bf16.mxu0 0
    %1579 = vmatpush1.bf16.xpose.msra.mxu0 0
    %1580 = vmatprep.subr.bf16.mxu0 0
    %1581 = vmatpush1.bf16.xpose.msra.mxu0 0
    %1582 = vmatprep.subr.bf16.mxu0 0
    %1583 = vmatpush1.bf16.xpose.msra.mxu0 0
    %1584 = vmatprep.subr.bf16.mxu0 0
    %1585 = vmatpush1.bf16.xpose.msra.mxu0 0
    %1586 = vmatprep.subr.bf16.mxu0 0
    %1587 = vmatpush1.bf16.xpose.msra.mxu0 0
    %1588 = vmatprep.mubr.bf16.mxu0 0
    %1589 = vmatmul.mubr.bf16.gmra.mrb[0].mxu0 %v1551
    %v1590 = vpop.f32.mrb[0].mxu0
    %v1591 = vadd.f32 0.0, %v1590
    %v1592 = vpop.f32.mrb[0].mxu0
    %v1593 = vpop.f32.mrb[0].mxu0
    %v1594 = vpop.f32.mrb[0].mxu0
    %1595 = vdwg.mxu0
    %1597 = vrot.lane.b32.xlu0 %v1492, 120
    %v1598 = vpop.permute.xlu0 %1597
    %v1600 = vsel %vm182, %v1492, 0
    %v1603 = vsel %vm182, %v1598, 0
    %1605 = vmatprep.subr.bf16.mxu0 0
    %1606 = vmatpush1.bf16.xpose.msra.mxu0 %v1603
    %1607 = vmatprep.subr.bf16.mxu0 0
    %1608 = vmatpush1.bf16.xpose.msra.mxu0 0
    %1609 = vmatprep.subr.bf16.mxu0 0
    %1610 = vmatpush1.bf16.xpose.msra.mxu0 0
    %1611 = vmatprep.subr.bf16.mxu0 0
    %1612 = vmatpush1.bf16.xpose.msra.mxu0 0
    %1613 = vmatprep.subr.bf16.mxu0 0
    %1614 = vmatpush1.bf16.xpose.msra.mxu0 0
    %1615 = vmatprep.subr.bf16.mxu0 0
    %1616 = vmatpush1.bf16.xpose.msra.mxu0 0
    %1617 = vmatprep.subr.bf16.mxu0 0
    %1618 = vmatpush1.bf16.xpose.msra.mxu0 0
    %1619 = vmatprep.subr.bf16.mxu0 0
    %1620 = vmatpush1.bf16.xpose.msra.mxu0 0
    %1621 = vmatprep.subr.bf16.mxu0 0
    %1622 = vmatpush1.bf16.xpose.msra.mxu0 0
    %1623 = vmatprep.subr.bf16.mxu0 0
    %1624 = vmatpush1.bf16.xpose.msra.mxu0 0
    %1625 = vmatprep.subr.bf16.mxu0 0
    %1626 = vmatpush1.bf16.xpose.msra.mxu0 0
    %1627 = vmatprep.subr.bf16.mxu0 0
    %1628 = vmatpush1.bf16.xpose.msra.mxu0 0
    %1629 = vmatprep.subr.bf16.mxu0 0
    %1630 = vmatpush1.bf16.xpose.msra.mxu0 0
    %1631 = vmatprep.subr.bf16.mxu0 0
    %1632 = vmatpush1.bf16.xpose.msra.mxu0 0
    %1633 = vmatprep.subr.bf16.mxu0 0
    %1634 = vmatpush1.bf16.xpose.msra.mxu0 0
    %1635 = vmatprep.subr.bf16.mxu0 0
    %1636 = vmatpush1.bf16.xpose.msra.mxu0 0
    %1637 = vmatprep.mubr.bf16.mxu0 0
    %1638 = vmatmul.mubr.bf16.gmra.mrb[0].mxu0 %v1600
    %v1639 = vpop.f32.mrb[0].mxu0
    %v1640 = vadd.f32 0.0, %v1639
    %v1641 = vpop.f32.mrb[0].mxu0
    %v1642 = vpop.f32.mrb[0].mxu0
    %v1643 = vpop.f32.mrb[0].mxu0
    %1644 = vdwg.mxu0
    %1646 = vrot.lane.b32.xlu0 %v1493, 120
    %v1647 = vpop.permute.xlu0 %1646
    %v1649 = vsel %vm182, %v1493, 0
    %v1652 = vsel %vm182, %v1647, 0
    %1654 = vmatprep.subr.bf16.mxu0 0
    %1655 = vmatpush1.bf16.xpose.msra.mxu0 %v1652
    %1656 = vmatprep.subr.bf16.mxu0 0
    %1657 = vmatpush1.bf16.xpose.msra.mxu0 0
    %1658 = vmatprep.subr.bf16.mxu0 0
    %1659 = vmatpush1.bf16.xpose.msra.mxu0 0
    %1660 = vmatprep.subr.bf16.mxu0 0
    %1661 = vmatpush1.bf16.xpose.msra.mxu0 0
    %1662 = vmatprep.subr.bf16.mxu0 0
    %1663 = vmatpush1.bf16.xpose.msra.mxu0 0
    %1664 = vmatprep.subr.bf16.mxu0 0
    %1665 = vmatpush1.bf16.xpose.msra.mxu0 0
    %1666 = vmatprep.subr.bf16.mxu0 0
    %1667 = vmatpush1.bf16.xpose.msra.mxu0 0
    %1668 = vmatprep.subr.bf16.mxu0 0
    %1669 = vmatpush1.bf16.xpose.msra.mxu0 0
    %1670 = vmatprep.subr.bf16.mxu0 0
    %1671 = vmatpush1.bf16.xpose.msra.mxu0 0
    %1672 = vmatprep.subr.bf16.mxu0 0
    %1673 = vmatpush1.bf16.xpose.msra.mxu0 0
    %1674 = vmatprep.subr.bf16.mxu0 0
    %1675 = vmatpush1.bf16.xpose.msra.mxu0 0
    %1676 = vmatprep.subr.bf16.mxu0 0
    %1677 = vmatpush1.bf16.xpose.msra.mxu0 0
    %1678 = vmatprep.subr.bf16.mxu0 0
    %1679 = vmatpush1.bf16.xpose.msra.mxu0 0
    %1680 = vmatprep.subr.bf16.mxu0 0
    %1681 = vmatpush1.bf16.xpose.msra.mxu0 0
    %1682 = vmatprep.subr.bf16.mxu0 0
    %1683 = vmatpush1.bf16.xpose.msra.mxu0 0
    %1684 = vmatprep.subr.bf16.mxu0 0
    %1685 = vmatpush1.bf16.xpose.msra.mxu0 0
    %1686 = vmatprep.mubr.bf16.mxu0 0
    %1687 = vmatmul.mubr.bf16.gmra.mrb[0].mxu0 %v1649
    %v1688 = vpop.f32.mrb[0].mxu0
    %v1689 = vadd.f32 0.0, %v1688
    %v1690 = vpop.f32.mrb[0].mxu0
    %v1691 = vpop.f32.mrb[0].mxu0
    %v1692 = vpop.f32.mrb[0].mxu0
    %1693 = vdwg.mxu0
    %1695 = vrot.lane.b32.xlu0 %v1494, 120
    %v1696 = vpop.permute.xlu0 %1695
    %v1698 = vsel %vm182, %v1494, 0
    %v1701 = vsel %vm182, %v1696, 0
    %1703 = vmatprep.subr.bf16.mxu0 0
    %1704 = vmatpush1.bf16.xpose.msra.mxu0 %v1701
    %1705 = vmatprep.subr.bf16.mxu0 0
    %1706 = vmatpush1.bf16.xpose.msra.mxu0 0
    %1707 = vmatprep.subr.bf16.mxu0 0
    %1708 = vmatpush1.bf16.xpose.msra.mxu0 0
    %1709 = vmatprep.subr.bf16.mxu0 0
    %1710 = vmatpush1.bf16.xpose.msra.mxu0 0
    %1711 = vmatprep.subr.bf16.mxu0 0
    %1712 = vmatpush1.bf16.xpose.msra.mxu0 0
    %1713 = vmatprep.subr.bf16.mxu0 0
    %1714 = vmatpush1.bf16.xpose.msra.mxu0 0
    %1715 = vmatprep.subr.bf16.mxu0 0
    %1716 = vmatpush1.bf16.xpose.msra.mxu0 0
    %1717 = vmatprep.subr.bf16.mxu0 0
    %1718 = vmatpush1.bf16.xpose.msra.mxu0 0
    %1719 = vmatprep.subr.bf16.mxu0 0
    %1720 = vmatpush1.bf16.xpose.msra.mxu0 0
    %1721 = vmatprep.subr.bf16.mxu0 0
    %1722 = vmatpush1.bf16.xpose.msra.mxu0 0
    %1723 = vmatprep.subr.bf16.mxu0 0
    %1724 = vmatpush1.bf16.xpose.msra.mxu0 0
    %1725 = vmatprep.subr.bf16.mxu0 0
    %1726 = vmatpush1.bf16.xpose.msra.mxu0 0
    %1727 = vmatprep.subr.bf16.mxu0 0
    %1728 = vmatpush1.bf16.xpose.msra.mxu0 0
    %1729 = vmatprep.subr.bf16.mxu0 0
    %1730 = vmatpush1.bf16.xpose.msra.mxu0 0
    %1731 = vmatprep.subr.bf16.mxu0 0
    %1732 = vmatpush1.bf16.xpose.msra.mxu0 0
    %1733 = vmatprep.subr.bf16.mxu0 0
    %1734 = vmatpush1.bf16.xpose.msra.mxu0 0
    %1735 = vmatprep.mubr.bf16.mxu0 0
    %1736 = vmatmul.mubr.bf16.gmra.mrb[0].mxu0 %v1698
    %v1737 = vpop.f32.mrb[0].mxu0
    %v1738 = vadd.f32 0.0, %v1737
    %v1739 = vpop.f32.mrb[0].mxu0
    %v1740 = vpop.f32.mrb[0].mxu0
    %v1741 = vpop.f32.mrb[0].mxu0
    %1742 = vdwg.mxu0
    %1744 = vrot.lane.b32.xlu0 %v1495, 120
    %v1745 = vpop.permute.xlu0 %1744
    %v1747 = vsel %vm182, %v1495, 0
    %v1750 = vsel %vm182, %v1745, 0
    %1752 = vmatprep.subr.bf16.mxu0 0
    %1753 = vmatpush1.bf16.xpose.msra.mxu0 %v1750
    %1754 = vmatprep.subr.bf16.mxu0 0
    %1755 = vmatpush1.bf16.xpose.msra.mxu0 0
    %1756 = vmatprep.subr.bf16.mxu0 0
    %1757 = vmatpush1.bf16.xpose.msra.mxu0 0
    %1758 = vmatprep.subr.bf16.mxu0 0
    %1759 = vmatpush1.bf16.xpose.msra.mxu0 0
    %1760 = vmatprep.subr.bf16.mxu0 0
    %1761 = vmatpush1.bf16.xpose.msra.mxu0 0
    %1762 = vmatprep.subr.bf16.mxu0 0
    %1763 = vmatpush1.bf16.xpose.msra.mxu0 0
    %1764 = vmatprep.subr.bf16.mxu0 0
    %1765 = vmatpush1.bf16.xpose.msra.mxu0 0
    %1766 = vmatprep.subr.bf16.mxu0 0
    %1767 = vmatpush1.bf16.xpose.msra.mxu0 0
    %1768 = vmatprep.subr.bf16.mxu0 0
    %1769 = vmatpush1.bf16.xpose.msra.mxu0 0
    %1770 = vmatprep.subr.bf16.mxu0 0
    %1771 = vmatpush1.bf16.xpose.msra.mxu0 0
    %1772 = vmatprep.subr.bf16.mxu0 0
    %1773 = vmatpush1.bf16.xpose.msra.mxu0 0
    %1774 = vmatprep.subr.bf16.mxu0 0
    %1775 = vmatpush1.bf16.xpose.msra.mxu0 0
    %1776 = vmatprep.subr.bf16.mxu0 0
    %1777 = vmatpush1.bf16.xpose.msra.mxu0 0
    %1778 = vmatprep.subr.bf16.mxu0 0
    %1779 = vmatpush1.bf16.xpose.msra.mxu0 0
    %1780 = vmatprep.subr.bf16.mxu0 0
    %1781 = vmatpush1.bf16.xpose.msra.mxu0 0
    %1782 = vmatprep.subr.bf16.mxu0 0
    %1783 = vmatpush1.bf16.xpose.msra.mxu0 0
    %1784 = vmatprep.mubr.bf16.mxu0 0
    %1785 = vmatmul.mubr.bf16.gmra.mrb[0].mxu0 %v1747
    %v1786 = vpop.f32.mrb[0].mxu0
    %v1787 = vadd.f32 0.0, %v1786
    %v1788 = vpop.f32.mrb[0].mxu0
    %v1789 = vpop.f32.mrb[0].mxu0
    %v1790 = vpop.f32.mrb[0].mxu0
    %1791 = vdwg.mxu0
    %1793 = vrot.lane.b32.xlu0 %v1496, 120
    %v1794 = vpop.permute.xlu0 %1793
    %v1796 = vsel %vm182, %v1496, 0
    %v1799 = vsel %vm182, %v1794, 0
    %1801 = vmatprep.subr.bf16.mxu0 0
    %1802 = vmatpush1.bf16.xpose.msra.mxu0 %v1799
    %1803 = vmatprep.subr.bf16.mxu0 0
    %1804 = vmatpush1.bf16.xpose.msra.mxu0 0
    %1805 = vmatprep.subr.bf16.mxu0 0
    %1806 = vmatpush1.bf16.xpose.msra.mxu0 0
    %1807 = vmatprep.subr.bf16.mxu0 0
    %1808 = vmatpush1.bf16.xpose.msra.mxu0 0
    %1809 = vmatprep.subr.bf16.mxu0 0
    %1810 = vmatpush1.bf16.xpose.msra.mxu0 0
    %1811 = vmatprep.subr.bf16.mxu0 0
    %1812 = vmatpush1.bf16.xpose.msra.mxu0 0
    %1813 = vmatprep.subr.bf16.mxu0 0
    %1814 = vmatpush1.bf16.xpose.msra.mxu0 0
    %1815 = vmatprep.subr.bf16.mxu0 0
    %1816 = vmatpush1.bf16.xpose.msra.mxu0 0
    %1817 = vmatprep.subr.bf16.mxu0 0
    %1818 = vmatpush1.bf16.xpose.msra.mxu0 0
    %1819 = vmatprep.subr.bf16.mxu0 0
    %1820 = vmatpush1.bf16.xpose.msra.mxu0 0
    %1821 = vmatprep.subr.bf16.mxu0 0
    %1822 = vmatpush1.bf16.xpose.msra.mxu0 0
    %1823 = vmatprep.subr.bf16.mxu0 0
    %1824 = vmatpush1.bf16.xpose.msra.mxu0 0
    %1825 = vmatprep.subr.bf16.mxu0 0
    %1826 = vmatpush1.bf16.xpose.msra.mxu0 0
    %1827 = vmatprep.subr.bf16.mxu0 0
    %1828 = vmatpush1.bf16.xpose.msra.mxu0 0
    %1829 = vmatprep.subr.bf16.mxu0 0
    %1830 = vmatpush1.bf16.xpose.msra.mxu0 0
    %1831 = vmatprep.subr.bf16.mxu0 0
    %1832 = vmatpush1.bf16.xpose.msra.mxu0 0
    %1833 = vmatprep.mubr.bf16.mxu0 0
    %1834 = vmatmul.mubr.bf16.gmra.mrb[0].mxu0 %v1796
    %v1835 = vpop.f32.mrb[0].mxu0
    %v1836 = vadd.f32 0.0, %v1835
    %v1837 = vpop.f32.mrb[0].mxu0
    %v1838 = vpop.f32.mrb[0].mxu0
    %v1839 = vpop.f32.mrb[0].mxu0
    %1840 = vdwg.mxu0
    %1842 = vrot.lane.b32.xlu0 %v1497, 120
    %v1843 = vpop.permute.xlu0 %1842
    %v1845 = vsel %vm182, %v1497, 0
    %v1848 = vsel %vm182, %v1843, 0
    %1850 = vmatprep.subr.bf16.mxu0 0
    %1851 = vmatpush1.bf16.xpose.msra.mxu0 %v1848
    %1852 = vmatprep.subr.bf16.mxu0 0
    %1853 = vmatpush1.bf16.xpose.msra.mxu0 0
    %1854 = vmatprep.subr.bf16.mxu0 0
    %1855 = vmatpush1.bf16.xpose.msra.mxu0 0
    %1856 = vmatprep.subr.bf16.mxu0 0
    %1857 = vmatpush1.bf16.xpose.msra.mxu0 0
    %1858 = vmatprep.subr.bf16.mxu0 0
    %1859 = vmatpush1.bf16.xpose.msra.mxu0 0
    %1860 = vmatprep.subr.bf16.mxu0 0
    %1861 = vmatpush1.bf16.xpose.msra.mxu0 0
    %1862 = vmatprep.subr.bf16.mxu0 0
    %1863 = vmatpush1.bf16.xpose.msra.mxu0 0
    %1864 = vmatprep.subr.bf16.mxu0 0
    %1865 = vmatpush1.bf16.xpose.msra.mxu0 0
    %1866 = vmatprep.subr.bf16.mxu0 0
    %1867 = vmatpush1.bf16.xpose.msra.mxu0 0
    %1868 = vmatprep.subr.bf16.mxu0 0
    %1869 = vmatpush1.bf16.xpose.msra.mxu0 0
    %1870 = vmatprep.subr.bf16.mxu0 0
    %1871 = vmatpush1.bf16.xpose.msra.mxu0 0
    %1872 = vmatprep.subr.bf16.mxu0 0
    %1873 = vmatpush1.bf16.xpose.msra.mxu0 0
    %1874 = vmatprep.subr.bf16.mxu0 0
    %1875 = vmatpush1.bf16.xpose.msra.mxu0 0
    %1876 = vmatprep.subr.bf16.mxu0 0
    %1877 = vmatpush1.bf16.xpose.msra.mxu0 0
    %1878 = vmatprep.subr.bf16.mxu0 0
    %1879 = vmatpush1.bf16.xpose.msra.mxu0 0
    %1880 = vmatprep.subr.bf16.mxu0 0
    %1881 = vmatpush1.bf16.xpose.msra.mxu0 0
    %1882 = vmatprep.mubr.bf16.mxu0 0
    %1883 = vmatmul.mubr.bf16.gmra.mrb[0].mxu0 %v1845
    %v1884 = vpop.f32.mrb[0].mxu0
    %v1885 = vadd.f32 0.0, %v1884
    %v1886 = vpop.f32.mrb[0].mxu0
    %v1887 = vpop.f32.mrb[0].mxu0
    %v1888 = vpop.f32.mrb[0].mxu0
    %1889 = vdwg.mxu0
    %v1890 = vsel %vm182, %v1542, -inf
    %1891 = vmax.xlane.f32.xlu0 %v1890
    %v1892 = vpop.xlane.xlu0 %1891
    %v1893 = vsel %vm182, %v1591, -inf
    %1894 = vmax.xlane.f32.xlu0 %v1893
    %v1895 = vpop.xlane.xlu0 %1894
    %v1896 = vsel %vm182, %v1640, -inf
    %1897 = vmax.xlane.f32.xlu0 %v1896
    %v1898 = vpop.xlane.xlu0 %1897
    %v1899 = vsel %vm182, %v1689, -inf
    %1900 = vmax.xlane.f32.xlu0 %v1899
    %v1901 = vpop.xlane.xlu0 %1900
    %v1902 = vsel %vm182, %v1738, -inf
    %1903 = vmax.xlane.f32.xlu0 %v1902
    %v1904 = vpop.xlane.xlu0 %1903
    %v1905 = vsel %vm182, %v1787, -inf
    %1906 = vmax.xlane.f32.xlu0 %v1905
    %v1907 = vpop.xlane.xlu0 %1906
    %v1908 = vsel %vm182, %v1836, -inf
    %1909 = vmax.xlane.f32.xlu0 %v1908
    %v1910 = vpop.xlane.xlu0 %1909
    %v1911 = vsel %vm182, %v1885, -inf
    %1912 = vmax.xlane.f32.xlu0 %v1911
    %v1913 = vpop.xlane.xlu0 %1912
    %v1914 = vsub.f32 %v1542, %v1892
    %v1915 = vsub.f32 %v1591, %v1895
    %v1916 = vsub.f32 %v1640, %v1898
    %v1917 = vsub.f32 %v1689, %v1901
    %v1918 = vsub.f32 %v1738, %v1904
    %v1919 = vsub.f32 %v1787, %v1907
    %v1920 = vsub.f32 %v1836, %v1910
    %v1921 = vsub.f32 %v1885, %v1913
    %v1922 = vmul.f32 %v1914, 1.442695
    %v1923 = vpow.pop %v1922
    %v1924 = vmul.f32 %v1915, 1.442695
    %v1925 = vpow.pop %v1924
    %v1926 = vmul.f32 %v1916, 1.442695
    %v1927 = vpow.pop %v1926
    %v1928 = vmul.f32 %v1917, 1.442695
    %v1929 = vpow.pop %v1928
    %v1930 = vmul.f32 %v1918, 1.442695
    %v1931 = vpow.pop %v1930
    %v1932 = vmul.f32 %v1919, 1.442695
    %v1933 = vpow.pop %v1932
    %v1934 = vmul.f32 %v1920, 1.442695
    %v1935 = vpow.pop %v1934
    %v1936 = vmul.f32 %v1921, 1.442695
    %v1937 = vpow.pop %v1936
    %v1938 = vsel %vm182, %v1923, 0.0
    %1939 = vadd.xlane.f32.xlu0 %v1938
    %v1940 = vpop.xlane.xlu0 %1939
    %v1941 = vsel %vm182, %v1925, 0.0
    %1942 = vadd.xlane.f32.xlu0 %v1941
    %v1943 = vpop.xlane.xlu0 %1942
    %v1944 = vsel %vm182, %v1927, 0.0
    %1945 = vadd.xlane.f32.xlu0 %v1944
    %v1946 = vpop.xlane.xlu0 %1945
    %v1947 = vsel %vm182, %v1929, 0.0
    %1948 = vadd.xlane.f32.xlu0 %v1947
    %v1949 = vpop.xlane.xlu0 %1948
    %v1950 = vsel %vm182, %v1931, 0.0
    %1951 = vadd.xlane.f32.xlu0 %v1950
    %v1952 = vpop.xlane.xlu0 %1951
    %v1953 = vsel %vm182, %v1933, 0.0
    %1954 = vadd.xlane.f32.xlu0 %v1953
    %v1955 = vpop.xlane.xlu0 %1954
    %v1956 = vsel %vm182, %v1935, 0.0
    %1957 = vadd.xlane.f32.xlu0 %v1956
    %v1958 = vpop.xlane.xlu0 %1957
    %v1959 = vsel %vm182, %v1937, 0.0
    %1960 = vadd.xlane.f32.xlu0 %v1959
    %v1961 = vpop.xlane.xlu0 %1960
    %v1962 = vrcp.pop %v1940
    %v1963 = vmul.f32 %v1923, %v1962
    %v1964 = vrcp.pop %v1943
    %v1965 = vmul.f32 %v1925, %v1964
    %v1966 = vrcp.pop %v1946
    %v1967 = vmul.f32 %v1927, %v1966
    %v1968 = vrcp.pop %v1949
    %v1969 = vmul.f32 %v1929, %v1968
    %v1970 = vrcp.pop %v1952
    %v1971 = vmul.f32 %v1931, %v1970
    %v1972 = vrcp.pop %v1955
    %v1973 = vmul.f32 %v1933, %v1972
    %v1974 = vrcp.pop %v1958
    %v1975 = vmul.f32 %v1935, %v1974
    %v1976 = vrcp.pop %v1961
    %v1977 = vmul.f32 %v1937, %v1976
    %v1978 = vpack.c.bf16 %v1963, %v1963
    %v1979 = vpack.c.bf16 %v1965, %v1965
    %v1980 = vpack.c.bf16 %v1967, %v1967
    %v1981 = vpack.c.bf16 %v1969, %v1969
    %v1982 = vpack.c.bf16 %v1971, %v1971
    %v1983 = vpack.c.bf16 %v1973, %v1973
    %v1984 = vpack.c.bf16 %v1975, %v1975
    %v1985 = vpack.c.bf16 %v1977, %v1977
    %1986 = vrot.lane.b32.xlu0 %v1490, 112
    %v1987 = vpop.permute.xlu0 %1986
    %v1989 = vsel %vm182, %v1978, 0
    %v1992 = vsel %vm673, %v1987, 0
    %1994 = vmatprep.subr.bf16.mxu0 0
    %1995 = vmatpush1.bf16.msra.mxu0 %v1992
    %1996 = vmatprep.subr.bf16.mxu0 0
    %1997 = vmatpush1.bf16.msra.mxu0 0
    %1998 = vmatprep.subr.bf16.mxu0 0
    %1999 = vmatpush1.bf16.msra.mxu0 0
    %2000 = vmatprep.subr.bf16.mxu0 0
    %2001 = vmatpush1.bf16.msra.mxu0 0
    %2002 = vmatprep.subr.bf16.mxu0 0
    %2003 = vmatpush1.bf16.msra.mxu0 0
    %2004 = vmatprep.subr.bf16.mxu0 0
    %2005 = vmatpush1.bf16.msra.mxu0 0
    %2006 = vmatprep.subr.bf16.mxu0 0
    %2007 = vmatpush1.bf16.msra.mxu0 0
    %2008 = vmatprep.subr.bf16.mxu0 0
    %2009 = vmatpush1.bf16.msra.mxu0 0
    %2010 = vmatprep.subr.bf16.mxu0 0
    %2011 = vmatpush1.bf16.msra.mxu0 0
    %2012 = vmatprep.subr.bf16.mxu0 0
    %2013 = vmatpush1.bf16.msra.mxu0 0
    %2014 = vmatprep.subr.bf16.mxu0 0
    %2015 = vmatpush1.bf16.msra.mxu0 0
    %2016 = vmatprep.subr.bf16.mxu0 0
    %2017 = vmatpush1.bf16.msra.mxu0 0
    %2018 = vmatprep.subr.bf16.mxu0 0
    %2019 = vmatpush1.bf16.msra.mxu0 0
    %2020 = vmatprep.subr.bf16.mxu0 0
    %2021 = vmatpush1.bf16.msra.mxu0 0
    %2022 = vmatprep.subr.bf16.mxu0 0
    %2023 = vmatpush1.bf16.msra.mxu0 0
    %2024 = vmatprep.subr.bf16.mxu0 0
    %2025 = vmatpush1.bf16.msra.mxu0 0
    %2026 = vmatprep.mubr.bf16.mxu0 0
    %2027 = vmatmul.mubr.bf16.gmra.mrb[0].mxu0 %v1989
    %v2028 = vpop.f32.mrb[0].mxu0
    %v2029 = vadd.f32 0.0, %v2028
    %v2030 = vpop.f32.mrb[0].mxu0
    %v2031 = vpop.f32.mrb[0].mxu0
    %v2032 = vpop.f32.mrb[0].mxu0
    %2033 = vdwg.mxu0
    %2034 = vrot.lane.b32.xlu0 %v1491, 112
    %v2035 = vpop.permute.xlu0 %2034
    %v2037 = vsel %vm182, %v1979, 0
    %v2040 = vsel %vm673, %v2035, 0
    %2042 = vmatprep.subr.bf16.mxu0 0
    %2043 = vmatpush1.bf16.msra.mxu0 %v2040
    %2044 = vmatprep.subr.bf16.mxu0 0
    %2045 = vmatpush1.bf16.msra.mxu0 0
    %2046 = vmatprep.subr.bf16.mxu0 0
    %2047 = vmatpush1.bf16.msra.mxu0 0
    %2048 = vmatprep.subr.bf16.mxu0 0
    %2049 = vmatpush1.bf16.msra.mxu0 0
    %2050 = vmatprep.subr.bf16.mxu0 0
    %2051 = vmatpush1.bf16.msra.mxu0 0
    %2052 = vmatprep.subr.bf16.mxu0 0
    %2053 = vmatpush1.bf16.msra.mxu0 0
    %2054 = vmatprep.subr.bf16.mxu0 0
    %2055 = vmatpush1.bf16.msra.mxu0 0
    %2056 = vmatprep.subr.bf16.mxu0 0
    %2057 = vmatpush1.bf16.msra.mxu0 0
    %2058 = vmatprep.subr.bf16.mxu0 0
    %2059 = vmatpush1.bf16.msra.mxu0 0
    %2060 = vmatprep.subr.bf16.mxu0 0
    %2061 = vmatpush1.bf16.msra.mxu0 0
    %2062 = vmatprep.subr.bf16.mxu0 0
    %2063 = vmatpush1.bf16.msra.mxu0 0
    %2064 = vmatprep.subr.bf16.mxu0 0
    %2065 = vmatpush1.bf16.msra.mxu0 0
    %2066 = vmatprep.subr.bf16.mxu0 0
    %2067 = vmatpush1.bf16.msra.mxu0 0
    %2068 = vmatprep.subr.bf16.mxu0 0
    %2069 = vmatpush1.bf16.msra.mxu0 0
    %2070 = vmatprep.subr.bf16.mxu0 0
    %2071 = vmatpush1.bf16.msra.mxu0 0
    %2072 = vmatprep.subr.bf16.mxu0 0
    %2073 = vmatpush1.bf16.msra.mxu0 0
    %2074 = vmatprep.mubr.bf16.mxu0 0
    %2075 = vmatmul.mubr.bf16.gmra.mrb[0].mxu0 %v2037
    %v2076 = vpop.f32.mrb[0].mxu0
    %v2077 = vadd.f32 0.0, %v2076
    %v2078 = vpop.f32.mrb[0].mxu0
    %v2079 = vpop.f32.mrb[0].mxu0
    %v2080 = vpop.f32.mrb[0].mxu0
    %2081 = vdwg.mxu0
    %2082 = vrot.lane.b32.xlu0 %v1492, 112
    %v2083 = vpop.permute.xlu0 %2082
    %v2085 = vsel %vm182, %v1980, 0
    %v2088 = vsel %vm673, %v2083, 0
    %2090 = vmatprep.subr.bf16.mxu0 0
    %2091 = vmatpush1.bf16.msra.mxu0 %v2088
    %2092 = vmatprep.subr.bf16.mxu0 0
    %2093 = vmatpush1.bf16.msra.mxu0 0
    %2094 = vmatprep.subr.bf16.mxu0 0
    %2095 = vmatpush1.bf16.msra.mxu0 0
    %2096 = vmatprep.subr.bf16.mxu0 0
    %2097 = vmatpush1.bf16.msra.mxu0 0
    %2098 = vmatprep.subr.bf16.mxu0 0
    %2099 = vmatpush1.bf16.msra.mxu0 0
    %2100 = vmatprep.subr.bf16.mxu0 0
    %2101 = vmatpush1.bf16.msra.mxu0 0
    %2102 = vmatprep.subr.bf16.mxu0 0
    %2103 = vmatpush1.bf16.msra.mxu0 0
    %2104 = vmatprep.subr.bf16.mxu0 0
    %2105 = vmatpush1.bf16.msra.mxu0 0
    %2106 = vmatprep.subr.bf16.mxu0 0
    %2107 = vmatpush1.bf16.msra.mxu0 0
    %2108 = vmatprep.subr.bf16.mxu0 0
    %2109 = vmatpush1.bf16.msra.mxu0 0
    %2110 = vmatprep.subr.bf16.mxu0 0
    %2111 = vmatpush1.bf16.msra.mxu0 0
    %2112 = vmatprep.subr.bf16.mxu0 0
    %2113 = vmatpush1.bf16.msra.mxu0 0
    %2114 = vmatprep.subr.bf16.mxu0 0
    %2115 = vmatpush1.bf16.msra.mxu0 0
    %2116 = vmatprep.subr.bf16.mxu0 0
    %2117 = vmatpush1.bf16.msra.mxu0 0
    %2118 = vmatprep.subr.bf16.mxu0 0
    %2119 = vmatpush1.bf16.msra.mxu0 0
    %2120 = vmatprep.subr.bf16.mxu0 0
    %2121 = vmatpush1.bf16.msra.mxu0 0
    %2122 = vmatprep.mubr.bf16.mxu0 0
    %2123 = vmatmul.mubr.bf16.gmra.mrb[0].mxu0 %v2085
    %v2124 = vpop.f32.mrb[0].mxu0
    %v2125 = vadd.f32 0.0, %v2124
    %v2126 = vpop.f32.mrb[0].mxu0
    %v2127 = vpop.f32.mrb[0].mxu0
    %v2128 = vpop.f32.mrb[0].mxu0
    %2129 = vdwg.mxu0
    %2130 = vrot.lane.b32.xlu0 %v1493, 112
    %v2131 = vpop.permute.xlu0 %2130
    %v2133 = vsel %vm182, %v1981, 0
    %v2136 = vsel %vm673, %v2131, 0
    %2138 = vmatprep.subr.bf16.mxu0 0
    %2139 = vmatpush1.bf16.msra.mxu0 %v2136
    %2140 = vmatprep.subr.bf16.mxu0 0
    %2141 = vmatpush1.bf16.msra.mxu0 0
    %2142 = vmatprep.subr.bf16.mxu0 0
    %2143 = vmatpush1.bf16.msra.mxu0 0
    %2144 = vmatprep.subr.bf16.mxu0 0
    %2145 = vmatpush1.bf16.msra.mxu0 0
    %2146 = vmatprep.subr.bf16.mxu0 0
    %2147 = vmatpush1.bf16.msra.mxu0 0
    %2148 = vmatprep.subr.bf16.mxu0 0
    %2149 = vmatpush1.bf16.msra.mxu0 0
    %2150 = vmatprep.subr.bf16.mxu0 0
    %2151 = vmatpush1.bf16.msra.mxu0 0
    %2152 = vmatprep.subr.bf16.mxu0 0
    %2153 = vmatpush1.bf16.msra.mxu0 0
    %2154 = vmatprep.subr.bf16.mxu0 0
    %2155 = vmatpush1.bf16.msra.mxu0 0
    %2156 = vmatprep.subr.bf16.mxu0 0
    %2157 = vmatpush1.bf16.msra.mxu0 0
    %2158 = vmatprep.subr.bf16.mxu0 0
    %2159 = vmatpush1.bf16.msra.mxu0 0
    %2160 = vmatprep.subr.bf16.mxu0 0
    %2161 = vmatpush1.bf16.msra.mxu0 0
    %2162 = vmatprep.subr.bf16.mxu0 0
    %2163 = vmatpush1.bf16.msra.mxu0 0
    %2164 = vmatprep.subr.bf16.mxu0 0
    %2165 = vmatpush1.bf16.msra.mxu0 0
    %2166 = vmatprep.subr.bf16.mxu0 0
    %2167 = vmatpush1.bf16.msra.mxu0 0
    %2168 = vmatprep.subr.bf16.mxu0 0
    %2169 = vmatpush1.bf16.msra.mxu0 0
    %2170 = vmatprep.mubr.bf16.mxu0 0
    %2171 = vmatmul.mubr.bf16.gmra.mrb[0].mxu0 %v2133
    %v2172 = vpop.f32.mrb[0].mxu0
    %v2173 = vadd.f32 0.0, %v2172
    %v2174 = vpop.f32.mrb[0].mxu0
    %v2175 = vpop.f32.mrb[0].mxu0
    %v2176 = vpop.f32.mrb[0].mxu0
    %2177 = vdwg.mxu0
    %2178 = vrot.lane.b32.xlu0 %v1494, 112
    %v2179 = vpop.permute.xlu0 %2178
    %v2181 = vsel %vm182, %v1982, 0
    %v2184 = vsel %vm673, %v2179, 0
    %2186 = vmatprep.subr.bf16.mxu0 0
    %2187 = vmatpush1.bf16.msra.mxu0 %v2184
    %2188 = vmatprep.subr.bf16.mxu0 0
    %2189 = vmatpush1.bf16.msra.mxu0 0
    %2190 = vmatprep.subr.bf16.mxu0 0
    %2191 = vmatpush1.bf16.msra.mxu0 0
    %2192 = vmatprep.subr.bf16.mxu0 0
    %2193 = vmatpush1.bf16.msra.mxu0 0
    %2194 = vmatprep.subr.bf16.mxu0 0
    %2195 = vmatpush1.bf16.msra.mxu0 0
    %2196 = vmatprep.subr.bf16.mxu0 0
    %2197 = vmatpush1.bf16.msra.mxu0 0
    %2198 = vmatprep.subr.bf16.mxu0 0
    %2199 = vmatpush1.bf16.msra.mxu0 0
    %2200 = vmatprep.subr.bf16.mxu0 0
    %2201 = vmatpush1.bf16.msra.mxu0 0
    %2202 = vmatprep.subr.bf16.mxu0 0
    %2203 = vmatpush1.bf16.msra.mxu0 0
    %2204 = vmatprep.subr.bf16.mxu0 0
    %2205 = vmatpush1.bf16.msra.mxu0 0
    %2206 = vmatprep.subr.bf16.mxu0 0
    %2207 = vmatpush1.bf16.msra.mxu0 0
    %2208 = vmatprep.subr.bf16.mxu0 0
    %2209 = vmatpush1.bf16.msra.mxu0 0
    %2210 = vmatprep.subr.bf16.mxu0 0
    %2211 = vmatpush1.bf16.msra.mxu0 0
    %2212 = vmatprep.subr.bf16.mxu0 0
    %2213 = vmatpush1.bf16.msra.mxu0 0
    %2214 = vmatprep.subr.bf16.mxu0 0
    %2215 = vmatpush1.bf16.msra.mxu0 0
    %2216 = vmatprep.subr.bf16.mxu0 0
    %2217 = vmatpush1.bf16.msra.mxu0 0
    %2218 = vmatprep.mubr.bf16.mxu0 0
    %2219 = vmatmul.mubr.bf16.gmra.mrb[0].mxu0 %v2181
    %v2220 = vpop.f32.mrb[0].mxu0
    %v2221 = vadd.f32 0.0, %v2220
    %v2222 = vpop.f32.mrb[0].mxu0
    %v2223 = vpop.f32.mrb[0].mxu0
    %v2224 = vpop.f32.mrb[0].mxu0
    %2225 = vdwg.mxu0
    %2226 = vrot.lane.b32.xlu0 %v1495, 112
    %v2227 = vpop.permute.xlu0 %2226
    %v2229 = vsel %vm182, %v1983, 0
    %v2232 = vsel %vm673, %v2227, 0
    %2234 = vmatprep.subr.bf16.mxu0 0
    %2235 = vmatpush1.bf16.msra.mxu0 %v2232
    %2236 = vmatprep.subr.bf16.mxu0 0
    %2237 = vmatpush1.bf16.msra.mxu0 0
    %2238 = vmatprep.subr.bf16.mxu0 0
    %2239 = vmatpush1.bf16.msra.mxu0 0
    %2240 = vmatprep.subr.bf16.mxu0 0
    %2241 = vmatpush1.bf16.msra.mxu0 0
    %2242 = vmatprep.subr.bf16.mxu0 0
    %2243 = vmatpush1.bf16.msra.mxu0 0
    %2244 = vmatprep.subr.bf16.mxu0 0
    %2245 = vmatpush1.bf16.msra.mxu0 0
    %2246 = vmatprep.subr.bf16.mxu0 0
    %2247 = vmatpush1.bf16.msra.mxu0 0
    %2248 = vmatprep.subr.bf16.mxu0 0
    %2249 = vmatpush1.bf16.msra.mxu0 0
    %2250 = vmatprep.subr.bf16.mxu0 0
    %2251 = vmatpush1.bf16.msra.mxu0 0
    %2252 = vmatprep.subr.bf16.mxu0 0
    %2253 = vmatpush1.bf16.msra.mxu0 0
    %2254 = vmatprep.subr.bf16.mxu0 0
    %2255 = vmatpush1.bf16.msra.mxu0 0
    %2256 = vmatprep.subr.bf16.mxu0 0
    %2257 = vmatpush1.bf16.msra.mxu0 0
    %2258 = vmatprep.subr.bf16.mxu0 0
    %2259 = vmatpush1.bf16.msra.mxu0 0
    %2260 = vmatprep.subr.bf16.mxu0 0
    %2261 = vmatpush1.bf16.msra.mxu0 0
    %2262 = vmatprep.subr.bf16.mxu0 0
    %2263 = vmatpush1.bf16.msra.mxu0 0
    %2264 = vmatprep.subr.bf16.mxu0 0
    %2265 = vmatpush1.bf16.msra.mxu0 0
    %2266 = vmatprep.mubr.bf16.mxu0 0
    %2267 = vmatmul.mubr.bf16.gmra.mrb[0].mxu0 %v2229
    %v2268 = vpop.f32.mrb[0].mxu0
    %v2269 = vadd.f32 0.0, %v2268
    %v2270 = vpop.f32.mrb[0].mxu0
    %v2271 = vpop.f32.mrb[0].mxu0
    %v2272 = vpop.f32.mrb[0].mxu0
    %2273 = vdwg.mxu0
    %2274 = vrot.lane.b32.xlu0 %v1496, 112
    %v2275 = vpop.permute.xlu0 %2274
    %v2277 = vsel %vm182, %v1984, 0
    %v2280 = vsel %vm673, %v2275, 0
    %2282 = vmatprep.subr.bf16.mxu0 0
    %2283 = vmatpush1.bf16.msra.mxu0 %v2280
    %2284 = vmatprep.subr.bf16.mxu0 0
    %2285 = vmatpush1.bf16.msra.mxu0 0
    %2286 = vmatprep.subr.bf16.mxu0 0
    %2287 = vmatpush1.bf16.msra.mxu0 0
    %2288 = vmatprep.subr.bf16.mxu0 0
    %2289 = vmatpush1.bf16.msra.mxu0 0
    %2290 = vmatprep.subr.bf16.mxu0 0
    %2291 = vmatpush1.bf16.msra.mxu0 0
    %2292 = vmatprep.subr.bf16.mxu0 0
    %2293 = vmatpush1.bf16.msra.mxu0 0
    %2294 = vmatprep.subr.bf16.mxu0 0
    %2295 = vmatpush1.bf16.msra.mxu0 0
    %2296 = vmatprep.subr.bf16.mxu0 0
    %2297 = vmatpush1.bf16.msra.mxu0 0
    %2298 = vmatprep.subr.bf16.mxu0 0
    %2299 = vmatpush1.bf16.msra.mxu0 0
    %2300 = vmatprep.subr.bf16.mxu0 0
    %2301 = vmatpush1.bf16.msra.mxu0 0
    %2302 = vmatprep.subr.bf16.mxu0 0
    %2303 = vmatpush1.bf16.msra.mxu0 0
    %2304 = vmatprep.subr.bf16.mxu0 0
    %2305 = vmatpush1.bf16.msra.mxu0 0
    %2306 = vmatprep.subr.bf16.mxu0 0
    %2307 = vmatpush1.bf16.msra.mxu0 0
    %2308 = vmatprep.subr.bf16.mxu0 0
    %2309 = vmatpush1.bf16.msra.mxu0 0
    %2310 = vmatprep.subr.bf16.mxu0 0
    %2311 = vmatpush1.bf16.msra.mxu0 0
    %2312 = vmatprep.subr.bf16.mxu0 0
    %2313 = vmatpush1.bf16.msra.mxu0 0
    %2314 = vmatprep.mubr.bf16.mxu0 0
    %2315 = vmatmul.mubr.bf16.gmra.mrb[0].mxu0 %v2277
    %v2316 = vpop.f32.mrb[0].mxu0
    %v2317 = vadd.f32 0.0, %v2316
    %v2318 = vpop.f32.mrb[0].mxu0
    %v2319 = vpop.f32.mrb[0].mxu0
    %v2320 = vpop.f32.mrb[0].mxu0
    %2321 = vdwg.mxu0
    %2322 = vrot.lane.b32.xlu0 %v1497, 112
    %v2323 = vpop.permute.xlu0 %2322
    %v2325 = vsel %vm182, %v1985, 0
    %v2328 = vsel %vm673, %v2323, 0
    %2330 = vmatprep.subr.bf16.mxu0 0
    %2331 = vmatpush1.bf16.msra.mxu0 %v2328
    %2332 = vmatprep.subr.bf16.mxu0 0
    %2333 = vmatpush1.bf16.msra.mxu0 0
    %2334 = vmatprep.subr.bf16.mxu0 0
    %2335 = vmatpush1.bf16.msra.mxu0 0
    %2336 = vmatprep.subr.bf16.mxu0 0
    %2337 = vmatpush1.bf16.msra.mxu0 0
    %2338 = vmatprep.subr.bf16.mxu0 0
    %2339 = vmatpush1.bf16.msra.mxu0 0
    %2340 = vmatprep.subr.bf16.mxu0 0
    %2341 = vmatpush1.bf16.msra.mxu0 0
    %2342 = vmatprep.subr.bf16.mxu0 0
    %2343 = vmatpush1.bf16.msra.mxu0 0
    %2344 = vmatprep.subr.bf16.mxu0 0
    %2345 = vmatpush1.bf16.msra.mxu0 0
    %2346 = vmatprep.subr.bf16.mxu0 0
    %2347 = vmatpush1.bf16.msra.mxu0 0
    %2348 = vmatprep.subr.bf16.mxu0 0
    %2349 = vmatpush1.bf16.msra.mxu0 0
    %2350 = vmatprep.subr.bf16.mxu0 0
    %2351 = vmatpush1.bf16.msra.mxu0 0
    %2352 = vmatprep.subr.bf16.mxu0 0
    %2353 = vmatpush1.bf16.msra.mxu0 0
    %2354 = vmatprep.subr.bf16.mxu0 0
    %2355 = vmatpush1.bf16.msra.mxu0 0
    %2356 = vmatprep.subr.bf16.mxu0 0
    %2357 = vmatpush1.bf16.msra.mxu0 0
    %2358 = vmatprep.subr.bf16.mxu0 0
    %2359 = vmatpush1.bf16.msra.mxu0 0
    %2360 = vmatprep.subr.bf16.mxu0 0
    %2361 = vmatpush1.bf16.msra.mxu0 0
    %2362 = vmatprep.mubr.bf16.mxu0 0
    %2363 = vmatmul.mubr.bf16.gmra.mrb[0].mxu0 %v2325
    %v2364 = vpop.f32.mrb[0].mxu0
    %v2365 = vadd.f32 0.0, %v2364
    %v2366 = vpop.f32.mrb[0].mxu0
    %v2367 = vpop.f32.mrb[0].mxu0
    %v2368 = vpop.f32.mrb[0].mxu0
    %2369 = vdwg.mxu0
    %2372 = vrot.lane.b32.xlu0 %v2125, 8
    %v2373 = vpop.permute.xlu0 %2372
    %2374 = vrot.lane.b32.xlu0 %v2173, 8
    %v2375 = vpop.permute.xlu0 %2374
    %2380 = vrot.lane.b32.xlu0 %v2221, 16
    %v2381 = vpop.permute.xlu0 %2380
    %2382 = vrot.lane.b32.xlu0 %v2269, 16
    %v2383 = vpop.permute.xlu0 %2382
    %2388 = vrot.lane.b32.xlu0 %v2317, 24
    %v2389 = vpop.permute.xlu0 %2388
    %2390 = vrot.lane.b32.xlu0 %v2365, 24
    %v2391 = vpop.permute.xlu0 %2390
    %v2394 = vsel %vm182, %v2029, %v2373
    %v2395 = vsel %vm182, %v2077, %v2375
    %v2396 = vsel %vm1079, %v2394, %v2381
    %v2397 = vsel %vm1079, %v2395, %v2383
    %v2398 = vsel %vm1082, %v2396, %v2389
    %v2399 = vsel %vm1082, %v2397, %v2391
    %v2400 = vld [vmem:[%s1 + $0x1a8] sm:$0xff]
    %v2401 = vld [vmem:[%s1 + $0x1b0] sm:$0xff]
    %v2402 = vld [vmem:[%s1 + $0x1b8] sm:$0xff]
    %v2403 = vld [vmem:[%s1 + $0x1c0] sm:$0xff]
    %v2404 = vld [vmem:[%s1 + $0x1c8] sm:$0x1]
    %v2405 = vpack.c.bf16 %v2399, %v2398
    %v2406 = vpack.c.bf16 %v2401, %v2400
    %v2407 = vpack.c.bf16 %v2403, %v2402
    %v2408 = vlaneseq
    %v2409 = vshrl.u32 %v2408, 7
    %v2410 = vsub.s32 0, %v2409
    %v2411 = vrot.slane %v2404, %v2410
    %v2413 = vsel %vm25, %v2405, 0
    %v2416 = vsel %vm25, %v2406, 0
    %v2419 = vsel %vm25, %v2407, 0
    %2421 = vmatprep.subr.bf16.mxu0 0
    %2422 = vmatpush1.bf16.xpose.msra.mxu0 %v2416
    %2423 = vmatprep.subr.bf16.mxu0 0
    %2424 = vmatpush1.bf16.xpose.msra.mxu0 %v2419
    %2425 = vmatprep.subr.bf16.mxu0 0
    %2426 = vmatpush1.bf16.xpose.msra.mxu0 0
    %2427 = vmatprep.subr.bf16.mxu0 0
    %2428 = vmatpush1.bf16.xpose.msra.mxu0 0
    %2429 = vmatprep.subr.bf16.mxu0 0
    %2430 = vmatpush1.bf16.xpose.msra.mxu0 0
    %2431 = vmatprep.subr.bf16.mxu0 0
    %2432 = vmatpush1.bf16.xpose.msra.mxu0 0
    %2433 = vmatprep.subr.bf16.mxu0 0
    %2434 = vmatpush1.bf16.xpose.msra.mxu0 0
    %2435 = vmatprep.subr.bf16.mxu0 0
    %2436 = vmatpush1.bf16.xpose.msra.mxu0 0
    %2437 = vmatprep.subr.bf16.mxu0 0
    %2438 = vmatpush1.bf16.xpose.msra.mxu0 0
    %2439 = vmatprep.subr.bf16.mxu0 0
    %2440 = vmatpush1.bf16.xpose.msra.mxu0 0
    %2441 = vmatprep.subr.bf16.mxu0 0
    %2442 = vmatpush1.bf16.xpose.msra.mxu0 0
    %2443 = vmatprep.subr.bf16.mxu0 0
    %2444 = vmatpush1.bf16.xpose.msra.mxu0 0
    %2445 = vmatprep.subr.bf16.mxu0 0
    %2446 = vmatpush1.bf16.xpose.msra.mxu0 0
    %2447 = vmatprep.subr.bf16.mxu0 0
    %2448 = vmatpush1.bf16.xpose.msra.mxu0 0
    %2449 = vmatprep.subr.bf16.mxu0 0
    %2450 = vmatpush1.bf16.xpose.msra.mxu0 0
    %2451 = vmatprep.subr.bf16.mxu0 0
    %2452 = vmatpush1.bf16.xpose.msra.mxu0 0
    %2453 = vmatprep.mubr.bf16.mxu0 0
    %2454 = vmatmul.mubr.bf16.gmra.mrb[0].mxu0 %v2413
    %v2455 = vpop.f32.mrb[0].mxu0
    %v2456 = vadd.f32 %v2411, %v2455
    %v2457 = vpop.f32.mrb[0].mxu0
    %v2458 = vpop.f32.mrb[0].mxu0
    %v2459 = vadd.f32 %v2411, %v2458
    %v2460 = vpop.f32.mrb[0].mxu0
    %2461 = vdwg.mxu0
    %v2462 = vadd.f32 %v1342, %v2456
    %v2463 = vadd.f32 %v1343, %v2459
    %v2464 = vld [vmem:[%s1 + $0x1d0] sm:$0x1]
    %v2465 = vld [vmem:[%s1 + $0x1d8] sm:$0x1]
    %v2466 = vsel %vm25, %v2462, 0.0
    %2467 = vadd.xlane.f32.xlu0 %v2466
    %v2468 = vpop.xlane.xlu0 %2467
    %v2469 = vsel %vm25, %v2463, 0.0
    %2470 = vadd.xlane.f32.xlu0 %v2469
    %v2471 = vpop.xlane.xlu0 %2470
    %v2472 = vmul.f32 %v2468, %v32
    %v2473 = vmul.f32 %v2471, %v32
    %v2474 = vsub.f32 %v2462, %v2472
    %v2475 = vsub.f32 %v2463, %v2473
    %v2476 = vmul.f32 %v2474, %v2474
    %v2477 = vmul.f32 %v2475, %v2475
    %v2478 = vsel %vm25, %v2476, 0.0
    %2479 = vadd.xlane.f32.xlu0 %v2478
    %v2480 = vpop.xlane.xlu0 %2479
    %v2481 = vsel %vm25, %v2477, 0.0
    %2482 = vadd.xlane.f32.xlu0 %v2481
    %v2483 = vpop.xlane.xlu0 %2482
    %v2484 = vmul.f32 %v2480, %v32
    %v2485 = vmul.f32 %v2483, %v32
    %v2486 = vadd.f32 %v2484, 1e-05
    %v2487 = vadd.f32 %v2485, 1e-05
    %v2488 = vrsqrt.pop %v2486
    %v2489 = vrsqrt.pop %v2487
    %v2490 = vmul.f32 %v2474, %v2488
    %v2491 = vmul.f32 %v2475, %v2489
    %v2492 = vlaneseq
    %v2493 = vshrl.u32 %v2492, 7
    %v2494 = vsub.s32 0, %v2493
    %v2495 = vrot.slane %v2464, %v2494
    %v2496 = vmul.f32 %v2490, %v2495
    %v2497 = vmul.f32 %v2491, %v2495
    %v2498 = vlaneseq
    %v2499 = vshrl.u32 %v2498, 7
    %v2500 = vsub.s32 0, %v2499
    %v2501 = vrot.slane %v2465, %v2500
    %v2502 = vadd.f32 %v2496, %v2501
    %v2503 = vadd.f32 %v2497, %v2501
    %v2504 = vld [vmem:[%s1 + $0x1e0] sm:$0xff]
    %v2505 = vld [vmem:[%s1 + $0x1e8] sm:$0xff]
    %v2506 = vld [vmem:[%s1 + $0x1f0] sm:$0xff]
    %v2507 = vld [vmem:[%s1 + $0x1f8] sm:$0xff]
    %v2508 = vld [vmem:[%s1 + $0x200] sm:$0xff]
    %v2509 = vld [vmem:[%s1 + $0x208] sm:$0xff]
    %v2510 = vld [vmem:[%s1 + $0x210] sm:$0xff]
    %v2511 = vld [vmem:[%s1 + $0x218] sm:$0xff]
    %v2512 = vld [vmem:[%s1 + $0x220] sm:$0xff]
    %v2513 = vld [vmem:[%s1 + $0x228] sm:$0xff]
    %v2514 = vld [vmem:[%s1 + $0x230] sm:$0xff]
    %v2515 = vld [vmem:[%s1 + $0x238] sm:$0xff]
    %v2516 = vld [vmem:[%s1 + $0x240] sm:$0xff]
    %v2517 = vld [vmem:[%s1 + $0x248] sm:$0xff]
    %v2518 = vld [vmem:[%s1 + $0x250] sm:$0xff]
    %v2519 = vld [vmem:[%s1 + $0x258] sm:$0xff]
    %v2520 = vld [vmem:[%s2 + $0x38] sm:$0x1]
    %v2521 = vpack.c.bf16 %v2503, %v2502
    %v2522 = vpack.c.bf16 %v2505, %v2504
    %v2523 = vpack.c.bf16 %v2507, %v2506
    %v2524 = vpack.c.bf16 %v2509, %v2508
    %v2525 = vpack.c.bf16 %v2511, %v2510
    %v2526 = vpack.c.bf16 %v2513, %v2512
    %v2527 = vpack.c.bf16 %v2515, %v2514
    %v2528 = vpack.c.bf16 %v2517, %v2516
    %v2529 = vpack.c.bf16 %v2519, %v2518
    %v2530 = vlaneseq
    %v2531 = vshrl.u32 %v2530, 7
    %v2532 = vsub.s32 0, %v2531
    %v2533 = vrot.slane %v2520, %v2532
    %v2535 = vsel %vm25, %v2521, 0
    %v2538 = vsel %vm25, %v2522, 0
    %v2541 = vsel %vm25, %v2523, 0
    %v2544 = vsel %vm25, %v2524, 0
    %v2547 = vsel %vm25, %v2525, 0
    %v2550 = vsel %vm25, %v2526, 0
    %v2553 = vsel %vm25, %v2527, 0
    %v2556 = vsel %vm25, %v2528, 0
    %v2559 = vsel %vm25, %v2529, 0
    %2561 = vmatprep.subr.bf16.mxu0 0
    %2562 = vmatpush1.bf16.xpose.msra.mxu0 %v2538
    %2563 = vmatprep.subr.bf16.mxu0 0
    %2564 = vmatpush1.bf16.xpose.msra.mxu0 %v2541
    %2565 = vmatprep.subr.bf16.mxu0 0
    %2566 = vmatpush1.bf16.xpose.msra.mxu0 %v2544
    %2567 = vmatprep.subr.bf16.mxu0 0
    %2568 = vmatpush1.bf16.xpose.msra.mxu0 %v2547
    %2569 = vmatprep.subr.bf16.mxu0 0
    %2570 = vmatpush1.bf16.xpose.msra.mxu0 %v2550
    %2571 = vmatprep.subr.bf16.mxu0 0
    %2572 = vmatpush1.bf16.xpose.msra.mxu0 %v2553
    %2573 = vmatprep.subr.bf16.mxu0 0
    %2574 = vmatpush1.bf16.xpose.msra.mxu0 %v2556
    %2575 = vmatprep.subr.bf16.mxu0 0
    %2576 = vmatpush1.bf16.xpose.msra.mxu0 %v2559
    %2577 = vmatprep.subr.bf16.mxu0 0
    %2578 = vmatpush1.bf16.xpose.msra.mxu0 0
    %2579 = vmatprep.subr.bf16.mxu0 0
    %2580 = vmatpush1.bf16.xpose.msra.mxu0 0
    %2581 = vmatprep.subr.bf16.mxu0 0
    %2582 = vmatpush1.bf16.xpose.msra.mxu0 0
    %2583 = vmatprep.subr.bf16.mxu0 0
    %2584 = vmatpush1.bf16.xpose.msra.mxu0 0
    %2585 = vmatprep.subr.bf16.mxu0 0
    %2586 = vmatpush1.bf16.xpose.msra.mxu0 0
    %2587 = vmatprep.subr.bf16.mxu0 0
    %2588 = vmatpush1.bf16.xpose.msra.mxu0 0
    %2589 = vmatprep.subr.bf16.mxu0 0
    %2590 = vmatpush1.bf16.xpose.msra.mxu0 0
    %2591 = vmatprep.subr.bf16.mxu0 0
    %2592 = vmatpush1.bf16.xpose.msra.mxu0 0
    %2593 = vmatprep.mubr.bf16.mxu0 0
    %2594 = vmatmul.mubr.bf16.gmra.mrb[0].mxu0 %v2535
    %v2595 = vpop.f32.mrb[0].mxu0
    %v2596 = vadd.f32 %v2533, %v2595
    %v2597 = vpop.f32.mrb[0].mxu0
    %v2598 = vpop.f32.mrb[0].mxu0
    %v2599 = vadd.f32 %v2533, %v2598
    %v2600 = vpop.f32.mrb[0].mxu0
    %2601 = vdwg.mxu0
    %v2602 = vmax.f32 %v2596, 0.0
    %v2603 = vmax.f32 %v2599, 0.0
    %v2604 = vld [vmem:[%s2 + $0x40] sm:$0xff]
    %v2605 = vld [vmem:[%s2 + $0x48] sm:$0xff]
    %v2606 = vld [vmem:[%s2 + $0x50] sm:$0xff]
    %v2607 = vld [vmem:[%s2 + $0x58] sm:$0xff]
    %v2608 = vld [vmem:[%s1 + $0x260] sm:$0x1]
    %v2609 = vpack.c.bf16 %v2603, %v2602
    %v2610 = vpack.c.bf16 %v2605, %v2604
    %v2611 = vpack.c.bf16 %v2607, %v2606
    %v2612 = vlaneseq
    %v2613 = vshrl.u32 %v2612, 7
    %v2614 = vsub.s32 0, %v2613
    %v2615 = vrot.slane %v2608, %v2614
    %2616 = vmatprep.subr.bf16.mxu0 0
    %2617 = vmatpush1.bf16.xpose.msra.mxu0 %v2610
    %2618 = vmatprep.subr.bf16.mxu0 0
    %2619 = vmatpush1.bf16.xpose.msra.mxu0 %v2611
    %2620 = vmatprep.subr.bf16.mxu0 0
    %2621 = vmatpush1.bf16.xpose.msra.mxu0 0
    %2622 = vmatprep.subr.bf16.mxu0 0
    %2623 = vmatpush1.bf16.xpose.msra.mxu0 0
    %2624 = vmatprep.subr.bf16.mxu0 0
    %2625 = vmatpush1.bf16.xpose.msra.mxu0 0
    %2626 = vmatprep.subr.bf16.mxu0 0
    %2627 = vmatpush1.bf16.xpose.msra.mxu0 0
    %2628 = vmatprep.subr.bf16.mxu0 0
    %2629 = vmatpush1.bf16.xpose.msra.mxu0 0
    %2630 = vmatprep.subr.bf16.mxu0 0
    %2631 = vmatpush1.bf16.xpose.msra.mxu0 0
    %2632 = vmatprep.subr.bf16.mxu0 0
    %2633 = vmatpush1.bf16.xpose.msra.mxu0 0
    %2634 = vmatprep.subr.bf16.mxu0 0
    %2635 = vmatpush1.bf16.xpose.msra.mxu0 0
    %2636 = vmatprep.subr.bf16.mxu0 0
    %2637 = vmatpush1.bf16.xpose.msra.mxu0 0
    %2638 = vmatprep.subr.bf16.mxu0 0
    %2639 = vmatpush1.bf16.xpose.msra.mxu0 0
    %2640 = vmatprep.subr.bf16.mxu0 0
    %2641 = vmatpush1.bf16.xpose.msra.mxu0 0
    %2642 = vmatprep.subr.bf16.mxu0 0
    %2643 = vmatpush1.bf16.xpose.msra.mxu0 0
    %2644 = vmatprep.subr.bf16.mxu0 0
    %2645 = vmatpush1.bf16.xpose.msra.mxu0 0
    %2646 = vmatprep.subr.bf16.mxu0 0
    %2647 = vmatpush1.bf16.xpose.msra.mxu0 0
    %2648 = vmatprep.mubr.bf16.mxu0 0
    %2649 = vmatmul.mubr.bf16.gmra.mrb[0].mxu0 %v2609
    %v2650 = vpop.f32.mrb[0].mxu0
    %v2651 = vadd.f32 %v2615, %v2650
    %v2652 = vpop.f32.mrb[0].mxu0
    %v2653 = vpop.f32.mrb[0].mxu0
    %v2654 = vadd.f32 %v2615, %v2653
    %v2655 = vpop.f32.mrb[0].mxu0
    %2656 = vdwg.mxu0
    %v2657 = vadd.f32 %v2462, %v2651
    %v2658 = vadd.f32 %v2463, %v2654
    %v2659 = vld [vmem:[%s1 + $0x268] sm:$0x1]
    %v2660 = vld [vmem:[%s1 + $0x270] sm:$0x1]
    %v2661 = vsel %vm25, %v2657, 0.0
    %2662 = vadd.xlane.f32.xlu0 %v2661
    %v2663 = vpop.xlane.xlu0 %2662
    %v2664 = vsel %vm25, %v2658, 0.0
    %2665 = vadd.xlane.f32.xlu0 %v2664
    %v2666 = vpop.xlane.xlu0 %2665
    %v2667 = vmul.f32 %v2663, %v32
    %v2668 = vmul.f32 %v2666, %v32
    %v2669 = vsub.f32 %v2657, %v2667
    %v2670 = vsub.f32 %v2658, %v2668
    %v2671 = vmul.f32 %v2669, %v2669
    %v2672 = vmul.f32 %v2670, %v2670
    %v2673 = vsel %vm25, %v2671, 0.0
    %2674 = vadd.xlane.f32.xlu0 %v2673
    %v2675 = vpop.xlane.xlu0 %2674
    %v2676 = vsel %vm25, %v2672, 0.0
    %2677 = vadd.xlane.f32.xlu0 %v2676
    %v2678 = vpop.xlane.xlu0 %2677
    %v2679 = vmul.f32 %v2675, %v32
    %v2680 = vmul.f32 %v2678, %v32
    %v2681 = vadd.f32 %v2679, 1e-05
    %v2682 = vadd.f32 %v2680, 1e-05
    %v2683 = vrsqrt.pop %v2681
    %v2684 = vrsqrt.pop %v2682
    %v2685 = vmul.f32 %v2669, %v2683
    %v2686 = vmul.f32 %v2670, %v2684
    %v2687 = vlaneseq
    %v2688 = vshrl.u32 %v2687, 7
    %v2689 = vsub.s32 0, %v2688
    %v2690 = vrot.slane %v2659, %v2689
    %v2691 = vmul.f32 %v2685, %v2690
    %v2692 = vmul.f32 %v2686, %v2690
    %v2693 = vlaneseq
    %v2694 = vshrl.u32 %v2693, 7
    %v2695 = vsub.s32 0, %v2694
    %v2696 = vrot.slane %v2660, %v2695
    %v2697 = vadd.f32 %v2691, %v2696
    %v2698 = vadd.f32 %v2692, %v2696
    %v2699 = vsel %vm25, %v2697, 0.0
    %v2700 = vrot.slane %v2699, 4
    %v2701 = vadd.f32 %v2699, %v2700
    %v2702 = vrot.slane %v2701, 2
    %v2703 = vadd.f32 %v2701, %v2702
    %v2704 = vrot.slane %v2703, 1
    %v2705 = vadd.f32 %v2703, %v2704
    %v2706 = vsel %vm25, %v2698, 0.0
    %v2707 = vrot.slane %v2706, 4
    %v2708 = vadd.f32 %v2706, %v2707
    %v2709 = vrot.slane %v2708, 2
    %v2710 = vadd.f32 %v2708, %v2709
    %v2711 = vrot.slane %v2710, 1
    %v2712 = vadd.f32 %v2710, %v2711
    %v2713 = vld [vmem:[%s1 + $0x278] sm:$0xff]
    %v2714 = vld [vmem:[%s1 + $0x280] sm:$0xff]
    %v2715 = vld [vmem:[%s1 + $0x288] sm:$0xff]
    %v2716 = vld [vmem:[%s1 + $0x290] sm:$0xff]
    %v2717 = vld [vmem:[%s2 + $0x60] sm:$0x1]
    %v2718 = vpack.c.bf16 %v2705, %v2705
    %v2719 = vpack.c.bf16 %v2712, %v2712
    %v2720 = vpack.c.bf16 %v2714, %v2713
    %v2721 = vpack.c.bf16 %v2716, %v2715
    %v2722 = vlaneseq
    %v2723 = vshrl.u32 %v2722, 7
    %v2724 = vsub.s32 0, %v2723
    %v2725 = vrot.slane %v2717, %v2724
    %v2728 = vunpack.c.l.b16 %v2718
    %v2729 = vunpack.c.l.b16 %v2719
    %vm2730 = vcmask 1041409
    %v2731 = vsel %vm2730, %v2729, %v2728
    %v2732 = vpack.c.b16 %v2731, %v2731
    %v2734 = vsel %vm25, %v2732, 0
    %v2737 = vsel %vm25, %v2720, 0
    %v2740 = vsel %vm25, %v2721, 0
    %2742 = vmatprep.subr.bf16.mxu0 0
    %2743 = vmatpush1.bf16.xpose.msra.mxu0 %v2737
    %2744 = vmatprep.subr.bf16.mxu0 0
    %2745 = vmatpush1.bf16.xpose.msra.mxu0 %v2740
    %2746 = vmatprep.subr.bf16.mxu0 0
    %2747 = vmatpush1.bf16.xpose.msra.mxu0 0
    %2748 = vmatprep.subr.bf16.mxu0 0
    %2749 = vmatpush1.bf16.xpose.msra.mxu0 0
    %2750 = vmatprep.subr.bf16.mxu0 0
    %2751 = vmatpush1.bf16.xpose.msra.mxu0 0
    %2752 = vmatprep.subr.bf16.mxu0 0
    %2753 = vmatpush1.bf16.xpose.msra.mxu0 0
    %2754 = vmatprep.subr.bf16.mxu0 0
    %2755 = vmatpush1.bf16.xpose.msra.mxu0 0
    %2756 = vmatprep.subr.bf16.mxu0 0
    %2757 = vmatpush1.bf16.xpose.msra.mxu0 0
    %2758 = vmatprep.subr.bf16.mxu0 0
    %2759 = vmatpush1.bf16.xpose.msra.mxu0 0
    %2760 = vmatprep.subr.bf16.mxu0 0
    %2761 = vmatpush1.bf16.xpose.msra.mxu0 0
    %2762 = vmatprep.subr.bf16.mxu0 0
    %2763 = vmatpush1.bf16.xpose.msra.mxu0 0
    %2764 = vmatprep.subr.bf16.mxu0 0
    %2765 = vmatpush1.bf16.xpose.msra.mxu0 0
    %2766 = vmatprep.subr.bf16.mxu0 0
    %2767 = vmatpush1.bf16.xpose.msra.mxu0 0
    %2768 = vmatprep.subr.bf16.mxu0 0
    %2769 = vmatpush1.bf16.xpose.msra.mxu0 0
    %2770 = vmatprep.subr.bf16.mxu0 0
    %2771 = vmatpush1.bf16.xpose.msra.mxu0 0
    %2772 = vmatprep.subr.bf16.mxu0 0
    %2773 = vmatpush1.bf16.xpose.msra.mxu0 0
    %2774 = vmatprep.mubr.bf16.mxu0 0
    %2775 = vmatmul.mubr.bf16.gmra.mrb[0].mxu0 %v2734
    %v2776 = vpop.f32.mrb[0].mxu0
    %v2777 = vadd.f32 %v2725, %v2776
    %v2778 = vpop.f32.mrb[0].mxu0
    %v2779 = vpop.f32.mrb[0].mxu0
    %v2780 = vpop.f32.mrb[0].mxu0
    %2781 = vdwg.mxu0
    %vm2782 = vcmask 254976
    %2783 = vst.msk [vmem:[#allocation2] sm:$0x3] %vm2782, %v2777
    %s2784 = scalar_lea.vmem %s1, 664
    %v2785 = vld [vmem:[%s2784] sm:$0xff]
    %s2786 = scalar_lea.vmem %s0, 16
    %v2787 = vld [vmem:[%s2786] sm:$0xff]
    %v2788 = vld [vmem:[%s2786 + $0x8] sm:$0xff]
    %v2789 = vmul.f32 %v2787, 5.656854
    %v2790 = vmul.f32 %v2788, 5.656854
    %v2791 = vadd.f32 %v2789, %v2785
    %v2792 = vadd.f32 %v2790, %v2785
    %v2793 = vld [vmem:[%s2784 + $0x8] sm:$0x1]
    %v2794 = vld [vmem:[%s2784 + $0x10] sm:$0x1]
    %v2795 = vsel %vm25, %v2791, 0.0
    %2796 = vadd.xlane.f32.xlu0 %v2795
    %v2797 = vpop.xlane.xlu0 %2796
    %v2798 = vsel %vm25, %v2792, 0.0
    %2799 = vadd.xlane.f32.xlu0 %v2798
    %v2800 = vpop.xlane.xlu0 %2799
    %v2801 = vmul.f32 %v2797, %v32
    %v2802 = vmul.f32 %v2800, %v32
    %v2803 = vsub.f32 %v2791, %v2801
    %v2804 = vsub.f32 %v2792, %v2802
    %v2805 = vmul.f32 %v2803, %v2803
    %v2806 = vmul.f32 %v2804, %v2804
    %v2807 = vsel %vm25, %v2805, 0.0
    %2808 = vadd.xlane.f32.xlu0 %v2807
    %v2809 = vpop.xlane.xlu0 %2808
    %v2810 = vsel %vm25, %v2806, 0.0
    %2811 = vadd.xlane.f32.xlu0 %v2810
    %v2812 = vpop.xlane.xlu0 %2811
    %v2813 = vmul.f32 %v2809, %v32
    %v2814 = vmul.f32 %v2812, %v32
    %v2815 = vadd.f32 %v2813, 1e-05
    %v2816 = vadd.f32 %v2814, 1e-05
    %v2817 = vrsqrt.pop %v2815
    %v2818 = vrsqrt.pop %v2816
    %v2819 = vmul.f32 %v2803, %v2817
    %v2820 = vmul.f32 %v2804, %v2818
    %v2821 = vlaneseq
    %v2822 = vshrl.u32 %v2821, 7
    %v2823 = vsub.s32 0, %v2822
    %v2824 = vrot.slane %v2793, %v2823
    %v2825 = vmul.f32 %v2819, %v2824
    %v2826 = vmul.f32 %v2820, %v2824
    %v2827 = vlaneseq
    %v2828 = vshrl.u32 %v2827, 7
    %v2829 = vsub.s32 0, %v2828
    %v2830 = vrot.slane %v2794, %v2829
    %v2831 = vadd.f32 %v2825, %v2830
    %v2832 = vadd.f32 %v2826, %v2830
    %v2833 = vld [vmem:[%s2784 + $0x18] sm:$0xff]
    %v2834 = vld [vmem:[%s2784 + $0x20] sm:$0xff]
    %v2835 = vld [vmem:[%s2784 + $0x28] sm:$0xff]
    %v2836 = vld [vmem:[%s2784 + $0x30] sm:$0xff]
    %v2837 = vld [vmem:[%s2784 + $0x38] sm:$0xff]
    %v2838 = vld [vmem:[%s2784 + $0x40] sm:$0xff]
    %v2839 = vld [vmem:[%s2784 + $0x48] sm:$0xff]
    %v2840 = vld [vmem:[%s2784 + $0x50] sm:$0xff]
    %v2841 = vld [vmem:[%s2784 + $0x58] sm:$0xff]
    %v2842 = vld [vmem:[%s2784 + $0x60] sm:$0xff]
    %v2843 = vld [vmem:[%s2784 + $0x68] sm:$0xff]
    %v2844 = vld [vmem:[%s2784 + $0x70] sm:$0xff]
    %s2845 = scalar_lea.vmem %s2, 104
    %v2846 = vld [vmem:[%s2845] sm:$0x1]
    %v2847 = vpack.c.bf16 %v2832, %v2831
    %v2848 = vpack.c.bf16 %v2834, %v2833
    %v2849 = vpack.c.bf16 %v2836, %v2835
    %v2850 = vpack.c.bf16 %v2838, %v2837
    %v2851 = vpack.c.bf16 %v2840, %v2839
    %v2852 = vpack.c.bf16 %v2842, %v2841
    %v2853 = vpack.c.bf16 %v2844, %v2843
    %v2854 = vlaneseq
    %v2855 = vshrl.u32 %v2854, 7
    %v2856 = vsub.s32 0, %v2855
    %v2857 = vrot.slane %v2846, %v2856
    %v2859 = vsel %vm25, %v2847, 0
    %v2862 = vsel %vm25, %v2848, 0
    %v2865 = vsel %vm25, %v2849, 0
    %v2868 = vsel %vm25, %v2850, 0
    %v2871 = vsel %vm25, %v2851, 0
    %v2874 = vsel %vm25, %v2852, 0
    %v2877 = vsel %vm25, %v2853, 0
    %2879 = vmatprep.subr.bf16.mxu0 0
    %2880 = vmatpush1.bf16.xpose.msra.mxu0 %v2862
    %2881 = vmatprep.subr.bf16.mxu0 0
    %2882 = vmatpush1.bf16.xpose.msra.mxu0 %v2865
    %2883 = vmatprep.subr.bf16.mxu0 0
    %2884 = vmatpush1.bf16.xpose.msra.mxu0 %v2868
    %2885 = vmatprep.subr.bf16.mxu0 0
    %2886 = vmatpush1.bf16.xpose.msra.mxu0 %v2871
    %2887 = vmatprep.subr.bf16.mxu0 0
    %2888 = vmatpush1.bf16.xpose.msra.mxu0 %v2874
    %2889 = vmatprep.subr.bf16.mxu0 0
    %2890 = vmatpush1.bf16.xpose.msra.mxu0 %v2877
    %2891 = vmatprep.subr.bf16.mxu0 0
    %2892 = vmatpush1.bf16.xpose.msra.mxu0 0
    %2893 = vmatprep.subr.bf16.mxu0 0
    %2894 = vmatpush1.bf16.xpose.msra.mxu0 0
    %2895 = vmatprep.subr.bf16.mxu0 0
    %2896 = vmatpush1.bf16.xpose.msra.mxu0 0
    %2897 = vmatprep.subr.bf16.mxu0 0
    %2898 = vmatpush1.bf16.xpose.msra.mxu0 0
    %2899 = vmatprep.subr.bf16.mxu0 0
    %2900 = vmatpush1.bf16.xpose.msra.mxu0 0
    %2901 = vmatprep.subr.bf16.mxu0 0
    %2902 = vmatpush1.bf16.xpose.msra.mxu0 0
    %2903 = vmatprep.subr.bf16.mxu0 0
    %2904 = vmatpush1.bf16.xpose.msra.mxu0 0
    %2905 = vmatprep.subr.bf16.mxu0 0
    %2906 = vmatpush1.bf16.xpose.msra.mxu0 0
    %2907 = vmatprep.subr.bf16.mxu0 0
    %2908 = vmatpush1.bf16.xpose.msra.mxu0 0
    %2909 = vmatprep.subr.bf16.mxu0 0
    %2910 = vmatpush1.bf16.xpose.msra.mxu0 0
    %2911 = vmatprep.mubr.bf16.mxu0 0
    %2912 = vmatmul.mubr.bf16.gmra.mrb[0].mxu0 %v2859
    %v2913 = vpop.f32.mrb[0].mxu0
    %v2914 = vadd.f32 %v2857, %v2913
    %v2915 = vpop.f32.mrb[0].mxu0
    %v2916 = vpop.f32.mrb[0].mxu0
    %v2917 = vadd.f32 %v2857, %v2916
    %v2918 = vpop.f32.mrb[0].mxu0
    %2919 = vdwg.mxu0
    %2922 = vrot.lane.b32.xlu0 %v2914, 104
    %v2923 = vpop.permute.xlu0 %2922
    %2924 = vrot.lane.b32.xlu0 %v2917, 104
    %v2925 = vpop.permute.xlu0 %2924
    %2928 = vrot.lane.b32.xlu0 %v2914, 80
    %v2929 = vpop.permute.xlu0 %2928
    %2930 = vrot.lane.b32.xlu0 %v2917, 80
    %v2931 = vpop.permute.xlu0 %2930
    %2934 = vrot.lane.b32.xlu0 %v2914, 56
    %v2935 = vpop.permute.xlu0 %2934
    %2936 = vrot.lane.b32.xlu0 %v2917, 56
    %v2937 = vpop.permute.xlu0 %2936
    %v2940 = vpack.c.bf16 %v2914, %v2914
    %v2941 = vpack.c.bf16 %v2917, %v2917
    %v2942 = vpack.c.bf16 %v2923, %v2923
    %v2943 = vpack.c.bf16 %v2925, %v2925
    %v2944 = vpack.c.bf16 %v2929, %v2929
    %v2945 = vpack.c.bf16 %v2931, %v2931
    %v2946 = vpack.c.bf16 %v2935, %v2935
    %v2947 = vpack.c.bf16 %v2937, %v2937
    %2949 = vrot.lane.b32.xlu0 %v2940, 120
    %v2950 = vpop.permute.xlu0 %2949
    %v2952 = vsel %vm182, %v2940, 0
    %v2955 = vsel %vm182, %v2950, 0
    %2957 = vmatprep.subr.bf16.mxu0 0
    %2958 = vmatpush1.bf16.xpose.msra.mxu0 %v2955
    %2959 = vmatprep.subr.bf16.mxu0 0
    %2960 = vmatpush1.bf16.xpose.msra.mxu0 0
    %2961 = vmatprep.subr.bf16.mxu0 0
    %2962 = vmatpush1.bf16.xpose.msra.mxu0 0
    %2963 = vmatprep.subr.bf16.mxu0 0
    %2964 = vmatpush1.bf16.xpose.msra.mxu0 0
    %2965 = vmatprep.subr.bf16.mxu0 0
    %2966 = vmatpush1.bf16.xpose.msra.mxu0 0
    %2967 = vmatprep.subr.bf16.mxu0 0
    %2968 = vmatpush1.bf16.xpose.msra.mxu0 0
    %2969 = vmatprep.subr.bf16.mxu0 0
    %2970 = vmatpush1.bf16.xpose.msra.mxu0 0
    %2971 = vmatprep.subr.bf16.mxu0 0
    %2972 = vmatpush1.bf16.xpose.msra.mxu0 0
    %2973 = vmatprep.subr.bf16.mxu0 0
    %2974 = vmatpush1.bf16.xpose.msra.mxu0 0
    %2975 = vmatprep.subr.bf16.mxu0 0
    %2976 = vmatpush1.bf16.xpose.msra.mxu0 0
    %2977 = vmatprep.subr.bf16.mxu0 0
    %2978 = vmatpush1.bf16.xpose.msra.mxu0 0
    %2979 = vmatprep.subr.bf16.mxu0 0
    %2980 = vmatpush1.bf16.xpose.msra.mxu0 0
    %2981 = vmatprep.subr.bf16.mxu0 0
    %2982 = vmatpush1.bf16.xpose.msra.mxu0 0
    %2983 = vmatprep.subr.bf16.mxu0 0
    %2984 = vmatpush1.bf16.xpose.msra.mxu0 0
    %2985 = vmatprep.subr.bf16.mxu0 0
    %2986 = vmatpush1.bf16.xpose.msra.mxu0 0
    %2987 = vmatprep.subr.bf16.mxu0 0
    %2988 = vmatpush1.bf16.xpose.msra.mxu0 0
    %2989 = vmatprep.mubr.bf16.mxu0 0
    %2990 = vmatmul.mubr.bf16.gmra.mrb[0].mxu0 %v2952
    %v2991 = vpop.f32.mrb[0].mxu0
    %v2992 = vadd.f32 0.0, %v2991
    %v2993 = vpop.f32.mrb[0].mxu0
    %v2994 = vpop.f32.mrb[0].mxu0
    %v2995 = vpop.f32.mrb[0].mxu0
    %2996 = vdwg.mxu0
    %2998 = vrot.lane.b32.xlu0 %v2941, 120
    %v2999 = vpop.permute.xlu0 %2998
    %v3001 = vsel %vm182, %v2941, 0
    %v3004 = vsel %vm182, %v2999, 0
    %3006 = vmatprep.subr.bf16.mxu0 0
    %3007 = vmatpush1.bf16.xpose.msra.mxu0 %v3004
    %3008 = vmatprep.subr.bf16.mxu0 0
    %3009 = vmatpush1.bf16.xpose.msra.mxu0 0
    %3010 = vmatprep.subr.bf16.mxu0 0
    %3011 = vmatpush1.bf16.xpose.msra.mxu0 0
    %3012 = vmatprep.subr.bf16.mxu0 0
    %3013 = vmatpush1.bf16.xpose.msra.mxu0 0
    %3014 = vmatprep.subr.bf16.mxu0 0
    %3015 = vmatpush1.bf16.xpose.msra.mxu0 0
    %3016 = vmatprep.subr.bf16.mxu0 0
    %3017 = vmatpush1.bf16.xpose.msra.mxu0 0
    %3018 = vmatprep.subr.bf16.mxu0 0
    %3019 = vmatpush1.bf16.xpose.msra.mxu0 0
    %3020 = vmatprep.subr.bf16.mxu0 0
    %3021 = vmatpush1.bf16.xpose.msra.mxu0 0
    %3022 = vmatprep.subr.bf16.mxu0 0
    %3023 = vmatpush1.bf16.xpose.msra.mxu0 0
    %3024 = vmatprep.subr.bf16.mxu0 0
    %3025 = vmatpush1.bf16.xpose.msra.mxu0 0
    %3026 = vmatprep.subr.bf16.mxu0 0
    %3027 = vmatpush1.bf16.xpose.msra.mxu0 0
    %3028 = vmatprep.subr.bf16.mxu0 0
    %3029 = vmatpush1.bf16.xpose.msra.mxu0 0
    %3030 = vmatprep.subr.bf16.mxu0 0
    %3031 = vmatpush1.bf16.xpose.msra.mxu0 0
    %3032 = vmatprep.subr.bf16.mxu0 0
    %3033 = vmatpush1.bf16.xpose.msra.mxu0 0
    %3034 = vmatprep.subr.bf16.mxu0 0
    %3035 = vmatpush1.bf16.xpose.msra.mxu0 0
    %3036 = vmatprep.subr.bf16.mxu0 0
    %3037 = vmatpush1.bf16.xpose.msra.mxu0 0
    %3038 = vmatprep.mubr.bf16.mxu0 0
    %3039 = vmatmul.mubr.bf16.gmra.mrb[0].mxu0 %v3001
    %v3040 = vpop.f32.mrb[0].mxu0
    %v3041 = vadd.f32 0.0, %v3040
    %v3042 = vpop.f32.mrb[0].mxu0
    %v3043 = vpop.f32.mrb[0].mxu0
    %v3044 = vpop.f32.mrb[0].mxu0
    %3045 = vdwg.mxu0
    %3047 = vrot.lane.b32.xlu0 %v2942, 120
    %v3048 = vpop.permute.xlu0 %3047
    %v3050 = vsel %vm182, %v2942, 0
    %v3053 = vsel %vm182, %v3048, 0
    %3055 = vmatprep.subr.bf16.mxu0 0
    %3056 = vmatpush1.bf16.xpose.msra.mxu0 %v3053
    %3057 = vmatprep.subr.bf16.mxu0 0
    %3058 = vmatpush1.bf16.xpose.msra.mxu0 0
    %3059 = vmatprep.subr.bf16.mxu0 0
    %3060 = vmatpush1.bf16.xpose.msra.mxu0 0
    %3061 = vmatprep.subr.bf16.mxu0 0
    %3062 = vmatpush1.bf16.xpose.msra.mxu0 0
    %3063 = vmatprep.subr.bf16.mxu0 0
    %3064 = vmatpush1.bf16.xpose.msra.mxu0 0
    %3065 = vmatprep.subr.bf16.mxu0 0
    %3066 = vmatpush1.bf16.xpose.msra.mxu0 0
    %3067 = vmatprep.subr.bf16.mxu0 0
    %3068 = vmatpush1.bf16.xpose.msra.mxu0 0
    %3069 = vmatprep.subr.bf16.mxu0 0
    %3070 = vmatpush1.bf16.xpose.msra.mxu0 0
    %3071 = vmatprep.subr.bf16.mxu0 0
    %3072 = vmatpush1.bf16.xpose.msra.mxu0 0
    %3073 = vmatprep.subr.bf16.mxu0 0
    %3074 = vmatpush1.bf16.xpose.msra.mxu0 0
    %3075 = vmatprep.subr.bf16.mxu0 0
    %3076 = vmatpush1.bf16.xpose.msra.mxu0 0
    %3077 = vmatprep.subr.bf16.mxu0 0
    %3078 = vmatpush1.bf16.xpose.msra.mxu0 0
    %3079 = vmatprep.subr.bf16.mxu0 0
    %3080 = vmatpush1.bf16.xpose.msra.mxu0 0
    %3081 = vmatprep.subr.bf16.mxu0 0
    %3082 = vmatpush1.bf16.xpose.msra.mxu0 0
    %3083 = vmatprep.subr.bf16.mxu0 0
    %3084 = vmatpush1.bf16.xpose.msra.mxu0 0
    %3085 = vmatprep.subr.bf16.mxu0 0
    %3086 = vmatpush1.bf16.xpose.msra.mxu0 0
    %3087 = vmatprep.mubr.bf16.mxu0 0
    %3088 = vmatmul.mubr.bf16.gmra.mrb[0].mxu0 %v3050
    %v3089 = vpop.f32.mrb[0].mxu0
    %v3090 = vadd.f32 0.0, %v3089
    %v3091 = vpop.f32.mrb[0].mxu0
    %v3092 = vpop.f32.mrb[0].mxu0
    %v3093 = vpop.f32.mrb[0].mxu0
    %3094 = vdwg.mxu0
    %3096 = vrot.lane.b32.xlu0 %v2943, 120
    %v3097 = vpop.permute.xlu0 %3096
    %v3099 = vsel %vm182, %v2943, 0
    %v3102 = vsel %vm182, %v3097, 0
    %3104 = vmatprep.subr.bf16.mxu0 0
    %3105 = vmatpush1.bf16.xpose.msra.mxu0 %v3102
    %3106 = vmatprep.subr.bf16.mxu0 0
    %3107 = vmatpush1.bf16.xpose.msra.mxu0 0
    %3108 = vmatprep.subr.bf16.mxu0 0
    %3109 = vmatpush1.bf16.xpose.msra.mxu0 0
    %3110 = vmatprep.subr.bf16.mxu0 0
    %3111 = vmatpush1.bf16.xpose.msra.mxu0 0
    %3112 = vmatprep.subr.bf16.mxu0 0
    %3113 = vmatpush1.bf16.xpose.msra.mxu0 0
    %3114 = vmatprep.subr.bf16.mxu0 0
    %3115 = vmatpush1.bf16.xpose.msra.mxu0 0
    %3116 = vmatprep.subr.bf16.mxu0 0
    %3117 = vmatpush1.bf16.xpose.msra.mxu0 0
    %3118 = vmatprep.subr.bf16.mxu0 0
    %3119 = vmatpush1.bf16.xpose.msra.mxu0 0
    %3120 = vmatprep.subr.bf16.mxu0 0
    %3121 = vmatpush1.bf16.xpose.msra.mxu0 0
    %3122 = vmatprep.subr.bf16.mxu0 0
    %3123 = vmatpush1.bf16.xpose.msra.mxu0 0
    %3124 = vmatprep.subr.bf16.mxu0 0
    %3125 = vmatpush1.bf16.xpose.msra.mxu0 0
    %3126 = vmatprep.subr.bf16.mxu0 0
    %3127 = vmatpush1.bf16.xpose.msra.mxu0 0
    %3128 = vmatprep.subr.bf16.mxu0 0
    %3129 = vmatpush1.bf16.xpose.msra.mxu0 0
    %3130 = vmatprep.subr.bf16.mxu0 0
    %3131 = vmatpush1.bf16.xpose.msra.mxu0 0
    %3132 = vmatprep.subr.bf16.mxu0 0
    %3133 = vmatpush1.bf16.xpose.msra.mxu0 0
    %3134 = vmatprep.subr.bf16.mxu0 0
    %3135 = vmatpush1.bf16.xpose.msra.mxu0 0
    %3136 = vmatprep.mubr.bf16.mxu0 0
    %3137 = vmatmul.mubr.bf16.gmra.mrb[0].mxu0 %v3099
    %v3138 = vpop.f32.mrb[0].mxu0
    %v3139 = vadd.f32 0.0, %v3138
    %v3140 = vpop.f32.mrb[0].mxu0
    %v3141 = vpop.f32.mrb[0].mxu0
    %v3142 = vpop.f32.mrb[0].mxu0
    %3143 = vdwg.mxu0
    %3145 = vrot.lane.b32.xlu0 %v2944, 120
    %v3146 = vpop.permute.xlu0 %3145
    %v3148 = vsel %vm182, %v2944, 0
    %v3151 = vsel %vm182, %v3146, 0
    %3153 = vmatprep.subr.bf16.mxu0 0
    %3154 = vmatpush1.bf16.xpose.msra.mxu0 %v3151
    %3155 = vmatprep.subr.bf16.mxu0 0
    %3156 = vmatpush1.bf16.xpose.msra.mxu0 0
    %3157 = vmatprep.subr.bf16.mxu0 0
    %3158 = vmatpush1.bf16.xpose.msra.mxu0 0
    %3159 = vmatprep.subr.bf16.mxu0 0
    %3160 = vmatpush1.bf16.xpose.msra.mxu0 0
    %3161 = vmatprep.subr.bf16.mxu0 0
    %3162 = vmatpush1.bf16.xpose.msra.mxu0 0
    %3163 = vmatprep.subr.bf16.mxu0 0
    %3164 = vmatpush1.bf16.xpose.msra.mxu0 0
    %3165 = vmatprep.subr.bf16.mxu0 0
    %3166 = vmatpush1.bf16.xpose.msra.mxu0 0
    %3167 = vmatprep.subr.bf16.mxu0 0
    %3168 = vmatpush1.bf16.xpose.msra.mxu0 0
    %3169 = vmatprep.subr.bf16.mxu0 0
    %3170 = vmatpush1.bf16.xpose.msra.mxu0 0
    %3171 = vmatprep.subr.bf16.mxu0 0
    %3172 = vmatpush1.bf16.xpose.msra.mxu0 0
    %3173 = vmatprep.subr.bf16.mxu0 0
    %3174 = vmatpush1.bf16.xpose.msra.mxu0 0
    %3175 = vmatprep.subr.bf16.mxu0 0
    %3176 = vmatpush1.bf16.xpose.msra.mxu0 0
    %3177 = vmatprep.subr.bf16.mxu0 0
    %3178 = vmatpush1.bf16.xpose.msra.mxu0 0
    %3179 = vmatprep.subr.bf16.mxu0 0
    %3180 = vmatpush1.bf16.xpose.msra.mxu0 0
    %3181 = vmatprep.subr.bf16.mxu0 0
    %3182 = vmatpush1.bf16.xpose.msra.mxu0 0
    %3183 = vmatprep.subr.bf16.mxu0 0
    %3184 = vmatpush1.bf16.xpose.msra.mxu0 0
    %3185 = vmatprep.mubr.bf16.mxu0 0
    %3186 = vmatmul.mubr.bf16.gmra.mrb[0].mxu0 %v3148
    %v3187 = vpop.f32.mrb[0].mxu0
    %v3188 = vadd.f32 0.0, %v3187
    %v3189 = vpop.f32.mrb[0].mxu0
    %v3190 = vpop.f32.mrb[0].mxu0
    %v3191 = vpop.f32.mrb[0].mxu0
    %3192 = vdwg.mxu0
    %3194 = vrot.lane.b32.xlu0 %v2945, 120
    %v3195 = vpop.permute.xlu0 %3194
    %v3197 = vsel %vm182, %v2945, 0
    %v3200 = vsel %vm182, %v3195, 0
    %3202 = vmatprep.subr.bf16.mxu0 0
    %3203 = vmatpush1.bf16.xpose.msra.mxu0 %v3200
    %3204 = vmatprep.subr.bf16.mxu0 0
    %3205 = vmatpush1.bf16.xpose.msra.mxu0 0
    %3206 = vmatprep.subr.bf16.mxu0 0
    %3207 = vmatpush1.bf16.xpose.msra.mxu0 0
    %3208 = vmatprep.subr.bf16.mxu0 0
    %3209 = vmatpush1.bf16.xpose.msra.mxu0 0
    %3210 = vmatprep.subr.bf16.mxu0 0
    %3211 = vmatpush1.bf16.xpose.msra.mxu0 0
    %3212 = vmatprep.subr.bf16.mxu0 0
    %3213 = vmatpush1.bf16.xpose.msra.mxu0 0
    %3214 = vmatprep.subr.bf16.mxu0 0
    %3215 = vmatpush1.bf16.xpose.msra.mxu0 0
    %3216 = vmatprep.subr.bf16.mxu0 0
    %3217 = vmatpush1.bf16.xpose.msra.mxu0 0
    %3218 = vmatprep.subr.bf16.mxu0 0
    %3219 = vmatpush1.bf16.xpose.msra.mxu0 0
    %3220 = vmatprep.subr.bf16.mxu0 0
    %3221 = vmatpush1.bf16.xpose.msra.mxu0 0
    %3222 = vmatprep.subr.bf16.mxu0 0
    %3223 = vmatpush1.bf16.xpose.msra.mxu0 0
    %3224 = vmatprep.subr.bf16.mxu0 0
    %3225 = vmatpush1.bf16.xpose.msra.mxu0 0
    %3226 = vmatprep.subr.bf16.mxu0 0
    %3227 = vmatpush1.bf16.xpose.msra.mxu0 0
    %3228 = vmatprep.subr.bf16.mxu0 0
    %3229 = vmatpush1.bf16.xpose.msra.mxu0 0
    %3230 = vmatprep.subr.bf16.mxu0 0
    %3231 = vmatpush1.bf16.xpose.msra.mxu0 0
    %3232 = vmatprep.subr.bf16.mxu0 0
    %3233 = vmatpush1.bf16.xpose.msra.mxu0 0
    %3234 = vmatprep.mubr.bf16.mxu0 0
    %3235 = vmatmul.mubr.bf16.gmra.mrb[0].mxu0 %v3197
    %v3236 = vpop.f32.mrb[0].mxu0
    %v3237 = vadd.f32 0.0, %v3236
    %v3238 = vpop.f32.mrb[0].mxu0
    %v3239 = vpop.f32.mrb[0].mxu0
    %v3240 = vpop.f32.mrb[0].mxu0
    %3241 = vdwg.mxu0
    %3243 = vrot.lane.b32.xlu0 %v2946, 120
    %v3244 = vpop.permute.xlu0 %3243
    %v3246 = vsel %vm182, %v2946, 0
    %v3249 = vsel %vm182, %v3244, 0
    %3251 = vmatprep.subr.bf16.mxu0 0
    %3252 = vmatpush1.bf16.xpose.msra.mxu0 %v3249
    %3253 = vmatprep.subr.bf16.mxu0 0
    %3254 = vmatpush1.bf16.xpose.msra.mxu0 0
    %3255 = vmatprep.subr.bf16.mxu0 0
    %3256 = vmatpush1.bf16.xpose.msra.mxu0 0
    %3257 = vmatprep.subr.bf16.mxu0 0
    %3258 = vmatpush1.bf16.xpose.msra.mxu0 0
    %3259 = vmatprep.subr.bf16.mxu0 0
    %3260 = vmatpush1.bf16.xpose.msra.mxu0 0
    %3261 = vmatprep.subr.bf16.mxu0 0
    %3262 = vmatpush1.bf16.xpose.msra.mxu0 0
    %3263 = vmatprep.subr.bf16.mxu0 0
    %3264 = vmatpush1.bf16.xpose.msra.mxu0 0
    %3265 = vmatprep.subr.bf16.mxu0 0
    %3266 = vmatpush1.bf16.xpose.msra.mxu0 0
    %3267 = vmatprep.subr.bf16.mxu0 0
    %3268 = vmatpush1.bf16.xpose.msra.mxu0 0
    %3269 = vmatprep.subr.bf16.mxu0 0
    %3270 = vmatpush1.bf16.xpose.msra.mxu0 0
    %3271 = vmatprep.subr.bf16.mxu0 0
    %3272 = vmatpush1.bf16.xpose.msra.mxu0 0
    %3273 = vmatprep.subr.bf16.mxu0 0
    %3274 = vmatpush1.bf16.xpose.msra.mxu0 0
    %3275 = vmatprep.subr.bf16.mxu0 0
    %3276 = vmatpush1.bf16.xpose.msra.mxu0 0
    %3277 = vmatprep.subr.bf16.mxu0 0
    %3278 = vmatpush1.bf16.xpose.msra.mxu0 0
    %3279 = vmatprep.subr.bf16.mxu0 0
    %3280 = vmatpush1.bf16.xpose.msra.mxu0 0
    %3281 = vmatprep.subr.bf16.mxu0 0
    %3282 = vmatpush1.bf16.xpose.msra.mxu0 0
    %3283 = vmatprep.mubr.bf16.mxu0 0
    %3284 = vmatmul.mubr.bf16.gmra.mrb[0].mxu0 %v3246
    %v3285 = vpop.f32.mrb[0].mxu0
    %v3286 = vadd.f32 0.0, %v3285
    %v3287 = vpop.f32.mrb[0].mxu0
    %v3288 = vpop.f32.mrb[0].mxu0
    %v3289 = vpop.f32.mrb[0].mxu0
    %3290 = vdwg.mxu0
    %3292 = vrot.lane.b32.xlu0 %v2947, 120
    %v3293 = vpop.permute.xlu0 %3292
    %v3295 = vsel %vm182, %v2947, 0
    %v3298 = vsel %vm182, %v3293, 0
    %3300 = vmatprep.subr.bf16.mxu0 0
    %3301 = vmatpush1.bf16.xpose.msra.mxu0 %v3298
    %3302 = vmatprep.subr.bf16.mxu0 0
    %3303 = vmatpush1.bf16.xpose.msra.mxu0 0
    %3304 = vmatprep.subr.bf16.mxu0 0
    %3305 = vmatpush1.bf16.xpose.msra.mxu0 0
    %3306 = vmatprep.subr.bf16.mxu0 0
    %3307 = vmatpush1.bf16.xpose.msra.mxu0 0
    %3308 = vmatprep.subr.bf16.mxu0 0
    %3309 = vmatpush1.bf16.xpose.msra.mxu0 0
    %3310 = vmatprep.subr.bf16.mxu0 0
    %3311 = vmatpush1.bf16.xpose.msra.mxu0 0
    %3312 = vmatprep.subr.bf16.mxu0 0
    %3313 = vmatpush1.bf16.xpose.msra.mxu0 0
    %3314 = vmatprep.subr.bf16.mxu0 0
    %3315 = vmatpush1.bf16.xpose.msra.mxu0 0
    %3316 = vmatprep.subr.bf16.mxu0 0
    %3317 = vmatpush1.bf16.xpose.msra.mxu0 0
    %3318 = vmatprep.subr.bf16.mxu0 0
    %3319 = vmatpush1.bf16.xpose.msra.mxu0 0
    %3320 = vmatprep.subr.bf16.mxu0 0
    %3321 = vmatpush1.bf16.xpose.msra.mxu0 0
    %3322 = vmatprep.subr.bf16.mxu0 0
    %3323 = vmatpush1.bf16.xpose.msra.mxu0 0
    %3324 = vmatprep.subr.bf16.mxu0 0
    %3325 = vmatpush1.bf16.xpose.msra.mxu0 0
    %3326 = vmatprep.subr.bf16.mxu0 0
    %3327 = vmatpush1.bf16.xpose.msra.mxu0 0
    %3328 = vmatprep.subr.bf16.mxu0 0
    %3329 = vmatpush1.bf16.xpose.msra.mxu0 0
    %3330 = vmatprep.subr.bf16.mxu0 0
    %3331 = vmatpush1.bf16.xpose.msra.mxu0 0
    %3332 = vmatprep.mubr.bf16.mxu0 0
    %3333 = vmatmul.mubr.bf16.gmra.mrb[0].mxu0 %v3295
    %v3334 = vpop.f32.mrb[0].mxu0
    %v3335 = vadd.f32 0.0, %v3334
    %v3336 = vpop.f32.mrb[0].mxu0
    %v3337 = vpop.f32.mrb[0].mxu0
    %v3338 = vpop.f32.mrb[0].mxu0
    %3339 = vdwg.mxu0
    %v3340 = vsel %vm182, %v2992, -inf
    %3341 = vmax.xlane.f32.xlu0 %v3340
    %v3342 = vpop.xlane.xlu0 %3341
    %v3343 = vsel %vm182, %v3041, -inf
    %3344 = vmax.xlane.f32.xlu0 %v3343
    %v3345 = vpop.xlane.xlu0 %3344
    %v3346 = vsel %vm182, %v3090, -inf
    %3347 = vmax.xlane.f32.xlu0 %v3346
    %v3348 = vpop.xlane.xlu0 %3347
    %v3349 = vsel %vm182, %v3139, -inf
    %3350 = vmax.xlane.f32.xlu0 %v3349
    %v3351 = vpop.xlane.xlu0 %3350
    %v3352 = vsel %vm182, %v3188, -inf
    %3353 = vmax.xlane.f32.xlu0 %v3352
    %v3354 = vpop.xlane.xlu0 %3353
    %v3355 = vsel %vm182, %v3237, -inf
    %3356 = vmax.xlane.f32.xlu0 %v3355
    %v3357 = vpop.xlane.xlu0 %3356
    %v3358 = vsel %vm182, %v3286, -inf
    %3359 = vmax.xlane.f32.xlu0 %v3358
    %v3360 = vpop.xlane.xlu0 %3359
    %v3361 = vsel %vm182, %v3335, -inf
    %3362 = vmax.xlane.f32.xlu0 %v3361
    %v3363 = vpop.xlane.xlu0 %3362
    %v3364 = vsub.f32 %v2992, %v3342
    %v3365 = vsub.f32 %v3041, %v3345
    %v3366 = vsub.f32 %v3090, %v3348
    %v3367 = vsub.f32 %v3139, %v3351
    %v3368 = vsub.f32 %v3188, %v3354
    %v3369 = vsub.f32 %v3237, %v3357
    %v3370 = vsub.f32 %v3286, %v3360
    %v3371 = vsub.f32 %v3335, %v3363
    %v3372 = vmul.f32 %v3364, 1.442695
    %v3373 = vpow.pop %v3372
    %v3374 = vmul.f32 %v3365, 1.442695
    %v3375 = vpow.pop %v3374
    %v3376 = vmul.f32 %v3366, 1.442695
    %v3377 = vpow.pop %v3376
    %v3378 = vmul.f32 %v3367, 1.442695
    %v3379 = vpow.pop %v3378
    %v3380 = vmul.f32 %v3368, 1.442695
    %v3381 = vpow.pop %v3380
    %v3382 = vmul.f32 %v3369, 1.442695
    %v3383 = vpow.pop %v3382
    %v3384 = vmul.f32 %v3370, 1.442695
    %v3385 = vpow.pop %v3384
    %v3386 = vmul.f32 %v3371, 1.442695
    %v3387 = vpow.pop %v3386
    %v3388 = vsel %vm182, %v3373, 0.0
    %3389 = vadd.xlane.f32.xlu0 %v3388
    %v3390 = vpop.xlane.xlu0 %3389
    %v3391 = vsel %vm182, %v3375, 0.0
    %3392 = vadd.xlane.f32.xlu0 %v3391
    %v3393 = vpop.xlane.xlu0 %3392
    %v3394 = vsel %vm182, %v3377, 0.0
    %3395 = vadd.xlane.f32.xlu0 %v3394
    %v3396 = vpop.xlane.xlu0 %3395
    %v3397 = vsel %vm182, %v3379, 0.0
    %3398 = vadd.xlane.f32.xlu0 %v3397
    %v3399 = vpop.xlane.xlu0 %3398
    %v3400 = vsel %vm182, %v3381, 0.0
    %3401 = vadd.xlane.f32.xlu0 %v3400
    %v3402 = vpop.xlane.xlu0 %3401
    %v3403 = vsel %vm182, %v3383, 0.0
    %3404 = vadd.xlane.f32.xlu0 %v3403
    %v3405 = vpop.xlane.xlu0 %3404
    %v3406 = vsel %vm182, %v3385, 0.0
    %3407 = vadd.xlane.f32.xlu0 %v3406
    %v3408 = vpop.xlane.xlu0 %3407
    %v3409 = vsel %vm182, %v3387, 0.0
    %3410 = vadd.xlane.f32.xlu0 %v3409
    %v3411 = vpop.xlane.xlu0 %3410
    %v3412 = vrcp.pop %v3390
    %v3413 = vmul.f32 %v3373, %v3412
    %v3414 = vrcp.pop %v3393
    %v3415 = vmul.f32 %v3375, %v3414
    %v3416 = vrcp.pop %v3396
    %v3417 = vmul.f32 %v3377, %v3416
    %v3418 = vrcp.pop %v3399
    %v3419 = vmul.f32 %v3379, %v3418
    %v3420 = vrcp.pop %v3402
    %v3421 = vmul.f32 %v3381, %v3420
    %v3422 = vrcp.pop %v3405
    %v3423 = vmul.f32 %v3383, %v3422
    %v3424 = vrcp.pop %v3408
    %v3425 = vmul.f32 %v3385, %v3424
    %v3426 = vrcp.pop %v3411
    %v3427 = vmul.f32 %v3387, %v3426
    %v3428 = vpack.c.bf16 %v3413, %v3413
    %v3429 = vpack.c.bf16 %v3415, %v3415
    %v3430 = vpack.c.bf16 %v3417, %v3417
    %v3431 = vpack.c.bf16 %v3419, %v3419
    %v3432 = vpack.c.bf16 %v3421, %v3421
    %v3433 = vpack.c.bf16 %v3423, %v3423
    %v3434 = vpack.c.bf16 %v3425, %v3425
    %v3435 = vpack.c.bf16 %v3427, %v3427
    %3436 = vrot.lane.b32.xlu0 %v2940, 112
    %v3437 = vpop.permute.xlu0 %3436
    %v3439 = vsel %vm182, %v3428, 0
    %v3442 = vsel %vm673, %v3437, 0
    %3444 = vmatprep.subr.bf16.mxu0 0
    %3445 = vmatpush1.bf16.msra.mxu0 %v3442
    %3446 = vmatprep.subr.bf16.mxu0 0
    %3447 = vmatpush1.bf16.msra.mxu0 0
    %3448 = vmatprep.subr.bf16.mxu0 0
    %3449 = vmatpush1.bf16.msra.mxu0 0
    %3450 = vmatprep.subr.bf16.mxu0 0
    %3451 = vmatpush1.bf16.msra.mxu0 0
    %3452 = vmatprep.subr.bf16.mxu0 0
    %3453 = vmatpush1.bf16.msra.mxu0 0
    %3454 = vmatprep.subr.bf16.mxu0 0
    %3455 = vmatpush1.bf16.msra.mxu0 0
    %3456 = vmatprep.subr.bf16.mxu0 0
    %3457 = vmatpush1.bf16.msra.mxu0 0
    %3458 = vmatprep.subr.bf16.mxu0 0
    %3459 = vmatpush1.bf16.msra.mxu0 0
    %3460 = vmatprep.subr.bf16.mxu0 0
    %3461 = vmatpush1.bf16.msra.mxu0 0
    %3462 = vmatprep.subr.bf16.mxu0 0
    %3463 = vmatpush1.bf16.msra.mxu0 0
    %3464 = vmatprep.subr.bf16.mxu0 0
    %3465 = vmatpush1.bf16.msra.mxu0 0
    %3466 = vmatprep.subr.bf16.mxu0 0
    %3467 = vmatpush1.bf16.msra.mxu0 0
    %3468 = vmatprep.subr.bf16.mxu0 0
    %3469 = vmatpush1.bf16.msra.mxu0 0
    %3470 = vmatprep.subr.bf16.mxu0 0
    %3471 = vmatpush1.bf16.msra.mxu0 0
    %3472 = vmatprep.subr.bf16.mxu0 0
    %3473 = vmatpush1.bf16.msra.mxu0 0
    %3474 = vmatprep.subr.bf16.mxu0 0
    %3475 = vmatpush1.bf16.msra.mxu0 0
    %3476 = vmatprep.mubr.bf16.mxu0 0
    %3477 = vmatmul.mubr.bf16.gmra.mrb[0].mxu0 %v3439
    %v3478 = vpop.f32.mrb[0].mxu0
    %v3479 = vadd.f32 0.0, %v3478
    %v3480 = vpop.f32.mrb[0].mxu0
    %v3481 = vpop.f32.mrb[0].mxu0
    %v3482 = vpop.f32.mrb[0].mxu0
    %3483 = vdwg.mxu0
    %3484 = vrot.lane.b32.xlu0 %v2941, 112
    %v3485 = vpop.permute.xlu0 %3484
    %v3487 = vsel %vm182, %v3429, 0
    %v3490 = vsel %vm673, %v3485, 0
    %3492 = vmatprep.subr.bf16.mxu0 0
    %3493 = vmatpush1.bf16.msra.mxu0 %v3490
    %3494 = vmatprep.subr.bf16.mxu0 0
    %3495 = vmatpush1.bf16.msra.mxu0 0
    %3496 = vmatprep.subr.bf16.mxu0 0
    %3497 = vmatpush1.bf16.msra.mxu0 0
    %3498 = vmatprep.subr.bf16.mxu0 0
    %3499 = vmatpush1.bf16.msra.mxu0 0
    %3500 = vmatprep.subr.bf16.mxu0 0
    %3501 = vmatpush1.bf16.msra.mxu0 0
    %3502 = vmatprep.subr.bf16.mxu0 0
    %3503 = vmatpush1.bf16.msra.mxu0 0
    %3504 = vmatprep.subr.bf16.mxu0 0
    %3505 = vmatpush1.bf16.msra.mxu0 0
    %3506 = vmatprep.subr.bf16.mxu0 0
    %3507 = vmatpush1.bf16.msra.mxu0 0
    %3508 = vmatprep.subr.bf16.mxu0 0
    %3509 = vmatpush1.bf16.msra.mxu0 0
    %3510 = vmatprep.subr.bf16.mxu0 0
    %3511 = vmatpush1.bf16.msra.mxu0 0
    %3512 = vmatprep.subr.bf16.mxu0 0
    %3513 = vmatpush1.bf16.msra.mxu0 0
    %3514 = vmatprep.subr.bf16.mxu0 0
    %3515 = vmatpush1.bf16.msra.mxu0 0
    %3516 = vmatprep.subr.bf16.mxu0 0
    %3517 = vmatpush1.bf16.msra.mxu0 0
    %3518 = vmatprep.subr.bf16.mxu0 0
    %3519 = vmatpush1.bf16.msra.mxu0 0
    %3520 = vmatprep.subr.bf16.mxu0 0
    %3521 = vmatpush1.bf16.msra.mxu0 0
    %3522 = vmatprep.subr.bf16.mxu0 0
    %3523 = vmatpush1.bf16.msra.mxu0 0
    %3524 = vmatprep.mubr.bf16.mxu0 0
    %3525 = vmatmul.mubr.bf16.gmra.mrb[0].mxu0 %v3487
    %v3526 = vpop.f32.mrb[0].mxu0
    %v3527 = vadd.f32 0.0, %v3526
    %v3528 = vpop.f32.mrb[0].mxu0
    %v3529 = vpop.f32.mrb[0].mxu0
    %v3530 = vpop.f32.mrb[0].mxu0
    %3531 = vdwg.mxu0
    %3532 = vrot.lane.b32.xlu0 %v2942, 112
    %v3533 = vpop.permute.xlu0 %3532
    %v3535 = vsel %vm182, %v3430, 0
    %v3538 = vsel %vm673, %v3533, 0
    %3540 = vmatprep.subr.bf16.mxu0 0
    %3541 = vmatpush1.bf16.msra.mxu0 %v3538
    %3542 = vmatprep.subr.bf16.mxu0 0
    %3543 = vmatpush1.bf16.msra.mxu0 0
    %3544 = vmatprep.subr.bf16.mxu0 0
    %3545 = vmatpush1.bf16.msra.mxu0 0
    %3546 = vmatprep.subr.bf16.mxu0 0
    %3547 = vmatpush1.bf16.msra.mxu0 0
    %3548 = vmatprep.subr.bf16.mxu0 0
    %3549 = vmatpush1.bf16.msra.mxu0 0
    %3550 = vmatprep.subr.bf16.mxu0 0
    %3551 = vmatpush1.bf16.msra.mxu0 0
    %3552 = vmatprep.subr.bf16.mxu0 0
    %3553 = vmatpush1.bf16.msra.mxu0 0
    %3554 = vmatprep.subr.bf16.mxu0 0
    %3555 = vmatpush1.bf16.msra.mxu0 0
    %3556 = vmatprep.subr.bf16.mxu0 0
    %3557 = vmatpush1.bf16.msra.mxu0 0
    %3558 = vmatprep.subr.bf16.mxu0 0
    %3559 = vmatpush1.bf16.msra.mxu0 0
    %3560 = vmatprep.subr.bf16.mxu0 0
    %3561 = vmatpush1.bf16.msra.mxu0 0
    %3562 = vmatprep.subr.bf16.mxu0 0
    %3563 = vmatpush1.bf16.msra.mxu0 0
    %3564 = vmatprep.subr.bf16.mxu0 0
    %3565 = vmatpush1.bf16.msra.mxu0 0
    %3566 = vmatprep.subr.bf16.mxu0 0
    %3567 = vmatpush1.bf16.msra.mxu0 0
    %3568 = vmatprep.subr.bf16.mxu0 0
    %3569 = vmatpush1.bf16.msra.mxu0 0
    %3570 = vmatprep.subr.bf16.mxu0 0
    %3571 = vmatpush1.bf16.msra.mxu0 0
    %3572 = vmatprep.mubr.bf16.mxu0 0
    %3573 = vmatmul.mubr.bf16.gmra.mrb[0].mxu0 %v3535
    %v3574 = vpop.f32.mrb[0].mxu0
    %v3575 = vadd.f32 0.0, %v3574
    %v3576 = vpop.f32.mrb[0].mxu0
    %v3577 = vpop.f32.mrb[0].mxu0
    %v3578 = vpop.f32.mrb[0].mxu0
    %3579 = vdwg.mxu0
    %3580 = vrot.lane.b32.xlu0 %v2943, 112
    %v3581 = vpop.permute.xlu0 %3580
    %v3583 = vsel %vm182, %v3431, 0
    %v3586 = vsel %vm673, %v3581, 0
    %3588 = vmatprep.subr.bf16.mxu0 0
    %3589 = vmatpush1.bf16.msra.mxu0 %v3586
    %3590 = vmatprep.subr.bf16.mxu0 0
    %3591 = vmatpush1.bf16.msra.mxu0 0
    %3592 = vmatprep.subr.bf16.mxu0 0
    %3593 = vmatpush1.bf16.msra.mxu0 0
    %3594 = vmatprep.subr.bf16.mxu0 0
    %3595 = vmatpush1.bf16.msra.mxu0 0
    %3596 = vmatprep.subr.bf16.mxu0 0
    %3597 = vmatpush1.bf16.msra.mxu0 0
    %3598 = vmatprep.subr.bf16.mxu0 0
    %3599 = vmatpush1.bf16.msra.mxu0 0
    %3600 = vmatprep.subr.bf16.mxu0 0
    %3601 = vmatpush1.bf16.msra.mxu0 0
    %3602 = vmatprep.subr.bf16.mxu0 0
    %3603 = vmatpush1.bf16.msra.mxu0 0
    %3604 = vmatprep.subr.bf16.mxu0 0
    %3605 = vmatpush1.bf16.msra.mxu0 0
    %3606 = vmatprep.subr.bf16.mxu0 0
    %3607 = vmatpush1.bf16.msra.mxu0 0
    %3608 = vmatprep.subr.bf16.mxu0 0
    %3609 = vmatpush1.bf16.msra.mxu0 0
    %3610 = vmatprep.subr.bf16.mxu0 0
    %3611 = vmatpush1.bf16.msra.mxu0 0
    %3612 = vmatprep.subr.bf16.mxu0 0
    %3613 = vmatpush1.bf16.msra.mxu0 0
    %3614 = vmatprep.subr.bf16.mxu0 0
    %3615 = vmatpush1.bf16.msra.mxu0 0
    %3616 = vmatprep.subr.bf16.mxu0 0
    %3617 = vmatpush1.bf16.msra.mxu0 0
    %3618 = vmatprep.subr.bf16.mxu0 0
    %3619 = vmatpush1.bf16.msra.mxu0 0
    %3620 = vmatprep.mubr.bf16.mxu0 0
    %3621 = vmatmul.mubr.bf16.gmra.mrb[0].mxu0 %v3583
    %v3622 = vpop.f32.mrb[0].mxu0
    %v3623 = vadd.f32 0.0, %v3622
    %v3624 = vpop.f32.mrb[0].mxu0
    %v3625 = vpop.f32.mrb[0].mxu0
    %v3626 = vpop.f32.mrb[0].mxu0
    %3627 = vdwg.mxu0
    %3628 = vrot.lane.b32.xlu0 %v2944, 112
    %v3629 = vpop.permute.xlu0 %3628
    %v3631 = vsel %vm182, %v3432, 0
    %v3634 = vsel %vm673, %v3629, 0
    %3636 = vmatprep.subr.bf16.mxu0 0
    %3637 = vmatpush1.bf16.msra.mxu0 %v3634
    %3638 = vmatprep.subr.bf16.mxu0 0
    %3639 = vmatpush1.bf16.msra.mxu0 0
    %3640 = vmatprep.subr.bf16.mxu0 0
    %3641 = vmatpush1.bf16.msra.mxu0 0
    %3642 = vmatprep.subr.bf16.mxu0 0
    %3643 = vmatpush1.bf16.msra.mxu0 0
    %3644 = vmatprep.subr.bf16.mxu0 0
    %3645 = vmatpush1.bf16.msra.mxu0 0
    %3646 = vmatprep.subr.bf16.mxu0 0
    %3647 = vmatpush1.bf16.msra.mxu0 0
    %3648 = vmatprep.subr.bf16.mxu0 0
    %3649 = vmatpush1.bf16.msra.mxu0 0
    %3650 = vmatprep.subr.bf16.mxu0 0
    %3651 = vmatpush1.bf16.msra.mxu0 0
    %3652 = vmatprep.subr.bf16.mxu0 0
    %3653 = vmatpush1.bf16.msra.mxu0 0
    %3654 = vmatprep.subr.bf16.mxu0 0
    %3655 = vmatpush1.bf16.msra.mxu0 0
    %3656 = vmatprep.subr.bf16.mxu0 0
    %3657 = vmatpush1.bf16.msra.mxu0 0
    %3658 = vmatprep.subr.bf16.mxu0 0
    %3659 = vmatpush1.bf16.msra.mxu0 0
    %3660 = vmatprep.subr.bf16.mxu0 0
    %3661 = vmatpush1.bf16.msra.mxu0 0
    %3662 = vmatprep.subr.bf16.mxu0 0
    %3663 = vmatpush1.bf16.msra.mxu0 0
    %3664 = vmatprep.subr.bf16.mxu0 0
    %3665 = vmatpush1.bf16.msra.mxu0 0
    %3666 = vmatprep.subr.bf16.mxu0 0
    %3667 = vmatpush1.bf16.msra.mxu0 0
    %3668 = vmatprep.mubr.bf16.mxu0 0
    %3669 = vmatmul.mubr.bf16.gmra.mrb[0].mxu0 %v3631
    %v3670 = vpop.f32.mrb[0].mxu0
    %v3671 = vadd.f32 0.0, %v3670
    %v3672 = vpop.f32.mrb[0].mxu0
    %v3673 = vpop.f32.mrb[0].mxu0
    %v3674 = vpop.f32.mrb[0].mxu0
    %3675 = vdwg.mxu0
    %3676 = vrot.lane.b32.xlu0 %v2945, 112
    %v3677 = vpop.permute.xlu0 %3676
    %v3679 = vsel %vm182, %v3433, 0
    %v3682 = vsel %vm673, %v3677, 0
    %3684 = vmatprep.subr.bf16.mxu0 0
    %3685 = vmatpush1.bf16.msra.mxu0 %v3682
    %3686 = vmatprep.subr.bf16.mxu0 0
    %3687 = vmatpush1.bf16.msra.mxu0 0
    %3688 = vmatprep.subr.bf16.mxu0 0
    %3689 = vmatpush1.bf16.msra.mxu0 0
    %3690 = vmatprep.subr.bf16.mxu0 0
    %3691 = vmatpush1.bf16.msra.mxu0 0
    %3692 = vmatprep.subr.bf16.mxu0 0
    %3693 = vmatpush1.bf16.msra.mxu0 0
    %3694 = vmatprep.subr.bf16.mxu0 0
    %3695 = vmatpush1.bf16.msra.mxu0 0
    %3696 = vmatprep.subr.bf16.mxu0 0
    %3697 = vmatpush1.bf16.msra.mxu0 0
    %3698 = vmatprep.subr.bf16.mxu0 0
    %3699 = vmatpush1.bf16.msra.mxu0 0
    %3700 = vmatprep.subr.bf16.mxu0 0
    %3701 = vmatpush1.bf16.msra.mxu0 0
    %3702 = vmatprep.subr.bf16.mxu0 0
    %3703 = vmatpush1.bf16.msra.mxu0 0
    %3704 = vmatprep.subr.bf16.mxu0 0
    %3705 = vmatpush1.bf16.msra.mxu0 0
    %3706 = vmatprep.subr.bf16.mxu0 0
    %3707 = vmatpush1.bf16.msra.mxu0 0
    %3708 = vmatprep.subr.bf16.mxu0 0
    %3709 = vmatpush1.bf16.msra.mxu0 0
    %3710 = vmatprep.subr.bf16.mxu0 0
    %3711 = vmatpush1.bf16.msra.mxu0 0
    %3712 = vmatprep.subr.bf16.mxu0 0
    %3713 = vmatpush1.bf16.msra.mxu0 0
    %3714 = vmatprep.subr.bf16.mxu0 0
    %3715 = vmatpush1.bf16.msra.mxu0 0
    %3716 = vmatprep.mubr.bf16.mxu0 0
    %3717 = vmatmul.mubr.bf16.gmra.mrb[0].mxu0 %v3679
    %v3718 = vpop.f32.mrb[0].mxu0
    %v3719 = vadd.f32 0.0, %v3718
    %v3720 = vpop.f32.mrb[0].mxu0
    %v3721 = vpop.f32.mrb[0].mxu0
    %v3722 = vpop.f32.mrb[0].mxu0
    %3723 = vdwg.mxu0
    %3724 = vrot.lane.b32.xlu0 %v2946, 112
    %v3725 = vpop.permute.xlu0 %3724
    %v3727 = vsel %vm182, %v3434, 0
    %v3730 = vsel %vm673, %v3725, 0
    %3732 = vmatprep.subr.bf16.mxu0 0
    %3733 = vmatpush1.bf16.msra.mxu0 %v3730
    %3734 = vmatprep.subr.bf16.mxu0 0
    %3735 = vmatpush1.bf16.msra.mxu0 0
    %3736 = vmatprep.subr.bf16.mxu0 0
    %3737 = vmatpush1.bf16.msra.mxu0 0
    %3738 = vmatprep.subr.bf16.mxu0 0
    %3739 = vmatpush1.bf16.msra.mxu0 0
    %3740 = vmatprep.subr.bf16.mxu0 0
    %3741 = vmatpush1.bf16.msra.mxu0 0
    %3742 = vmatprep.subr.bf16.mxu0 0
    %3743 = vmatpush1.bf16.msra.mxu0 0
    %3744 = vmatprep.subr.bf16.mxu0 0
    %3745 = vmatpush1.bf16.msra.mxu0 0
    %3746 = vmatprep.subr.bf16.mxu0 0
    %3747 = vmatpush1.bf16.msra.mxu0 0
    %3748 = vmatprep.subr.bf16.mxu0 0
    %3749 = vmatpush1.bf16.msra.mxu0 0
    %3750 = vmatprep.subr.bf16.mxu0 0
    %3751 = vmatpush1.bf16.msra.mxu0 0
    %3752 = vmatprep.subr.bf16.mxu0 0
    %3753 = vmatpush1.bf16.msra.mxu0 0
    %3754 = vmatprep.subr.bf16.mxu0 0
    %3755 = vmatpush1.bf16.msra.mxu0 0
    %3756 = vmatprep.subr.bf16.mxu0 0
    %3757 = vmatpush1.bf16.msra.mxu0 0
    %3758 = vmatprep.subr.bf16.mxu0 0
    %3759 = vmatpush1.bf16.msra.mxu0 0
    %3760 = vmatprep.subr.bf16.mxu0 0
    %3761 = vmatpush1.bf16.msra.mxu0 0
    %3762 = vmatprep.subr.bf16.mxu0 0
    %3763 = vmatpush1.bf16.msra.mxu0 0
    %3764 = vmatprep.mubr.bf16.mxu0 0
    %3765 = vmatmul.mubr.bf16.gmra.mrb[0].mxu0 %v3727
    %v3766 = vpop.f32.mrb[0].mxu0
    %v3767 = vadd.f32 0.0, %v3766
    %v3768 = vpop.f32.mrb[0].mxu0
    %v3769 = vpop.f32.mrb[0].mxu0
    %v3770 = vpop.f32.mrb[0].mxu0
    %3771 = vdwg.mxu0
    %3772 = vrot.lane.b32.xlu0 %v2947, 112
    %v3773 = vpop.permute.xlu0 %3772
    %v3775 = vsel %vm182, %v3435, 0
    %v3778 = vsel %vm673, %v3773, 0
    %3780 = vmatprep.subr.bf16.mxu0 0
    %3781 = vmatpush1.bf16.msra.mxu0 %v3778
    %3782 = vmatprep.subr.bf16.mxu0 0
    %3783 = vmatpush1.bf16.msra.mxu0 0
    %3784 = vmatprep.subr.bf16.mxu0 0
    %3785 = vmatpush1.bf16.msra.mxu0 0
    %3786 = vmatprep.subr.bf16.mxu0 0
    %3787 = vmatpush1.bf16.msra.mxu0 0
    %3788 = vmatprep.subr.bf16.mxu0 0
    %3789 = vmatpush1.bf16.msra.mxu0 0
    %3790 = vmatprep.subr.bf16.mxu0 0
    %3791 = vmatpush1.bf16.msra.mxu0 0
    %3792 = vmatprep.subr.bf16.mxu0 0
    %3793 = vmatpush1.bf16.msra.mxu0 0
    %3794 = vmatprep.subr.bf16.mxu0 0
    %3795 = vmatpush1.bf16.msra.mxu0 0
    %3796 = vmatprep.subr.bf16.mxu0 0
    %3797 = vmatpush1.bf16.msra.mxu0 0
    %3798 = vmatprep.subr.bf16.mxu0 0
    %3799 = vmatpush1.bf16.msra.mxu0 0
    %3800 = vmatprep.subr.bf16.mxu0 0
    %3801 = vmatpush1.bf16.msra.mxu0 0
    %3802 = vmatprep.subr.bf16.mxu0 0
    %3803 = vmatpush1.bf16.msra.mxu0 0
    %3804 = vmatprep.subr.bf16.mxu0 0
    %3805 = vmatpush1.bf16.msra.mxu0 0
    %3806 = vmatprep.subr.bf16.mxu0 0
    %3807 = vmatpush1.bf16.msra.mxu0 0
    %3808 = vmatprep.subr.bf16.mxu0 0
    %3809 = vmatpush1.bf16.msra.mxu0 0
    %3810 = vmatprep.subr.bf16.mxu0 0
    %3811 = vmatpush1.bf16.msra.mxu0 0
    %3812 = vmatprep.mubr.bf16.mxu0 0
    %3813 = vmatmul.mubr.bf16.gmra.mrb[0].mxu0 %v3775
    %v3814 = vpop.f32.mrb[0].mxu0
    %v3815 = vadd.f32 0.0, %v3814
    %v3816 = vpop.f32.mrb[0].mxu0
    %v3817 = vpop.f32.mrb[0].mxu0
    %v3818 = vpop.f32.mrb[0].mxu0
    %3819 = vdwg.mxu0
    %3822 = vrot.lane.b32.xlu0 %v3575, 8
    %v3823 = vpop.permute.xlu0 %3822
    %3824 = vrot.lane.b32.xlu0 %v3623, 8
    %v3825 = vpop.permute.xlu0 %3824
    %3830 = vrot.lane.b32.xlu0 %v3671, 16
    %v3831 = vpop.permute.xlu0 %3830
    %3832 = vrot.lane.b32.xlu0 %v3719, 16
    %v3833 = vpop.permute.xlu0 %3832
    %3838 = vrot.lane.b32.xlu0 %v3767, 24
    %v3839 = vpop.permute.xlu0 %3838
    %3840 = vrot.lane.b32.xlu0 %v3815, 24
    %v3841 = vpop.permute.xlu0 %3840
    %v3844 = vsel %vm182, %v3479, %v3823
    %v3845 = vsel %vm182, %v3527, %v3825
    %v3846 = vsel %vm1079, %v3844, %v3831
    %v3847 = vsel %vm1079, %v3845, %v3833
    %v3848 = vsel %vm1082, %v3846, %v3839
    %v3849 = vsel %vm1082, %v3847, %v3841
    %v3850 = vld [vmem:[%s2784 + $0x78] sm:$0xff]
    %v3851 = vld [vmem:[%s2784 + $0x80] sm:$0xff]
    %v3852 = vld [vmem:[%s2784 + $0x88] sm:$0xff]
    %v3853 = vld [vmem:[%s2784 + $0x90] sm:$0xff]
    %v3854 = vld [vmem:[%s2784 + $0x98] sm:$0x1]
    %v3855 = vpack.c.bf16 %v3849, %v3848
    %v3856 = vpack.c.bf16 %v3851, %v3850
    %v3857 = vpack.c.bf16 %v3853, %v3852
    %v3858 = vlaneseq
    %v3859 = vshrl.u32 %v3858, 7
    %v3860 = vsub.s32 0, %v3859
    %v3861 = vrot.slane %v3854, %v3860
    %v3863 = vsel %vm25, %v3855, 0
    %v3866 = vsel %vm25, %v3856, 0
    %v3869 = vsel %vm25, %v3857, 0
    %3871 = vmatprep.subr.bf16.mxu0 0
    %3872 = vmatpush1.bf16.xpose.msra.mxu0 %v3866
    %3873 = vmatprep.subr.bf16.mxu0 0
    %3874 = vmatpush1.bf16.xpose.msra.mxu0 %v3869
    %3875 = vmatprep.subr.bf16.mxu0 0
    %3876 = vmatpush1.bf16.xpose.msra.mxu0 0
    %3877 = vmatprep.subr.bf16.mxu0 0
    %3878 = vmatpush1.bf16.xpose.msra.mxu0 0
    %3879 = vmatprep.subr.bf16.mxu0 0
    %3880 = vmatpush1.bf16.xpose.msra.mxu0 0
    %3881 = vmatprep.subr.bf16.mxu0 0
    %3882 = vmatpush1.bf16.xpose.msra.mxu0 0
    %3883 = vmatprep.subr.bf16.mxu0 0
    %3884 = vmatpush1.bf16.xpose.msra.mxu0 0
    %3885 = vmatprep.subr.bf16.mxu0 0
    %3886 = vmatpush1.bf16.xpose.msra.mxu0 0
    %3887 = vmatprep.subr.bf16.mxu0 0
    %3888 = vmatpush1.bf16.xpose.msra.mxu0 0
    %3889 = vmatprep.subr.bf16.mxu0 0
    %3890 = vmatpush1.bf16.xpose.msra.mxu0 0
    %3891 = vmatprep.subr.bf16.mxu0 0
    %3892 = vmatpush1.bf16.xpose.msra.mxu0 0
    %3893 = vmatprep.subr.bf16.mxu0 0
    %3894 = vmatpush1.bf16.xpose.msra.mxu0 0
    %3895 = vmatprep.subr.bf16.mxu0 0
    %3896 = vmatpush1.bf16.xpose.msra.mxu0 0
    %3897 = vmatprep.subr.bf16.mxu0 0
    %3898 = vmatpush1.bf16.xpose.msra.mxu0 0
    %3899 = vmatprep.subr.bf16.mxu0 0
    %3900 = vmatpush1.bf16.xpose.msra.mxu0 0
    %3901 = vmatprep.subr.bf16.mxu0 0
    %3902 = vmatpush1.bf16.xpose.msra.mxu0 0
    %3903 = vmatprep.mubr.bf16.mxu0 0
    %3904 = vmatmul.mubr.bf16.gmra.mrb[0].mxu0 %v3863
    %v3905 = vpop.f32.mrb[0].mxu0
    %v3906 = vadd.f32 %v3861, %v3905
    %v3907 = vpop.f32.mrb[0].mxu0
    %v3908 = vpop.f32.mrb[0].mxu0
    %v3909 = vadd.f32 %v3861, %v3908
    %v3910 = vpop.f32.mrb[0].mxu0
    %3911 = vdwg.mxu0
    %v3912 = vadd.f32 %v2791, %v3906
    %v3913 = vadd.f32 %v2792, %v3909
    %v3914 = vld [vmem:[%s2784 + $0xa0] sm:$0x1]
    %v3915 = vld [vmem:[%s2784 + $0xa8] sm:$0x1]
    %v3916 = vsel %vm25, %v3912, 0.0
    %3917 = vadd.xlane.f32.xlu0 %v3916
    %v3918 = vpop.xlane.xlu0 %3917
    %v3919 = vsel %vm25, %v3913, 0.0
    %3920 = vadd.xlane.f32.xlu0 %v3919
    %v3921 = vpop.xlane.xlu0 %3920
    %v3922 = vmul.f32 %v3918, %v32
    %v3923 = vmul.f32 %v3921, %v32
    %v3924 = vsub.f32 %v3912, %v3922
    %v3925 = vsub.f32 %v3913, %v3923
    %v3926 = vmul.f32 %v3924, %v3924
    %v3927 = vmul.f32 %v3925, %v3925
    %v3928 = vsel %vm25, %v3926, 0.0
    %3929 = vadd.xlane.f32.xlu0 %v3928
    %v3930 = vpop.xlane.xlu0 %3929
    %v3931 = vsel %vm25, %v3927, 0.0
    %3932 = vadd.xlane.f32.xlu0 %v3931
    %v3933 = vpop.xlane.xlu0 %3932
    %v3934 = vmul.f32 %v3930, %v32
    %v3935 = vmul.f32 %v3933, %v32
    %v3936 = vadd.f32 %v3934, 1e-05
    %v3937 = vadd.f32 %v3935, 1e-05
    %v3938 = vrsqrt.pop %v3936
    %v3939 = vrsqrt.pop %v3937
    %v3940 = vmul.f32 %v3924, %v3938
    %v3941 = vmul.f32 %v3925, %v3939
    %v3942 = vlaneseq
    %v3943 = vshrl.u32 %v3942, 7
    %v3944 = vsub.s32 0, %v3943
    %v3945 = vrot.slane %v3914, %v3944
    %v3946 = vmul.f32 %v3940, %v3945
    %v3947 = vmul.f32 %v3941, %v3945
    %v3948 = vlaneseq
    %v3949 = vshrl.u32 %v3948, 7
    %v3950 = vsub.s32 0, %v3949
    %v3951 = vrot.slane %v3915, %v3950
    %v3952 = vadd.f32 %v3946, %v3951
    %v3953 = vadd.f32 %v3947, %v3951
    %v3954 = vld [vmem:[%s2784 + $0xb0] sm:$0xff]
    %v3955 = vld [vmem:[%s2784 + $0xb8] sm:$0xff]
    %v3956 = vld [vmem:[%s2784 + $0xc0] sm:$0xff]
    %v3957 = vld [vmem:[%s2784 + $0xc8] sm:$0xff]
    %v3958 = vld [vmem:[%s2784 + $0xd0] sm:$0xff]
    %v3959 = vld [vmem:[%s2784 + $0xd8] sm:$0xff]
    %v3960 = vld [vmem:[%s2784 + $0xe0] sm:$0xff]
    %v3961 = vld [vmem:[%s2784 + $0xe8] sm:$0xff]
    %v3962 = vld [vmem:[%s2784 + $0xf0] sm:$0xff]
    %v3963 = vld [vmem:[%s2784 + $0xf8] sm:$0xff]
    %v3964 = vld [vmem:[%s2784 + $0x100] sm:$0xff]
    %v3965 = vld [vmem:[%s2784 + $0x108] sm:$0xff]
    %v3966 = vld [vmem:[%s2784 + $0x110] sm:$0xff]
    %v3967 = vld [vmem:[%s2784 + $0x118] sm:$0xff]
    %v3968 = vld [vmem:[%s2784 + $0x120] sm:$0xff]
    %v3969 = vld [vmem:[%s2784 + $0x128] sm:$0xff]
    %v3970 = vld [vmem:[%s2845 + $0x8] sm:$0x1]
    %v3971 = vpack.c.bf16 %v3953, %v3952
    %v3972 = vpack.c.bf16 %v3955, %v3954
    %v3973 = vpack.c.bf16 %v3957, %v3956
    %v3974 = vpack.c.bf16 %v3959, %v3958
    %v3975 = vpack.c.bf16 %v3961, %v3960
    %v3976 = vpack.c.bf16 %v3963, %v3962
    %v3977 = vpack.c.bf16 %v3965, %v3964
    %v3978 = vpack.c.bf16 %v3967, %v3966
    %v3979 = vpack.c.bf16 %v3969, %v3968
    %v3980 = vlaneseq
    %v3981 = vshrl.u32 %v3980, 7
    %v3982 = vsub.s32 0, %v3981
    %v3983 = vrot.slane %v3970, %v3982
    %v3985 = vsel %vm25, %v3971, 0
    %v3988 = vsel %vm25, %v3972, 0
    %v3991 = vsel %vm25, %v3973, 0
    %v3994 = vsel %vm25, %v3974, 0
    %v3997 = vsel %vm25, %v3975, 0
    %v4000 = vsel %vm25, %v3976, 0
    %v4003 = vsel %vm25, %v3977, 0
    %v4006 = vsel %vm25, %v3978, 0
    %v4009 = vsel %vm25, %v3979, 0
    %4011 = vmatprep.subr.bf16.mxu0 0
    %4012 = vmatpush1.bf16.xpose.msra.mxu0 %v3988
    %4013 = vmatprep.subr.bf16.mxu0 0
    %4014 = vmatpush1.bf16.xpose.msra.mxu0 %v3991
    %4015 = vmatprep.subr.bf16.mxu0 0
    %4016 = vmatpush1.bf16.xpose.msra.mxu0 %v3994
    %4017 = vmatprep.subr.bf16.mxu0 0
    %4018 = vmatpush1.bf16.xpose.msra.mxu0 %v3997
    %4019 = vmatprep.subr.bf16.mxu0 0
    %4020 = vmatpush1.bf16.xpose.msra.mxu0 %v4000
    %4021 = vmatprep.subr.bf16.mxu0 0
    %4022 = vmatpush1.bf16.xpose.msra.mxu0 %v4003
    %4023 = vmatprep.subr.bf16.mxu0 0
    %4024 = vmatpush1.bf16.xpose.msra.mxu0 %v4006
    %4025 = vmatprep.subr.bf16.mxu0 0
    %4026 = vmatpush1.bf16.xpose.msra.mxu0 %v4009
    %4027 = vmatprep.subr.bf16.mxu0 0
    %4028 = vmatpush1.bf16.xpose.msra.mxu0 0
    %4029 = vmatprep.subr.bf16.mxu0 0
    %4030 = vmatpush1.bf16.xpose.msra.mxu0 0
    %4031 = vmatprep.subr.bf16.mxu0 0
    %4032 = vmatpush1.bf16.xpose.msra.mxu0 0
    %4033 = vmatprep.subr.bf16.mxu0 0
    %4034 = vmatpush1.bf16.xpose.msra.mxu0 0
    %4035 = vmatprep.subr.bf16.mxu0 0
    %4036 = vmatpush1.bf16.xpose.msra.mxu0 0
    %4037 = vmatprep.subr.bf16.mxu0 0
    %4038 = vmatpush1.bf16.xpose.msra.mxu0 0
    %4039 = vmatprep.subr.bf16.mxu0 0
    %4040 = vmatpush1.bf16.xpose.msra.mxu0 0
    %4041 = vmatprep.subr.bf16.mxu0 0
    %4042 = vmatpush1.bf16.xpose.msra.mxu0 0
    %4043 = vmatprep.mubr.bf16.mxu0 0
    %4044 = vmatmul.mubr.bf16.gmra.mrb[0].mxu0 %v3985
    %v4045 = vpop.f32.mrb[0].mxu0
    %v4046 = vadd.f32 %v3983, %v4045
    %v4047 = vpop.f32.mrb[0].mxu0
    %v4048 = vpop.f32.mrb[0].mxu0
    %v4049 = vadd.f32 %v3983, %v4048
    %v4050 = vpop.f32.mrb[0].mxu0
    %4051 = vdwg.mxu0
    %v4052 = vmax.f32 %v4046, 0.0
    %v4053 = vmax.f32 %v4049, 0.0
    %v4054 = vld [vmem:[%s2845 + $0x10] sm:$0xff]
    %v4055 = vld [vmem:[%s2845 + $0x18] sm:$0xff]
    %v4056 = vld [vmem:[%s2845 + $0x20] sm:$0xff]
    %v4057 = vld [vmem:[%s2845 + $0x28] sm:$0xff]
    %v4058 = vld [vmem:[%s2784 + $0x130] sm:$0x1]
    %v4059 = vpack.c.bf16 %v4053, %v4052
    %v4060 = vpack.c.bf16 %v4055, %v4054
    %v4061 = vpack.c.bf16 %v4057, %v4056
    %v4062 = vlaneseq
    %v4063 = vshrl.u32 %v4062, 7
    %v4064 = vsub.s32 0, %v4063
    %v4065 = vrot.slane %v4058, %v4064
    %4066 = vmatprep.subr.bf16.mxu0 0
    %4067 = vmatpush1.bf16.xpose.msra.mxu0 %v4060
    %4068 = vmatprep.subr.bf16.mxu0 0
    %4069 = vmatpush1.bf16.xpose.msra.mxu0 %v4061
    %4070 = vmatprep.subr.bf16.mxu0 0
    %4071 = vmatpush1.bf16.xpose.msra.mxu0 0
    %4072 = vmatprep.subr.bf16.mxu0 0
    %4073 = vmatpush1.bf16.xpose.msra.mxu0 0
    %4074 = vmatprep.subr.bf16.mxu0 0
    %4075 = vmatpush1.bf16.xpose.msra.mxu0 0
    %4076 = vmatprep.subr.bf16.mxu0 0
    %4077 = vmatpush1.bf16.xpose.msra.mxu0 0
    %4078 = vmatprep.subr.bf16.mxu0 0
    %4079 = vmatpush1.bf16.xpose.msra.mxu0 0
    %4080 = vmatprep.subr.bf16.mxu0 0
    %4081 = vmatpush1.bf16.xpose.msra.mxu0 0
    %4082 = vmatprep.subr.bf16.mxu0 0
    %4083 = vmatpush1.bf16.xpose.msra.mxu0 0
    %4084 = vmatprep.subr.bf16.mxu0 0
    %4085 = vmatpush1.bf16.xpose.msra.mxu0 0
    %4086 = vmatprep.subr.bf16.mxu0 0
    %4087 = vmatpush1.bf16.xpose.msra.mxu0 0
    %4088 = vmatprep.subr.bf16.mxu0 0
    %4089 = vmatpush1.bf16.xpose.msra.mxu0 0
    %4090 = vmatprep.subr.bf16.mxu0 0
    %4091 = vmatpush1.bf16.xpose.msra.mxu0 0
    %4092 = vmatprep.subr.bf16.mxu0 0
    %4093 = vmatpush1.bf16.xpose.msra.mxu0 0
    %4094 = vmatprep.subr.bf16.mxu0 0
    %4095 = vmatpush1.bf16.xpose.msra.mxu0 0
    %4096 = vmatprep.subr.bf16.mxu0 0
    %4097 = vmatpush1.bf16.xpose.msra.mxu0 0
    %4098 = vmatprep.mubr.bf16.mxu0 0
    %4099 = vmatmul.mubr.bf16.gmra.mrb[0].mxu0 %v4059
    %v4100 = vpop.f32.mrb[0].mxu0
    %v4101 = vadd.f32 %v4065, %v4100
    %v4102 = vpop.f32.mrb[0].mxu0
    %v4103 = vpop.f32.mrb[0].mxu0
    %v4104 = vadd.f32 %v4065, %v4103
    %v4105 = vpop.f32.mrb[0].mxu0
    %4106 = vdwg.mxu0
    %v4107 = vadd.f32 %v3912, %v4101
    %v4108 = vadd.f32 %v3913, %v4104
    %v4109 = vld [vmem:[%s2784 + $0x138] sm:$0x1]
    %v4110 = vld [vmem:[%s2784 + $0x140] sm:$0x1]
    %v4111 = vsel %vm25, %v4107, 0.0
    %4112 = vadd.xlane.f32.xlu0 %v4111
    %v4113 = vpop.xlane.xlu0 %4112
    %v4114 = vsel %vm25, %v4108, 0.0
    %4115 = vadd.xlane.f32.xlu0 %v4114
    %v4116 = vpop.xlane.xlu0 %4115
    %v4117 = vmul.f32 %v4113, %v32
    %v4118 = vmul.f32 %v4116, %v32
    %v4119 = vsub.f32 %v4107, %v4117
    %v4120 = vsub.f32 %v4108, %v4118
    %v4121 = vmul.f32 %v4119, %v4119
    %v4122 = vmul.f32 %v4120, %v4120
    %v4123 = vsel %vm25, %v4121, 0.0
    %4124 = vadd.xlane.f32.xlu0 %v4123
    %v4125 = vpop.xlane.xlu0 %4124
    %v4126 = vsel %vm25, %v4122, 0.0
    %4127 = vadd.xlane.f32.xlu0 %v4126
    %v4128 = vpop.xlane.xlu0 %4127
    %v4129 = vmul.f32 %v4125, %v32
    %v4130 = vmul.f32 %v4128, %v32
    %v4131 = vadd.f32 %v4129, 1e-05
    %v4132 = vadd.f32 %v4130, 1e-05
    %v4133 = vrsqrt.pop %v4131
    %v4134 = vrsqrt.pop %v4132
    %v4135 = vmul.f32 %v4119, %v4133
    %v4136 = vmul.f32 %v4120, %v4134
    %v4137 = vlaneseq
    %v4138 = vshrl.u32 %v4137, 7
    %v4139 = vsub.s32 0, %v4138
    %v4140 = vrot.slane %v4109, %v4139
    %v4141 = vmul.f32 %v4135, %v4140
    %v4142 = vmul.f32 %v4136, %v4140
    %v4143 = vlaneseq
    %v4144 = vshrl.u32 %v4143, 7
    %v4145 = vsub.s32 0, %v4144
    %v4146 = vrot.slane %v4110, %v4145
    %v4147 = vadd.f32 %v4141, %v4146
    %v4148 = vadd.f32 %v4142, %v4146
    %v4149 = vld [vmem:[%s2784 + $0x148] sm:$0xff]
    %v4150 = vld [vmem:[%s2784 + $0x150] sm:$0xff]
    %v4151 = vld [vmem:[%s2784 + $0x158] sm:$0xff]
    %v4152 = vld [vmem:[%s2784 + $0x160] sm:$0xff]
    %v4153 = vld [vmem:[%s2784 + $0x168] sm:$0xff]
    %v4154 = vld [vmem:[%s2784 + $0x170] sm:$0xff]
    %v4155 = vld [vmem:[%s2784 + $0x178] sm:$0xff]
    %v4156 = vld [vmem:[%s2784 + $0x180] sm:$0xff]
    %v4157 = vld [vmem:[%s2784 + $0x188] sm:$0xff]
    %v4158 = vld [vmem:[%s2784 + $0x190] sm:$0xff]
    %v4159 = vld [vmem:[%s2784 + $0x198] sm:$0xff]
    %v4160 = vld [vmem:[%s2784 + $0x1a0] sm:$0xff]
    %v4161 = vld [vmem:[%s2845 + $0x30] sm:$0x1]
    %v4162 = vpack.c.bf16 %v4148, %v4147
    %v4163 = vpack.c.bf16 %v4150, %v4149
    %v4164 = vpack.c.bf16 %v4152, %v4151
    %v4165 = vpack.c.bf16 %v4154, %v4153
    %v4166 = vpack.c.bf16 %v4156, %v4155
    %v4167 = vpack.c.bf16 %v4158, %v4157
    %v4168 = vpack.c.bf16 %v4160, %v4159
    %v4169 = vlaneseq
    %v4170 = vshrl.u32 %v4169, 7
    %v4171 = vsub.s32 0, %v4170
    %v4172 = vrot.slane %v4161, %v4171
    %v4174 = vsel %vm25, %v4162, 0
    %v4177 = vsel %vm25, %v4163, 0
    %v4180 = vsel %vm25, %v4164, 0
    %v4183 = vsel %vm25, %v4165, 0
    %v4186 = vsel %vm25, %v4166, 0
    %v4189 = vsel %vm25, %v4167, 0
    %v4192 = vsel %vm25, %v4168, 0
    %4194 = vmatprep.subr.bf16.mxu0 0
    %4195 = vmatpush1.bf16.xpose.msra.mxu0 %v4177
    %4196 = vmatprep.subr.bf16.mxu0 0
    %4197 = vmatpush1.bf16.xpose.msra.mxu0 %v4180
    %4198 = vmatprep.subr.bf16.mxu0 0
    %4199 = vmatpush1.bf16.xpose.msra.mxu0 %v4183
    %4200 = vmatprep.subr.bf16.mxu0 0
    %4201 = vmatpush1.bf16.xpose.msra.mxu0 %v4186
    %4202 = vmatprep.subr.bf16.mxu0 0
    %4203 = vmatpush1.bf16.xpose.msra.mxu0 %v4189
    %4204 = vmatprep.subr.bf16.mxu0 0
    %4205 = vmatpush1.bf16.xpose.msra.mxu0 %v4192
    %4206 = vmatprep.subr.bf16.mxu0 0
    %4207 = vmatpush1.bf16.xpose.msra.mxu0 0
    %4208 = vmatprep.subr.bf16.mxu0 0
    %4209 = vmatpush1.bf16.xpose.msra.mxu0 0
    %4210 = vmatprep.subr.bf16.mxu0 0
    %4211 = vmatpush1.bf16.xpose.msra.mxu0 0
    %4212 = vmatprep.subr.bf16.mxu0 0
    %4213 = vmatpush1.bf16.xpose.msra.mxu0 0
    %4214 = vmatprep.subr.bf16.mxu0 0
    %4215 = vmatpush1.bf16.xpose.msra.mxu0 0
    %4216 = vmatprep.subr.bf16.mxu0 0
    %4217 = vmatpush1.bf16.xpose.msra.mxu0 0
    %4218 = vmatprep.subr.bf16.mxu0 0
    %4219 = vmatpush1.bf16.xpose.msra.mxu0 0
    %4220 = vmatprep.subr.bf16.mxu0 0
    %4221 = vmatpush1.bf16.xpose.msra.mxu0 0
    %4222 = vmatprep.subr.bf16.mxu0 0
    %4223 = vmatpush1.bf16.xpose.msra.mxu0 0
    %4224 = vmatprep.subr.bf16.mxu0 0
    %4225 = vmatpush1.bf16.xpose.msra.mxu0 0
    %4226 = vmatprep.mubr.bf16.mxu0 0
    %4227 = vmatmul.mubr.bf16.gmra.mrb[0].mxu0 %v4174
    %v4228 = vpop.f32.mrb[0].mxu0
    %v4229 = vadd.f32 %v4172, %v4228
    %v4230 = vpop.f32.mrb[0].mxu0
    %v4231 = vpop.f32.mrb[0].mxu0
    %v4232 = vadd.f32 %v4172, %v4231
    %v4233 = vpop.f32.mrb[0].mxu0
    %4234 = vdwg.mxu0
    %4237 = vrot.lane.b32.xlu0 %v4229, 104
    %v4238 = vpop.permute.xlu0 %4237
    %4239 = vrot.lane.b32.xlu0 %v4232, 104
    %v4240 = vpop.permute.xlu0 %4239
    %4243 = vrot.lane.b32.xlu0 %v4229, 80
    %v4244 = vpop.permute.xlu0 %4243
    %4245 = vrot.lane.b32.xlu0 %v4232, 80
    %v4246 = vpop.permute.xlu0 %4245
    %4249 = vrot.lane.b32.xlu0 %v4229, 56
    %v4250 = vpop.permute.xlu0 %4249
    %4251 = vrot.lane.b32.xlu0 %v4232, 56
    %v4252 = vpop.permute.xlu0 %4251
    %v4255 = vpack.c.bf16 %v4229, %v4229
    %v4256 = vpack.c.bf16 %v4232, %v4232
    %v4257 = vpack.c.bf16 %v4238, %v4238
    %v4258 = vpack.c.bf16 %v4240, %v4240
    %v4259 = vpack.c.bf16 %v4244, %v4244
    %v4260 = vpack.c.bf16 %v4246, %v4246
    %v4261 = vpack.c.bf16 %v4250, %v4250
    %v4262 = vpack.c.bf16 %v4252, %v4252
    %4264 = vrot.lane.b32.xlu0 %v4255, 120
    %v4265 = vpop.permute.xlu0 %4264
    %v4267 = vsel %vm182, %v4255, 0
    %v4270 = vsel %vm182, %v4265, 0
    %4272 = vmatprep.subr.bf16.mxu0 0
    %4273 = vmatpush1.bf16.xpose.msra.mxu0 %v4270
    %4274 = vmatprep.subr.bf16.mxu0 0
    %4275 = vmatpush1.bf16.xpose.msra.mxu0 0
    %4276 = vmatprep.subr.bf16.mxu0 0
    %4277 = vmatpush1.bf16.xpose.msra.mxu0 0
    %4278 = vmatprep.subr.bf16.mxu0 0
    %4279 = vmatpush1.bf16.xpose.msra.mxu0 0
    %4280 = vmatprep.subr.bf16.mxu0 0
    %4281 = vmatpush1.bf16.xpose.msra.mxu0 0
    %4282 = vmatprep.subr.bf16.mxu0 0
    %4283 = vmatpush1.bf16.xpose.msra.mxu0 0
    %4284 = vmatprep.subr.bf16.mxu0 0
    %4285 = vmatpush1.bf16.xpose.msra.mxu0 0
    %4286 = vmatprep.subr.bf16.mxu0 0
    %4287 = vmatpush1.bf16.xpose.msra.mxu0 0
    %4288 = vmatprep.subr.bf16.mxu0 0
    %4289 = vmatpush1.bf16.xpose.msra.mxu0 0
    %4290 = vmatprep.subr.bf16.mxu0 0
    %4291 = vmatpush1.bf16.xpose.msra.mxu0 0
    %4292 = vmatprep.subr.bf16.mxu0 0
    %4293 = vmatpush1.bf16.xpose.msra.mxu0 0
    %4294 = vmatprep.subr.bf16.mxu0 0
    %4295 = vmatpush1.bf16.xpose.msra.mxu0 0
    %4296 = vmatprep.subr.bf16.mxu0 0
    %4297 = vmatpush1.bf16.xpose.msra.mxu0 0
    %4298 = vmatprep.subr.bf16.mxu0 0
    %4299 = vmatpush1.bf16.xpose.msra.mxu0 0
    %4300 = vmatprep.subr.bf16.mxu0 0
    %4301 = vmatpush1.bf16.xpose.msra.mxu0 0
    %4302 = vmatprep.subr.bf16.mxu0 0
    %4303 = vmatpush1.bf16.xpose.msra.mxu0 0
    %4304 = vmatprep.mubr.bf16.mxu0 0
    %4305 = vmatmul.mubr.bf16.gmra.mrb[0].mxu0 %v4267
    %v4306 = vpop.f32.mrb[0].mxu0
    %v4307 = vadd.f32 0.0, %v4306
    %v4308 = vpop.f32.mrb[0].mxu0
    %v4309 = vpop.f32.mrb[0].mxu0
    %v4310 = vpop.f32.mrb[0].mxu0
    %4311 = vdwg.mxu0
    %4313 = vrot.lane.b32.xlu0 %v4256, 120
    %v4314 = vpop.permute.xlu0 %4313
    %v4316 = vsel %vm182, %v4256, 0
    %v4319 = vsel %vm182, %v4314, 0
    %4321 = vmatprep.subr.bf16.mxu0 0
    %4322 = vmatpush1.bf16.xpose.msra.mxu0 %v4319
    %4323 = vmatprep.subr.bf16.mxu0 0
    %4324 = vmatpush1.bf16.xpose.msra.mxu0 0
    %4325 = vmatprep.subr.bf16.mxu0 0
    %4326 = vmatpush1.bf16.xpose.msra.mxu0 0
    %4327 = vmatprep.subr.bf16.mxu0 0
    %4328 = vmatpush1.bf16.xpose.msra.mxu0 0
    %4329 = vmatprep.subr.bf16.mxu0 0
    %4330 = vmatpush1.bf16.xpose.msra.mxu0 0
    %4331 = vmatprep.subr.bf16.mxu0 0
    %4332 = vmatpush1.bf16.xpose.msra.mxu0 0
    %4333 = vmatprep.subr.bf16.mxu0 0
    %4334 = vmatpush1.bf16.xpose.msra.mxu0 0
    %4335 = vmatprep.subr.bf16.mxu0 0
    %4336 = vmatpush1.bf16.xpose.msra.mxu0 0
    %4337 = vmatprep.subr.bf16.mxu0 0
    %4338 = vmatpush1.bf16.xpose.msra.mxu0 0
    %4339 = vmatprep.subr.bf16.mxu0 0
    %4340 = vmatpush1.bf16.xpose.msra.mxu0 0
    %4341 = vmatprep.subr.bf16.mxu0 0
    %4342 = vmatpush1.bf16.xpose.msra.mxu0 0
    %4343 = vmatprep.subr.bf16.mxu0 0
    %4344 = vmatpush1.bf16.xpose.msra.mxu0 0
    %4345 = vmatprep.subr.bf16.mxu0 0
    %4346 = vmatpush1.bf16.xpose.msra.mxu0 0
    %4347 = vmatprep.subr.bf16.mxu0 0
    %4348 = vmatpush1.bf16.xpose.msra.mxu0 0
    %4349 = vmatprep.subr.bf16.mxu0 0
    %4350 = vmatpush1.bf16.xpose.msra.mxu0 0
    %4351 = vmatprep.subr.bf16.mxu0 0
    %4352 = vmatpush1.bf16.xpose.msra.mxu0 0
    %4353 = vmatprep.mubr.bf16.mxu0 0
    %4354 = vmatmul.mubr.bf16.gmra.mrb[0].mxu0 %v4316
    %v4355 = vpop.f32.mrb[0].mxu0
    %v4356 = vadd.f32 0.0, %v4355
    %v4357 = vpop.f32.mrb[0].mxu0
    %v4358 = vpop.f32.mrb[0].mxu0
    %v4359 = vpop.f32.mrb[0].mxu0
    %4360 = vdwg.mxu0
    %4362 = vrot.lane.b32.xlu0 %v4257, 120
    %v4363 = vpop.permute.xlu0 %4362
    %v4365 = vsel %vm182, %v4257, 0
    %v4368 = vsel %vm182, %v4363, 0
    %4370 = vmatprep.subr.bf16.mxu0 0
    %4371 = vmatpush1.bf16.xpose.msra.mxu0 %v4368
    %4372 = vmatprep.subr.bf16.mxu0 0
    %4373 = vmatpush1.bf16.xpose.msra.mxu0 0
    %4374 = vmatprep.subr.bf16.mxu0 0
    %4375 = vmatpush1.bf16.xpose.msra.mxu0 0
    %4376 = vmatprep.subr.bf16.mxu0 0
    %4377 = vmatpush1.bf16.xpose.msra.mxu0 0
    %4378 = vmatprep.subr.bf16.mxu0 0
    %4379 = vmatpush1.bf16.xpose.msra.mxu0 0
    %4380 = vmatprep.subr.bf16.mxu0 0
    %4381 = vmatpush1.bf16.xpose.msra.mxu0 0
    %4382 = vmatprep.subr.bf16.mxu0 0
    %4383 = vmatpush1.bf16.xpose.msra.mxu0 0
    %4384 = vmatprep.subr.bf16.mxu0 0
    %4385 = vmatpush1.bf16.xpose.msra.mxu0 0
    %4386 = vmatprep.subr.bf16.mxu0 0
    %4387 = vmatpush1.bf16.xpose.msra.mxu0 0
    %4388 = vmatprep.subr.bf16.mxu0 0
    %4389 = vmatpush1.bf16.xpose.msra.mxu0 0
    %4390 = vmatprep.subr.bf16.mxu0 0
    %4391 = vmatpush1.bf16.xpose.msra.mxu0 0
    %4392 = vmatprep.subr.bf16.mxu0 0
    %4393 = vmatpush1.bf16.xpose.msra.mxu0 0
    %4394 = vmatprep.subr.bf16.mxu0 0
    %4395 = vmatpush1.bf16.xpose.msra.mxu0 0
    %4396 = vmatprep.subr.bf16.mxu0 0
    %4397 = vmatpush1.bf16.xpose.msra.mxu0 0
    %4398 = vmatprep.subr.bf16.mxu0 0
    %4399 = vmatpush1.bf16.xpose.msra.mxu0 0
    %4400 = vmatprep.subr.bf16.mxu0 0
    %4401 = vmatpush1.bf16.xpose.msra.mxu0 0
    %4402 = vmatprep.mubr.bf16.mxu0 0
    %4403 = vmatmul.mubr.bf16.gmra.mrb[0].mxu0 %v4365
    %v4404 = vpop.f32.mrb[0].mxu0
    %v4405 = vadd.f32 0.0, %v4404
    %v4406 = vpop.f32.mrb[0].mxu0
    %v4407 = vpop.f32.mrb[0].mxu0
    %v4408 = vpop.f32.mrb[0].mxu0
    %4409 = vdwg.mxu0
    %4411 = vrot.lane.b32.xlu0 %v4258, 120
    %v4412 = vpop.permute.xlu0 %4411
    %v4414 = vsel %vm182, %v4258, 0
    %v4417 = vsel %vm182, %v4412, 0
    %4419 = vmatprep.subr.bf16.mxu0 0
    %4420 = vmatpush1.bf16.xpose.msra.mxu0 %v4417
    %4421 = vmatprep.subr.bf16.mxu0 0
    %4422 = vmatpush1.bf16.xpose.msra.mxu0 0
    %4423 = vmatprep.subr.bf16.mxu0 0
    %4424 = vmatpush1.bf16.xpose.msra.mxu0 0
    %4425 = vmatprep.subr.bf16.mxu0 0
    %4426 = vmatpush1.bf16.xpose.msra.mxu0 0
    %4427 = vmatprep.subr.bf16.mxu0 0
    %4428 = vmatpush1.bf16.xpose.msra.mxu0 0
    %4429 = vmatprep.subr.bf16.mxu0 0
    %4430 = vmatpush1.bf16.xpose.msra.mxu0 0
    %4431 = vmatprep.subr.bf16.mxu0 0
    %4432 = vmatpush1.bf16.xpose.msra.mxu0 0
    %4433 = vmatprep.subr.bf16.mxu0 0
    %4434 = vmatpush1.bf16.xpose.msra.mxu0 0
    %4435 = vmatprep.subr.bf16.mxu0 0
    %4436 = vmatpush1.bf16.xpose.msra.mxu0 0
    %4437 = vmatprep.subr.bf16.mxu0 0
    %4438 = vmatpush1.bf16.xpose.msra.mxu0 0
    %4439 = vmatprep.subr.bf16.mxu0 0
    %4440 = vmatpush1.bf16.xpose.msra.mxu0 0
    %4441 = vmatprep.subr.bf16.mxu0 0
    %4442 = vmatpush1.bf16.xpose.msra.mxu0 0
    %4443 = vmatprep.subr.bf16.mxu0 0
    %4444 = vmatpush1.bf16.xpose.msra.mxu0 0
    %4445 = vmatprep.subr.bf16.mxu0 0
    %4446 = vmatpush1.bf16.xpose.msra.mxu0 0
    %4447 = vmatprep.subr.bf16.mxu0 0
    %4448 = vmatpush1.bf16.xpose.msra.mxu0 0
    %4449 = vmatprep.subr.bf16.mxu0 0
    %4450 = vmatpush1.bf16.xpose.msra.mxu0 0
    %4451 = vmatprep.mubr.bf16.mxu0 0
    %4452 = vmatmul.mubr.bf16.gmra.mrb[0].mxu0 %v4414
    %v4453 = vpop.f32.mrb[0].mxu0
    %v4454 = vadd.f32 0.0, %v4453
    %v4455 = vpop.f32.mrb[0].mxu0
    %v4456 = vpop.f32.mrb[0].mxu0
    %v4457 = vpop.f32.mrb[0].mxu0
    %4458 = vdwg.mxu0
    %4460 = vrot.lane.b32.xlu0 %v4259, 120
    %v4461 = vpop.permute.xlu0 %4460
    %v4463 = vsel %vm182, %v4259, 0
    %v4466 = vsel %vm182, %v4461, 0
    %4468 = vmatprep.subr.bf16.mxu0 0
    %4469 = vmatpush1.bf16.xpose.msra.mxu0 %v4466
    %4470 = vmatprep.subr.bf16.mxu0 0
    %4471 = vmatpush1.bf16.xpose.msra.mxu0 0
    %4472 = vmatprep.subr.bf16.mxu0 0
    %4473 = vmatpush1.bf16.xpose.msra.mxu0 0
    %4474 = vmatprep.subr.bf16.mxu0 0
    %4475 = vmatpush1.bf16.xpose.msra.mxu0 0
    %4476 = vmatprep.subr.bf16.mxu0 0
    %4477 = vmatpush1.bf16.xpose.msra.mxu0 0
    %4478 = vmatprep.subr.bf16.mxu0 0
    %4479 = vmatpush1.bf16.xpose.msra.mxu0 0
    %4480 = vmatprep.subr.bf16.mxu0 0
    %4481 = vmatpush1.bf16.xpose.msra.mxu0 0
    %4482 = vmatprep.subr.bf16.mxu0 0
    %4483 = vmatpush1.bf16.xpose.msra.mxu0 0
    %4484 = vmatprep.subr.bf16.mxu0 0
    %4485 = vmatpush1.bf16.xpose.msra.mxu0 0
    %4486 = vmatprep.subr.bf16.mxu0 0
    %4487 = vmatpush1.bf16.xpose.msra.mxu0 0
    %4488 = vmatprep.subr.bf16.mxu0 0
    %4489 = vmatpush1.bf16.xpose.msra.mxu0 0
    %4490 = vmatprep.subr.bf16.mxu0 0
    %4491 = vmatpush1.bf16.xpose.msra.mxu0 0
    %4492 = vmatprep.subr.bf16.mxu0 0
    %4493 = vmatpush1.bf16.xpose.msra.mxu0 0
    %4494 = vmatprep.subr.bf16.mxu0 0
    %4495 = vmatpush1.bf16.xpose.msra.mxu0 0
    %4496 = vmatprep.subr.bf16.mxu0 0
    %4497 = vmatpush1.bf16.xpose.msra.mxu0 0
    %4498 = vmatprep.subr.bf16.mxu0 0
    %4499 = vmatpush1.bf16.xpose.msra.mxu0 0
    %4500 = vmatprep.mubr.bf16.mxu0 0
    %4501 = vmatmul.mubr.bf16.gmra.mrb[0].mxu0 %v4463
    %v4502 = vpop.f32.mrb[0].mxu0
    %v4503 = vadd.f32 0.0, %v4502
    %v4504 = vpop.f32.mrb[0].mxu0
    %v4505 = vpop.f32.mrb[0].mxu0
    %v4506 = vpop.f32.mrb[0].mxu0
    %4507 = vdwg.mxu0
    %4509 = vrot.lane.b32.xlu0 %v4260, 120
    %v4510 = vpop.permute.xlu0 %4509
    %v4512 = vsel %vm182, %v4260, 0
    %v4515 = vsel %vm182, %v4510, 0
    %4517 = vmatprep.subr.bf16.mxu0 0
    %4518 = vmatpush1.bf16.xpose.msra.mxu0 %v4515
    %4519 = vmatprep.subr.bf16.mxu0 0
    %4520 = vmatpush1.bf16.xpose.msra.mxu0 0
    %4521 = vmatprep.subr.bf16.mxu0 0
    %4522 = vmatpush1.bf16.xpose.msra.mxu0 0
    %4523 = vmatprep.subr.bf16.mxu0 0
    %4524 = vmatpush1.bf16.xpose.msra.mxu0 0
    %4525 = vmatprep.subr.bf16.mxu0 0
    %4526 = vmatpush1.bf16.xpose.msra.mxu0 0
    %4527 = vmatprep.subr.bf16.mxu0 0
    %4528 = vmatpush1.bf16.xpose.msra.mxu0 0
    %4529 = vmatprep.subr.bf16.mxu0 0
    %4530 = vmatpush1.bf16.xpose.msra.mxu0 0
    %4531 = vmatprep.subr.bf16.mxu0 0
    %4532 = vmatpush1.bf16.xpose.msra.mxu0 0
    %4533 = vmatprep.subr.bf16.mxu0 0
    %4534 = vmatpush1.bf16.xpose.msra.mxu0 0
    %4535 = vmatprep.subr.bf16.mxu0 0
    %4536 = vmatpush1.bf16.xpose.msra.mxu0 0
    %4537 = vmatprep.subr.bf16.mxu0 0
    %4538 = vmatpush1.bf16.xpose.msra.mxu0 0
    %4539 = vmatprep.subr.bf16.mxu0 0
    %4540 = vmatpush1.bf16.xpose.msra.mxu0 0
    %4541 = vmatprep.subr.bf16.mxu0 0
    %4542 = vmatpush1.bf16.xpose.msra.mxu0 0
    %4543 = vmatprep.subr.bf16.mxu0 0
    %4544 = vmatpush1.bf16.xpose.msra.mxu0 0
    %4545 = vmatprep.subr.bf16.mxu0 0
    %4546 = vmatpush1.bf16.xpose.msra.mxu0 0
    %4547 = vmatprep.subr.bf16.mxu0 0
    %4548 = vmatpush1.bf16.xpose.msra.mxu0 0
    %4549 = vmatprep.mubr.bf16.mxu0 0
    %4550 = vmatmul.mubr.bf16.gmra.mrb[0].mxu0 %v4512
    %v4551 = vpop.f32.mrb[0].mxu0
    %v4552 = vadd.f32 0.0, %v4551
    %v4553 = vpop.f32.mrb[0].mxu0
    %v4554 = vpop.f32.mrb[0].mxu0
    %v4555 = vpop.f32.mrb[0].mxu0
    %4556 = vdwg.mxu0
    %4558 = vrot.lane.b32.xlu0 %v4261, 120
    %v4559 = vpop.permute.xlu0 %4558
    %v4561 = vsel %vm182, %v4261, 0
    %v4564 = vsel %vm182, %v4559, 0
    %4566 = vmatprep.subr.bf16.mxu0 0
    %4567 = vmatpush1.bf16.xpose.msra.mxu0 %v4564
    %4568 = vmatprep.subr.bf16.mxu0 0
    %4569 = vmatpush1.bf16.xpose.msra.mxu0 0
    %4570 = vmatprep.subr.bf16.mxu0 0
    %4571 = vmatpush1.bf16.xpose.msra.mxu0 0
    %4572 = vmatprep.subr.bf16.mxu0 0
    %4573 = vmatpush1.bf16.xpose.msra.mxu0 0
    %4574 = vmatprep.subr.bf16.mxu0 0
    %4575 = vmatpush1.bf16.xpose.msra.mxu0 0
    %4576 = vmatprep.subr.bf16.mxu0 0
    %4577 = vmatpush1.bf16.xpose.msra.mxu0 0
    %4578 = vmatprep.subr.bf16.mxu0 0
    %4579 = vmatpush1.bf16.xpose.msra.mxu0 0
    %4580 = vmatprep.subr.bf16.mxu0 0
    %4581 = vmatpush1.bf16.xpose.msra.mxu0 0
    %4582 = vmatprep.subr.bf16.mxu0 0
    %4583 = vmatpush1.bf16.xpose.msra.mxu0 0
    %4584 = vmatprep.subr.bf16.mxu0 0
    %4585 = vmatpush1.bf16.xpose.msra.mxu0 0
    %4586 = vmatprep.subr.bf16.mxu0 0
    %4587 = vmatpush1.bf16.xpose.msra.mxu0 0
    %4588 = vmatprep.subr.bf16.mxu0 0
    %4589 = vmatpush1.bf16.xpose.msra.mxu0 0
    %4590 = vmatprep.subr.bf16.mxu0 0
    %4591 = vmatpush1.bf16.xpose.msra.mxu0 0
    %4592 = vmatprep.subr.bf16.mxu0 0
    %4593 = vmatpush1.bf16.xpose.msra.mxu0 0
    %4594 = vmatprep.subr.bf16.mxu0 0
    %4595 = vmatpush1.bf16.xpose.msra.mxu0 0
    %4596 = vmatprep.subr.bf16.mxu0 0
    %4597 = vmatpush1.bf16.xpose.msra.mxu0 0
    %4598 = vmatprep.mubr.bf16.mxu0 0
    %4599 = vmatmul.mubr.bf16.gmra.mrb[0].mxu0 %v4561
    %v4600 = vpop.f32.mrb[0].mxu0
    %v4601 = vadd.f32 0.0, %v4600
    %v4602 = vpop.f32.mrb[0].mxu0
    %v4603 = vpop.f32.mrb[0].mxu0
    %v4604 = vpop.f32.mrb[0].mxu0
    %4605 = vdwg.mxu0
    %4607 = vrot.lane.b32.xlu0 %v4262, 120
    %v4608 = vpop.permute.xlu0 %4607
    %v4610 = vsel %vm182, %v4262, 0
    %v4613 = vsel %vm182, %v4608, 0
    %4615 = vmatprep.subr.bf16.mxu0 0
    %4616 = vmatpush1.bf16.xpose.msra.mxu0 %v4613
    %4617 = vmatprep.subr.bf16.mxu0 0
    %4618 = vmatpush1.bf16.xpose.msra.mxu0 0
    %4619 = vmatprep.subr.bf16.mxu0 0
    %4620 = vmatpush1.bf16.xpose.msra.mxu0 0
    %4621 = vmatprep.subr.bf16.mxu0 0
    %4622 = vmatpush1.bf16.xpose.msra.mxu0 0
    %4623 = vmatprep.subr.bf16.mxu0 0
    %4624 = vmatpush1.bf16.xpose.msra.mxu0 0
    %4625 = vmatprep.subr.bf16.mxu0 0
    %4626 = vmatpush1.bf16.xpose.msra.mxu0 0
    %4627 = vmatprep.subr.bf16.mxu0 0
    %4628 = vmatpush1.bf16.xpose.msra.mxu0 0
    %4629 = vmatprep.subr.bf16.mxu0 0
    %4630 = vmatpush1.bf16.xpose.msra.mxu0 0
    %4631 = vmatprep.subr.bf16.mxu0 0
    %4632 = vmatpush1.bf16.xpose.msra.mxu0 0
    %4633 = vmatprep.subr.bf16.mxu0 0
    %4634 = vmatpush1.bf16.xpose.msra.mxu0 0
    %4635 = vmatprep.subr.bf16.mxu0 0
    %4636 = vmatpush1.bf16.xpose.msra.mxu0 0
    %4637 = vmatprep.subr.bf16.mxu0 0
    %4638 = vmatpush1.bf16.xpose.msra.mxu0 0
    %4639 = vmatprep.subr.bf16.mxu0 0
    %4640 = vmatpush1.bf16.xpose.msra.mxu0 0
    %4641 = vmatprep.subr.bf16.mxu0 0
    %4642 = vmatpush1.bf16.xpose.msra.mxu0 0
    %4643 = vmatprep.subr.bf16.mxu0 0
    %4644 = vmatpush1.bf16.xpose.msra.mxu0 0
    %4645 = vmatprep.subr.bf16.mxu0 0
    %4646 = vmatpush1.bf16.xpose.msra.mxu0 0
    %4647 = vmatprep.mubr.bf16.mxu0 0
    %4648 = vmatmul.mubr.bf16.gmra.mrb[0].mxu0 %v4610
    %v4649 = vpop.f32.mrb[0].mxu0
    %v4650 = vadd.f32 0.0, %v4649
    %v4651 = vpop.f32.mrb[0].mxu0
    %v4652 = vpop.f32.mrb[0].mxu0
    %v4653 = vpop.f32.mrb[0].mxu0
    %4654 = vdwg.mxu0
    %v4655 = vsel %vm182, %v4307, -inf
    %4656 = vmax.xlane.f32.xlu0 %v4655
    %v4657 = vpop.xlane.xlu0 %4656
    %v4658 = vsel %vm182, %v4356, -inf
    %4659 = vmax.xlane.f32.xlu0 %v4658
    %v4660 = vpop.xlane.xlu0 %4659
    %v4661 = vsel %vm182, %v4405, -inf
    %4662 = vmax.xlane.f32.xlu0 %v4661
    %v4663 = vpop.xlane.xlu0 %4662
    %v4664 = vsel %vm182, %v4454, -inf
    %4665 = vmax.xlane.f32.xlu0 %v4664
    %v4666 = vpop.xlane.xlu0 %4665
    %v4667 = vsel %vm182, %v4503, -inf
    %4668 = vmax.xlane.f32.xlu0 %v4667
    %v4669 = vpop.xlane.xlu0 %4668
    %v4670 = vsel %vm182, %v4552, -inf
    %4671 = vmax.xlane.f32.xlu0 %v4670
    %v4672 = vpop.xlane.xlu0 %4671
    %v4673 = vsel %vm182, %v4601, -inf
    %4674 = vmax.xlane.f32.xlu0 %v4673
    %v4675 = vpop.xlane.xlu0 %4674
    %v4676 = vsel %vm182, %v4650, -inf
    %4677 = vmax.xlane.f32.xlu0 %v4676
    %v4678 = vpop.xlane.xlu0 %4677
    %v4679 = vsub.f32 %v4307, %v4657
    %v4680 = vsub.f32 %v4356, %v4660
    %v4681 = vsub.f32 %v4405, %v4663
    %v4682 = vsub.f32 %v4454, %v4666
    %v4683 = vsub.f32 %v4503, %v4669
    %v4684 = vsub.f32 %v4552, %v4672
    %v4685 = vsub.f32 %v4601, %v4675
    %v4686 = vsub.f32 %v4650, %v4678
    %v4687 = vmul.f32 %v4679, 1.442695
    %v4688 = vpow.pop %v4687
    %v4689 = vmul.f32 %v4680, 1.442695
    %v4690 = vpow.pop %v4689
    %v4691 = vmul.f32 %v4681, 1.442695
    %v4692 = vpow.pop %v4691
    %v4693 = vmul.f32 %v4682, 1.442695
    %v4694 = vpow.pop %v4693
    %v4695 = vmul.f32 %v4683, 1.442695
    %v4696 = vpow.pop %v4695
    %v4697 = vmul.f32 %v4684, 1.442695
    %v4698 = vpow.pop %v4697
    %v4699 = vmul.f32 %v4685, 1.442695
    %v4700 = vpow.pop %v4699
    %v4701 = vmul.f32 %v4686, 1.442695
    %v4702 = vpow.pop %v4701
    %v4703 = vsel %vm182, %v4688, 0.0
    %4704 = vadd.xlane.f32.xlu0 %v4703
    %v4705 = vpop.xlane.xlu0 %4704
    %v4706 = vsel %vm182, %v4690, 0.0
    %4707 = vadd.xlane.f32.xlu0 %v4706
    %v4708 = vpop.xlane.xlu0 %4707
    %v4709 = vsel %vm182, %v4692, 0.0
    %4710 = vadd.xlane.f32.xlu0 %v4709
    %v4711 = vpop.xlane.xlu0 %4710
    %v4712 = vsel %vm182, %v4694, 0.0
    %4713 = vadd.xlane.f32.xlu0 %v4712
    %v4714 = vpop.xlane.xlu0 %4713
    %v4715 = vsel %vm182, %v4696, 0.0
    %4716 = vadd.xlane.f32.xlu0 %v4715
    %v4717 = vpop.xlane.xlu0 %4716
    %v4718 = vsel %vm182, %v4698, 0.0
    %4719 = vadd.xlane.f32.xlu0 %v4718
    %v4720 = vpop.xlane.xlu0 %4719
    %v4721 = vsel %vm182, %v4700, 0.0
    %4722 = vadd.xlane.f32.xlu0 %v4721
    %v4723 = vpop.xlane.xlu0 %4722
    %v4724 = vsel %vm182, %v4702, 0.0
    %4725 = vadd.xlane.f32.xlu0 %v4724
    %v4726 = vpop.xlane.xlu0 %4725
    %v4727 = vrcp.pop %v4705
    %v4728 = vmul.f32 %v4688, %v4727
    %v4729 = vrcp.pop %v4708
    %v4730 = vmul.f32 %v4690, %v4729
    %v4731 = vrcp.pop %v4711
    %v4732 = vmul.f32 %v4692, %v4731
    %v4733 = vrcp.pop %v4714
    %v4734 = vmul.f32 %v4694, %v4733
    %v4735 = vrcp.pop %v4717
    %v4736 = vmul.f32 %v4696, %v4735
    %v4737 = vrcp.pop %v4720
    %v4738 = vmul.f32 %v4698, %v4737
    %v4739 = vrcp.pop %v4723
    %v4740 = vmul.f32 %v4700, %v4739
    %v4741 = vrcp.pop %v4726
    %v4742 = vmul.f32 %v4702, %v4741
    %v4743 = vpack.c.bf16 %v4728, %v4728
    %v4744 = vpack.c.bf16 %v4730, %v4730
    %v4745 = vpack.c.bf16 %v4732, %v4732
    %v4746 = vpack.c.bf16 %v4734, %v4734
    %v4747 = vpack.c.bf16 %v4736, %v4736
    %v4748 = vpack.c.bf16 %v4738, %v4738
    %v4749 = vpack.c.bf16 %v4740, %v4740
    %v4750 = vpack.c.bf16 %v4742, %v4742
    %4751 = vrot.lane.b32.xlu0 %v4255, 112
    %v4752 = vpop.permute.xlu0 %4751
    %v4754 = vsel %vm182, %v4743, 0
    %v4757 = vsel %vm673, %v4752, 0
    %4759 = vmatprep.subr.bf16.mxu0 0
    %4760 = vmatpush1.bf16.msra.mxu0 %v4757
    %4761 = vmatprep.subr.bf16.mxu0 0
    %4762 = vmatpush1.bf16.msra.mxu0 0
    %4763 = vmatprep.subr.bf16.mxu0 0
    %4764 = vmatpush1.bf16.msra.mxu0 0
    %4765 = vmatprep.subr.bf16.mxu0 0
    %4766 = vmatpush1.bf16.msra.mxu0 0
    %4767 = vmatprep.subr.bf16.mxu0 0
    %4768 = vmatpush1.bf16.msra.mxu0 0
    %4769 = vmatprep.subr.bf16.mxu0 0
    %4770 = vmatpush1.bf16.msra.mxu0 0
    %4771 = vmatprep.subr.bf16.mxu0 0
    %4772 = vmatpush1.bf16.msra.mxu0 0
    %4773 = vmatprep.subr.bf16.mxu0 0
    %4774 = vmatpush1.bf16.msra.mxu0 0
    %4775 = vmatprep.subr.bf16.mxu0 0
    %4776 = vmatpush1.bf16.msra.mxu0 0
    %4777 = vmatprep.subr.bf16.mxu0 0
    %4778 = vmatpush1.bf16.msra.mxu0 0
    %4779 = vmatprep.subr.bf16.mxu0 0
    %4780 = vmatpush1.bf16.msra.mxu0 0
    %4781 = vmatprep.subr.bf16.mxu0 0
    %4782 = vmatpush1.bf16.msra.mxu0 0
    %4783 = vmatprep.subr.bf16.mxu0 0
    %4784 = vmatpush1.bf16.msra.mxu0 0
    %4785 = vmatprep.subr.bf16.mxu0 0
    %4786 = vmatpush1.bf16.msra.mxu0 0
    %4787 = vmatprep.subr.bf16.mxu0 0
    %4788 = vmatpush1.bf16.msra.mxu0 0
    %4789 = vmatprep.subr.bf16.mxu0 0
    %4790 = vmatpush1.bf16.msra.mxu0 0
    %4791 = vmatprep.mubr.bf16.mxu0 0
    %4792 = vmatmul.mubr.bf16.gmra.mrb[0].mxu0 %v4754
    %v4793 = vpop.f32.mrb[0].mxu0
    %v4794 = vadd.f32 0.0, %v4793
    %v4795 = vpop.f32.mrb[0].mxu0
    %v4796 = vpop.f32.mrb[0].mxu0
    %v4797 = vpop.f32.mrb[0].mxu0
    %4798 = vdwg.mxu0
    %4799 = vrot.lane.b32.xlu0 %v4256, 112
    %v4800 = vpop.permute.xlu0 %4799
    %v4802 = vsel %vm182, %v4744, 0
    %v4805 = vsel %vm673, %v4800, 0
    %4807 = vmatprep.subr.bf16.mxu0 0
    %4808 = vmatpush1.bf16.msra.mxu0 %v4805
    %4809 = vmatprep.subr.bf16.mxu0 0
    %4810 = vmatpush1.bf16.msra.mxu0 0
    %4811 = vmatprep.subr.bf16.mxu0 0
    %4812 = vmatpush1.bf16.msra.mxu0 0
    %4813 = vmatprep.subr.bf16.mxu0 0
    %4814 = vmatpush1.bf16.msra.mxu0 0
    %4815 = vmatprep.subr.bf16.mxu0 0
    %4816 = vmatpush1.bf16.msra.mxu0 0
    %4817 = vmatprep.subr.bf16.mxu0 0
    %4818 = vmatpush1.bf16.msra.mxu0 0
    %4819 = vmatprep.subr.bf16.mxu0 0
    %4820 = vmatpush1.bf16.msra.mxu0 0
    %4821 = vmatprep.subr.bf16.mxu0 0
    %4822 = vmatpush1.bf16.msra.mxu0 0
    %4823 = vmatprep.subr.bf16.mxu0 0
    %4824 = vmatpush1.bf16.msra.mxu0 0
    %4825 = vmatprep.subr.bf16.mxu0 0
    %4826 = vmatpush1.bf16.msra.mxu0 0
    %4827 = vmatprep.subr.bf16.mxu0 0
    %4828 = vmatpush1.bf16.msra.mxu0 0
    %4829 = vmatprep.subr.bf16.mxu0 0
    %4830 = vmatpush1.bf16.msra.mxu0 0
    %4831 = vmatprep.subr.bf16.mxu0 0
    %4832 = vmatpush1.bf16.msra.mxu0 0
    %4833 = vmatprep.subr.bf16.mxu0 0
    %4834 = vmatpush1.bf16.msra.mxu0 0
    %4835 = vmatprep.subr.bf16.mxu0 0
    %4836 = vmatpush1.bf16.msra.mxu0 0
    %4837 = vmatprep.subr.bf16.mxu0 0
    %4838 = vmatpush1.bf16.msra.mxu0 0
    %4839 = vmatprep.mubr.bf16.mxu0 0
    %4840 = vmatmul.mubr.bf16.gmra.mrb[0].mxu0 %v4802
    %v4841 = vpop.f32.mrb[0].mxu0
    %v4842 = vadd.f32 0.0, %v4841
    %v4843 = vpop.f32.mrb[0].mxu0
    %v4844 = vpop.f32.mrb[0].mxu0
    %v4845 = vpop.f32.mrb[0].mxu0
    %4846 = vdwg.mxu0
    %4847 = vrot.lane.b32.xlu0 %v4257, 112
    %v4848 = vpop.permute.xlu0 %4847
    %v4850 = vsel %vm182, %v4745, 0
    %v4853 = vsel %vm673, %v4848, 0
    %4855 = vmatprep.subr.bf16.mxu0 0
    %4856 = vmatpush1.bf16.msra.mxu0 %v4853
    %4857 = vmatprep.subr.bf16.mxu0 0
    %4858 = vmatpush1.bf16.msra.mxu0 0
    %4859 = vmatprep.subr.bf16.mxu0 0
    %4860 = vmatpush1.bf16.msra.mxu0 0
    %4861 = vmatprep.subr.bf16.mxu0 0
    %4862 = vmatpush1.bf16.msra.mxu0 0
    %4863 = vmatprep.subr.bf16.mxu0 0
    %4864 = vmatpush1.bf16.msra.mxu0 0
    %4865 = vmatprep.subr.bf16.mxu0 0
    %4866 = vmatpush1.bf16.msra.mxu0 0
    %4867 = vmatprep.subr.bf16.mxu0 0
    %4868 = vmatpush1.bf16.msra.mxu0 0
    %4869 = vmatprep.subr.bf16.mxu0 0
    %4870 = vmatpush1.bf16.msra.mxu0 0
    %4871 = vmatprep.subr.bf16.mxu0 0
    %4872 = vmatpush1.bf16.msra.mxu0 0
    %4873 = vmatprep.subr.bf16.mxu0 0
    %4874 = vmatpush1.bf16.msra.mxu0 0
    %4875 = vmatprep.subr.bf16.mxu0 0
    %4876 = vmatpush1.bf16.msra.mxu0 0
    %4877 = vmatprep.subr.bf16.mxu0 0
    %4878 = vmatpush1.bf16.msra.mxu0 0
    %4879 = vmatprep.subr.bf16.mxu0 0
    %4880 = vmatpush1.bf16.msra.mxu0 0
    %4881 = vmatprep.subr.bf16.mxu0 0
    %4882 = vmatpush1.bf16.msra.mxu0 0
    %4883 = vmatprep.subr.bf16.mxu0 0
    %4884 = vmatpush1.bf16.msra.mxu0 0
    %4885 = vmatprep.subr.bf16.mxu0 0
    %4886 = vmatpush1.bf16.msra.mxu0 0
    %4887 = vmatprep.mubr.bf16.mxu0 0
    %4888 = vmatmul.mubr.bf16.gmra.mrb[0].mxu0 %v4850
    %v4889 = vpop.f32.mrb[0].mxu0
    %v4890 = vadd.f32 0.0, %v4889
    %v4891 = vpop.f32.mrb[0].mxu0
    %v4892 = vpop.f32.mrb[0].mxu0
    %v4893 = vpop.f32.mrb[0].mxu0
    %4894 = vdwg.mxu0
    %4895 = vrot.lane.b32.xlu0 %v4258, 112
    %v4896 = vpop.permute.xlu0 %4895
    %v4898 = vsel %vm182, %v4746, 0
    %v4901 = vsel %vm673, %v4896, 0
    %4903 = vmatprep.subr.bf16.mxu0 0
    %4904 = vmatpush1.bf16.msra.mxu0 %v4901
    %4905 = vmatprep.subr.bf16.mxu0 0
    %4906 = vmatpush1.bf16.msra.mxu0 0
    %4907 = vmatprep.subr.bf16.mxu0 0
    %4908 = vmatpush1.bf16.msra.mxu0 0
    %4909 = vmatprep.subr.bf16.mxu0 0
    %4910 = vmatpush1.bf16.msra.mxu0 0
    %4911 = vmatprep.subr.bf16.mxu0 0
    %4912 = vmatpush1.bf16.msra.mxu0 0
    %4913 = vmatprep.subr.bf16.mxu0 0
    %4914 = vmatpush1.bf16.msra.mxu0 0
    %4915 = vmatprep.subr.bf16.mxu0 0
    %4916 = vmatpush1.bf16.msra.mxu0 0
    %4917 = vmatprep.subr.bf16.mxu0 0
    %4918 = vmatpush1.bf16.msra.mxu0 0
    %4919 = vmatprep.subr.bf16.mxu0 0
    %4920 = vmatpush1.bf16.msra.mxu0 0
    %4921 = vmatprep.subr.bf16.mxu0 0
    %4922 = vmatpush1.bf16.msra.mxu0 0
    %4923 = vmatprep.subr.bf16.mxu0 0
    %4924 = vmatpush1.bf16.msra.mxu0 0
    %4925 = vmatprep.subr.bf16.mxu0 0
    %4926 = vmatpush1.bf16.msra.mxu0 0
    %4927 = vmatprep.subr.bf16.mxu0 0
    %4928 = vmatpush1.bf16.msra.mxu0 0
    %4929 = vmatprep.subr.bf16.mxu0 0
    %4930 = vmatpush1.bf16.msra.mxu0 0
    %4931 = vmatprep.subr.bf16.mxu0 0
    %4932 = vmatpush1.bf16.msra.mxu0 0
    %4933 = vmatprep.subr.bf16.mxu0 0
    %4934 = vmatpush1.bf16.msra.mxu0 0
    %4935 = vmatprep.mubr.bf16.mxu0 0
    %4936 = vmatmul.mubr.bf16.gmra.mrb[0].mxu0 %v4898
    %v4937 = vpop.f32.mrb[0].mxu0
    %v4938 = vadd.f32 0.0, %v4937
    %v4939 = vpop.f32.mrb[0].mxu0
    %v4940 = vpop.f32.mrb[0].mxu0
    %v4941 = vpop.f32.mrb[0].mxu0
    %4942 = vdwg.mxu0
    %4943 = vrot.lane.b32.xlu0 %v4259, 112
    %v4944 = vpop.permute.xlu0 %4943
    %v4946 = vsel %vm182, %v4747, 0
    %v4949 = vsel %vm673, %v4944, 0
    %4951 = vmatprep.subr.bf16.mxu0 0
    %4952 = vmatpush1.bf16.msra.mxu0 %v4949
    %4953 = vmatprep.subr.bf16.mxu0 0
    %4954 = vmatpush1.bf16.msra.mxu0 0
    %4955 = vmatprep.subr.bf16.mxu0 0
    %4956 = vmatpush1.bf16.msra.mxu0 0
    %4957 = vmatprep.subr.bf16.mxu0 0
    %4958 = vmatpush1.bf16.msra.mxu0 0
    %4959 = vmatprep.subr.bf16.mxu0 0
    %4960 = vmatpush1.bf16.msra.mxu0 0
    %4961 = vmatprep.subr.bf16.mxu0 0
    %4962 = vmatpush1.bf16.msra.mxu0 0
    %4963 = vmatprep.subr.bf16.mxu0 0
    %4964 = vmatpush1.bf16.msra.mxu0 0
    %4965 = vmatprep.subr.bf16.mxu0 0
    %4966 = vmatpush1.bf16.msra.mxu0 0
    %4967 = vmatprep.subr.bf16.mxu0 0
    %4968 = vmatpush1.bf16.msra.mxu0 0
    %4969 = vmatprep.subr.bf16.mxu0 0
    %4970 = vmatpush1.bf16.msra.mxu0 0
    %4971 = vmatprep.subr.bf16.mxu0 0
    %4972 = vmatpush1.bf16.msra.mxu0 0
    %4973 = vmatprep.subr.bf16.mxu0 0
    %4974 = vmatpush1.bf16.msra.mxu0 0
    %4975 = vmatprep.subr.bf16.mxu0 0
    %4976 = vmatpush1.bf16.msra.mxu0 0
    %4977 = vmatprep.subr.bf16.mxu0 0
    %4978 = vmatpush1.bf16.msra.mxu0 0
    %4979 = vmatprep.subr.bf16.mxu0 0
    %4980 = vmatpush1.bf16.msra.mxu0 0
    %4981 = vmatprep.subr.bf16.mxu0 0
    %4982 = vmatpush1.bf16.msra.mxu0 0
    %4983 = vmatprep.mubr.bf16.mxu0 0
    %4984 = vmatmul.mubr.bf16.gmra.mrb[0].mxu0 %v4946
    %v4985 = vpop.f32.mrb[0].mxu0
    %v4986 = vadd.f32 0.0, %v4985
    %v4987 = vpop.f32.mrb[0].mxu0
    %v4988 = vpop.f32.mrb[0].mxu0
    %v4989 = vpop.f32.mrb[0].mxu0
    %4990 = vdwg.mxu0
    %4991 = vrot.lane.b32.xlu0 %v4260, 112
    %v4992 = vpop.permute.xlu0 %4991
    %v4994 = vsel %vm182, %v4748, 0
    %v4997 = vsel %vm673, %v4992, 0
    %4999 = vmatprep.subr.bf16.mxu0 0
    %5000 = vmatpush1.bf16.msra.mxu0 %v4997
    %5001 = vmatprep.subr.bf16.mxu0 0
    %5002 = vmatpush1.bf16.msra.mxu0 0
    %5003 = vmatprep.subr.bf16.mxu0 0
    %5004 = vmatpush1.bf16.msra.mxu0 0
    %5005 = vmatprep.subr.bf16.mxu0 0
    %5006 = vmatpush1.bf16.msra.mxu0 0
    %5007 = vmatprep.subr.bf16.mxu0 0
    %5008 = vmatpush1.bf16.msra.mxu0 0
    %5009 = vmatprep.subr.bf16.mxu0 0
    %5010 = vmatpush1.bf16.msra.mxu0 0
    %5011 = vmatprep.subr.bf16.mxu0 0
    %5012 = vmatpush1.bf16.msra.mxu0 0
    %5013 = vmatprep.subr.bf16.mxu0 0
    %5014 = vmatpush1.bf16.msra.mxu0 0
    %5015 = vmatprep.subr.bf16.mxu0 0
    %5016 = vmatpush1.bf16.msra.mxu0 0
    %5017 = vmatprep.subr.bf16.mxu0 0
    %5018 = vmatpush1.bf16.msra.mxu0 0
    %5019 = vmatprep.subr.bf16.mxu0 0
    %5020 = vmatpush1.bf16.msra.mxu0 0
    %5021 = vmatprep.subr.bf16.mxu0 0
    %5022 = vmatpush1.bf16.msra.mxu0 0
    %5023 = vmatprep.subr.bf16.mxu0 0
    %5024 = vmatpush1.bf16.msra.mxu0 0
    %5025 = vmatprep.subr.bf16.mxu0 0
    %5026 = vmatpush1.bf16.msra.mxu0 0
    %5027 = vmatprep.subr.bf16.mxu0 0
    %5028 = vmatpush1.bf16.msra.mxu0 0
    %5029 = vmatprep.subr.bf16.mxu0 0
    %5030 = vmatpush1.bf16.msra.mxu0 0
    %5031 = vmatprep.mubr.bf16.mxu0 0
    %5032 = vmatmul.mubr.bf16.gmra.mrb[0].mxu0 %v4994
    %v5033 = vpop.f32.mrb[0].mxu0
    %v5034 = vadd.f32 0.0, %v5033
    %v5035 = vpop.f32.mrb[0].mxu0
    %v5036 = vpop.f32.mrb[0].mxu0
    %v5037 = vpop.f32.mrb[0].mxu0
    %5038 = vdwg.mxu0
    %5039 = vrot.lane.b32.xlu0 %v4261, 112
    %v5040 = vpop.permute.xlu0 %5039
    %v5042 = vsel %vm182, %v4749, 0
    %v5045 = vsel %vm673, %v5040, 0
    %5047 = vmatprep.subr.bf16.mxu0 0
    %5048 = vmatpush1.bf16.msra.mxu0 %v5045
    %5049 = vmatprep.subr.bf16.mxu0 0
    %5050 = vmatpush1.bf16.msra.mxu0 0
    %5051 = vmatprep.subr.bf16.mxu0 0
    %5052 = vmatpush1.bf16.msra.mxu0 0
    %5053 = vmatprep.subr.bf16.mxu0 0
    %5054 = vmatpush1.bf16.msra.mxu0 0
    %5055 = vmatprep.subr.bf16.mxu0 0
    %5056 = vmatpush1.bf16.msra.mxu0 0
    %5057 = vmatprep.subr.bf16.mxu0 0
    %5058 = vmatpush1.bf16.msra.mxu0 0
    %5059 = vmatprep.subr.bf16.mxu0 0
    %5060 = vmatpush1.bf16.msra.mxu0 0
    %5061 = vmatprep.subr.bf16.mxu0 0
    %5062 = vmatpush1.bf16.msra.mxu0 0
    %5063 = vmatprep.subr.bf16.mxu0 0
    %5064 = vmatpush1.bf16.msra.mxu0 0
    %5065 = vmatprep.subr.bf16.mxu0 0
    %5066 = vmatpush1.bf16.msra.mxu0 0
    %5067 = vmatprep.subr.bf16.mxu0 0
    %5068 = vmatpush1.bf16.msra.mxu0 0
    %5069 = vmatprep.subr.bf16.mxu0 0
    %5070 = vmatpush1.bf16.msra.mxu0 0
    %5071 = vmatprep.subr.bf16.mxu0 0
    %5072 = vmatpush1.bf16.msra.mxu0 0
    %5073 = vmatprep.subr.bf16.mxu0 0
    %5074 = vmatpush1.bf16.msra.mxu0 0
    %5075 = vmatprep.subr.bf16.mxu0 0
    %5076 = vmatpush1.bf16.msra.mxu0 0
    %5077 = vmatprep.subr.bf16.mxu0 0
    %5078 = vmatpush1.bf16.msra.mxu0 0
    %5079 = vmatprep.mubr.bf16.mxu0 0
    %5080 = vmatmul.mubr.bf16.gmra.mrb[0].mxu0 %v5042
    %v5081 = vpop.f32.mrb[0].mxu0
    %v5082 = vadd.f32 0.0, %v5081
    %v5083 = vpop.f32.mrb[0].mxu0
    %v5084 = vpop.f32.mrb[0].mxu0
    %v5085 = vpop.f32.mrb[0].mxu0
    %5086 = vdwg.mxu0
    %5087 = vrot.lane.b32.xlu0 %v4262, 112
    %v5088 = vpop.permute.xlu0 %5087
    %v5090 = vsel %vm182, %v4750, 0
    %v5093 = vsel %vm673, %v5088, 0
    %5095 = vmatprep.subr.bf16.mxu0 0
    %5096 = vmatpush1.bf16.msra.mxu0 %v5093
    %5097 = vmatprep.subr.bf16.mxu0 0
    %5098 = vmatpush1.bf16.msra.mxu0 0
    %5099 = vmatprep.subr.bf16.mxu0 0
    %5100 = vmatpush1.bf16.msra.mxu0 0
    %5101 = vmatprep.subr.bf16.mxu0 0
    %5102 = vmatpush1.bf16.msra.mxu0 0
    %5103 = vmatprep.subr.bf16.mxu0 0
    %5104 = vmatpush1.bf16.msra.mxu0 0
    %5105 = vmatprep.subr.bf16.mxu0 0
    %5106 = vmatpush1.bf16.msra.mxu0 0
    %5107 = vmatprep.subr.bf16.mxu0 0
    %5108 = vmatpush1.bf16.msra.mxu0 0
    %5109 = vmatprep.subr.bf16.mxu0 0
    %5110 = vmatpush1.bf16.msra.mxu0 0
    %5111 = vmatprep.subr.bf16.mxu0 0
    %5112 = vmatpush1.bf16.msra.mxu0 0
    %5113 = vmatprep.subr.bf16.mxu0 0
    %5114 = vmatpush1.bf16.msra.mxu0 0
    %5115 = vmatprep.subr.bf16.mxu0 0
    %5116 = vmatpush1.bf16.msra.mxu0 0
    %5117 = vmatprep.subr.bf16.mxu0 0
    %5118 = vmatpush1.bf16.msra.mxu0 0
    %5119 = vmatprep.subr.bf16.mxu0 0
    %5120 = vmatpush1.bf16.msra.mxu0 0
    %5121 = vmatprep.subr.bf16.mxu0 0
    %5122 = vmatpush1.bf16.msra.mxu0 0
    %5123 = vmatprep.subr.bf16.mxu0 0
    %5124 = vmatpush1.bf16.msra.mxu0 0
    %5125 = vmatprep.subr.bf16.mxu0 0
    %5126 = vmatpush1.bf16.msra.mxu0 0
    %5127 = vmatprep.mubr.bf16.mxu0 0
    %5128 = vmatmul.mubr.bf16.gmra.mrb[0].mxu0 %v5090
    %v5129 = vpop.f32.mrb[0].mxu0
    %v5130 = vadd.f32 0.0, %v5129
    %v5131 = vpop.f32.mrb[0].mxu0
    %v5132 = vpop.f32.mrb[0].mxu0
    %v5133 = vpop.f32.mrb[0].mxu0
    %5134 = vdwg.mxu0
    %5137 = vrot.lane.b32.xlu0 %v4890, 8
    %v5138 = vpop.permute.xlu0 %5137
    %5139 = vrot.lane.b32.xlu0 %v4938, 8
    %v5140 = vpop.permute.xlu0 %5139
    %5145 = vrot.lane.b32.xlu0 %v4986, 16
    %v5146 = vpop.permute.xlu0 %5145
    %5147 = vrot.lane.b32.xlu0 %v5034, 16
    %v5148 = vpop.permute.xlu0 %5147
    %5153 = vrot.lane.b32.xlu0 %v5082, 24
    %v5154 = vpop.permute.xlu0 %5153
    %5155 = vrot.lane.b32.xlu0 %v5130, 24
    %v5156 = vpop.permute.xlu0 %5155
    %v5159 = vsel %vm182, %v4794, %v5138
    %v5160 = vsel %vm182, %v4842, %v5140
    %v5161 = vsel %vm1079, %v5159, %v5146
    %v5162 = vsel %vm1079, %v5160, %v5148
    %v5163 = vsel %vm1082, %v5161, %v5154
    %v5164 = vsel %vm1082, %v5162, %v5156
    %v5165 = vld [vmem:[%s2784 + $0x1a8] sm:$0xff]
    %v5166 = vld [vmem:[%s2784 + $0x1b0] sm:$0xff]
    %v5167 = vld [vmem:[%s2784 + $0x1b8] sm:$0xff]
    %v5168 = vld [vmem:[%s2784 + $0x1c0] sm:$0xff]
    %v5169 = vld [vmem:[%s2784 + $0x1c8] sm:$0x1]
    %v5170 = vpack.c.bf16 %v5164, %v5163
    %v5171 = vpack.c.bf16 %v5166, %v5165
    %v5172 = vpack.c.bf16 %v5168, %v5167
    %v5173 = vlaneseq
    %v5174 = vshrl.u32 %v5173, 7
    %v5175 = vsub.s32 0, %v5174
    %v5176 = vrot.slane %v5169, %v5175
    %v5178 = vsel %vm25, %v5170, 0
    %v5181 = vsel %vm25, %v5171, 0
    %v5184 = vsel %vm25, %v5172, 0
    %5186 = vmatprep.subr.bf16.mxu0 0
    %5187 = vmatpush1.bf16.xpose.msra.mxu0 %v5181
    %5188 = vmatprep.subr.bf16.mxu0 0
    %5189 = vmatpush1.bf16.xpose.msra.mxu0 %v5184
    %5190 = vmatprep.subr.bf16.mxu0 0
    %5191 = vmatpush1.bf16.xpose.msra.mxu0 0
    %5192 = vmatprep.subr.bf16.mxu0 0
    %5193 = vmatpush1.bf16.xpose.msra.mxu0 0
    %5194 = vmatprep.subr.bf16.mxu0 0
    %5195 = vmatpush1.bf16.xpose.msra.mxu0 0
    %5196 = vmatprep.subr.bf16.mxu0 0
    %5197 = vmatpush1.bf16.xpose.msra.mxu0 0
    %5198 = vmatprep.subr.bf16.mxu0 0
    %5199 = vmatpush1.bf16.xpose.msra.mxu0 0
    %5200 = vmatprep.subr.bf16.mxu0 0
    %5201 = vmatpush1.bf16.xpose.msra.mxu0 0
    %5202 = vmatprep.subr.bf16.mxu0 0
    %5203 = vmatpush1.bf16.xpose.msra.mxu0 0
    %5204 = vmatprep.subr.bf16.mxu0 0
    %5205 = vmatpush1.bf16.xpose.msra.mxu0 0
    %5206 = vmatprep.subr.bf16.mxu0 0
    %5207 = vmatpush1.bf16.xpose.msra.mxu0 0
    %5208 = vmatprep.subr.bf16.mxu0 0
    %5209 = vmatpush1.bf16.xpose.msra.mxu0 0
    %5210 = vmatprep.subr.bf16.mxu0 0
    %5211 = vmatpush1.bf16.xpose.msra.mxu0 0
    %5212 = vmatprep.subr.bf16.mxu0 0
    %5213 = vmatpush1.bf16.xpose.msra.mxu0 0
    %5214 = vmatprep.subr.bf16.mxu0 0
    %5215 = vmatpush1.bf16.xpose.msra.mxu0 0
    %5216 = vmatprep.subr.bf16.mxu0 0
    %5217 = vmatpush1.bf16.xpose.msra.mxu0 0
    %5218 = vmatprep.mubr.bf16.mxu0 0
    %5219 = vmatmul.mubr.bf16.gmra.mrb[0].mxu0 %v5178
    %v5220 = vpop.f32.mrb[0].mxu0
    %v5221 = vadd.f32 %v5176, %v5220
    %v5222 = vpop.f32.mrb[0].mxu0
    %v5223 = vpop.f32.mrb[0].mxu0
    %v5224 = vadd.f32 %v5176, %v5223
    %v5225 = vpop.f32.mrb[0].mxu0
    %5226 = vdwg.mxu0
    %v5227 = vadd.f32 %v4107, %v5221
    %v5228 = vadd.f32 %v4108, %v5224
    %v5229 = vld [vmem:[%s2784 + $0x1d0] sm:$0x1]
    %v5230 = vld [vmem:[%s2784 + $0x1d8] sm:$0x1]
    %v5231 = vsel %vm25, %v5227, 0.0
    %5232 = vadd.xlane.f32.xlu0 %v5231
    %v5233 = vpop.xlane.xlu0 %5232
    %v5234 = vsel %vm25, %v5228, 0.0
    %5235 = vadd.xlane.f32.xlu0 %v5234
    %v5236 = vpop.xlane.xlu0 %5235
    %v5237 = vmul.f32 %v5233, %v32
    %v5238 = vmul.f32 %v5236, %v32
    %v5239 = vsub.f32 %v5227, %v5237
    %v5240 = vsub.f32 %v5228, %v5238
    %v5241 = vmul.f32 %v5239, %v5239
    %v5242 = vmul.f32 %v5240, %v5240
    %v5243 = vsel %vm25, %v5241, 0.0
    %5244 = vadd.xlane.f32.xlu0 %v5243
    %v5245 = vpop.xlane.xlu0 %5244
    %v5246 = vsel %vm25, %v5242, 0.0
    %5247 = vadd.xlane.f32.xlu0 %v5246
    %v5248 = vpop.xlane.xlu0 %5247
    %v5249 = vmul.f32 %v5245, %v32
    %v5250 = vmul.f32 %v5248, %v32
    %v5251 = vadd.f32 %v5249, 1e-05
    %v5252 = vadd.f32 %v5250, 1e-05
    %v5253 = vrsqrt.pop %v5251
    %v5254 = vrsqrt.pop %v5252
    %v5255 = vmul.f32 %v5239, %v5253
    %v5256 = vmul.f32 %v5240, %v5254
    %v5257 = vlaneseq
    %v5258 = vshrl.u32 %v5257, 7
    %v5259 = vsub.s32 0, %v5258
    %v5260 = vrot.slane %v5229, %v5259
    %v5261 = vmul.f32 %v5255, %v5260
    %v5262 = vmul.f32 %v5256, %v5260
    %v5263 = vlaneseq
    %v5264 = vshrl.u32 %v5263, 7
    %v5265 = vsub.s32 0, %v5264
    %v5266 = vrot.slane %v5230, %v5265
    %v5267 = vadd.f32 %v5261, %v5266
    %v5268 = vadd.f32 %v5262, %v5266
    %v5269 = vld [vmem:[%s2784 + $0x1e0] sm:$0xff]
    %v5270 = vld [vmem:[%s2784 + $0x1e8] sm:$0xff]
    %v5271 = vld [vmem:[%s2784 + $0x1f0] sm:$0xff]
    %v5272 = vld [vmem:[%s2784 + $0x1f8] sm:$0xff]
    %v5273 = vld [vmem:[%s2784 + $0x200] sm:$0xff]
    %v5274 = vld [vmem:[%s2784 + $0x208] sm:$0xff]
    %v5275 = vld [vmem:[%s2784 + $0x210] sm:$0xff]
    %v5276 = vld [vmem:[%s2784 + $0x218] sm:$0xff]
    %v5277 = vld [vmem:[%s2784 + $0x220] sm:$0xff]
    %v5278 = vld [vmem:[%s2784 + $0x228] sm:$0xff]
    %v5279 = vld [vmem:[%s2784 + $0x230] sm:$0xff]
    %v5280 = vld [vmem:[%s2784 + $0x238] sm:$0xff]
    %v5281 = vld [vmem:[%s2784 + $0x240] sm:$0xff]
    %v5282 = vld [vmem:[%s2784 + $0x248] sm:$0xff]
    %v5283 = vld [vmem:[%s2784 + $0x250] sm:$0xff]
    %v5284 = vld [vmem:[%s2784 + $0x258] sm:$0xff]
    %v5285 = vld [vmem:[%s2845 + $0x38] sm:$0x1]
    %v5286 = vpack.c.bf16 %v5268, %v5267
    %v5287 = vpack.c.bf16 %v5270, %v5269
    %v5288 = vpack.c.bf16 %v5272, %v5271
    %v5289 = vpack.c.bf16 %v5274, %v5273
    %v5290 = vpack.c.bf16 %v5276, %v5275
    %v5291 = vpack.c.bf16 %v5278, %v5277
    %v5292 = vpack.c.bf16 %v5280, %v5279
    %v5293 = vpack.c.bf16 %v5282, %v5281
    %v5294 = vpack.c.bf16 %v5284, %v5283
    %v5295 = vlaneseq
    %v5296 = vshrl.u32 %v5295, 7
    %v5297 = vsub.s32 0, %v5296
    %v5298 = vrot.slane %v5285, %v5297
    %v5300 = vsel %vm25, %v5286, 0
    %v5303 = vsel %vm25, %v5287, 0
    %v5306 = vsel %vm25, %v5288, 0
    %v5309 = vsel %vm25, %v5289, 0
    %v5312 = vsel %vm25, %v5290, 0
    %v5315 = vsel %vm25, %v5291, 0
    %v5318 = vsel %vm25, %v5292, 0
    %v5321 = vsel %vm25, %v5293, 0
    %v5324 = vsel %vm25, %v5294, 0
    %5326 = vmatprep.subr.bf16.mxu0 0
    %5327 = vmatpush1.bf16.xpose.msra.mxu0 %v5303
    %5328 = vmatprep.subr.bf16.mxu0 0
    %5329 = vmatpush1.bf16.xpose.msra.mxu0 %v5306
    %5330 = vmatprep.subr.bf16.mxu0 0
    %5331 = vmatpush1.bf16.xpose.msra.mxu0 %v5309
    %5332 = vmatprep.subr.bf16.mxu0 0
    %5333 = vmatpush1.bf16.xpose.msra.mxu0 %v5312
    %5334 = vmatprep.subr.bf16.mxu0 0
    %5335 = vmatpush1.bf16.xpose.msra.mxu0 %v5315
    %5336 = vmatprep.subr.bf16.mxu0 0
    %5337 = vmatpush1.bf16.xpose.msra.mxu0 %v5318
    %5338 = vmatprep.subr.bf16.mxu0 0
    %5339 = vmatpush1.bf16.xpose.msra.mxu0 %v5321
    %5340 = vmatprep.subr.bf16.mxu0 0
    %5341 = vmatpush1.bf16.xpose.msra.mxu0 %v5324
    %5342 = vmatprep.subr.bf16.mxu0 0
    %5343 = vmatpush1.bf16.xpose.msra.mxu0 0
    %5344 = vmatprep.subr.bf16.mxu0 0
    %5345 = vmatpush1.bf16.xpose.msra.mxu0 0
    %5346 = vmatprep.subr.bf16.mxu0 0
    %5347 = vmatpush1.bf16.xpose.msra.mxu0 0
    %5348 = vmatprep.subr.bf16.mxu0 0
    %5349 = vmatpush1.bf16.xpose.msra.mxu0 0
    %5350 = vmatprep.subr.bf16.mxu0 0
    %5351 = vmatpush1.bf16.xpose.msra.mxu0 0
    %5352 = vmatprep.subr.bf16.mxu0 0
    %5353 = vmatpush1.bf16.xpose.msra.mxu0 0
    %5354 = vmatprep.subr.bf16.mxu0 0
    %5355 = vmatpush1.bf16.xpose.msra.mxu0 0
    %5356 = vmatprep.subr.bf16.mxu0 0
    %5357 = vmatpush1.bf16.xpose.msra.mxu0 0
    %5358 = vmatprep.mubr.bf16.mxu0 0
    %5359 = vmatmul.mubr.bf16.gmra.mrb[0].mxu0 %v5300
    %v5360 = vpop.f32.mrb[0].mxu0
    %v5361 = vadd.f32 %v5298, %v5360
    %v5362 = vpop.f32.mrb[0].mxu0
    %v5363 = vpop.f32.mrb[0].mxu0
    %v5364 = vadd.f32 %v5298, %v5363
    %v5365 = vpop.f32.mrb[0].mxu0
    %5366 = vdwg.mxu0
    %v5367 = vmax.f32 %v5361, 0.0
    %v5368 = vmax.f32 %v5364, 0.0
    %v5369 = vld [vmem:[%s2845 + $0x40] sm:$0xff]
    %v5370 = vld [vmem:[%s2845 + $0x48] sm:$0xff]
    %v5371 = vld [vmem:[%s2845 + $0x50] sm:$0xff]
    %v5372 = vld [vmem:[%s2845 + $0x58] sm:$0xff]
    %v5373 = vld [vmem:[%s2784 + $0x260] sm:$0x1]
    %v5374 = vpack.c.bf16 %v5368, %v5367
    %v5375 = vpack.c.bf16 %v5370, %v5369
    %v5376 = vpack.c.bf16 %v5372, %v5371
    %v5377 = vlaneseq
    %v5378 = vshrl.u32 %v5377, 7
    %v5379 = vsub.s32 0, %v5378
    %v5380 = vrot.slane %v5373, %v5379
    %5381 = vmatprep.subr.bf16.mxu0 0
    %5382 = vmatpush1.bf16.xpose.msra.mxu0 %v5375
    %5383 = vmatprep.subr.bf16.mxu0 0
    %5384 = vmatpush1.bf16.xpose.msra.mxu0 %v5376
    %5385 = vmatprep.subr.bf16.mxu0 0
    %5386 = vmatpush1.bf16.xpose.msra.mxu0 0
    %5387 = vmatprep.subr.bf16.mxu0 0
    %5388 = vmatpush1.bf16.xpose.msra.mxu0 0
    %5389 = vmatprep.subr.bf16.mxu0 0
    %5390 = vmatpush1.bf16.xpose.msra.mxu0 0
    %5391 = vmatprep.subr.bf16.mxu0 0
    %5392 = vmatpush1.bf16.xpose.msra.mxu0 0
    %5393 = vmatprep.subr.bf16.mxu0 0
    %5394 = vmatpush1.bf16.xpose.msra.mxu0 0
    %5395 = vmatprep.subr.bf16.mxu0 0
    %5396 = vmatpush1.bf16.xpose.msra.mxu0 0
    %5397 = vmatprep.subr.bf16.mxu0 0
    %5398 = vmatpush1.bf16.xpose.msra.mxu0 0
    %5399 = vmatprep.subr.bf16.mxu0 0
    %5400 = vmatpush1.bf16.xpose.msra.mxu0 0
    %5401 = vmatprep.subr.bf16.mxu0 0
    %5402 = vmatpush1.bf16.xpose.msra.mxu0 0
    %5403 = vmatprep.subr.bf16.mxu0 0
    %5404 = vmatpush1.bf16.xpose.msra.mxu0 0
    %5405 = vmatprep.subr.bf16.mxu0 0
    %5406 = vmatpush1.bf16.xpose.msra.mxu0 0
    %5407 = vmatprep.subr.bf16.mxu0 0
    %5408 = vmatpush1.bf16.xpose.msra.mxu0 0
    %5409 = vmatprep.subr.bf16.mxu0 0
    %5410 = vmatpush1.bf16.xpose.msra.mxu0 0
    %5411 = vmatprep.subr.bf16.mxu0 0
    %5412 = vmatpush1.bf16.xpose.msra.mxu0 0
    %5413 = vmatprep.mubr.bf16.mxu0 0
    %5414 = vmatmul.mubr.bf16.gmra.mrb[0].mxu0 %v5374
    %v5415 = vpop.f32.mrb[0].mxu0
    %v5416 = vadd.f32 %v5380, %v5415
    %v5417 = vpop.f32.mrb[0].mxu0
    %v5418 = vpop.f32.mrb[0].mxu0
    %v5419 = vadd.f32 %v5380, %v5418
    %v5420 = vpop.f32.mrb[0].mxu0
    %5421 = vdwg.mxu0
    %v5422 = vadd.f32 %v5227, %v5416
    %v5423 = vadd.f32 %v5228, %v5419
    %v5424 = vld [vmem:[%s2784 + $0x268] sm:$0x1]
    %v5425 = vld [vmem:[%s2784 + $0x270] sm:$0x1]
    %v5426 = vsel %vm25, %v5422, 0.0
    %5427 = vadd.xlane.f32.xlu0 %v5426
    %v5428 = vpop.xlane.xlu0 %5427
    %v5429 = vsel %vm25, %v5423, 0.0
    %5430 = vadd.xlane.f32.xlu0 %v5429
    %v5431 = vpop.xlane.xlu0 %5430
    %v5432 = vmul.f32 %v5428, %v32
    %v5433 = vmul.f32 %v5431, %v32
    %v5434 = vsub.f32 %v5422, %v5432
    %v5435 = vsub.f32 %v5423, %v5433
    %v5436 = vmul.f32 %v5434, %v5434
    %v5437 = vmul.f32 %v5435, %v5435
    %v5438 = vsel %vm25, %v5436, 0.0
    %5439 = vadd.xlane.f32.xlu0 %v5438
    %v5440 = vpop.xlane.xlu0 %5439
    %v5441 = vsel %vm25, %v5437, 0.0
    %5442 = vadd.xlane.f32.xlu0 %v5441
    %v5443 = vpop.xlane.xlu0 %5442
    %v5444 = vmul.f32 %v5440, %v32
    %v5445 = vmul.f32 %v5443, %v32
    %v5446 = vadd.f32 %v5444, 1e-05
    %v5447 = vadd.f32 %v5445, 1e-05
    %v5448 = vrsqrt.pop %v5446
    %v5449 = vrsqrt.pop %v5447
    %v5450 = vmul.f32 %v5434, %v5448
    %v5451 = vmul.f32 %v5435, %v5449
    %v5452 = vlaneseq
    %v5453 = vshrl.u32 %v5452, 7
    %v5454 = vsub.s32 0, %v5453
    %v5455 = vrot.slane %v5424, %v5454
    %v5456 = vmul.f32 %v5450, %v5455
    %v5457 = vmul.f32 %v5451, %v5455
    %v5458 = vlaneseq
    %v5459 = vshrl.u32 %v5458, 7
    %v5460 = vsub.s32 0, %v5459
    %v5461 = vrot.slane %v5425, %v5460
    %v5462 = vadd.f32 %v5456, %v5461
    %v5463 = vadd.f32 %v5457, %v5461
    %v5464 = vsel %vm25, %v5462, 0.0
    %v5465 = vrot.slane %v5464, 4
    %v5466 = vadd.f32 %v5464, %v5465
    %v5467 = vrot.slane %v5466, 2
    %v5468 = vadd.f32 %v5466, %v5467
    %v5469 = vrot.slane %v5468, 1
    %v5470 = vadd.f32 %v5468, %v5469
    %v5471 = vsel %vm25, %v5463, 0.0
    %v5472 = vrot.slane %v5471, 4
    %v5473 = vadd.f32 %v5471, %v5472
    %v5474 = vrot.slane %v5473, 2
    %v5475 = vadd.f32 %v5473, %v5474
    %v5476 = vrot.slane %v5475, 1
    %v5477 = vadd.f32 %v5475, %v5476
    %v5478 = vld [vmem:[%s2784 + $0x278] sm:$0xff]
    %v5479 = vld [vmem:[%s2784 + $0x280] sm:$0xff]
    %v5480 = vld [vmem:[%s2784 + $0x288] sm:$0xff]
    %v5481 = vld [vmem:[%s2784 + $0x290] sm:$0xff]
    %v5482 = vld [vmem:[%s2845 + $0x60] sm:$0x1]
    %v5483 = vpack.c.bf16 %v5470, %v5470
    %v5484 = vpack.c.bf16 %v5477, %v5477
    %v5485 = vpack.c.bf16 %v5479, %v5478
    %v5486 = vpack.c.bf16 %v5481, %v5480
    %v5487 = vlaneseq
    %v5488 = vshrl.u32 %v5487, 7
    %v5489 = vsub.s32 0, %v5488
    %v5490 = vrot.slane %v5482, %v5489
    %v5493 = vunpack.c.l.b16 %v5483
    %v5494 = vunpack.c.l.b16 %v5484
    %v5495 = vsel %vm2730, %v5494, %v5493
    %v5496 = vpack.c.b16 %v5495, %v5495
    %v5498 = vsel %vm25, %v5496, 0
    %v5501 = vsel %vm25, %v5485, 0
    %v5504 = vsel %vm25, %v5486, 0
    %5506 = vmatprep.subr.bf16.mxu0 0
    %5507 = vmatpush1.bf16.xpose.msra.mxu0 %v5501
    %5508 = vmatprep.subr.bf16.mxu0 0
    %5509 = vmatpush1.bf16.xpose.msra.mxu0 %v5504
    %5510 = vmatprep.subr.bf16.mxu0 0
    %5511 = vmatpush1.bf16.xpose.msra.mxu0 0
    %5512 = vmatprep.subr.bf16.mxu0 0
    %5513 = vmatpush1.bf16.xpose.msra.mxu0 0
    %5514 = vmatprep.subr.bf16.mxu0 0
    %5515 = vmatpush1.bf16.xpose.msra.mxu0 0
    %5516 = vmatprep.subr.bf16.mxu0 0
    %5517 = vmatpush1.bf16.xpose.msra.mxu0 0
    %5518 = vmatprep.subr.bf16.mxu0 0
    %5519 = vmatpush1.bf16.xpose.msra.mxu0 0
    %5520 = vmatprep.subr.bf16.mxu0 0
    %5521 = vmatpush1.bf16.xpose.msra.mxu0 0
    %5522 = vmatprep.subr.bf16.mxu0 0
    %5523 = vmatpush1.bf16.xpose.msra.mxu0 0
    %5524 = vmatprep.subr.bf16.mxu0 0
    %5525 = vmatpush1.bf16.xpose.msra.mxu0 0
    %5526 = vmatprep.subr.bf16.mxu0 0
    %5527 = vmatpush1.bf16.xpose.msra.mxu0 0
    %5528 = vmatprep.subr.bf16.mxu0 0
    %5529 = vmatpush1.bf16.xpose.msra.mxu0 0
    %5530 = vmatprep.subr.bf16.mxu0 0
    %5531 = vmatpush1.bf16.xpose.msra.mxu0 0
    %5532 = vmatprep.subr.bf16.mxu0 0
    %5533 = vmatpush1.bf16.xpose.msra.mxu0 0
    %5534 = vmatprep.subr.bf16.mxu0 0
    %5535 = vmatpush1.bf16.xpose.msra.mxu0 0
    %5536 = vmatprep.subr.bf16.mxu0 0
    %5537 = vmatpush1.bf16.xpose.msra.mxu0 0
    %5538 = vmatprep.mubr.bf16.mxu0 0
    %5539 = vmatmul.mubr.bf16.gmra.mrb[0].mxu0 %v5498
    %v5540 = vpop.f32.mrb[0].mxu0
    %v5541 = vadd.f32 %v5490, %v5540
    %v5542 = vpop.f32.mrb[0].mxu0
    %v5543 = vpop.f32.mrb[0].mxu0
    %v5544 = vpop.f32.mrb[0].mxu0
    %5545 = vdwg.mxu0
    %s5546 = scalar_lea.vmem [#allocation2], 2
    %5547 = vst.msk [vmem:[%s5546] sm:$0x3] %vm2782, %v5541
    // Predicated region
    $region14: #{tpu_custom_call.1} parent=1 // pred_check
      _
    $region15: #{tpu_custom_call.1} parent=1 // pred_check_branch
      %5549 = sbr.rel (0) target = $region17
    $region16: #{tpu_custom_call.1} parent=1 // pred_region
      %s5551 = ssub.s32 64, 64
      %5552 = vsyncadd [#allocation3], %s5551
      %s5553 = sshll.u32 [#allocation2], 4
      %s5554 = int_to_ptr.vmem [resolvable:$true] %s5553
      %5559 = dma.vmem_to_hbm [thread:$0]  %s5554, 64, %s3, [#allocation3], 32, 32, 2
    $region17: #{tpu_custom_call.1} parent=1 // pred_fallthru
      _
    // Predicated region
    $region18: #{tpu_custom_call.1} parent=1 // pred_check
      _
    $region19: #{tpu_custom_call.1} parent=1 // pred_check_branch
      %5561 = sbr.rel (0) target = $region21
    $region20: #{tpu_custom_call.1} parent=1 // pred_region
      %5562 = dma.done [#allocation3], 64
    $region21: #{tpu_custom_call.1} parent=1 // pred_fallthru
      _
    %5563 = vsyncpa [#allocation3], 1

</llo_original>
